<compile_context>
chip_gen: v7x
topology: tpu7x:2x2x1
jax: 0.10.0
libtpu: 0.0.40
codegen_flags: <defaults>
</compile_context>

<pallas_src>
import functools

import jax
import jax.numpy as jnp
from jax import lax
from jax.experimental import pallas as pl
from jax.experimental.pallas import tpu as pltpu


def _res_block_kernel(xp_ref, w0_ref, b0_ref, w1_ref, b1_ref, o_ref, hpad_ref,
                      *, H, W, C, neg_slope):
    # xp_ref : (1, H+2, W+2, C)  zero-padded input image (one batch element)
    # w0/w1  : (9, C, C)         taps ordered ky*3+kx, layout [tap, in_c, out_c]
    # b0/b1  : (1, C)
    # o_ref  : (1, H, W, C)
    # hpad_ref: VMEM scratch (H+2, W+2, C) holding the zero-padded intermediate.
    f32 = jnp.float32

    def leaky_relu(v):
        return jnp.where(v >= 0, v, neg_slope * v)

    def conv3x3(src, w_ref, b_ref):
        # src: (H+2, W+2, C).  9 shifted slices, each a [H*W, C] @ [C, C] MXU matmul.
        # Accumulator starts as the broadcast bias (hoisted out of the tap loop).
        acc = jnp.broadcast_to(b_ref[...].astype(f32), (H * W, C))
        for ky in range(3):
            for kx in range(3):
                patch = src[ky:ky + H, kx:kx + W, :].reshape(H * W, C).astype(f32)
                acc = acc + jnp.dot(patch, w_ref[ky * 3 + kx],
                                    preferred_element_type=f32)
        return acc

    xp = xp_ref[0]  # (H+2, W+2, C)

    # conv0 + LeakyReLU, written into the padded scratch (zero halo for conv1).
    h = leaky_relu(conv3x3(xp, w0_ref, b0_ref))
    # Re-zero every step: dense unmasked store, negligible vs the 18 matmuls, and
    # correct regardless of how the grid is sharded across TensorCores.
    hpad_ref[...] = jnp.zeros_like(hpad_ref)
    hpad_ref[1:H + 1, 1:W + 1, :] = h.reshape(H, W, C)

    # conv1 + LeakyReLU
    res = leaky_relu(conv3x3(hpad_ref[...], w1_ref, b1_ref))

    # residual add with the unpadded input
    x_in = xp[1:H + 1, 1:W + 1, :].reshape(H * W, C).astype(f32)
    out = x_in + res
    o_ref[...] = out.reshape(1, H, W, C).astype(o_ref.dtype)


def basic_res_block_forward(x, w0, b0, w1, b1, neg_slope=0.2):
    """x: [B, C, H, W] (PyTorch NCHW); w: [C, C, 3, 3]; b: [C]."""
    B, C, H, W = x.shape

    # NCHW -> NHWC (channels on lanes) and zero-pad the 1-pixel halo once, outside.
    x_nhwc = jnp.transpose(x, (0, 2, 3, 1))
    x_pad = jnp.pad(x_nhwc, ((0, 0), (1, 1), (1, 1), (0, 0)))

    def to_taps(w):  # [O, I, 3, 3] -> [9, I, O] so the kernel does x @ W
        return jnp.transpose(w, (2, 3, 1, 0)).reshape(9, C, C)

    w0_t, w1_t = to_taps(w0), to_taps(w1)
    b0_r, b1_r = b0.reshape(1, C), b1.reshape(1, C)

    kernel = functools.partial(_res_block_kernel, H=H, W=W, C=C,
                               neg_slope=neg_slope)

    # VMEM budget: double-buffered in/out blocks + resident weights + padded scratch.
    bpe = 4  # f32
    blk_in = (H + 2) * (W + 2) * C * bpe
    blk_out = H * W * C * bpe
    weights = 2 * (9 * C * C + C) * bpe
    scratch = (H + 2) * (W + 2) * C * bpe
    vmem_needed = 2 * blk_in + 2 * blk_out + 2 * weights + scratch
    vmem_limit = int(min(64 << 20, max(32 << 20, 2 * vmem_needed)))

    # Advisory cost hint for the XLA scheduler (2 convs, 9 taps, 2 flops/MAC).
    flops = 2 * 2 * 9 * B * H * W * C * C
    bytes_accessed = bpe * (B * (H + 2) * (W + 2) * C + B * H * W * C
                            + 2 * (9 * C * C + C))
    cost = pl.CostEstimate(flops=flops, transcendentals=0,
                           bytes_accessed=bytes_accessed)

    out_nhwc = pl.pallas_call(
        kernel,
        out_shape=jax.ShapeDtypeStruct((B, H, W, C), x.dtype),
        grid_spec=pltpu.PrefetchScalarGridSpec(
            num_scalar_prefetch=0,
            grid=(B,),  # one image per grid step -> pipelined HBM<->VMEM traffic
            in_specs=[
                pl.BlockSpec((1, H + 2, W + 2, C), lambda b: (b, 0, 0, 0)),
                pl.BlockSpec((9, C, C), lambda b: (0, 0, 0)),   # weights resident
                pl.BlockSpec((1, C), lambda b: (0, 0)),
                pl.BlockSpec((9, C, C), lambda b: (0, 0, 0)),
                pl.BlockSpec((1, C), lambda b: (0, 0)),
            ],
            out_specs=pl.BlockSpec((1, H, W, C), lambda b: (b, 0, 0, 0)),
            scratch_shapes=[pltpu.VMEM((H + 2, W + 2, C), jnp.float32)],
        ),
        compiler_params=pltpu.CompilerParams(
            dimension_semantics=("parallel",),  # v7x: shard batch across both TCs
            vmem_limit_bytes=vmem_limit),
        cost_estimate=cost,
    )(x_pad, w0_t, b0_r, w1_t, b1_r)

    # back to PyTorch NCHW
    return jnp.transpose(out_nhwc, (0, 3, 1, 2))


def reference_forward(x, w0, b0, w1, b1, neg_slope=0.2):
    # Pure-JAX reference using lax conv (cross-correlation, same as PyTorch Conv2d).
    dn = ('NCHW', 'OIHW', 'NCHW')

    def conv(v, w, b):
        y = lax.conv_general_dilated(v, w, window_strides=(1, 1),
                                     padding=((1, 1), (1, 1)),
                                     dimension_numbers=dn)
        return y + b.reshape(1, -1, 1, 1)

    def lrelu(v):
        return jnp.where(v >= 0, v, neg_slope * v)

    res = lrelu(conv(x, w0, b0))
    res = lrelu(conv(res, w1, b1))
    return x + res


if __name__ == "__main__":
    key = jax.random.PRNGKey(0)
    kx, k0, kb0, k1, kb1 = jax.random.split(key, 5)

    B, C, H, W = 2, 4, 16, 16
    x = jax.random.normal(kx, (B, C, H, W), jnp.float32)

    # PyTorch Conv2d default init: uniform(+/- 1/sqrt(fan_in)), fan_in = C*3*3.
    lim = float(1.0 / (C * 3 * 3) ** 0.5)
    w0 = jax.random.uniform(k0, (C, C, 3, 3), jnp.float32, -lim, lim)
    b0 = jax.random.uniform(kb0, (C,), jnp.float32, -lim, lim)
    w1 = jax.random.uniform(k1, (C, C, 3, 3), jnp.float32, -lim, lim)
    b1 = jax.random.uniform(kb1, (C,), jnp.float32, -lim, lim)

    out = basic_res_block_forward(x, w0, b0, w1, b1)
    out = jax.block_until_ready(out)

    ref = reference_forward(x, w0, b0, w1, b1)
    assert out.shape == (B, C, H, W)
    err = float(jnp.max(jnp.abs(out - ref)))
    assert jnp.allclose(out, ref, atol=1e-4, rtol=1e-4), \
        f"mismatch vs reference (max abs err {err:.3e})"

    # TODO(synk): the norm=True branch builds an InstanceNorm2d that forward() never
    # calls, so it is intentionally not implemented.

    print("KERNEL_OK")
</pallas_src>

<mosaic_0001>
module attributes {stable_mosaic.version = 11 : i64} {
  func.func @_res_block_kernel(%arg0: i32, %arg1: memref<1x18x18x4xf32, #tpu.memory_space<vmem>>, %arg2: memref<9x4x4xf32, #tpu.memory_space<vmem>>, %arg3: memref<1x4xf32, #tpu.memory_space<vmem>>, %arg4: memref<9x4x4xf32, #tpu.memory_space<vmem>>, %arg5: memref<1x4xf32, #tpu.memory_space<vmem>>, %arg6: memref<1x16x16x4xf32, #tpu.memory_space<vmem>>, %arg7: memref<18x18x4xf32, #tpu.memory_space<vmem>>) attributes {dimension_semantics = [#tpu.dimension_semantics<parallel>], iteration_bounds = array<i64: 2>, scalar_prefetch = 0 : i64, scratch_operands = 1 : i64, tpu.core_type = #tpu.core_type<tc>, window_params = [{transform_indices = @transform_0, window_bounds = array<i64: 1, 18, 18, 4>}, {pipeline_mode = #tpu.pipeline_mode<synchronous>, transform_indices = @transform_1, window_bounds = array<i64: 9, 4, 4>}, {pipeline_mode = #tpu.pipeline_mode<synchronous>, transform_indices = @transform_2, window_bounds = array<i64: 1, 4>}, {pipeline_mode = #tpu.pipeline_mode<synchronous>, transform_indices = @transform_3, window_bounds = array<i64: 9, 4, 4>}, {pipeline_mode = #tpu.pipeline_mode<synchronous>, transform_indices = @transform_4, window_bounds = array<i64: 1, 4>}, {transform_indices = @transform_5, window_bounds = array<i64: 1, 16, 16, 4>}]} {
    %c0 = arith.constant 0 : index
    %c0_0 = arith.constant 0 : index
    %c0_1 = arith.constant 0 : index
    %c0_2 = arith.constant 0 : index
    %0 = vector.load %arg1[%c0, %c0_0, %c0_1, %c0_2] : memref<1x18x18x4xf32, #tpu.memory_space<vmem>>, vector<1x18x18x4xf32>
    %1 = vector.shape_cast %0 : vector<1x18x18x4xf32> to vector<18x18x4xf32>
    %c0_3 = arith.constant 0 : index
    %c0_4 = arith.constant 0 : index
    %2 = vector.load %arg3[%c0_3, %c0_4] : memref<1x4xf32, #tpu.memory_space<vmem>>, vector<1x4xf32>
    %3 = vector.shape_cast %2 : vector<1x4xf32> to vector<1x4xf32>
    %4 = vector.broadcast %3 : vector<1x4xf32> to vector<256x4xf32>
    %5 = vector.extract_strided_slice %1 {offsets = [0, 0, 0], sizes = [16, 16, 4], strides = [1, 1, 1]} : vector<18x18x4xf32> to vector<16x16x4xf32>
    %6 = vector.shape_cast %5 : vector<16x16x4xf32> to vector<256x4xf32>
    %c0_5 = arith.constant 0 : index
    %c0_6 = arith.constant 0 : index
    %c0_7 = arith.constant 0 : index
    %7 = vector.load %arg2[%c0_5, %c0_6, %c0_7] : memref<9x4x4xf32, #tpu.memory_space<vmem>>, vector<1x4x4xf32>
    %8 = vector.shape_cast %7 : vector<1x4x4xf32> to vector<4x4xf32>
    %cst = arith.constant dense<0.000000e+00> : vector<256x4xf32>
    %9 = tpu.matmul %6, %8, %cst {dimension_numbers = #tpu.dot_dimension_numbers<[1], [0], [0], [1], [0, 0, 1, 1], [], []>} : vector<256x4xf32>, vector<4x4xf32>, vector<256x4xf32> -> vector<256x4xf32>
    %10 = arith.addf %4, %9 : vector<256x4xf32>
    %11 = vector.extract_strided_slice %1 {offsets = [0, 1, 0], sizes = [16, 16, 4], strides = [1, 1, 1]} : vector<18x18x4xf32> to vector<16x16x4xf32>
    %12 = vector.shape_cast %11 : vector<16x16x4xf32> to vector<256x4xf32>
    %c1 = arith.constant 1 : index
    %c0_8 = arith.constant 0 : index
    %c0_9 = arith.constant 0 : index
    %13 = vector.load %arg2[%c1, %c0_8, %c0_9] : memref<9x4x4xf32, #tpu.memory_space<vmem>>, vector<1x4x4xf32>
    %14 = vector.shape_cast %13 : vector<1x4x4xf32> to vector<4x4xf32>
    %cst_10 = arith.constant dense<0.000000e+00> : vector<256x4xf32>
    %15 = tpu.matmul %12, %14, %cst_10 {dimension_numbers = #tpu.dot_dimension_numbers<[1], [0], [0], [1], [0, 0, 1, 1], [], []>} : vector<256x4xf32>, vector<4x4xf32>, vector<256x4xf32> -> vector<256x4xf32>
    %16 = arith.addf %10, %15 : vector<256x4xf32>
    %17 = vector.extract_strided_slice %1 {offsets = [0, 2, 0], sizes = [16, 16, 4], strides = [1, 1, 1]} : vector<18x18x4xf32> to vector<16x16x4xf32>
    %18 = vector.shape_cast %17 : vector<16x16x4xf32> to vector<256x4xf32>
    %c2 = arith.constant 2 : index
    %c0_11 = arith.constant 0 : index
    %c0_12 = arith.constant 0 : index
    %19 = vector.load %arg2[%c2, %c0_11, %c0_12] : memref<9x4x4xf32, #tpu.memory_space<vmem>>, vector<1x4x4xf32>
    %20 = vector.shape_cast %19 : vector<1x4x4xf32> to vector<4x4xf32>
    %cst_13 = arith.constant dense<0.000000e+00> : vector<256x4xf32>
    %21 = tpu.matmul %18, %20, %cst_13 {dimension_numbers = #tpu.dot_dimension_numbers<[1], [0], [0], [1], [0, 0, 1, 1], [], []>} : vector<256x4xf32>, vector<4x4xf32>, vector<256x4xf32> -> vector<256x4xf32>
    %22 = arith.addf %16, %21 : vector<256x4xf32>
    %23 = vector.extract_strided_slice %1 {offsets = [1, 0, 0], sizes = [16, 16, 4], strides = [1, 1, 1]} : vector<18x18x4xf32> to vector<16x16x4xf32>
    %24 = vector.shape_cast %23 : vector<16x16x4xf32> to vector<256x4xf32>
    %c3 = arith.constant 3 : index
    %c0_14 = arith.constant 0 : index
    %c0_15 = arith.constant 0 : index
    %25 = vector.load %arg2[%c3, %c0_14, %c0_15] : memref<9x4x4xf32, #tpu.memory_space<vmem>>, vector<1x4x4xf32>
    %26 = vector.shape_cast %25 : vector<1x4x4xf32> to vector<4x4xf32>
    %cst_16 = arith.constant dense<0.000000e+00> : vector<256x4xf32>
    %27 = tpu.matmul %24, %26, %cst_16 {dimension_numbers = #tpu.dot_dimension_numbers<[1], [0], [0], [1], [0, 0, 1, 1], [], []>} : vector<256x4xf32>, vector<4x4xf32>, vector<256x4xf32> -> vector<256x4xf32>
    %28 = arith.addf %22, %27 : vector<256x4xf32>
    %29 = vector.extract_strided_slice %1 {offsets = [1, 1, 0], sizes = [16, 16, 4], strides = [1, 1, 1]} : vector<18x18x4xf32> to vector<16x16x4xf32>
    %30 = vector.shape_cast %29 : vector<16x16x4xf32> to vector<256x4xf32>
    %c4 = arith.constant 4 : index
    %c0_17 = arith.constant 0 : index
    %c0_18 = arith.constant 0 : index
    %31 = vector.load %arg2[%c4, %c0_17, %c0_18] : memref<9x4x4xf32, #tpu.memory_space<vmem>>, vector<1x4x4xf32>
    %32 = vector.shape_cast %31 : vector<1x4x4xf32> to vector<4x4xf32>
    %cst_19 = arith.constant dense<0.000000e+00> : vector<256x4xf32>
    %33 = tpu.matmul %30, %32, %cst_19 {dimension_numbers = #tpu.dot_dimension_numbers<[1], [0], [0], [1], [0, 0, 1, 1], [], []>} : vector<256x4xf32>, vector<4x4xf32>, vector<256x4xf32> -> vector<256x4xf32>
    %34 = arith.addf %28, %33 : vector<256x4xf32>
    %35 = vector.extract_strided_slice %1 {offsets = [1, 2, 0], sizes = [16, 16, 4], strides = [1, 1, 1]} : vector<18x18x4xf32> to vector<16x16x4xf32>
    %36 = vector.shape_cast %35 : vector<16x16x4xf32> to vector<256x4xf32>
    %c5 = arith.constant 5 : index
    %c0_20 = arith.constant 0 : index
    %c0_21 = arith.constant 0 : index
    %37 = vector.load %arg2[%c5, %c0_20, %c0_21] : memref<9x4x4xf32, #tpu.memory_space<vmem>>, vector<1x4x4xf32>
    %38 = vector.shape_cast %37 : vector<1x4x4xf32> to vector<4x4xf32>
    %cst_22 = arith.constant dense<0.000000e+00> : vector<256x4xf32>
    %39 = tpu.matmul %36, %38, %cst_22 {dimension_numbers = #tpu.dot_dimension_numbers<[1], [0], [0], [1], [0, 0, 1, 1], [], []>} : vector<256x4xf32>, vector<4x4xf32>, vector<256x4xf32> -> vector<256x4xf32>
    %40 = arith.addf %34, %39 : vector<256x4xf32>
    %41 = vector.extract_strided_slice %1 {offsets = [2, 0, 0], sizes = [16, 16, 4], strides = [1, 1, 1]} : vector<18x18x4xf32> to vector<16x16x4xf32>
    %42 = vector.shape_cast %41 : vector<16x16x4xf32> to vector<256x4xf32>
    %c6 = arith.constant 6 : index
    %c0_23 = arith.constant 0 : index
    %c0_24 = arith.constant 0 : index
    %43 = vector.load %arg2[%c6, %c0_23, %c0_24] : memref<9x4x4xf32, #tpu.memory_space<vmem>>, vector<1x4x4xf32>
    %44 = vector.shape_cast %43 : vector<1x4x4xf32> to vector<4x4xf32>
    %cst_25 = arith.constant dense<0.000000e+00> : vector<256x4xf32>
    %45 = tpu.matmul %42, %44, %cst_25 {dimension_numbers = #tpu.dot_dimension_numbers<[1], [0], [0], [1], [0, 0, 1, 1], [], []>} : vector<256x4xf32>, vector<4x4xf32>, vector<256x4xf32> -> vector<256x4xf32>
    %46 = arith.addf %40, %45 : vector<256x4xf32>
    %47 = vector.extract_strided_slice %1 {offsets = [2, 1, 0], sizes = [16, 16, 4], strides = [1, 1, 1]} : vector<18x18x4xf32> to vector<16x16x4xf32>
    %48 = vector.shape_cast %47 : vector<16x16x4xf32> to vector<256x4xf32>
    %c7 = arith.constant 7 : index
    %c0_26 = arith.constant 0 : index
    %c0_27 = arith.constant 0 : index
    %49 = vector.load %arg2[%c7, %c0_26, %c0_27] : memref<9x4x4xf32, #tpu.memory_space<vmem>>, vector<1x4x4xf32>
    %50 = vector.shape_cast %49 : vector<1x4x4xf32> to vector<4x4xf32>
    %cst_28 = arith.constant dense<0.000000e+00> : vector<256x4xf32>
    %51 = tpu.matmul %48, %50, %cst_28 {dimension_numbers = #tpu.dot_dimension_numbers<[1], [0], [0], [1], [0, 0, 1, 1], [], []>} : vector<256x4xf32>, vector<4x4xf32>, vector<256x4xf32> -> vector<256x4xf32>
    %52 = arith.addf %46, %51 : vector<256x4xf32>
    %53 = vector.extract_strided_slice %1 {offsets = [2, 2, 0], sizes = [16, 16, 4], strides = [1, 1, 1]} : vector<18x18x4xf32> to vector<16x16x4xf32>
    %54 = vector.shape_cast %53 : vector<16x16x4xf32> to vector<256x4xf32>
    %c8 = arith.constant 8 : index
    %c0_29 = arith.constant 0 : index
    %c0_30 = arith.constant 0 : index
    %55 = vector.load %arg2[%c8, %c0_29, %c0_30] : memref<9x4x4xf32, #tpu.memory_space<vmem>>, vector<1x4x4xf32>
    %56 = vector.shape_cast %55 : vector<1x4x4xf32> to vector<4x4xf32>
    %cst_31 = arith.constant dense<0.000000e+00> : vector<256x4xf32>
    %57 = tpu.matmul %54, %56, %cst_31 {dimension_numbers = #tpu.dot_dimension_numbers<[1], [0], [0], [1], [0, 0, 1, 1], [], []>} : vector<256x4xf32>, vector<4x4xf32>, vector<256x4xf32> -> vector<256x4xf32>
    %58 = arith.addf %52, %57 : vector<256x4xf32>
    %cst_32 = arith.constant 0.000000e+00 : f32
    %59 = vector.broadcast %cst_32 : f32 to vector<256x4xf32>
    %60 = arith.cmpf oge, %58, %59 : vector<256x4xf32>
    %cst_33 = arith.constant 2.000000e-01 : f32
    %61 = vector.broadcast %cst_33 : f32 to vector<256x4xf32>
    %62 = arith.mulf %61, %58 : vector<256x4xf32>
    %63 = arith.select %60, %58, %62 : vector<256x4xi1>, vector<256x4xf32>
    %cst_34 = arith.constant 0.000000e+00 : f32
    %64 = vector.broadcast %cst_34 : f32 to vector<18x18x4xf32>
    %c0_35 = arith.constant 0 : index
    %c0_36 = arith.constant 0 : index
    %c0_37 = arith.constant 0 : index
    %65 = vector.load %arg7[%c0_35, %c0_36, %c0_37] : memref<18x18x4xf32, #tpu.memory_space<vmem>>, vector<18x18x4xf32>
    tpu.vector_store %arg7[%c0_35, %c0_36, %c0_37], %64 {strides = array<i32>} : memref<18x18x4xf32, #tpu.memory_space<vmem>>, vector<18x18x4xf32>,
    %66 = vector.shape_cast %63 : vector<256x4xf32> to vector<16x16x4xf32>
    %c1_38 = arith.constant 1 : index
    %c1_39 = arith.constant 1 : index
    %c0_40 = arith.constant 0 : index
    %67 = vector.load %arg7[%c1_38, %c1_39, %c0_40] : memref<18x18x4xf32, #tpu.memory_space<vmem>>, vector<16x16x4xf32>
    tpu.vector_store %arg7[%c1_38, %c1_39, %c0_40], %66 {strides = array<i32>} : memref<18x18x4xf32, #tpu.memory_space<vmem>>, vector<16x16x4xf32>,
    %c0_41 = arith.constant 0 : index
    %c0_42 = arith.constant 0 : index
    %c0_43 = arith.constant 0 : index
    %68 = vector.load %arg7[%c0_41, %c0_42, %c0_43] : memref<18x18x4xf32, #tpu.memory_space<vmem>>, vector<18x18x4xf32>
    %c0_44 = arith.constant 0 : index
    %c0_45 = arith.constant 0 : index
    %69 = vector.load %arg5[%c0_44, %c0_45] : memref<1x4xf32, #tpu.memory_space<vmem>>, vector<1x4xf32>
    %70 = vector.shape_cast %69 : vector<1x4xf32> to vector<1x4xf32>
    %71 = vector.broadcast %70 : vector<1x4xf32> to vector<256x4xf32>
    %72 = vector.extract_strided_slice %68 {offsets = [0, 0, 0], sizes = [16, 16, 4], strides = [1, 1, 1]} : vector<18x18x4xf32> to vector<16x16x4xf32>
    %73 = vector.shape_cast %72 : vector<16x16x4xf32> to vector<256x4xf32>
    %c0_46 = arith.constant 0 : index
    %c0_47 = arith.constant 0 : index
    %c0_48 = arith.constant 0 : index
    %74 = vector.load %arg4[%c0_46, %c0_47, %c0_48] : memref<9x4x4xf32, #tpu.memory_space<vmem>>, vector<1x4x4xf32>
    %75 = vector.shape_cast %74 : vector<1x4x4xf32> to vector<4x4xf32>
    %cst_49 = arith.constant dense<0.000000e+00> : vector<256x4xf32>
    %76 = tpu.matmul %73, %75, %cst_49 {dimension_numbers = #tpu.dot_dimension_numbers<[1], [0], [0], [1], [0, 0, 1, 1], [], []>} : vector<256x4xf32>, vector<4x4xf32>, vector<256x4xf32> -> vector<256x4xf32>
    %77 = arith.addf %71, %76 : vector<256x4xf32>
    %78 = vector.extract_strided_slice %68 {offsets = [0, 1, 0], sizes = [16, 16, 4], strides = [1, 1, 1]} : vector<18x18x4xf32> to vector<16x16x4xf32>
    %79 = vector.shape_cast %78 : vector<16x16x4xf32> to vector<256x4xf32>
    %c1_50 = arith.constant 1 : index
    %c0_51 = arith.constant 0 : index
    %c0_52 = arith.constant 0 : index
    %80 = vector.load %arg4[%c1_50, %c0_51, %c0_52] : memref<9x4x4xf32, #tpu.memory_space<vmem>>, vector<1x4x4xf32>
    %81 = vector.shape_cast %80 : vector<1x4x4xf32> to vector<4x4xf32>
    %cst_53 = arith.constant dense<0.000000e+00> : vector<256x4xf32>
    %82 = tpu.matmul %79, %81, %cst_53 {dimension_numbers = #tpu.dot_dimension_numbers<[1], [0], [0], [1], [0, 0, 1, 1], [], []>} : vector<256x4xf32>, vector<4x4xf32>, vector<256x4xf32> -> vector<256x4xf32>
    %83 = arith.addf %77, %82 : vector<256x4xf32>
    %84 = vector.extract_strided_slice %68 {offsets = [0, 2, 0], sizes = [16, 16, 4], strides = [1, 1, 1]} : vector<18x18x4xf32> to vector<16x16x4xf32>
    %85 = vector.shape_cast %84 : vector<16x16x4xf32> to vector<256x4xf32>
    %c2_54 = arith.constant 2 : index
    %c0_55 = arith.constant 0 : index
    %c0_56 = arith.constant 0 : index
    %86 = vector.load %arg4[%c2_54, %c0_55, %c0_56] : memref<9x4x4xf32, #tpu.memory_space<vmem>>, vector<1x4x4xf32>
    %87 = vector.shape_cast %86 : vector<1x4x4xf32> to vector<4x4xf32>
    %cst_57 = arith.constant dense<0.000000e+00> : vector<256x4xf32>
    %88 = tpu.matmul %85, %87, %cst_57 {dimension_numbers = #tpu.dot_dimension_numbers<[1], [0], [0], [1], [0, 0, 1, 1], [], []>} : vector<256x4xf32>, vector<4x4xf32>, vector<256x4xf32> -> vector<256x4xf32>
    %89 = arith.addf %83, %88 : vector<256x4xf32>
    %90 = vector.extract_strided_slice %68 {offsets = [1, 0, 0], sizes = [16, 16, 4], strides = [1, 1, 1]} : vector<18x18x4xf32> to vector<16x16x4xf32>
    %91 = vector.shape_cast %90 : vector<16x16x4xf32> to vector<256x4xf32>
    %c3_58 = arith.constant 3 : index
    %c0_59 = arith.constant 0 : index
    %c0_60 = arith.constant 0 : index
    %92 = vector.load %arg4[%c3_58, %c0_59, %c0_60] : memref<9x4x4xf32, #tpu.memory_space<vmem>>, vector<1x4x4xf32>
    %93 = vector.shape_cast %92 : vector<1x4x4xf32> to vector<4x4xf32>
    %cst_61 = arith.constant dense<0.000000e+00> : vector<256x4xf32>
    %94 = tpu.matmul %91, %93, %cst_61 {dimension_numbers = #tpu.dot_dimension_numbers<[1], [0], [0], [1], [0, 0, 1, 1], [], []>} : vector<256x4xf32>, vector<4x4xf32>, vector<256x4xf32> -> vector<256x4xf32>
    %95 = arith.addf %89, %94 : vector<256x4xf32>
    %96 = vector.extract_strided_slice %68 {offsets = [1, 1, 0], sizes = [16, 16, 4], strides = [1, 1, 1]} : vector<18x18x4xf32> to vector<16x16x4xf32>
    %97 = vector.shape_cast %96 : vector<16x16x4xf32> to vector<256x4xf32>
    %c4_62 = arith.constant 4 : index
    %c0_63 = arith.constant 0 : index
    %c0_64 = arith.constant 0 : index
    %98 = vector.load %arg4[%c4_62, %c0_63, %c0_64] : memref<9x4x4xf32, #tpu.memory_space<vmem>>, vector<1x4x4xf32>
    %99 = vector.shape_cast %98 : vector<1x4x4xf32> to vector<4x4xf32>
    %cst_65 = arith.constant dense<0.000000e+00> : vector<256x4xf32>
    %100 = tpu.matmul %97, %99, %cst_65 {dimension_numbers = #tpu.dot_dimension_numbers<[1], [0], [0], [1], [0, 0, 1, 1], [], []>} : vector<256x4xf32>, vector<4x4xf32>, vector<256x4xf32> -> vector<256x4xf32>
    %101 = arith.addf %95, %100 : vector<256x4xf32>
    %102 = vector.extract_strided_slice %68 {offsets = [1, 2, 0], sizes = [16, 16, 4], strides = [1, 1, 1]} : vector<18x18x4xf32> to vector<16x16x4xf32>
    %103 = vector.shape_cast %102 : vector<16x16x4xf32> to vector<256x4xf32>
    %c5_66 = arith.constant 5 : index
    %c0_67 = arith.constant 0 : index
    %c0_68 = arith.constant 0 : index
    %104 = vector.load %arg4[%c5_66, %c0_67, %c0_68] : memref<9x4x4xf32, #tpu.memory_space<vmem>>, vector<1x4x4xf32>
    %105 = vector.shape_cast %104 : vector<1x4x4xf32> to vector<4x4xf32>
    %cst_69 = arith.constant dense<0.000000e+00> : vector<256x4xf32>
    %106 = tpu.matmul %103, %105, %cst_69 {dimension_numbers = #tpu.dot_dimension_numbers<[1], [0], [0], [1], [0, 0, 1, 1], [], []>} : vector<256x4xf32>, vector<4x4xf32>, vector<256x4xf32> -> vector<256x4xf32>
    %107 = arith.addf %101, %106 : vector<256x4xf32>
    %108 = vector.extract_strided_slice %68 {offsets = [2, 0, 0], sizes = [16, 16, 4], strides = [1, 1, 1]} : vector<18x18x4xf32> to vector<16x16x4xf32>
    %109 = vector.shape_cast %108 : vector<16x16x4xf32> to vector<256x4xf32>
    %c6_70 = arith.constant 6 : index
    %c0_71 = arith.constant 0 : index
    %c0_72 = arith.constant 0 : index
    %110 = vector.load %arg4[%c6_70, %c0_71, %c0_72] : memref<9x4x4xf32, #tpu.memory_space<vmem>>, vector<1x4x4xf32>
    %111 = vector.shape_cast %110 : vector<1x4x4xf32> to vector<4x4xf32>
    %cst_73 = arith.constant dense<0.000000e+00> : vector<256x4xf32>
    %112 = tpu.matmul %109, %111, %cst_73 {dimension_numbers = #tpu.dot_dimension_numbers<[1], [0], [0], [1], [0, 0, 1, 1], [], []>} : vector<256x4xf32>, vector<4x4xf32>, vector<256x4xf32> -> vector<256x4xf32>
    %113 = arith.addf %107, %112 : vector<256x4xf32>
    %114 = vector.extract_strided_slice %68 {offsets = [2, 1, 0], sizes = [16, 16, 4], strides = [1, 1, 1]} : vector<18x18x4xf32> to vector<16x16x4xf32>
    %115 = vector.shape_cast %114 : vector<16x16x4xf32> to vector<256x4xf32>
    %c7_74 = arith.constant 7 : index
    %c0_75 = arith.constant 0 : index
    %c0_76 = arith.constant 0 : index
    %116 = vector.load %arg4[%c7_74, %c0_75, %c0_76] : memref<9x4x4xf32, #tpu.memory_space<vmem>>, vector<1x4x4xf32>
    %117 = vector.shape_cast %116 : vector<1x4x4xf32> to vector<4x4xf32>
    %cst_77 = arith.constant dense<0.000000e+00> : vector<256x4xf32>
    %118 = tpu.matmul %115, %117, %cst_77 {dimension_numbers = #tpu.dot_dimension_numbers<[1], [0], [0], [1], [0, 0, 1, 1], [], []>} : vector<256x4xf32>, vector<4x4xf32>, vector<256x4xf32> -> vector<256x4xf32>
    %119 = arith.addf %113, %118 : vector<256x4xf32>
    %120 = vector.extract_strided_slice %68 {offsets = [2, 2, 0], sizes = [16, 16, 4], strides = [1, 1, 1]} : vector<18x18x4xf32> to vector<16x16x4xf32>
    %121 = vector.shape_cast %120 : vector<16x16x4xf32> to vector<256x4xf32>
    %c8_78 = arith.constant 8 : index
    %c0_79 = arith.constant 0 : index
    %c0_80 = arith.constant 0 : index
    %122 = vector.load %arg4[%c8_78, %c0_79, %c0_80] : memref<9x4x4xf32, #tpu.memory_space<vmem>>, vector<1x4x4xf32>
    %123 = vector.shape_cast %122 : vector<1x4x4xf32> to vector<4x4xf32>
    %cst_81 = arith.constant dense<0.000000e+00> : vector<256x4xf32>
    %124 = tpu.matmul %121, %123, %cst_81 {dimension_numbers = #tpu.dot_dimension_numbers<[1], [0], [0], [1], [0, 0, 1, 1], [], []>} : vector<256x4xf32>, vector<4x4xf32>, vector<256x4xf32> -> vector<256x4xf32>
    %125 = arith.addf %119, %124 : vector<256x4xf32>
    %cst_82 = arith.constant 0.000000e+00 : f32
    %126 = vector.broadcast %cst_82 : f32 to vector<256x4xf32>
    %127 = arith.cmpf oge, %125, %126 : vector<256x4xf32>
    %cst_83 = arith.constant 2.000000e-01 : f32
    %128 = vector.broadcast %cst_83 : f32 to vector<256x4xf32>
    %129 = arith.mulf %128, %125 : vector<256x4xf32>
    %130 = arith.select %127, %125, %129 : vector<256x4xi1>, vector<256x4xf32>
    %131 = vector.extract_strided_slice %1 {offsets = [1, 1, 0], sizes = [16, 16, 4], strides = [1, 1, 1]} : vector<18x18x4xf32> to vector<16x16x4xf32>
    %132 = vector.shape_cast %131 : vector<16x16x4xf32> to vector<256x4xf32>
    %133 = arith.addf %132, %130 : vector<256x4xf32>
    %134 = vector.shape_cast %133 : vector<256x4xf32> to vector<1x16x16x4xf32>
    %c0_84 = arith.constant 0 : index
    %c0_85 = arith.constant 0 : index
    %c0_86 = arith.constant 0 : index
    %c0_87 = arith.constant 0 : index
    %135 = vector.load %arg6[%c0_84, %c0_85, %c0_86, %c0_87] : memref<1x16x16x4xf32, #tpu.memory_space<vmem>>, vector<1x16x16x4xf32>
    tpu.vector_store %arg6[%c0_84, %c0_85, %c0_86, %c0_87], %134 {strides = array<i32>} : memref<1x16x16x4xf32, #tpu.memory_space<vmem>>, vector<1x16x16x4xf32>,
    return
  }
  func.func @transform_0(%arg0: i32) -> (i32, i32, i32, i32) {
    %c0_i32 = arith.constant 0 : i32
    %c0_i32_0 = arith.constant 0 : i32
    %c0_i32_1 = arith.constant 0 : i32
    %c0_i32_2 = arith.constant 0 : i32
    return %arg0, %c0_i32, %c0_i32_0, %c0_i32_1 : i32, i32, i32, i32
  }
  func.func @transform_1(%arg0: i32) -> (i32, i32, i32) {
    %c0_i32 = arith.constant 0 : i32
    %c0_i32_0 = arith.constant 0 : i32
    %c0_i32_1 = arith.constant 0 : i32
    %c0_i32_2 = arith.constant 0 : i32
    return %c0_i32, %c0_i32_0, %c0_i32_1 : i32, i32, i32
  }
  func.func @transform_2(%arg0: i32) -> (i32, i32) {
    %c0_i32 = arith.constant 0 : i32
    %c0_i32_0 = arith.constant 0 : i32
    %c0_i32_1 = arith.constant 0 : i32
    return %c0_i32, %c0_i32_0 : i32, i32
  }
  func.func @transform_3(%arg0: i32) -> (i32, i32, i32) {
    %c0_i32 = arith.constant 0 : i32
    %c0_i32_0 = arith.constant 0 : i32
    %c0_i32_1 = arith.constant 0 : i32
    %c0_i32_2 = arith.constant 0 : i32
    return %c0_i32, %c0_i32_0, %c0_i32_1 : i32, i32, i32
  }
  func.func @transform_4(%arg0: i32) -> (i32, i32) {
    %c0_i32 = arith.constant 0 : i32
    %c0_i32_0 = arith.constant 0 : i32
    %c0_i32_1 = arith.constant 0 : i32
    return %c0_i32, %c0_i32_0 : i32, i32
  }
  func.func @transform_5(%arg0: i32) -> (i32, i32, i32, i32) {
    %c0_i32 = arith.constant 0 : i32
    %c0_i32_0 = arith.constant 0 : i32
    %c0_i32_1 = arith.constant 0 : i32
    %c0_i32_2 = arith.constant 0 : i32
    return %arg0, %c0_i32, %c0_i32_0, %c0_i32_1 : i32, i32, i32, i32
  }
}

</mosaic_0001>

<llo_original>
// kernel: tpu_custom_call.1
$region0: #{tpu_custom_call.1}
  #allocation0 [shape = 'u32[]', space=smem, size = 0x4, offset = 0x4, fixed_abs, tag = 'smem constant byte address 0x4 - core index']
  #allocation1 [shape = 'u32[144,128]{1,0:T(1,128)}', space=vmem, size = 0x12000, scoped, tag = 'internal scratch']
  #allocation2 [shape = 'f32[18,18,4]{2,1,0:T(8,128)}', space=vmem, size = 0x36000, scoped, tag = 'scratch operand']
  %s0 = inlined_call_operand.vmem [shape: f32[2,18,18,4], index: 0, kind: input, shape index: {}]
  %s1 = inlined_call_operand.vmem [shape: f32[9,4,4], index: 1, kind: input, shape index: {}]
  %s2 = inlined_call_operand.vmem [shape: f32[1,4], index: 2, kind: input, shape index: {}]
  %s3 = inlined_call_operand.vmem [shape: f32[9,4,4], index: 3, kind: input, shape index: {}]
  %s4 = inlined_call_operand.vmem [shape: f32[1,4], index: 4, kind: input, shape index: {}]
  %s5 = inlined_call_operand.vmem [shape: f32[2,16,16,4], index: 5, kind: output, shape index: {}]
  %s6 = sld [smem:[#allocation0]]
  $region53: #{tpu_custom_call.1} parent=0
    _
  %s8 = ssub.s32 1, %s6
  %s9 = scalar_select 0, %s8, %s6
  loop: start=0, step=1, limit=4
  $region2: #{tpu_custom_call.1} parent=0 // loop_pre_header
    _
  $region3: #{tpu_custom_call.1} parent=0 // loop_header
    %s11 = sphi 0, %s15
    %p12 = scmp.ge.s32.totalorder %s11, 4
    %s21 = sphi 0, %s23
    %s24 = sphi 0, %s21
    %s25 = sphi 0, %s24
    %s41 = sphi 0, %s25
    %s45 = sphi 0, %s45
    %s47 = sphi 0, %s45
    %s48 = sphi 0, %s47
    %s62 = sphi 0, %s48
    %s66 = sphi 0, %s66
    %s68 = sphi 0, %s66
    %s69 = sphi 0, %s68
    %s83 = sphi 0, %s69
    %s87 = sphi 0, %s87
    %s89 = sphi 0, %s87
    %s90 = sphi 0, %s89
    %s104 = sphi 0, %s90
    %s108 = sphi 0, %s108
    %s110 = sphi 0, %s108
    %s111 = sphi 0, %s110
    %s125 = sphi 0, %s111
    %s131 = sphi 0, %s133
    %s134 = sphi 0, %s131
    %s135 = sphi 0, %s134
    %s151 = sphi 0, %s135
  $region4: #{tpu_custom_call.1} parent=0 // loop_header_branch
    %14 = sbr.rel (%p12) target = $region8
  $region5: #{tpu_custom_call.1} parent=0 // loop_body
    %s16 = ssub.s32 %s11, 1
    %s17 = ssub.s32 %s11, 2
    %s18 = sadd.s32 %s11, 1
    %s19 = ssub.s32 %s11, %s18
    %p20 = scmp.eq.s32.totalorder %s19, 0
    %s22 = sadd.s32 %s21, 1
    %s23 = scalar_select %p20, %s21, %s22
    %p26 = pneg %p20
    %p27 = scmp.eq.s32.totalorder %s11, 1
    %p28 = por %p26, %p27
    %p29 = scmp.ne.s32.totalorder %s21, %s24
    %p30 = scmp.eq.s32.totalorder %s11, 0
    %p31 = por %p29, %p30
    %p32 = scmp.ne.s32.totalorder %s21, %s24
    %p33 = scmp.eq.s32.totalorder %s16, 1
    %p34 = por %p32, %p33
    %p35 = scmp.ne.s32.totalorder %s24, %s25
    %p36 = scmp.eq.s32.totalorder %s16, 0
    %p37 = por %p35, %p36
    %p38 = scmp.ne.s32.totalorder %s24, %s25
    %p39 = scmp.eq.s32.totalorder %s17, 1
    %p40 = por %p38, %p39
    %p42 = scmp.ne.s32.totalorder %s25, %s41
    %p43 = scmp.eq.s32.totalorder %s17, 0
    %p44 = por %p42, %p43
    %s46 = sadd.s32 %s45, 1
    %p49 = scmp.eq.s32.totalorder %s11, 1
    %p50 = scmp.ne.s32.totalorder %s45, %s47
    %p51 = scmp.eq.s32.totalorder %s11, 0
    %p52 = por %p50, %p51
    %p53 = scmp.ne.s32.totalorder %s45, %s47
    %p54 = scmp.eq.s32.totalorder %s16, 1
    %p55 = por %p53, %p54
    %p56 = scmp.ne.s32.totalorder %s47, %s48
    %p57 = scmp.eq.s32.totalorder %s16, 0
    %p58 = por %p56, %p57
    %p59 = scmp.ne.s32.totalorder %s47, %s48
    %p60 = scmp.eq.s32.totalorder %s17, 1
    %p61 = por %p59, %p60
    %p63 = scmp.ne.s32.totalorder %s48, %s62
    %p64 = scmp.eq.s32.totalorder %s17, 0
    %p65 = por %p63, %p64
    %s67 = sadd.s32 %s66, 1
    %p70 = scmp.eq.s32.totalorder %s11, 1
    %p71 = scmp.ne.s32.totalorder %s66, %s68
    %p72 = scmp.eq.s32.totalorder %s11, 0
    %p73 = por %p71, %p72
    %p74 = scmp.ne.s32.totalorder %s66, %s68
    %p75 = scmp.eq.s32.totalorder %s16, 1
    %p76 = por %p74, %p75
    %p77 = scmp.ne.s32.totalorder %s68, %s69
    %p78 = scmp.eq.s32.totalorder %s16, 0
    %p79 = por %p77, %p78
    %p80 = scmp.ne.s32.totalorder %s68, %s69
    %p81 = scmp.eq.s32.totalorder %s17, 1
    %p82 = por %p80, %p81
    %p84 = scmp.ne.s32.totalorder %s69, %s83
    %p85 = scmp.eq.s32.totalorder %s17, 0
    %p86 = por %p84, %p85
    %s88 = sadd.s32 %s87, 1
    %p91 = scmp.eq.s32.totalorder %s11, 1
    %p92 = scmp.ne.s32.totalorder %s87, %s89
    %p93 = scmp.eq.s32.totalorder %s11, 0
    %p94 = por %p92, %p93
    %p95 = scmp.ne.s32.totalorder %s87, %s89
    %p96 = scmp.eq.s32.totalorder %s16, 1
    %p97 = por %p95, %p96
    %p98 = scmp.ne.s32.totalorder %s89, %s90
    %p99 = scmp.eq.s32.totalorder %s16, 0
    %p100 = por %p98, %p99
    %p101 = scmp.ne.s32.totalorder %s89, %s90
    %p102 = scmp.eq.s32.totalorder %s17, 1
    %p103 = por %p101, %p102
    %p105 = scmp.ne.s32.totalorder %s90, %s104
    %p106 = scmp.eq.s32.totalorder %s17, 0
    %p107 = por %p105, %p106
    %s109 = sadd.s32 %s108, 1
    %p112 = scmp.eq.s32.totalorder %s11, 1
    %p113 = scmp.ne.s32.totalorder %s108, %s110
    %p114 = scmp.eq.s32.totalorder %s11, 0
    %p115 = por %p113, %p114
    %p116 = scmp.ne.s32.totalorder %s108, %s110
    %p117 = scmp.eq.s32.totalorder %s16, 1
    %p118 = por %p116, %p117
    %p119 = scmp.ne.s32.totalorder %s110, %s111
    %p120 = scmp.eq.s32.totalorder %s16, 0
    %p121 = por %p119, %p120
    %p122 = scmp.ne.s32.totalorder %s110, %s111
    %p123 = scmp.eq.s32.totalorder %s17, 1
    %p124 = por %p122, %p123
    %p126 = scmp.ne.s32.totalorder %s111, %s125
    %p127 = scmp.eq.s32.totalorder %s17, 0
    %p128 = por %p126, %p127
    %s129 = ssub.s32 %s11, %s18
    %p130 = scmp.eq.s32.totalorder %s129, 0
    %s132 = sadd.s32 %s131, 1
    %s133 = scalar_select %p130, %s131, %s132
    %p136 = pneg %p130
    %p137 = scmp.eq.s32.totalorder %s11, 1
    %p138 = por %p136, %p137
    %p139 = scmp.ne.s32.totalorder %s131, %s134
    %p140 = scmp.eq.s32.totalorder %s11, 0
    %p141 = por %p139, %p140
    %p142 = scmp.ne.s32.totalorder %s131, %s134
    %p143 = scmp.eq.s32.totalorder %s16, 1
    %p144 = por %p142, %p143
    %p145 = scmp.ne.s32.totalorder %s134, %s135
    %p146 = scmp.eq.s32.totalorder %s16, 0
    %p147 = por %p145, %p146
    %p148 = scmp.ne.s32.totalorder %s134, %s135
    %p149 = scmp.eq.s32.totalorder %s17, 1
    %p150 = por %p148, %p149
    %p152 = scmp.ne.s32.totalorder %s135, %s151
    %p153 = scmp.eq.s32.totalorder %s17, 0
    %p154 = por %p152, %p153
    %p155 = scmp.le.s32.totalorder 1, %s11
    %p156 = scmp.lt.s32.totalorder %s11, 3
    %p157 = pnand %p155, %p156
    %p158 = pneg %p157
    // Predicated region
    $region9: #{tpu_custom_call.1} parent=5 // pred_check
      _
    $region10: #{tpu_custom_call.1} parent=5 // pred_check_branch
      %160 = sbr.rel (%p157) target = $region12
    $region11: #{tpu_custom_call.1} parent=5 // pred_region
      %s161 = ssub.s32 %s11, 1
      // Predicated region
      $region13: #{tpu_custom_call.1} parent=11 // pred_check
        %p162 = pneg %p58
      $region14: #{tpu_custom_call.1} parent=11 // pred_check_branch
        %164 = sbr.rel (%p162) target = $region16
      $region15: #{tpu_custom_call.1} parent=11 // pred_region
        _
      $region16: #{tpu_custom_call.1} parent=11 // pred_fallthru
        _
      // Predicated region
      $region17: #{tpu_custom_call.1} parent=11 // pred_check
        %p165 = pneg %p79
      $region18: #{tpu_custom_call.1} parent=11 // pred_check_branch
        %167 = sbr.rel (%p165) target = $region20
      $region19: #{tpu_custom_call.1} parent=11 // pred_region
        _
      $region20: #{tpu_custom_call.1} parent=11 // pred_fallthru
        _
      // Predicated region
      $region21: #{tpu_custom_call.1} parent=11 // pred_check
        %p168 = pneg %p100
      $region22: #{tpu_custom_call.1} parent=11 // pred_check_branch
        %170 = sbr.rel (%p168) target = $region24
      $region23: #{tpu_custom_call.1} parent=11 // pred_region
        _
      $region24: #{tpu_custom_call.1} parent=11 // pred_fallthru
        _
      // Predicated region
      $region25: #{tpu_custom_call.1} parent=11 // pred_check
        %p171 = pneg %p121
      $region26: #{tpu_custom_call.1} parent=11 // pred_check_branch
        %173 = sbr.rel (%p171) target = $region28
      $region27: #{tpu_custom_call.1} parent=11 // pred_region
        _
      $region28: #{tpu_custom_call.1} parent=11 // pred_fallthru
        _
    $region12: #{tpu_custom_call.1} parent=5 // pred_fallthru
      _
    %p174 = scmp.lt.s32.totalorder %s11, 2
    // Predicated region
    $region29: #{tpu_custom_call.1} parent=5 // pred_check
      %p175 = pneg %p174
    $region30: #{tpu_custom_call.1} parent=5 // pred_check_branch
      %177 = sbr.rel (%p175) target = $region32
    $region31: #{tpu_custom_call.1} parent=5 // pred_region
      // Predicated region
      $region33: #{tpu_custom_call.1} parent=31 // pred_check
        %p178 = pneg %p31
      $region34: #{tpu_custom_call.1} parent=31 // pred_check_branch
        %180 = sbr.rel (%p178) target = $region36
      $region35: #{tpu_custom_call.1} parent=31 // pred_region
        %p181 = scmp.lt.s32.totalorder %s11, 1
        %s182 = scalar_select %p181, %s11, 1
        %s183 = smul.addr %s182, 54
        %s184 = smul.addr %s183, 8
        %s185 = scalar_lea.vmem %s0, %s184
      $region36: #{tpu_custom_call.1} parent=31 // pred_fallthru
        _
    $region32: #{tpu_custom_call.1} parent=5 // pred_fallthru
      _
    %p186 = scmp.le.s32.totalorder 1, %s11
    %p187 = scmp.lt.s32.totalorder %s11, 3
    %p188 = pnand %p186, %p187
    %p189 = pneg %p188
    // Predicated region
    $region37: #{tpu_custom_call.1} parent=5 // pred_check
      _
    $region38: #{tpu_custom_call.1} parent=5 // pred_check_branch
      %191 = sbr.rel (%p188) target = $region40
    $region39: #{tpu_custom_call.1} parent=5 // pred_region
      %s192 = ssub.s32 %s11, 1
      %p193 = scmp.lt.s32.totalorder %s16, 1
      %s194 = scalar_select %p193, %s16, 1
      %s195 = smul.addr %s194, 54
      %s196 = smul.addr %s195, 8
      %s197 = scalar_lea.vmem %s0, %s196
      %p198 = pneg %p37
      %p199 = pneg %p34
      %p200 = pneg %p58
      %p201 = pneg %p55
      %p202 = pneg %p79
      %p203 = pneg %p76
      %p204 = pneg %p100
      %p205 = pneg %p97
      %p206 = pneg %p121
      %p207 = pneg %p118
      %p208 = pneg %p147
      %p209 = pneg %p144
      %p210 = scmp.lt.s32.totalorder %s16, 1
      %s211 = scalar_select %p210, %s16, 1
      %s212 = smul.addr %s211, 32
      %s213 = smul.addr %s212, 8
      %s214 = scalar_lea.vmem %s5, %s213
      %p215 = scmp.lt.s32.totalorder %s16, 1
      %s216 = scalar_select %p215, %s16, 1
      %s217 = smul.addr %s216, 54
      %s218 = smul.addr %s217, 8
      %s219 = scalar_lea.vmem %s0, %s218
      %p220 = scmp.lt.s32.totalorder %s16, 1
      %s221 = scalar_select %p220, %s16, 1
      %s222 = smul.addr %s221, 32
      %s223 = smul.addr %s222, 8
      %s224 = scalar_lea.vmem %s5, %s223
      %v225 = vld [vmem:[%s219] sm:$0xff]
      %v226 = vld [vmem:[%s219 + $0x8] sm:$0xff]
      %v227 = vld [vmem:[%s219 + $0x10] sm:$0x3]
      %v228 = vld [vmem:[%s219 + $0x18] sm:$0xff]
      %v229 = vld [vmem:[%s219 + $0x20] sm:$0xff]
      %v230 = vld [vmem:[%s219 + $0x28] sm:$0x3]
      %v231 = vld [vmem:[%s219 + $0x30] sm:$0xff]
      %v232 = vld [vmem:[%s219 + $0x38] sm:$0xff]
      %v233 = vld [vmem:[%s219 + $0x40] sm:$0x3]
      %v234 = vld [vmem:[%s219 + $0x48] sm:$0xff]
      %v235 = vld [vmem:[%s219 + $0x50] sm:$0xff]
      %v236 = vld [vmem:[%s219 + $0x58] sm:$0x3]
      %v237 = vld [vmem:[%s219 + $0x60] sm:$0xff]
      %v238 = vld [vmem:[%s219 + $0x68] sm:$0xff]
      %v239 = vld [vmem:[%s219 + $0x70] sm:$0x3]
      %v240 = vld [vmem:[%s219 + $0x78] sm:$0xff]
      %v241 = vld [vmem:[%s219 + $0x80] sm:$0xff]
      %v242 = vld [vmem:[%s219 + $0x88] sm:$0x3]
      %v243 = vld [vmem:[%s219 + $0x90] sm:$0xff]
      %v244 = vld [vmem:[%s219 + $0x98] sm:$0xff]
      %v245 = vld [vmem:[%s219 + $0xa0] sm:$0x3]
      %v246 = vld [vmem:[%s219 + $0xa8] sm:$0xff]
      %v247 = vld [vmem:[%s219 + $0xb0] sm:$0xff]
      %v248 = vld [vmem:[%s219 + $0xb8] sm:$0x3]
      %v249 = vld [vmem:[%s219 + $0xc0] sm:$0xff]
      %v250 = vld [vmem:[%s219 + $0xc8] sm:$0xff]
      %v251 = vld [vmem:[%s219 + $0xd0] sm:$0x3]
      %v252 = vld [vmem:[%s219 + $0xd8] sm:$0xff]
      %v253 = vld [vmem:[%s219 + $0xe0] sm:$0xff]
      %v254 = vld [vmem:[%s219 + $0xe8] sm:$0x3]
      %v255 = vld [vmem:[%s219 + $0xf0] sm:$0xff]
      %v256 = vld [vmem:[%s219 + $0xf8] sm:$0xff]
      %v257 = vld [vmem:[%s219 + $0x100] sm:$0x3]
      %v258 = vld [vmem:[%s219 + $0x108] sm:$0xff]
      %v259 = vld [vmem:[%s219 + $0x110] sm:$0xff]
      %v260 = vld [vmem:[%s219 + $0x118] sm:$0x3]
      %v261 = vld [vmem:[%s219 + $0x120] sm:$0xff]
      %v262 = vld [vmem:[%s219 + $0x128] sm:$0xff]
      %v263 = vld [vmem:[%s219 + $0x130] sm:$0x3]
      %v264 = vld [vmem:[%s219 + $0x138] sm:$0xff]
      %v265 = vld [vmem:[%s219 + $0x140] sm:$0xff]
      %v266 = vld [vmem:[%s219 + $0x148] sm:$0x3]
      %v267 = vld [vmem:[%s219 + $0x150] sm:$0xff]
      %v268 = vld [vmem:[%s219 + $0x158] sm:$0xff]
      %v269 = vld [vmem:[%s219 + $0x160] sm:$0x3]
      %v270 = vld [vmem:[%s219 + $0x168] sm:$0xff]
      %v271 = vld [vmem:[%s219 + $0x170] sm:$0xff]
      %v272 = vld [vmem:[%s219 + $0x178] sm:$0x3]
      %v273 = vld [vmem:[%s219 + $0x180] sm:$0xff]
      %v274 = vld [vmem:[%s219 + $0x188] sm:$0xff]
      %v275 = vld [vmem:[%s219 + $0x190] sm:$0x3]
      %v276 = vld [vmem:[%s219 + $0x198] sm:$0xff]
      %v277 = vld [vmem:[%s219 + $0x1a0] sm:$0xff]
      %v278 = vld [vmem:[%s219 + $0x1a8] sm:$0x3]
      %v279 = vld [vmem:[%s2] sm:$0x1]
      %v281 = vlaneseq
      %v282 = vshrl.u32 %v281, 7
      %v283 = vsub.s32 0, %v282
      %v284 = vrot.slane %v279, %v283
      %v286 = vld [vmem:[%s1] sm:$0xf]
      %vm287 = vcmask 31744
      %v289 = vsel %vm287, %v225, 0
      %v292 = vsel %vm287, %v226, 0
      %v295 = vsel %vm287, %v228, 0
      %v298 = vsel %vm287, %v229, 0
      %v301 = vsel %vm287, %v231, 0
      %v304 = vsel %vm287, %v232, 0
      %v307 = vsel %vm287, %v234, 0
      %v310 = vsel %vm287, %v235, 0
      %v313 = vsel %vm287, %v237, 0
      %v316 = vsel %vm287, %v238, 0
      %v319 = vsel %vm287, %v240, 0
      %v322 = vsel %vm287, %v241, 0
      %v325 = vsel %vm287, %v243, 0
      %v328 = vsel %vm287, %v244, 0
      %v331 = vsel %vm287, %v246, 0
      %v334 = vsel %vm287, %v247, 0
      %v337 = vsel %vm287, %v249, 0
      %v340 = vsel %vm287, %v250, 0
      %v343 = vsel %vm287, %v252, 0
      %v346 = vsel %vm287, %v253, 0
      %v349 = vsel %vm287, %v255, 0
      %v352 = vsel %vm287, %v256, 0
      %v355 = vsel %vm287, %v258, 0
      %v358 = vsel %vm287, %v259, 0
      %v361 = vsel %vm287, %v261, 0
      %v364 = vsel %vm287, %v262, 0
      %v367 = vsel %vm287, %v264, 0
      %v370 = vsel %vm287, %v265, 0
      %v373 = vsel %vm287, %v267, 0
      %v376 = vsel %vm287, %v268, 0
      %v379 = vsel %vm287, %v270, 0
      %v382 = vsel %vm287, %v271, 0
      %vm384 = vcmask 1043456
      %v386 = vsel %vm384, %v286, 0
      %388 = vmatprep.subr.mxu0 0.0
      %389 = vmatpush1.msra.mxu0 %v386
      %390 = vmatprep.subr.mxu0 0.0
      %391 = vmatpush1.msra.mxu0 0.0
      %392 = vmatprep.subr.mxu0 0.0
      %393 = vmatpush1.msra.mxu0 0.0
      %394 = vmatprep.subr.mxu0 0.0
      %395 = vmatpush1.msra.mxu0 0.0
      %396 = vmatprep.subr.mxu0 0.0
      %397 = vmatpush1.msra.mxu0 0.0
      %398 = vmatprep.subr.mxu0 0.0
      %399 = vmatpush1.msra.mxu0 0.0
      %400 = vmatprep.subr.mxu0 0.0
      %401 = vmatpush1.msra.mxu0 0.0
      %402 = vmatprep.subr.mxu0 0.0
      %403 = vmatpush1.msra.mxu0 0.0
      %404 = vmatprep.subr.mxu0 0.0
      %405 = vmatpush1.msra.mxu0 0.0
      %406 = vmatprep.subr.mxu0 0.0
      %407 = vmatpush1.msra.mxu0 0.0
      %408 = vmatprep.subr.mxu0 0.0
      %409 = vmatpush1.msra.mxu0 0.0
      %410 = vmatprep.subr.mxu0 0.0
      %411 = vmatpush1.msra.mxu0 0.0
      %412 = vmatprep.subr.mxu0 0.0
      %413 = vmatpush1.msra.mxu0 0.0
      %414 = vmatprep.subr.mxu0 0.0
      %415 = vmatpush1.msra.mxu0 0.0
      %416 = vmatprep.subr.mxu0 0.0
      %417 = vmatpush1.msra.mxu0 0.0
      %418 = vmatprep.subr.mxu0 0.0
      %419 = vmatpush1.msra.mxu0 0.0
      %420 = vmatprep.subr.mxu0 0.0
      %421 = vmatpush1.msra.mxu0 0.0
      %422 = vmatprep.subr.mxu0 0.0
      %423 = vmatpush1.msra.mxu0 0.0
      %424 = vmatprep.subr.mxu0 0.0
      %425 = vmatpush1.msra.mxu0 0.0
      %426 = vmatprep.subr.mxu0 0.0
      %427 = vmatpush1.msra.mxu0 0.0
      %428 = vmatprep.subr.mxu0 0.0
      %429 = vmatpush1.msra.mxu0 0.0
      %430 = vmatprep.subr.mxu0 0.0
      %431 = vmatpush1.msra.mxu0 0.0
      %432 = vmatprep.subr.mxu0 0.0
      %433 = vmatpush1.msra.mxu0 0.0
      %434 = vmatprep.subr.mxu0 0.0
      %435 = vmatpush1.msra.mxu0 0.0
      %436 = vmatprep.subr.mxu0 0.0
      %437 = vmatpush1.msra.mxu0 0.0
      %438 = vmatprep.subr.mxu0 0.0
      %439 = vmatpush1.msra.mxu0 0.0
      %440 = vmatprep.subr.mxu0 0.0
      %441 = vmatpush1.msra.mxu0 0.0
      %442 = vmatprep.subr.mxu0 0.0
      %443 = vmatpush1.msra.mxu0 0.0
      %444 = vmatprep.subr.mxu0 0.0
      %445 = vmatpush1.msra.mxu0 0.0
      %446 = vmatprep.subr.mxu0 0.0
      %447 = vmatpush1.msra.mxu0 0.0
      %448 = vmatprep.subr.mxu0 0.0
      %449 = vmatpush1.msra.mxu0 0.0
      %450 = vmatprep.subr.mxu0 0.0
      %451 = vmatpush1.msra.mxu0 0.0
      %452 = vmatprep.mubr.f32.mxu0 0.0
      %453 = vmatmul.mubr.f32.gmra.mrb[0].mxu0 %v289
      %v454 = vpop.f32.mrb[0].mxu0
      %v455 = vadd.f32 0.0, %v454
      %v456 = vpop.f32.mrb[0].mxu0
      %457 = vmatprep.mubr.f32.mxu0 0.0
      %458 = vmatmul.mubr.f32.gmra.mrb[0].mxu0 %v292
      %v459 = vpop.f32.mrb[0].mxu0
      %v460 = vadd.f32 0.0, %v459
      %v461 = vpop.f32.mrb[0].mxu0
      %462 = vmatprep.mubr.f32.mxu0 0.0
      %463 = vmatmul.mubr.f32.gmra.mrb[0].mxu0 %v295
      %v464 = vpop.f32.mrb[0].mxu0
      %v465 = vadd.f32 0.0, %v464
      %v466 = vpop.f32.mrb[0].mxu0
      %467 = vmatprep.mubr.f32.mxu0 0.0
      %468 = vmatmul.mubr.f32.gmra.mrb[0].mxu0 %v298
      %v469 = vpop.f32.mrb[0].mxu0
      %v470 = vadd.f32 0.0, %v469
      %v471 = vpop.f32.mrb[0].mxu0
      %472 = vmatprep.mubr.f32.mxu0 0.0
      %473 = vmatmul.mubr.f32.gmra.mrb[0].mxu0 %v301
      %v474 = vpop.f32.mrb[0].mxu0
      %v475 = vadd.f32 0.0, %v474
      %v476 = vpop.f32.mrb[0].mxu0
      %477 = vmatprep.mubr.f32.mxu0 0.0
      %478 = vmatmul.mubr.f32.gmra.mrb[0].mxu0 %v304
      %v479 = vpop.f32.mrb[0].mxu0
      %v480 = vadd.f32 0.0, %v479
      %v481 = vpop.f32.mrb[0].mxu0
      %482 = vmatprep.mubr.f32.mxu0 0.0
      %483 = vmatmul.mubr.f32.gmra.mrb[0].mxu0 %v307
      %v484 = vpop.f32.mrb[0].mxu0
      %v485 = vadd.f32 0.0, %v484
      %v486 = vpop.f32.mrb[0].mxu0
      %487 = vmatprep.mubr.f32.mxu0 0.0
      %488 = vmatmul.mubr.f32.gmra.mrb[0].mxu0 %v310
      %v489 = vpop.f32.mrb[0].mxu0
      %v490 = vadd.f32 0.0, %v489
      %v491 = vpop.f32.mrb[0].mxu0
      %492 = vmatprep.mubr.f32.mxu0 0.0
      %493 = vmatmul.mubr.f32.gmra.mrb[0].mxu0 %v313
      %v494 = vpop.f32.mrb[0].mxu0
      %v495 = vadd.f32 0.0, %v494
      %v496 = vpop.f32.mrb[0].mxu0
      %497 = vmatprep.mubr.f32.mxu0 0.0
      %498 = vmatmul.mubr.f32.gmra.mrb[0].mxu0 %v316
      %v499 = vpop.f32.mrb[0].mxu0
      %v500 = vadd.f32 0.0, %v499
      %v501 = vpop.f32.mrb[0].mxu0
      %502 = vmatprep.mubr.f32.mxu0 0.0
      %503 = vmatmul.mubr.f32.gmra.mrb[0].mxu0 %v319
      %v504 = vpop.f32.mrb[0].mxu0
      %v505 = vadd.f32 0.0, %v504
      %v506 = vpop.f32.mrb[0].mxu0
      %507 = vmatprep.mubr.f32.mxu0 0.0
      %508 = vmatmul.mubr.f32.gmra.mrb[0].mxu0 %v322
      %v509 = vpop.f32.mrb[0].mxu0
      %v510 = vadd.f32 0.0, %v509
      %v511 = vpop.f32.mrb[0].mxu0
      %512 = vmatprep.mubr.f32.mxu0 0.0
      %513 = vmatmul.mubr.f32.gmra.mrb[0].mxu0 %v325
      %v514 = vpop.f32.mrb[0].mxu0
      %v515 = vadd.f32 0.0, %v514
      %v516 = vpop.f32.mrb[0].mxu0
      %517 = vmatprep.mubr.f32.mxu0 0.0
      %518 = vmatmul.mubr.f32.gmra.mrb[0].mxu0 %v328
      %v519 = vpop.f32.mrb[0].mxu0
      %v520 = vadd.f32 0.0, %v519
      %v521 = vpop.f32.mrb[0].mxu0
      %522 = vmatprep.mubr.f32.mxu0 0.0
      %523 = vmatmul.mubr.f32.gmra.mrb[0].mxu0 %v331
      %v524 = vpop.f32.mrb[0].mxu0
      %v525 = vadd.f32 0.0, %v524
      %v526 = vpop.f32.mrb[0].mxu0
      %527 = vmatprep.mubr.f32.mxu0 0.0
      %528 = vmatmul.mubr.f32.gmra.mrb[0].mxu0 %v334
      %v529 = vpop.f32.mrb[0].mxu0
      %v530 = vadd.f32 0.0, %v529
      %v531 = vpop.f32.mrb[0].mxu0
      %532 = vmatprep.mubr.f32.mxu0 0.0
      %533 = vmatmul.mubr.f32.gmra.mrb[0].mxu0 %v337
      %v534 = vpop.f32.mrb[0].mxu0
      %v535 = vadd.f32 0.0, %v534
      %v536 = vpop.f32.mrb[0].mxu0
      %537 = vmatprep.mubr.f32.mxu0 0.0
      %538 = vmatmul.mubr.f32.gmra.mrb[0].mxu0 %v340
      %v539 = vpop.f32.mrb[0].mxu0
      %v540 = vadd.f32 0.0, %v539
      %v541 = vpop.f32.mrb[0].mxu0
      %542 = vmatprep.mubr.f32.mxu0 0.0
      %543 = vmatmul.mubr.f32.gmra.mrb[0].mxu0 %v343
      %v544 = vpop.f32.mrb[0].mxu0
      %v545 = vadd.f32 0.0, %v544
      %v546 = vpop.f32.mrb[0].mxu0
      %547 = vmatprep.mubr.f32.mxu0 0.0
      %548 = vmatmul.mubr.f32.gmra.mrb[0].mxu0 %v346
      %v549 = vpop.f32.mrb[0].mxu0
      %v550 = vadd.f32 0.0, %v549
      %v551 = vpop.f32.mrb[0].mxu0
      %552 = vmatprep.mubr.f32.mxu0 0.0
      %553 = vmatmul.mubr.f32.gmra.mrb[0].mxu0 %v349
      %v554 = vpop.f32.mrb[0].mxu0
      %v555 = vadd.f32 0.0, %v554
      %v556 = vpop.f32.mrb[0].mxu0
      %557 = vmatprep.mubr.f32.mxu0 0.0
      %558 = vmatmul.mubr.f32.gmra.mrb[0].mxu0 %v352
      %v559 = vpop.f32.mrb[0].mxu0
      %v560 = vadd.f32 0.0, %v559
      %v561 = vpop.f32.mrb[0].mxu0
      %562 = vmatprep.mubr.f32.mxu0 0.0
      %563 = vmatmul.mubr.f32.gmra.mrb[0].mxu0 %v355
      %v564 = vpop.f32.mrb[0].mxu0
      %v565 = vadd.f32 0.0, %v564
      %v566 = vpop.f32.mrb[0].mxu0
      %567 = vmatprep.mubr.f32.mxu0 0.0
      %568 = vmatmul.mubr.f32.gmra.mrb[0].mxu0 %v358
      %v569 = vpop.f32.mrb[0].mxu0
      %v570 = vadd.f32 0.0, %v569
      %v571 = vpop.f32.mrb[0].mxu0
      %572 = vmatprep.mubr.f32.mxu0 0.0
      %573 = vmatmul.mubr.f32.gmra.mrb[0].mxu0 %v361
      %v574 = vpop.f32.mrb[0].mxu0
      %v575 = vadd.f32 0.0, %v574
      %v576 = vpop.f32.mrb[0].mxu0
      %577 = vmatprep.mubr.f32.mxu0 0.0
      %578 = vmatmul.mubr.f32.gmra.mrb[0].mxu0 %v364
      %v579 = vpop.f32.mrb[0].mxu0
      %v580 = vadd.f32 0.0, %v579
      %v581 = vpop.f32.mrb[0].mxu0
      %582 = vmatprep.mubr.f32.mxu0 0.0
      %583 = vmatmul.mubr.f32.gmra.mrb[0].mxu0 %v367
      %v584 = vpop.f32.mrb[0].mxu0
      %v585 = vadd.f32 0.0, %v584
      %v586 = vpop.f32.mrb[0].mxu0
      %587 = vmatprep.mubr.f32.mxu0 0.0
      %588 = vmatmul.mubr.f32.gmra.mrb[0].mxu0 %v370
      %v589 = vpop.f32.mrb[0].mxu0
      %v590 = vadd.f32 0.0, %v589
      %v591 = vpop.f32.mrb[0].mxu0
      %592 = vmatprep.mubr.f32.mxu0 0.0
      %593 = vmatmul.mubr.f32.gmra.mrb[0].mxu0 %v373
      %v594 = vpop.f32.mrb[0].mxu0
      %v595 = vadd.f32 0.0, %v594
      %v596 = vpop.f32.mrb[0].mxu0
      %597 = vmatprep.mubr.f32.mxu0 0.0
      %598 = vmatmul.mubr.f32.gmra.mrb[0].mxu0 %v376
      %v599 = vpop.f32.mrb[0].mxu0
      %v600 = vadd.f32 0.0, %v599
      %v601 = vpop.f32.mrb[0].mxu0
      %602 = vmatprep.mubr.f32.mxu0 0.0
      %603 = vmatmul.mubr.f32.gmra.mrb[0].mxu0 %v379
      %v604 = vpop.f32.mrb[0].mxu0
      %v605 = vadd.f32 0.0, %v604
      %v606 = vpop.f32.mrb[0].mxu0
      %607 = vmatprep.mubr.f32.mxu0 0.0
      %608 = vmatmul.mubr.f32.gmra.mrb[0].mxu0 %v382
      %v609 = vpop.f32.mrb[0].mxu0
      %v610 = vadd.f32 0.0, %v609
      %v611 = vpop.f32.mrb[0].mxu0
      %612 = vdwg.mxu0
      %v613 = vadd.f32 %v284, %v455
      %v614 = vadd.f32 %v284, %v460
      %v615 = vadd.f32 %v284, %v465
      %v616 = vadd.f32 %v284, %v470
      %v617 = vadd.f32 %v284, %v475
      %v618 = vadd.f32 %v284, %v480
      %v619 = vadd.f32 %v284, %v485
      %v620 = vadd.f32 %v284, %v490
      %v621 = vadd.f32 %v284, %v495
      %v622 = vadd.f32 %v284, %v500
      %v623 = vadd.f32 %v284, %v505
      %v624 = vadd.f32 %v284, %v510
      %v625 = vadd.f32 %v284, %v515
      %v626 = vadd.f32 %v284, %v520
      %v627 = vadd.f32 %v284, %v525
      %v628 = vadd.f32 %v284, %v530
      %v629 = vadd.f32 %v284, %v535
      %v630 = vadd.f32 %v284, %v540
      %v631 = vadd.f32 %v284, %v545
      %v632 = vadd.f32 %v284, %v550
      %v633 = vadd.f32 %v284, %v555
      %v634 = vadd.f32 %v284, %v560
      %v635 = vadd.f32 %v284, %v565
      %v636 = vadd.f32 %v284, %v570
      %v637 = vadd.f32 %v284, %v575
      %v638 = vadd.f32 %v284, %v580
      %v639 = vadd.f32 %v284, %v585
      %v640 = vadd.f32 %v284, %v590
      %v641 = vadd.f32 %v284, %v595
      %v642 = vadd.f32 %v284, %v600
      %v643 = vadd.f32 %v284, %v605
      %v644 = vadd.f32 %v284, %v610
      %vm661 = vcmask 1046528
      %v662 = vrot.slane %v225, 1
      %v663 = vrot.slane %v226, 1
      %v664 = vsel %vm661, %v662, %v663
      %v665 = vrot.slane %v227, 1
      %v666 = vsel %vm661, %v663, %v665
      %v667 = vrot.slane %v228, 1
      %v668 = vrot.slane %v229, 1
      %v669 = vsel %vm661, %v667, %v668
      %v670 = vrot.slane %v230, 1
      %v671 = vsel %vm661, %v668, %v670
      %v672 = vrot.slane %v231, 1
      %v673 = vrot.slane %v232, 1
      %v674 = vsel %vm661, %v672, %v673
      %v675 = vrot.slane %v233, 1
      %v676 = vsel %vm661, %v673, %v675
      %v677 = vrot.slane %v234, 1
      %v678 = vrot.slane %v235, 1
      %v679 = vsel %vm661, %v677, %v678
      %v680 = vrot.slane %v236, 1
      %v681 = vsel %vm661, %v678, %v680
      %v682 = vrot.slane %v237, 1
      %v683 = vrot.slane %v238, 1
      %v684 = vsel %vm661, %v682, %v683
      %v685 = vrot.slane %v239, 1
      %v686 = vsel %vm661, %v683, %v685
      %v687 = vrot.slane %v240, 1
      %v688 = vrot.slane %v241, 1
      %v689 = vsel %vm661, %v687, %v688
      %v690 = vrot.slane %v242, 1
      %v691 = vsel %vm661, %v688, %v690
      %v692 = vrot.slane %v243, 1
      %v693 = vrot.slane %v244, 1
      %v694 = vsel %vm661, %v692, %v693
      %v695 = vrot.slane %v245, 1
      %v696 = vsel %vm661, %v693, %v695
      %v697 = vrot.slane %v246, 1
      %v698 = vrot.slane %v247, 1
      %v699 = vsel %vm661, %v697, %v698
      %v700 = vrot.slane %v248, 1
      %v701 = vsel %vm661, %v698, %v700
      %v702 = vrot.slane %v249, 1
      %v703 = vrot.slane %v250, 1
      %v704 = vsel %vm661, %v702, %v703
      %v705 = vrot.slane %v251, 1
      %v706 = vsel %vm661, %v703, %v705
      %v707 = vrot.slane %v252, 1
      %v708 = vrot.slane %v253, 1
      %v709 = vsel %vm661, %v707, %v708
      %v710 = vrot.slane %v254, 1
      %v711 = vsel %vm661, %v708, %v710
      %v712 = vrot.slane %v255, 1
      %v713 = vrot.slane %v256, 1
      %v714 = vsel %vm661, %v712, %v713
      %v715 = vrot.slane %v257, 1
      %v716 = vsel %vm661, %v713, %v715
      %v717 = vrot.slane %v258, 1
      %v718 = vrot.slane %v259, 1
      %v719 = vsel %vm661, %v717, %v718
      %v720 = vrot.slane %v260, 1
      %v721 = vsel %vm661, %v718, %v720
      %v722 = vrot.slane %v261, 1
      %v723 = vrot.slane %v262, 1
      %v724 = vsel %vm661, %v722, %v723
      %v725 = vrot.slane %v263, 1
      %v726 = vsel %vm661, %v723, %v725
      %v727 = vrot.slane %v264, 1
      %v728 = vrot.slane %v265, 1
      %v729 = vsel %vm661, %v727, %v728
      %v730 = vrot.slane %v266, 1
      %v731 = vsel %vm661, %v728, %v730
      %v732 = vrot.slane %v267, 1
      %v733 = vrot.slane %v268, 1
      %v734 = vsel %vm661, %v732, %v733
      %v735 = vrot.slane %v269, 1
      %v736 = vsel %vm661, %v733, %v735
      %v737 = vrot.slane %v270, 1
      %v738 = vrot.slane %v271, 1
      %v739 = vsel %vm661, %v737, %v738
      %v740 = vrot.slane %v272, 1
      %v741 = vsel %vm661, %v738, %v740
      %s742 = scalar_lea.vmem %s1, 4
      %v743 = vld [vmem:[%s742] sm:$0xf]
      %v744 = vsel %vm287, %v664, 0
      %v746 = vsel %vm287, %v666, 0
      %v748 = vsel %vm287, %v669, 0
      %v750 = vsel %vm287, %v671, 0
      %v752 = vsel %vm287, %v674, 0
      %v754 = vsel %vm287, %v676, 0
      %v756 = vsel %vm287, %v679, 0
      %v758 = vsel %vm287, %v681, 0
      %v760 = vsel %vm287, %v684, 0
      %v762 = vsel %vm287, %v686, 0
      %v764 = vsel %vm287, %v689, 0
      %v766 = vsel %vm287, %v691, 0
      %v768 = vsel %vm287, %v694, 0
      %v770 = vsel %vm287, %v696, 0
      %v772 = vsel %vm287, %v699, 0
      %v774 = vsel %vm287, %v701, 0
      %v776 = vsel %vm287, %v704, 0
      %v778 = vsel %vm287, %v706, 0
      %v780 = vsel %vm287, %v709, 0
      %v782 = vsel %vm287, %v711, 0
      %v784 = vsel %vm287, %v714, 0
      %v786 = vsel %vm287, %v716, 0
      %v788 = vsel %vm287, %v719, 0
      %v790 = vsel %vm287, %v721, 0
      %v792 = vsel %vm287, %v724, 0
      %v794 = vsel %vm287, %v726, 0
      %v796 = vsel %vm287, %v729, 0
      %v798 = vsel %vm287, %v731, 0
      %v800 = vsel %vm287, %v734, 0
      %v802 = vsel %vm287, %v736, 0
      %v804 = vsel %vm287, %v739, 0
      %v806 = vsel %vm287, %v741, 0
      %v809 = vsel %vm384, %v743, 0
      %811 = vmatprep.subr.mxu0 0.0
      %812 = vmatpush1.msra.mxu0 %v809
      %813 = vmatprep.subr.mxu0 0.0
      %814 = vmatpush1.msra.mxu0 0.0
      %815 = vmatprep.subr.mxu0 0.0
      %816 = vmatpush1.msra.mxu0 0.0
      %817 = vmatprep.subr.mxu0 0.0
      %818 = vmatpush1.msra.mxu0 0.0
      %819 = vmatprep.subr.mxu0 0.0
      %820 = vmatpush1.msra.mxu0 0.0
      %821 = vmatprep.subr.mxu0 0.0
      %822 = vmatpush1.msra.mxu0 0.0
      %823 = vmatprep.subr.mxu0 0.0
      %824 = vmatpush1.msra.mxu0 0.0
      %825 = vmatprep.subr.mxu0 0.0
      %826 = vmatpush1.msra.mxu0 0.0
      %827 = vmatprep.subr.mxu0 0.0
      %828 = vmatpush1.msra.mxu0 0.0
      %829 = vmatprep.subr.mxu0 0.0
      %830 = vmatpush1.msra.mxu0 0.0
      %831 = vmatprep.subr.mxu0 0.0
      %832 = vmatpush1.msra.mxu0 0.0
      %833 = vmatprep.subr.mxu0 0.0
      %834 = vmatpush1.msra.mxu0 0.0
      %835 = vmatprep.subr.mxu0 0.0
      %836 = vmatpush1.msra.mxu0 0.0
      %837 = vmatprep.subr.mxu0 0.0
      %838 = vmatpush1.msra.mxu0 0.0
      %839 = vmatprep.subr.mxu0 0.0
      %840 = vmatpush1.msra.mxu0 0.0
      %841 = vmatprep.subr.mxu0 0.0
      %842 = vmatpush1.msra.mxu0 0.0
      %843 = vmatprep.subr.mxu0 0.0
      %844 = vmatpush1.msra.mxu0 0.0
      %845 = vmatprep.subr.mxu0 0.0
      %846 = vmatpush1.msra.mxu0 0.0
      %847 = vmatprep.subr.mxu0 0.0
      %848 = vmatpush1.msra.mxu0 0.0
      %849 = vmatprep.subr.mxu0 0.0
      %850 = vmatpush1.msra.mxu0 0.0
      %851 = vmatprep.subr.mxu0 0.0
      %852 = vmatpush1.msra.mxu0 0.0
      %853 = vmatprep.subr.mxu0 0.0
      %854 = vmatpush1.msra.mxu0 0.0
      %855 = vmatprep.subr.mxu0 0.0
      %856 = vmatpush1.msra.mxu0 0.0
      %857 = vmatprep.subr.mxu0 0.0
      %858 = vmatpush1.msra.mxu0 0.0
      %859 = vmatprep.subr.mxu0 0.0
      %860 = vmatpush1.msra.mxu0 0.0
      %861 = vmatprep.subr.mxu0 0.0
      %862 = vmatpush1.msra.mxu0 0.0
      %863 = vmatprep.subr.mxu0 0.0
      %864 = vmatpush1.msra.mxu0 0.0
      %865 = vmatprep.subr.mxu0 0.0
      %866 = vmatpush1.msra.mxu0 0.0
      %867 = vmatprep.subr.mxu0 0.0
      %868 = vmatpush1.msra.mxu0 0.0
      %869 = vmatprep.subr.mxu0 0.0
      %870 = vmatpush1.msra.mxu0 0.0
      %871 = vmatprep.subr.mxu0 0.0
      %872 = vmatpush1.msra.mxu0 0.0
      %873 = vmatprep.subr.mxu0 0.0
      %874 = vmatpush1.msra.mxu0 0.0
      %875 = vmatprep.mubr.f32.mxu0 0.0
      %876 = vmatmul.mubr.f32.gmra.mrb[0].mxu0 %v744
      %v877 = vpop.f32.mrb[0].mxu0
      %v878 = vadd.f32 0.0, %v877
      %v879 = vpop.f32.mrb[0].mxu0
      %880 = vmatprep.mubr.f32.mxu0 0.0
      %881 = vmatmul.mubr.f32.gmra.mrb[0].mxu0 %v746
      %v882 = vpop.f32.mrb[0].mxu0
      %v883 = vadd.f32 0.0, %v882
      %v884 = vpop.f32.mrb[0].mxu0
      %885 = vmatprep.mubr.f32.mxu0 0.0
      %886 = vmatmul.mubr.f32.gmra.mrb[0].mxu0 %v748
      %v887 = vpop.f32.mrb[0].mxu0
      %v888 = vadd.f32 0.0, %v887
      %v889 = vpop.f32.mrb[0].mxu0
      %890 = vmatprep.mubr.f32.mxu0 0.0
      %891 = vmatmul.mubr.f32.gmra.mrb[0].mxu0 %v750
      %v892 = vpop.f32.mrb[0].mxu0
      %v893 = vadd.f32 0.0, %v892
      %v894 = vpop.f32.mrb[0].mxu0
      %895 = vmatprep.mubr.f32.mxu0 0.0
      %896 = vmatmul.mubr.f32.gmra.mrb[0].mxu0 %v752
      %v897 = vpop.f32.mrb[0].mxu0
      %v898 = vadd.f32 0.0, %v897
      %v899 = vpop.f32.mrb[0].mxu0
      %900 = vmatprep.mubr.f32.mxu0 0.0
      %901 = vmatmul.mubr.f32.gmra.mrb[0].mxu0 %v754
      %v902 = vpop.f32.mrb[0].mxu0
      %v903 = vadd.f32 0.0, %v902
      %v904 = vpop.f32.mrb[0].mxu0
      %905 = vmatprep.mubr.f32.mxu0 0.0
      %906 = vmatmul.mubr.f32.gmra.mrb[0].mxu0 %v756
      %v907 = vpop.f32.mrb[0].mxu0
      %v908 = vadd.f32 0.0, %v907
      %v909 = vpop.f32.mrb[0].mxu0
      %910 = vmatprep.mubr.f32.mxu0 0.0
      %911 = vmatmul.mubr.f32.gmra.mrb[0].mxu0 %v758
      %v912 = vpop.f32.mrb[0].mxu0
      %v913 = vadd.f32 0.0, %v912
      %v914 = vpop.f32.mrb[0].mxu0
      %915 = vmatprep.mubr.f32.mxu0 0.0
      %916 = vmatmul.mubr.f32.gmra.mrb[0].mxu0 %v760
      %v917 = vpop.f32.mrb[0].mxu0
      %v918 = vadd.f32 0.0, %v917
      %v919 = vpop.f32.mrb[0].mxu0
      %920 = vmatprep.mubr.f32.mxu0 0.0
      %921 = vmatmul.mubr.f32.gmra.mrb[0].mxu0 %v762
      %v922 = vpop.f32.mrb[0].mxu0
      %v923 = vadd.f32 0.0, %v922
      %v924 = vpop.f32.mrb[0].mxu0
      %925 = vmatprep.mubr.f32.mxu0 0.0
      %926 = vmatmul.mubr.f32.gmra.mrb[0].mxu0 %v764
      %v927 = vpop.f32.mrb[0].mxu0
      %v928 = vadd.f32 0.0, %v927
      %v929 = vpop.f32.mrb[0].mxu0
      %930 = vmatprep.mubr.f32.mxu0 0.0
      %931 = vmatmul.mubr.f32.gmra.mrb[0].mxu0 %v766
      %v932 = vpop.f32.mrb[0].mxu0
      %v933 = vadd.f32 0.0, %v932
      %v934 = vpop.f32.mrb[0].mxu0
      %935 = vmatprep.mubr.f32.mxu0 0.0
      %936 = vmatmul.mubr.f32.gmra.mrb[0].mxu0 %v768
      %v937 = vpop.f32.mrb[0].mxu0
      %v938 = vadd.f32 0.0, %v937
      %v939 = vpop.f32.mrb[0].mxu0
      %940 = vmatprep.mubr.f32.mxu0 0.0
      %941 = vmatmul.mubr.f32.gmra.mrb[0].mxu0 %v770
      %v942 = vpop.f32.mrb[0].mxu0
      %v943 = vadd.f32 0.0, %v942
      %v944 = vpop.f32.mrb[0].mxu0
      %945 = vmatprep.mubr.f32.mxu0 0.0
      %946 = vmatmul.mubr.f32.gmra.mrb[0].mxu0 %v772
      %v947 = vpop.f32.mrb[0].mxu0
      %v948 = vadd.f32 0.0, %v947
      %v949 = vpop.f32.mrb[0].mxu0
      %950 = vmatprep.mubr.f32.mxu0 0.0
      %951 = vmatmul.mubr.f32.gmra.mrb[0].mxu0 %v774
      %v952 = vpop.f32.mrb[0].mxu0
      %v953 = vadd.f32 0.0, %v952
      %v954 = vpop.f32.mrb[0].mxu0
      %955 = vmatprep.mubr.f32.mxu0 0.0
      %956 = vmatmul.mubr.f32.gmra.mrb[0].mxu0 %v776
      %v957 = vpop.f32.mrb[0].mxu0
      %v958 = vadd.f32 0.0, %v957
      %v959 = vpop.f32.mrb[0].mxu0
      %960 = vmatprep.mubr.f32.mxu0 0.0
      %961 = vmatmul.mubr.f32.gmra.mrb[0].mxu0 %v778
      %v962 = vpop.f32.mrb[0].mxu0
      %v963 = vadd.f32 0.0, %v962
      %v964 = vpop.f32.mrb[0].mxu0
      %965 = vmatprep.mubr.f32.mxu0 0.0
      %966 = vmatmul.mubr.f32.gmra.mrb[0].mxu0 %v780
      %v967 = vpop.f32.mrb[0].mxu0
      %v968 = vadd.f32 0.0, %v967
      %v969 = vpop.f32.mrb[0].mxu0
      %970 = vmatprep.mubr.f32.mxu0 0.0
      %971 = vmatmul.mubr.f32.gmra.mrb[0].mxu0 %v782
      %v972 = vpop.f32.mrb[0].mxu0
      %v973 = vadd.f32 0.0, %v972
      %v974 = vpop.f32.mrb[0].mxu0
      %975 = vmatprep.mubr.f32.mxu0 0.0
      %976 = vmatmul.mubr.f32.gmra.mrb[0].mxu0 %v784
      %v977 = vpop.f32.mrb[0].mxu0
      %v978 = vadd.f32 0.0, %v977
      %v979 = vpop.f32.mrb[0].mxu0
      %980 = vmatprep.mubr.f32.mxu0 0.0
      %981 = vmatmul.mubr.f32.gmra.mrb[0].mxu0 %v786
      %v982 = vpop.f32.mrb[0].mxu0
      %v983 = vadd.f32 0.0, %v982
      %v984 = vpop.f32.mrb[0].mxu0
      %985 = vmatprep.mubr.f32.mxu0 0.0
      %986 = vmatmul.mubr.f32.gmra.mrb[0].mxu0 %v788
      %v987 = vpop.f32.mrb[0].mxu0
      %v988 = vadd.f32 0.0, %v987
      %v989 = vpop.f32.mrb[0].mxu0
      %990 = vmatprep.mubr.f32.mxu0 0.0
      %991 = vmatmul.mubr.f32.gmra.mrb[0].mxu0 %v790
      %v992 = vpop.f32.mrb[0].mxu0
      %v993 = vadd.f32 0.0, %v992
      %v994 = vpop.f32.mrb[0].mxu0
      %995 = vmatprep.mubr.f32.mxu0 0.0
      %996 = vmatmul.mubr.f32.gmra.mrb[0].mxu0 %v792
      %v997 = vpop.f32.mrb[0].mxu0
      %v998 = vadd.f32 0.0, %v997
      %v999 = vpop.f32.mrb[0].mxu0
      %1000 = vmatprep.mubr.f32.mxu0 0.0
      %1001 = vmatmul.mubr.f32.gmra.mrb[0].mxu0 %v794
      %v1002 = vpop.f32.mrb[0].mxu0
      %v1003 = vadd.f32 0.0, %v1002
      %v1004 = vpop.f32.mrb[0].mxu0
      %1005 = vmatprep.mubr.f32.mxu0 0.0
      %1006 = vmatmul.mubr.f32.gmra.mrb[0].mxu0 %v796
      %v1007 = vpop.f32.mrb[0].mxu0
      %v1008 = vadd.f32 0.0, %v1007
      %v1009 = vpop.f32.mrb[0].mxu0
      %1010 = vmatprep.mubr.f32.mxu0 0.0
      %1011 = vmatmul.mubr.f32.gmra.mrb[0].mxu0 %v798
      %v1012 = vpop.f32.mrb[0].mxu0
      %v1013 = vadd.f32 0.0, %v1012
      %v1014 = vpop.f32.mrb[0].mxu0
      %1015 = vmatprep.mubr.f32.mxu0 0.0
      %1016 = vmatmul.mubr.f32.gmra.mrb[0].mxu0 %v800
      %v1017 = vpop.f32.mrb[0].mxu0
      %v1018 = vadd.f32 0.0, %v1017
      %v1019 = vpop.f32.mrb[0].mxu0
      %1020 = vmatprep.mubr.f32.mxu0 0.0
      %1021 = vmatmul.mubr.f32.gmra.mrb[0].mxu0 %v802
      %v1022 = vpop.f32.mrb[0].mxu0
      %v1023 = vadd.f32 0.0, %v1022
      %v1024 = vpop.f32.mrb[0].mxu0
      %1025 = vmatprep.mubr.f32.mxu0 0.0
      %1026 = vmatmul.mubr.f32.gmra.mrb[0].mxu0 %v804
      %v1027 = vpop.f32.mrb[0].mxu0
      %v1028 = vadd.f32 0.0, %v1027
      %v1029 = vpop.f32.mrb[0].mxu0
      %1030 = vmatprep.mubr.f32.mxu0 0.0
      %1031 = vmatmul.mubr.f32.gmra.mrb[0].mxu0 %v806
      %v1032 = vpop.f32.mrb[0].mxu0
      %v1033 = vadd.f32 0.0, %v1032
      %v1034 = vpop.f32.mrb[0].mxu0
      %1035 = vdwg.mxu0
      %v1036 = vadd.f32 %v613, %v878
      %v1037 = vadd.f32 %v614, %v883
      %v1038 = vadd.f32 %v615, %v888
      %v1039 = vadd.f32 %v616, %v893
      %v1040 = vadd.f32 %v617, %v898
      %v1041 = vadd.f32 %v618, %v903
      %v1042 = vadd.f32 %v619, %v908
      %v1043 = vadd.f32 %v620, %v913
      %v1044 = vadd.f32 %v621, %v918
      %v1045 = vadd.f32 %v622, %v923
      %v1046 = vadd.f32 %v623, %v928
      %v1047 = vadd.f32 %v624, %v933
      %v1048 = vadd.f32 %v625, %v938
      %v1049 = vadd.f32 %v626, %v943
      %v1050 = vadd.f32 %v627, %v948
      %v1051 = vadd.f32 %v628, %v953
      %v1052 = vadd.f32 %v629, %v958
      %v1053 = vadd.f32 %v630, %v963
      %v1054 = vadd.f32 %v631, %v968
      %v1055 = vadd.f32 %v632, %v973
      %v1056 = vadd.f32 %v633, %v978
      %v1057 = vadd.f32 %v634, %v983
      %v1058 = vadd.f32 %v635, %v988
      %v1059 = vadd.f32 %v636, %v993
      %v1060 = vadd.f32 %v637, %v998
      %v1061 = vadd.f32 %v638, %v1003
      %v1062 = vadd.f32 %v639, %v1008
      %v1063 = vadd.f32 %v640, %v1013
      %v1064 = vadd.f32 %v641, %v1018
      %v1065 = vadd.f32 %v642, %v1023
      %v1066 = vadd.f32 %v643, %v1028
      %v1067 = vadd.f32 %v644, %v1033
      %vm1068 = vcmask 1045504
      %v1069 = vrot.slane %v225, 2
      %v1070 = vrot.slane %v226, 2
      %v1071 = vsel %vm1068, %v1069, %v1070
      %v1072 = vrot.slane %v227, 2
      %v1073 = vsel %vm1068, %v1070, %v1072
      %v1074 = vrot.slane %v228, 2
      %v1075 = vrot.slane %v229, 2
      %v1076 = vsel %vm1068, %v1074, %v1075
      %v1077 = vrot.slane %v230, 2
      %v1078 = vsel %vm1068, %v1075, %v1077
      %v1079 = vrot.slane %v231, 2
      %v1080 = vrot.slane %v232, 2
      %v1081 = vsel %vm1068, %v1079, %v1080
      %v1082 = vrot.slane %v233, 2
      %v1083 = vsel %vm1068, %v1080, %v1082
      %v1084 = vrot.slane %v234, 2
      %v1085 = vrot.slane %v235, 2
      %v1086 = vsel %vm1068, %v1084, %v1085
      %v1087 = vrot.slane %v236, 2
      %v1088 = vsel %vm1068, %v1085, %v1087
      %v1089 = vrot.slane %v237, 2
      %v1090 = vrot.slane %v238, 2
      %v1091 = vsel %vm1068, %v1089, %v1090
      %v1092 = vrot.slane %v239, 2
      %v1093 = vsel %vm1068, %v1090, %v1092
      %v1094 = vrot.slane %v240, 2
      %v1095 = vrot.slane %v241, 2
      %v1096 = vsel %vm1068, %v1094, %v1095
      %v1097 = vrot.slane %v242, 2
      %v1098 = vsel %vm1068, %v1095, %v1097
      %v1099 = vrot.slane %v243, 2
      %v1100 = vrot.slane %v244, 2
      %v1101 = vsel %vm1068, %v1099, %v1100
      %v1102 = vrot.slane %v245, 2
      %v1103 = vsel %vm1068, %v1100, %v1102
      %v1104 = vrot.slane %v246, 2
      %v1105 = vrot.slane %v247, 2
      %v1106 = vsel %vm1068, %v1104, %v1105
      %v1107 = vrot.slane %v248, 2
      %v1108 = vsel %vm1068, %v1105, %v1107
      %v1109 = vrot.slane %v249, 2
      %v1110 = vrot.slane %v250, 2
      %v1111 = vsel %vm1068, %v1109, %v1110
      %v1112 = vrot.slane %v251, 2
      %v1113 = vsel %vm1068, %v1110, %v1112
      %v1114 = vrot.slane %v252, 2
      %v1115 = vrot.slane %v253, 2
      %v1116 = vsel %vm1068, %v1114, %v1115
      %v1117 = vrot.slane %v254, 2
      %v1118 = vsel %vm1068, %v1115, %v1117
      %v1119 = vrot.slane %v255, 2
      %v1120 = vrot.slane %v256, 2
      %v1121 = vsel %vm1068, %v1119, %v1120
      %v1122 = vrot.slane %v257, 2
      %v1123 = vsel %vm1068, %v1120, %v1122
      %v1124 = vrot.slane %v258, 2
      %v1125 = vrot.slane %v259, 2
      %v1126 = vsel %vm1068, %v1124, %v1125
      %v1127 = vrot.slane %v260, 2
      %v1128 = vsel %vm1068, %v1125, %v1127
      %v1129 = vrot.slane %v261, 2
      %v1130 = vrot.slane %v262, 2
      %v1131 = vsel %vm1068, %v1129, %v1130
      %v1132 = vrot.slane %v263, 2
      %v1133 = vsel %vm1068, %v1130, %v1132
      %v1134 = vrot.slane %v264, 2
      %v1135 = vrot.slane %v265, 2
      %v1136 = vsel %vm1068, %v1134, %v1135
      %v1137 = vrot.slane %v266, 2
      %v1138 = vsel %vm1068, %v1135, %v1137
      %v1139 = vrot.slane %v267, 2
      %v1140 = vrot.slane %v268, 2
      %v1141 = vsel %vm1068, %v1139, %v1140
      %v1142 = vrot.slane %v269, 2
      %v1143 = vsel %vm1068, %v1140, %v1142
      %v1144 = vrot.slane %v270, 2
      %v1145 = vrot.slane %v271, 2
      %v1146 = vsel %vm1068, %v1144, %v1145
      %v1147 = vrot.slane %v272, 2
      %v1148 = vsel %vm1068, %v1145, %v1147
      %s1149 = scalar_lea.vmem %s1, 8
      %v1150 = vld [vmem:[%s1149] sm:$0xf]
      %v1151 = vsel %vm287, %v1071, 0
      %v1153 = vsel %vm287, %v1073, 0
      %v1155 = vsel %vm287, %v1076, 0
      %v1157 = vsel %vm287, %v1078, 0
      %v1159 = vsel %vm287, %v1081, 0
      %v1161 = vsel %vm287, %v1083, 0
      %v1163 = vsel %vm287, %v1086, 0
      %v1165 = vsel %vm287, %v1088, 0
      %v1167 = vsel %vm287, %v1091, 0
      %v1169 = vsel %vm287, %v1093, 0
      %v1171 = vsel %vm287, %v1096, 0
      %v1173 = vsel %vm287, %v1098, 0
      %v1175 = vsel %vm287, %v1101, 0
      %v1177 = vsel %vm287, %v1103, 0
      %v1179 = vsel %vm287, %v1106, 0
      %v1181 = vsel %vm287, %v1108, 0
      %v1183 = vsel %vm287, %v1111, 0
      %v1185 = vsel %vm287, %v1113, 0
      %v1187 = vsel %vm287, %v1116, 0
      %v1189 = vsel %vm287, %v1118, 0
      %v1191 = vsel %vm287, %v1121, 0
      %v1193 = vsel %vm287, %v1123, 0
      %v1195 = vsel %vm287, %v1126, 0
      %v1197 = vsel %vm287, %v1128, 0
      %v1199 = vsel %vm287, %v1131, 0
      %v1201 = vsel %vm287, %v1133, 0
      %v1203 = vsel %vm287, %v1136, 0
      %v1205 = vsel %vm287, %v1138, 0
      %v1207 = vsel %vm287, %v1141, 0
      %v1209 = vsel %vm287, %v1143, 0
      %v1211 = vsel %vm287, %v1146, 0
      %v1213 = vsel %vm287, %v1148, 0
      %v1216 = vsel %vm384, %v1150, 0
      %1218 = vmatprep.subr.mxu0 0.0
      %1219 = vmatpush1.msra.mxu0 %v1216
      %1220 = vmatprep.subr.mxu0 0.0
      %1221 = vmatpush1.msra.mxu0 0.0
      %1222 = vmatprep.subr.mxu0 0.0
      %1223 = vmatpush1.msra.mxu0 0.0
      %1224 = vmatprep.subr.mxu0 0.0
      %1225 = vmatpush1.msra.mxu0 0.0
      %1226 = vmatprep.subr.mxu0 0.0
      %1227 = vmatpush1.msra.mxu0 0.0
      %1228 = vmatprep.subr.mxu0 0.0
      %1229 = vmatpush1.msra.mxu0 0.0
      %1230 = vmatprep.subr.mxu0 0.0
      %1231 = vmatpush1.msra.mxu0 0.0
      %1232 = vmatprep.subr.mxu0 0.0
      %1233 = vmatpush1.msra.mxu0 0.0
      %1234 = vmatprep.subr.mxu0 0.0
      %1235 = vmatpush1.msra.mxu0 0.0
      %1236 = vmatprep.subr.mxu0 0.0
      %1237 = vmatpush1.msra.mxu0 0.0
      %1238 = vmatprep.subr.mxu0 0.0
      %1239 = vmatpush1.msra.mxu0 0.0
      %1240 = vmatprep.subr.mxu0 0.0
      %1241 = vmatpush1.msra.mxu0 0.0
      %1242 = vmatprep.subr.mxu0 0.0
      %1243 = vmatpush1.msra.mxu0 0.0
      %1244 = vmatprep.subr.mxu0 0.0
      %1245 = vmatpush1.msra.mxu0 0.0
      %1246 = vmatprep.subr.mxu0 0.0
      %1247 = vmatpush1.msra.mxu0 0.0
      %1248 = vmatprep.subr.mxu0 0.0
      %1249 = vmatpush1.msra.mxu0 0.0
      %1250 = vmatprep.subr.mxu0 0.0
      %1251 = vmatpush1.msra.mxu0 0.0
      %1252 = vmatprep.subr.mxu0 0.0
      %1253 = vmatpush1.msra.mxu0 0.0
      %1254 = vmatprep.subr.mxu0 0.0
      %1255 = vmatpush1.msra.mxu0 0.0
      %1256 = vmatprep.subr.mxu0 0.0
      %1257 = vmatpush1.msra.mxu0 0.0
      %1258 = vmatprep.subr.mxu0 0.0
      %1259 = vmatpush1.msra.mxu0 0.0
      %1260 = vmatprep.subr.mxu0 0.0
      %1261 = vmatpush1.msra.mxu0 0.0
      %1262 = vmatprep.subr.mxu0 0.0
      %1263 = vmatpush1.msra.mxu0 0.0
      %1264 = vmatprep.subr.mxu0 0.0
      %1265 = vmatpush1.msra.mxu0 0.0
      %1266 = vmatprep.subr.mxu0 0.0
      %1267 = vmatpush1.msra.mxu0 0.0
      %1268 = vmatprep.subr.mxu0 0.0
      %1269 = vmatpush1.msra.mxu0 0.0
      %1270 = vmatprep.subr.mxu0 0.0
      %1271 = vmatpush1.msra.mxu0 0.0
      %1272 = vmatprep.subr.mxu0 0.0
      %1273 = vmatpush1.msra.mxu0 0.0
      %1274 = vmatprep.subr.mxu0 0.0
      %1275 = vmatpush1.msra.mxu0 0.0
      %1276 = vmatprep.subr.mxu0 0.0
      %1277 = vmatpush1.msra.mxu0 0.0
      %1278 = vmatprep.subr.mxu0 0.0
      %1279 = vmatpush1.msra.mxu0 0.0
      %1280 = vmatprep.subr.mxu0 0.0
      %1281 = vmatpush1.msra.mxu0 0.0
      %1282 = vmatprep.mubr.f32.mxu0 0.0
      %1283 = vmatmul.mubr.f32.gmra.mrb[0].mxu0 %v1151
      %v1284 = vpop.f32.mrb[0].mxu0
      %v1285 = vadd.f32 0.0, %v1284
      %v1286 = vpop.f32.mrb[0].mxu0
      %1287 = vmatprep.mubr.f32.mxu0 0.0
      %1288 = vmatmul.mubr.f32.gmra.mrb[0].mxu0 %v1153
      %v1289 = vpop.f32.mrb[0].mxu0
      %v1290 = vadd.f32 0.0, %v1289
      %v1291 = vpop.f32.mrb[0].mxu0
      %1292 = vmatprep.mubr.f32.mxu0 0.0
      %1293 = vmatmul.mubr.f32.gmra.mrb[0].mxu0 %v1155
      %v1294 = vpop.f32.mrb[0].mxu0
      %v1295 = vadd.f32 0.0, %v1294
      %v1296 = vpop.f32.mrb[0].mxu0
      %1297 = vmatprep.mubr.f32.mxu0 0.0
      %1298 = vmatmul.mubr.f32.gmra.mrb[0].mxu0 %v1157
      %v1299 = vpop.f32.mrb[0].mxu0
      %v1300 = vadd.f32 0.0, %v1299
      %v1301 = vpop.f32.mrb[0].mxu0
      %1302 = vmatprep.mubr.f32.mxu0 0.0
      %1303 = vmatmul.mubr.f32.gmra.mrb[0].mxu0 %v1159
      %v1304 = vpop.f32.mrb[0].mxu0
      %v1305 = vadd.f32 0.0, %v1304
      %v1306 = vpop.f32.mrb[0].mxu0
      %1307 = vmatprep.mubr.f32.mxu0 0.0
      %1308 = vmatmul.mubr.f32.gmra.mrb[0].mxu0 %v1161
      %v1309 = vpop.f32.mrb[0].mxu0
      %v1310 = vadd.f32 0.0, %v1309
      %v1311 = vpop.f32.mrb[0].mxu0
      %1312 = vmatprep.mubr.f32.mxu0 0.0
      %1313 = vmatmul.mubr.f32.gmra.mrb[0].mxu0 %v1163
      %v1314 = vpop.f32.mrb[0].mxu0
      %v1315 = vadd.f32 0.0, %v1314
      %v1316 = vpop.f32.mrb[0].mxu0
      %1317 = vmatprep.mubr.f32.mxu0 0.0
      %1318 = vmatmul.mubr.f32.gmra.mrb[0].mxu0 %v1165
      %v1319 = vpop.f32.mrb[0].mxu0
      %v1320 = vadd.f32 0.0, %v1319
      %v1321 = vpop.f32.mrb[0].mxu0
      %1322 = vmatprep.mubr.f32.mxu0 0.0
      %1323 = vmatmul.mubr.f32.gmra.mrb[0].mxu0 %v1167
      %v1324 = vpop.f32.mrb[0].mxu0
      %v1325 = vadd.f32 0.0, %v1324
      %v1326 = vpop.f32.mrb[0].mxu0
      %1327 = vmatprep.mubr.f32.mxu0 0.0
      %1328 = vmatmul.mubr.f32.gmra.mrb[0].mxu0 %v1169
      %v1329 = vpop.f32.mrb[0].mxu0
      %v1330 = vadd.f32 0.0, %v1329
      %v1331 = vpop.f32.mrb[0].mxu0
      %1332 = vmatprep.mubr.f32.mxu0 0.0
      %1333 = vmatmul.mubr.f32.gmra.mrb[0].mxu0 %v1171
      %v1334 = vpop.f32.mrb[0].mxu0
      %v1335 = vadd.f32 0.0, %v1334
      %v1336 = vpop.f32.mrb[0].mxu0
      %1337 = vmatprep.mubr.f32.mxu0 0.0
      %1338 = vmatmul.mubr.f32.gmra.mrb[0].mxu0 %v1173
      %v1339 = vpop.f32.mrb[0].mxu0
      %v1340 = vadd.f32 0.0, %v1339
      %v1341 = vpop.f32.mrb[0].mxu0
      %1342 = vmatprep.mubr.f32.mxu0 0.0
      %1343 = vmatmul.mubr.f32.gmra.mrb[0].mxu0 %v1175
      %v1344 = vpop.f32.mrb[0].mxu0
      %v1345 = vadd.f32 0.0, %v1344
      %v1346 = vpop.f32.mrb[0].mxu0
      %1347 = vmatprep.mubr.f32.mxu0 0.0
      %1348 = vmatmul.mubr.f32.gmra.mrb[0].mxu0 %v1177
      %v1349 = vpop.f32.mrb[0].mxu0
      %v1350 = vadd.f32 0.0, %v1349
      %v1351 = vpop.f32.mrb[0].mxu0
      %1352 = vmatprep.mubr.f32.mxu0 0.0
      %1353 = vmatmul.mubr.f32.gmra.mrb[0].mxu0 %v1179
      %v1354 = vpop.f32.mrb[0].mxu0
      %v1355 = vadd.f32 0.0, %v1354
      %v1356 = vpop.f32.mrb[0].mxu0
      %1357 = vmatprep.mubr.f32.mxu0 0.0
      %1358 = vmatmul.mubr.f32.gmra.mrb[0].mxu0 %v1181
      %v1359 = vpop.f32.mrb[0].mxu0
      %v1360 = vadd.f32 0.0, %v1359
      %v1361 = vpop.f32.mrb[0].mxu0
      %1362 = vmatprep.mubr.f32.mxu0 0.0
      %1363 = vmatmul.mubr.f32.gmra.mrb[0].mxu0 %v1183
      %v1364 = vpop.f32.mrb[0].mxu0
      %v1365 = vadd.f32 0.0, %v1364
      %v1366 = vpop.f32.mrb[0].mxu0
      %1367 = vmatprep.mubr.f32.mxu0 0.0
      %1368 = vmatmul.mubr.f32.gmra.mrb[0].mxu0 %v1185
      %v1369 = vpop.f32.mrb[0].mxu0
      %v1370 = vadd.f32 0.0, %v1369
      %v1371 = vpop.f32.mrb[0].mxu0
      %1372 = vmatprep.mubr.f32.mxu0 0.0
      %1373 = vmatmul.mubr.f32.gmra.mrb[0].mxu0 %v1187
      %v1374 = vpop.f32.mrb[0].mxu0
      %v1375 = vadd.f32 0.0, %v1374
      %v1376 = vpop.f32.mrb[0].mxu0
      %1377 = vmatprep.mubr.f32.mxu0 0.0
      %1378 = vmatmul.mubr.f32.gmra.mrb[0].mxu0 %v1189
      %v1379 = vpop.f32.mrb[0].mxu0
      %v1380 = vadd.f32 0.0, %v1379
      %v1381 = vpop.f32.mrb[0].mxu0
      %1382 = vmatprep.mubr.f32.mxu0 0.0
      %1383 = vmatmul.mubr.f32.gmra.mrb[0].mxu0 %v1191
      %v1384 = vpop.f32.mrb[0].mxu0
      %v1385 = vadd.f32 0.0, %v1384
      %v1386 = vpop.f32.mrb[0].mxu0
      %1387 = vmatprep.mubr.f32.mxu0 0.0
      %1388 = vmatmul.mubr.f32.gmra.mrb[0].mxu0 %v1193
      %v1389 = vpop.f32.mrb[0].mxu0
      %v1390 = vadd.f32 0.0, %v1389
      %v1391 = vpop.f32.mrb[0].mxu0
      %1392 = vmatprep.mubr.f32.mxu0 0.0
      %1393 = vmatmul.mubr.f32.gmra.mrb[0].mxu0 %v1195
      %v1394 = vpop.f32.mrb[0].mxu0
      %v1395 = vadd.f32 0.0, %v1394
      %v1396 = vpop.f32.mrb[0].mxu0
      %1397 = vmatprep.mubr.f32.mxu0 0.0
      %1398 = vmatmul.mubr.f32.gmra.mrb[0].mxu0 %v1197
      %v1399 = vpop.f32.mrb[0].mxu0
      %v1400 = vadd.f32 0.0, %v1399
      %v1401 = vpop.f32.mrb[0].mxu0
      %1402 = vmatprep.mubr.f32.mxu0 0.0
      %1403 = vmatmul.mubr.f32.gmra.mrb[0].mxu0 %v1199
      %v1404 = vpop.f32.mrb[0].mxu0
      %v1405 = vadd.f32 0.0, %v1404
      %v1406 = vpop.f32.mrb[0].mxu0
      %1407 = vmatprep.mubr.f32.mxu0 0.0
      %1408 = vmatmul.mubr.f32.gmra.mrb[0].mxu0 %v1201
      %v1409 = vpop.f32.mrb[0].mxu0
      %v1410 = vadd.f32 0.0, %v1409
      %v1411 = vpop.f32.mrb[0].mxu0
      %1412 = vmatprep.mubr.f32.mxu0 0.0
      %1413 = vmatmul.mubr.f32.gmra.mrb[0].mxu0 %v1203
      %v1414 = vpop.f32.mrb[0].mxu0
      %v1415 = vadd.f32 0.0, %v1414
      %v1416 = vpop.f32.mrb[0].mxu0
      %1417 = vmatprep.mubr.f32.mxu0 0.0
      %1418 = vmatmul.mubr.f32.gmra.mrb[0].mxu0 %v1205
      %v1419 = vpop.f32.mrb[0].mxu0
      %v1420 = vadd.f32 0.0, %v1419
      %v1421 = vpop.f32.mrb[0].mxu0
      %1422 = vmatprep.mubr.f32.mxu0 0.0
      %1423 = vmatmul.mubr.f32.gmra.mrb[0].mxu0 %v1207
      %v1424 = vpop.f32.mrb[0].mxu0
      %v1425 = vadd.f32 0.0, %v1424
      %v1426 = vpop.f32.mrb[0].mxu0
      %1427 = vmatprep.mubr.f32.mxu0 0.0
      %1428 = vmatmul.mubr.f32.gmra.mrb[0].mxu0 %v1209
      %v1429 = vpop.f32.mrb[0].mxu0
      %v1430 = vadd.f32 0.0, %v1429
      %v1431 = vpop.f32.mrb[0].mxu0
      %1432 = vmatprep.mubr.f32.mxu0 0.0
      %1433 = vmatmul.mubr.f32.gmra.mrb[0].mxu0 %v1211
      %v1434 = vpop.f32.mrb[0].mxu0
      %v1435 = vadd.f32 0.0, %v1434
      %v1436 = vpop.f32.mrb[0].mxu0
      %1437 = vmatprep.mubr.f32.mxu0 0.0
      %1438 = vmatmul.mubr.f32.gmra.mrb[0].mxu0 %v1213
      %v1439 = vpop.f32.mrb[0].mxu0
      %v1440 = vadd.f32 0.0, %v1439
      %v1441 = vpop.f32.mrb[0].mxu0
      %1442 = vdwg.mxu0
      %v1443 = vadd.f32 %v1036, %v1285
      %v1444 = vadd.f32 %v1037, %v1290
      %v1445 = vadd.f32 %v1038, %v1295
      %v1446 = vadd.f32 %v1039, %v1300
      %v1447 = vadd.f32 %v1040, %v1305
      %v1448 = vadd.f32 %v1041, %v1310
      %v1449 = vadd.f32 %v1042, %v1315
      %v1450 = vadd.f32 %v1043, %v1320
      %v1451 = vadd.f32 %v1044, %v1325
      %v1452 = vadd.f32 %v1045, %v1330
      %v1453 = vadd.f32 %v1046, %v1335
      %v1454 = vadd.f32 %v1047, %v1340
      %v1455 = vadd.f32 %v1048, %v1345
      %v1456 = vadd.f32 %v1049, %v1350
      %v1457 = vadd.f32 %v1050, %v1355
      %v1458 = vadd.f32 %v1051, %v1360
      %v1459 = vadd.f32 %v1052, %v1365
      %v1460 = vadd.f32 %v1053, %v1370
      %v1461 = vadd.f32 %v1054, %v1375
      %v1462 = vadd.f32 %v1055, %v1380
      %v1463 = vadd.f32 %v1056, %v1385
      %v1464 = vadd.f32 %v1057, %v1390
      %v1465 = vadd.f32 %v1058, %v1395
      %v1466 = vadd.f32 %v1059, %v1400
      %v1467 = vadd.f32 %v1060, %v1405
      %v1468 = vadd.f32 %v1061, %v1410
      %v1469 = vadd.f32 %v1062, %v1415
      %v1470 = vadd.f32 %v1063, %v1420
      %v1471 = vadd.f32 %v1064, %v1425
      %v1472 = vadd.f32 %v1065, %v1430
      %v1473 = vadd.f32 %v1066, %v1435
      %v1474 = vadd.f32 %v1067, %v1440
      %s1475 = scalar_lea.vmem %s1, 12
      %v1476 = vld [vmem:[%s1475] sm:$0xf]
      %v1478 = vsel %vm287, %v273, 0
      %v1481 = vsel %vm287, %v274, 0
      %v1484 = vsel %vm384, %v1476, 0
      %1486 = vmatprep.subr.mxu0 0.0
      %1487 = vmatpush1.msra.mxu0 %v1484
      %1488 = vmatprep.subr.mxu0 0.0
      %1489 = vmatpush1.msra.mxu0 0.0
      %1490 = vmatprep.subr.mxu0 0.0
      %1491 = vmatpush1.msra.mxu0 0.0
      %1492 = vmatprep.subr.mxu0 0.0
      %1493 = vmatpush1.msra.mxu0 0.0
      %1494 = vmatprep.subr.mxu0 0.0
      %1495 = vmatpush1.msra.mxu0 0.0
      %1496 = vmatprep.subr.mxu0 0.0
      %1497 = vmatpush1.msra.mxu0 0.0
      %1498 = vmatprep.subr.mxu0 0.0
      %1499 = vmatpush1.msra.mxu0 0.0
      %1500 = vmatprep.subr.mxu0 0.0
      %1501 = vmatpush1.msra.mxu0 0.0
      %1502 = vmatprep.subr.mxu0 0.0
      %1503 = vmatpush1.msra.mxu0 0.0
      %1504 = vmatprep.subr.mxu0 0.0
      %1505 = vmatpush1.msra.mxu0 0.0
      %1506 = vmatprep.subr.mxu0 0.0
      %1507 = vmatpush1.msra.mxu0 0.0
      %1508 = vmatprep.subr.mxu0 0.0
      %1509 = vmatpush1.msra.mxu0 0.0
      %1510 = vmatprep.subr.mxu0 0.0
      %1511 = vmatpush1.msra.mxu0 0.0
      %1512 = vmatprep.subr.mxu0 0.0
      %1513 = vmatpush1.msra.mxu0 0.0
      %1514 = vmatprep.subr.mxu0 0.0
      %1515 = vmatpush1.msra.mxu0 0.0
      %1516 = vmatprep.subr.mxu0 0.0
      %1517 = vmatpush1.msra.mxu0 0.0
      %1518 = vmatprep.subr.mxu0 0.0
      %1519 = vmatpush1.msra.mxu0 0.0
      %1520 = vmatprep.subr.mxu0 0.0
      %1521 = vmatpush1.msra.mxu0 0.0
      %1522 = vmatprep.subr.mxu0 0.0
      %1523 = vmatpush1.msra.mxu0 0.0
      %1524 = vmatprep.subr.mxu0 0.0
      %1525 = vmatpush1.msra.mxu0 0.0
      %1526 = vmatprep.subr.mxu0 0.0
      %1527 = vmatpush1.msra.mxu0 0.0
      %1528 = vmatprep.subr.mxu0 0.0
      %1529 = vmatpush1.msra.mxu0 0.0
      %1530 = vmatprep.subr.mxu0 0.0
      %1531 = vmatpush1.msra.mxu0 0.0
      %1532 = vmatprep.subr.mxu0 0.0
      %1533 = vmatpush1.msra.mxu0 0.0
      %1534 = vmatprep.subr.mxu0 0.0
      %1535 = vmatpush1.msra.mxu0 0.0
      %1536 = vmatprep.subr.mxu0 0.0
      %1537 = vmatpush1.msra.mxu0 0.0
      %1538 = vmatprep.subr.mxu0 0.0
      %1539 = vmatpush1.msra.mxu0 0.0
      %1540 = vmatprep.subr.mxu0 0.0
      %1541 = vmatpush1.msra.mxu0 0.0
      %1542 = vmatprep.subr.mxu0 0.0
      %1543 = vmatpush1.msra.mxu0 0.0
      %1544 = vmatprep.subr.mxu0 0.0
      %1545 = vmatpush1.msra.mxu0 0.0
      %1546 = vmatprep.subr.mxu0 0.0
      %1547 = vmatpush1.msra.mxu0 0.0
      %1548 = vmatprep.subr.mxu0 0.0
      %1549 = vmatpush1.msra.mxu0 0.0
      %1550 = vmatprep.mubr.f32.mxu0 0.0
      %1551 = vmatmul.mubr.f32.gmra.mrb[0].mxu0 %v295
      %v1552 = vpop.f32.mrb[0].mxu0
      %v1553 = vadd.f32 0.0, %v1552
      %v1554 = vpop.f32.mrb[0].mxu0
      %1555 = vmatprep.mubr.f32.mxu0 0.0
      %1556 = vmatmul.mubr.f32.gmra.mrb[0].mxu0 %v298
      %v1557 = vpop.f32.mrb[0].mxu0
      %v1558 = vadd.f32 0.0, %v1557
      %v1559 = vpop.f32.mrb[0].mxu0
      %1560 = vmatprep.mubr.f32.mxu0 0.0
      %1561 = vmatmul.mubr.f32.gmra.mrb[0].mxu0 %v301
      %v1562 = vpop.f32.mrb[0].mxu0
      %v1563 = vadd.f32 0.0, %v1562
      %v1564 = vpop.f32.mrb[0].mxu0
      %1565 = vmatprep.mubr.f32.mxu0 0.0
      %1566 = vmatmul.mubr.f32.gmra.mrb[0].mxu0 %v304
      %v1567 = vpop.f32.mrb[0].mxu0
      %v1568 = vadd.f32 0.0, %v1567
      %v1569 = vpop.f32.mrb[0].mxu0
      %1570 = vmatprep.mubr.f32.mxu0 0.0
      %1571 = vmatmul.mubr.f32.gmra.mrb[0].mxu0 %v307
      %v1572 = vpop.f32.mrb[0].mxu0
      %v1573 = vadd.f32 0.0, %v1572
      %v1574 = vpop.f32.mrb[0].mxu0
      %1575 = vmatprep.mubr.f32.mxu0 0.0
      %1576 = vmatmul.mubr.f32.gmra.mrb[0].mxu0 %v310
      %v1577 = vpop.f32.mrb[0].mxu0
      %v1578 = vadd.f32 0.0, %v1577
      %v1579 = vpop.f32.mrb[0].mxu0
      %1580 = vmatprep.mubr.f32.mxu0 0.0
      %1581 = vmatmul.mubr.f32.gmra.mrb[0].mxu0 %v313
      %v1582 = vpop.f32.mrb[0].mxu0
      %v1583 = vadd.f32 0.0, %v1582
      %v1584 = vpop.f32.mrb[0].mxu0
      %1585 = vmatprep.mubr.f32.mxu0 0.0
      %1586 = vmatmul.mubr.f32.gmra.mrb[0].mxu0 %v316
      %v1587 = vpop.f32.mrb[0].mxu0
      %v1588 = vadd.f32 0.0, %v1587
      %v1589 = vpop.f32.mrb[0].mxu0
      %1590 = vmatprep.mubr.f32.mxu0 0.0
      %1591 = vmatmul.mubr.f32.gmra.mrb[0].mxu0 %v319
      %v1592 = vpop.f32.mrb[0].mxu0
      %v1593 = vadd.f32 0.0, %v1592
      %v1594 = vpop.f32.mrb[0].mxu0
      %1595 = vmatprep.mubr.f32.mxu0 0.0
      %1596 = vmatmul.mubr.f32.gmra.mrb[0].mxu0 %v322
      %v1597 = vpop.f32.mrb[0].mxu0
      %v1598 = vadd.f32 0.0, %v1597
      %v1599 = vpop.f32.mrb[0].mxu0
      %1600 = vmatprep.mubr.f32.mxu0 0.0
      %1601 = vmatmul.mubr.f32.gmra.mrb[0].mxu0 %v325
      %v1602 = vpop.f32.mrb[0].mxu0
      %v1603 = vadd.f32 0.0, %v1602
      %v1604 = vpop.f32.mrb[0].mxu0
      %1605 = vmatprep.mubr.f32.mxu0 0.0
      %1606 = vmatmul.mubr.f32.gmra.mrb[0].mxu0 %v328
      %v1607 = vpop.f32.mrb[0].mxu0
      %v1608 = vadd.f32 0.0, %v1607
      %v1609 = vpop.f32.mrb[0].mxu0
      %1610 = vmatprep.mubr.f32.mxu0 0.0
      %1611 = vmatmul.mubr.f32.gmra.mrb[0].mxu0 %v331
      %v1612 = vpop.f32.mrb[0].mxu0
      %v1613 = vadd.f32 0.0, %v1612
      %v1614 = vpop.f32.mrb[0].mxu0
      %1615 = vmatprep.mubr.f32.mxu0 0.0
      %1616 = vmatmul.mubr.f32.gmra.mrb[0].mxu0 %v334
      %v1617 = vpop.f32.mrb[0].mxu0
      %v1618 = vadd.f32 0.0, %v1617
      %v1619 = vpop.f32.mrb[0].mxu0
      %1620 = vmatprep.mubr.f32.mxu0 0.0
      %1621 = vmatmul.mubr.f32.gmra.mrb[0].mxu0 %v337
      %v1622 = vpop.f32.mrb[0].mxu0
      %v1623 = vadd.f32 0.0, %v1622
      %v1624 = vpop.f32.mrb[0].mxu0
      %1625 = vmatprep.mubr.f32.mxu0 0.0
      %1626 = vmatmul.mubr.f32.gmra.mrb[0].mxu0 %v340
      %v1627 = vpop.f32.mrb[0].mxu0
      %v1628 = vadd.f32 0.0, %v1627
      %v1629 = vpop.f32.mrb[0].mxu0
      %1630 = vmatprep.mubr.f32.mxu0 0.0
      %1631 = vmatmul.mubr.f32.gmra.mrb[0].mxu0 %v343
      %v1632 = vpop.f32.mrb[0].mxu0
      %v1633 = vadd.f32 0.0, %v1632
      %v1634 = vpop.f32.mrb[0].mxu0
      %1635 = vmatprep.mubr.f32.mxu0 0.0
      %1636 = vmatmul.mubr.f32.gmra.mrb[0].mxu0 %v346
      %v1637 = vpop.f32.mrb[0].mxu0
      %v1638 = vadd.f32 0.0, %v1637
      %v1639 = vpop.f32.mrb[0].mxu0
      %1640 = vmatprep.mubr.f32.mxu0 0.0
      %1641 = vmatmul.mubr.f32.gmra.mrb[0].mxu0 %v349
      %v1642 = vpop.f32.mrb[0].mxu0
      %v1643 = vadd.f32 0.0, %v1642
      %v1644 = vpop.f32.mrb[0].mxu0
      %1645 = vmatprep.mubr.f32.mxu0 0.0
      %1646 = vmatmul.mubr.f32.gmra.mrb[0].mxu0 %v352
      %v1647 = vpop.f32.mrb[0].mxu0
      %v1648 = vadd.f32 0.0, %v1647
      %v1649 = vpop.f32.mrb[0].mxu0
      %1650 = vmatprep.mubr.f32.mxu0 0.0
      %1651 = vmatmul.mubr.f32.gmra.mrb[0].mxu0 %v355
      %v1652 = vpop.f32.mrb[0].mxu0
      %v1653 = vadd.f32 0.0, %v1652
      %v1654 = vpop.f32.mrb[0].mxu0
      %1655 = vmatprep.mubr.f32.mxu0 0.0
      %1656 = vmatmul.mubr.f32.gmra.mrb[0].mxu0 %v358
      %v1657 = vpop.f32.mrb[0].mxu0
      %v1658 = vadd.f32 0.0, %v1657
      %v1659 = vpop.f32.mrb[0].mxu0
      %1660 = vmatprep.mubr.f32.mxu0 0.0
      %1661 = vmatmul.mubr.f32.gmra.mrb[0].mxu0 %v361
      %v1662 = vpop.f32.mrb[0].mxu0
      %v1663 = vadd.f32 0.0, %v1662
      %v1664 = vpop.f32.mrb[0].mxu0
      %1665 = vmatprep.mubr.f32.mxu0 0.0
      %1666 = vmatmul.mubr.f32.gmra.mrb[0].mxu0 %v364
      %v1667 = vpop.f32.mrb[0].mxu0
      %v1668 = vadd.f32 0.0, %v1667
      %v1669 = vpop.f32.mrb[0].mxu0
      %1670 = vmatprep.mubr.f32.mxu0 0.0
      %1671 = vmatmul.mubr.f32.gmra.mrb[0].mxu0 %v367
      %v1672 = vpop.f32.mrb[0].mxu0
      %v1673 = vadd.f32 0.0, %v1672
      %v1674 = vpop.f32.mrb[0].mxu0
      %1675 = vmatprep.mubr.f32.mxu0 0.0
      %1676 = vmatmul.mubr.f32.gmra.mrb[0].mxu0 %v370
      %v1677 = vpop.f32.mrb[0].mxu0
      %v1678 = vadd.f32 0.0, %v1677
      %v1679 = vpop.f32.mrb[0].mxu0
      %1680 = vmatprep.mubr.f32.mxu0 0.0
      %1681 = vmatmul.mubr.f32.gmra.mrb[0].mxu0 %v373
      %v1682 = vpop.f32.mrb[0].mxu0
      %v1683 = vadd.f32 0.0, %v1682
      %v1684 = vpop.f32.mrb[0].mxu0
      %1685 = vmatprep.mubr.f32.mxu0 0.0
      %1686 = vmatmul.mubr.f32.gmra.mrb[0].mxu0 %v376
      %v1687 = vpop.f32.mrb[0].mxu0
      %v1688 = vadd.f32 0.0, %v1687
      %v1689 = vpop.f32.mrb[0].mxu0
      %1690 = vmatprep.mubr.f32.mxu0 0.0
      %1691 = vmatmul.mubr.f32.gmra.mrb[0].mxu0 %v379
      %v1692 = vpop.f32.mrb[0].mxu0
      %v1693 = vadd.f32 0.0, %v1692
      %v1694 = vpop.f32.mrb[0].mxu0
      %1695 = vmatprep.mubr.f32.mxu0 0.0
      %1696 = vmatmul.mubr.f32.gmra.mrb[0].mxu0 %v382
      %v1697 = vpop.f32.mrb[0].mxu0
      %v1698 = vadd.f32 0.0, %v1697
      %v1699 = vpop.f32.mrb[0].mxu0
      %1700 = vmatprep.mubr.f32.mxu0 0.0
      %1701 = vmatmul.mubr.f32.gmra.mrb[0].mxu0 %v1478
      %v1702 = vpop.f32.mrb[0].mxu0
      %v1703 = vadd.f32 0.0, %v1702
      %v1704 = vpop.f32.mrb[0].mxu0
      %1705 = vmatprep.mubr.f32.mxu0 0.0
      %1706 = vmatmul.mubr.f32.gmra.mrb[0].mxu0 %v1481
      %v1707 = vpop.f32.mrb[0].mxu0
      %v1708 = vadd.f32 0.0, %v1707
      %v1709 = vpop.f32.mrb[0].mxu0
      %1710 = vdwg.mxu0
      %v1711 = vadd.f32 %v1443, %v1553
      %v1712 = vadd.f32 %v1444, %v1558
      %v1713 = vadd.f32 %v1445, %v1563
      %v1714 = vadd.f32 %v1446, %v1568
      %v1715 = vadd.f32 %v1447, %v1573
      %v1716 = vadd.f32 %v1448, %v1578
      %v1717 = vadd.f32 %v1449, %v1583
      %v1718 = vadd.f32 %v1450, %v1588
      %v1719 = vadd.f32 %v1451, %v1593
      %v1720 = vadd.f32 %v1452, %v1598
      %v1721 = vadd.f32 %v1453, %v1603
      %v1722 = vadd.f32 %v1454, %v1608
      %v1723 = vadd.f32 %v1455, %v1613
      %v1724 = vadd.f32 %v1456, %v1618
      %v1725 = vadd.f32 %v1457, %v1623
      %v1726 = vadd.f32 %v1458, %v1628
      %v1727 = vadd.f32 %v1459, %v1633
      %v1728 = vadd.f32 %v1460, %v1638
      %v1729 = vadd.f32 %v1461, %v1643
      %v1730 = vadd.f32 %v1462, %v1648
      %v1731 = vadd.f32 %v1463, %v1653
      %v1732 = vadd.f32 %v1464, %v1658
      %v1733 = vadd.f32 %v1465, %v1663
      %v1734 = vadd.f32 %v1466, %v1668
      %v1735 = vadd.f32 %v1467, %v1673
      %v1736 = vadd.f32 %v1468, %v1678
      %v1737 = vadd.f32 %v1469, %v1683
      %v1738 = vadd.f32 %v1470, %v1688
      %v1739 = vadd.f32 %v1471, %v1693
      %v1740 = vadd.f32 %v1472, %v1698
      %v1741 = vadd.f32 %v1473, %v1703
      %v1742 = vadd.f32 %v1474, %v1708
      %v1744 = vrot.slane %v273, 1
      %v1745 = vrot.slane %v274, 1
      %v1746 = vsel %vm661, %v1744, %v1745
      %v1747 = vrot.slane %v275, 1
      %v1748 = vsel %vm661, %v1745, %v1747
      %s1781 = scalar_lea.vmem %s1, 16
      %v1782 = vld [vmem:[%s1781] sm:$0xf]
      %v1783 = vsel %vm287, %v1746, 0
      %v1785 = vsel %vm287, %v1748, 0
      %v1788 = vsel %vm384, %v1782, 0
      %1790 = vmatprep.subr.mxu0 0.0
      %1791 = vmatpush1.msra.mxu0 %v1788
      %1792 = vmatprep.subr.mxu0 0.0
      %1793 = vmatpush1.msra.mxu0 0.0
      %1794 = vmatprep.subr.mxu0 0.0
      %1795 = vmatpush1.msra.mxu0 0.0
      %1796 = vmatprep.subr.mxu0 0.0
      %1797 = vmatpush1.msra.mxu0 0.0
      %1798 = vmatprep.subr.mxu0 0.0
      %1799 = vmatpush1.msra.mxu0 0.0
      %1800 = vmatprep.subr.mxu0 0.0
      %1801 = vmatpush1.msra.mxu0 0.0
      %1802 = vmatprep.subr.mxu0 0.0
      %1803 = vmatpush1.msra.mxu0 0.0
      %1804 = vmatprep.subr.mxu0 0.0
      %1805 = vmatpush1.msra.mxu0 0.0
      %1806 = vmatprep.subr.mxu0 0.0
      %1807 = vmatpush1.msra.mxu0 0.0
      %1808 = vmatprep.subr.mxu0 0.0
      %1809 = vmatpush1.msra.mxu0 0.0
      %1810 = vmatprep.subr.mxu0 0.0
      %1811 = vmatpush1.msra.mxu0 0.0
      %1812 = vmatprep.subr.mxu0 0.0
      %1813 = vmatpush1.msra.mxu0 0.0
      %1814 = vmatprep.subr.mxu0 0.0
      %1815 = vmatpush1.msra.mxu0 0.0
      %1816 = vmatprep.subr.mxu0 0.0
      %1817 = vmatpush1.msra.mxu0 0.0
      %1818 = vmatprep.subr.mxu0 0.0
      %1819 = vmatpush1.msra.mxu0 0.0
      %1820 = vmatprep.subr.mxu0 0.0
      %1821 = vmatpush1.msra.mxu0 0.0
      %1822 = vmatprep.subr.mxu0 0.0
      %1823 = vmatpush1.msra.mxu0 0.0
      %1824 = vmatprep.subr.mxu0 0.0
      %1825 = vmatpush1.msra.mxu0 0.0
      %1826 = vmatprep.subr.mxu0 0.0
      %1827 = vmatpush1.msra.mxu0 0.0
      %1828 = vmatprep.subr.mxu0 0.0
      %1829 = vmatpush1.msra.mxu0 0.0
      %1830 = vmatprep.subr.mxu0 0.0
      %1831 = vmatpush1.msra.mxu0 0.0
      %1832 = vmatprep.subr.mxu0 0.0
      %1833 = vmatpush1.msra.mxu0 0.0
      %1834 = vmatprep.subr.mxu0 0.0
      %1835 = vmatpush1.msra.mxu0 0.0
      %1836 = vmatprep.subr.mxu0 0.0
      %1837 = vmatpush1.msra.mxu0 0.0
      %1838 = vmatprep.subr.mxu0 0.0
      %1839 = vmatpush1.msra.mxu0 0.0
      %1840 = vmatprep.subr.mxu0 0.0
      %1841 = vmatpush1.msra.mxu0 0.0
      %1842 = vmatprep.subr.mxu0 0.0
      %1843 = vmatpush1.msra.mxu0 0.0
      %1844 = vmatprep.subr.mxu0 0.0
      %1845 = vmatpush1.msra.mxu0 0.0
      %1846 = vmatprep.subr.mxu0 0.0
      %1847 = vmatpush1.msra.mxu0 0.0
      %1848 = vmatprep.subr.mxu0 0.0
      %1849 = vmatpush1.msra.mxu0 0.0
      %1850 = vmatprep.subr.mxu0 0.0
      %1851 = vmatpush1.msra.mxu0 0.0
      %1852 = vmatprep.subr.mxu0 0.0
      %1853 = vmatpush1.msra.mxu0 0.0
      %1854 = vmatprep.mubr.f32.mxu0 0.0
      %1855 = vmatmul.mubr.f32.gmra.mrb[0].mxu0 %v748
      %v1856 = vpop.f32.mrb[0].mxu0
      %v1857 = vadd.f32 0.0, %v1856
      %v1858 = vpop.f32.mrb[0].mxu0
      %1859 = vmatprep.mubr.f32.mxu0 0.0
      %1860 = vmatmul.mubr.f32.gmra.mrb[0].mxu0 %v750
      %v1861 = vpop.f32.mrb[0].mxu0
      %v1862 = vadd.f32 0.0, %v1861
      %v1863 = vpop.f32.mrb[0].mxu0
      %1864 = vmatprep.mubr.f32.mxu0 0.0
      %1865 = vmatmul.mubr.f32.gmra.mrb[0].mxu0 %v752
      %v1866 = vpop.f32.mrb[0].mxu0
      %v1867 = vadd.f32 0.0, %v1866
      %v1868 = vpop.f32.mrb[0].mxu0
      %1869 = vmatprep.mubr.f32.mxu0 0.0
      %1870 = vmatmul.mubr.f32.gmra.mrb[0].mxu0 %v754
      %v1871 = vpop.f32.mrb[0].mxu0
      %v1872 = vadd.f32 0.0, %v1871
      %v1873 = vpop.f32.mrb[0].mxu0
      %1874 = vmatprep.mubr.f32.mxu0 0.0
      %1875 = vmatmul.mubr.f32.gmra.mrb[0].mxu0 %v756
      %v1876 = vpop.f32.mrb[0].mxu0
      %v1877 = vadd.f32 0.0, %v1876
      %v1878 = vpop.f32.mrb[0].mxu0
      %1879 = vmatprep.mubr.f32.mxu0 0.0
      %1880 = vmatmul.mubr.f32.gmra.mrb[0].mxu0 %v758
      %v1881 = vpop.f32.mrb[0].mxu0
      %v1882 = vadd.f32 0.0, %v1881
      %v1883 = vpop.f32.mrb[0].mxu0
      %1884 = vmatprep.mubr.f32.mxu0 0.0
      %1885 = vmatmul.mubr.f32.gmra.mrb[0].mxu0 %v760
      %v1886 = vpop.f32.mrb[0].mxu0
      %v1887 = vadd.f32 0.0, %v1886
      %v1888 = vpop.f32.mrb[0].mxu0
      %1889 = vmatprep.mubr.f32.mxu0 0.0
      %1890 = vmatmul.mubr.f32.gmra.mrb[0].mxu0 %v762
      %v1891 = vpop.f32.mrb[0].mxu0
      %v1892 = vadd.f32 0.0, %v1891
      %v1893 = vpop.f32.mrb[0].mxu0
      %1894 = vmatprep.mubr.f32.mxu0 0.0
      %1895 = vmatmul.mubr.f32.gmra.mrb[0].mxu0 %v764
      %v1896 = vpop.f32.mrb[0].mxu0
      %v1897 = vadd.f32 0.0, %v1896
      %v1898 = vpop.f32.mrb[0].mxu0
      %1899 = vmatprep.mubr.f32.mxu0 0.0
      %1900 = vmatmul.mubr.f32.gmra.mrb[0].mxu0 %v766
      %v1901 = vpop.f32.mrb[0].mxu0
      %v1902 = vadd.f32 0.0, %v1901
      %v1903 = vpop.f32.mrb[0].mxu0
      %1904 = vmatprep.mubr.f32.mxu0 0.0
      %1905 = vmatmul.mubr.f32.gmra.mrb[0].mxu0 %v768
      %v1906 = vpop.f32.mrb[0].mxu0
      %v1907 = vadd.f32 0.0, %v1906
      %v1908 = vpop.f32.mrb[0].mxu0
      %1909 = vmatprep.mubr.f32.mxu0 0.0
      %1910 = vmatmul.mubr.f32.gmra.mrb[0].mxu0 %v770
      %v1911 = vpop.f32.mrb[0].mxu0
      %v1912 = vadd.f32 0.0, %v1911
      %v1913 = vpop.f32.mrb[0].mxu0
      %1914 = vmatprep.mubr.f32.mxu0 0.0
      %1915 = vmatmul.mubr.f32.gmra.mrb[0].mxu0 %v772
      %v1916 = vpop.f32.mrb[0].mxu0
      %v1917 = vadd.f32 0.0, %v1916
      %v1918 = vpop.f32.mrb[0].mxu0
      %1919 = vmatprep.mubr.f32.mxu0 0.0
      %1920 = vmatmul.mubr.f32.gmra.mrb[0].mxu0 %v774
      %v1921 = vpop.f32.mrb[0].mxu0
      %v1922 = vadd.f32 0.0, %v1921
      %v1923 = vpop.f32.mrb[0].mxu0
      %1924 = vmatprep.mubr.f32.mxu0 0.0
      %1925 = vmatmul.mubr.f32.gmra.mrb[0].mxu0 %v776
      %v1926 = vpop.f32.mrb[0].mxu0
      %v1927 = vadd.f32 0.0, %v1926
      %v1928 = vpop.f32.mrb[0].mxu0
      %1929 = vmatprep.mubr.f32.mxu0 0.0
      %1930 = vmatmul.mubr.f32.gmra.mrb[0].mxu0 %v778
      %v1931 = vpop.f32.mrb[0].mxu0
      %v1932 = vadd.f32 0.0, %v1931
      %v1933 = vpop.f32.mrb[0].mxu0
      %1934 = vmatprep.mubr.f32.mxu0 0.0
      %1935 = vmatmul.mubr.f32.gmra.mrb[0].mxu0 %v780
      %v1936 = vpop.f32.mrb[0].mxu0
      %v1937 = vadd.f32 0.0, %v1936
      %v1938 = vpop.f32.mrb[0].mxu0
      %1939 = vmatprep.mubr.f32.mxu0 0.0
      %1940 = vmatmul.mubr.f32.gmra.mrb[0].mxu0 %v782
      %v1941 = vpop.f32.mrb[0].mxu0
      %v1942 = vadd.f32 0.0, %v1941
      %v1943 = vpop.f32.mrb[0].mxu0
      %1944 = vmatprep.mubr.f32.mxu0 0.0
      %1945 = vmatmul.mubr.f32.gmra.mrb[0].mxu0 %v784
      %v1946 = vpop.f32.mrb[0].mxu0
      %v1947 = vadd.f32 0.0, %v1946
      %v1948 = vpop.f32.mrb[0].mxu0
      %1949 = vmatprep.mubr.f32.mxu0 0.0
      %1950 = vmatmul.mubr.f32.gmra.mrb[0].mxu0 %v786
      %v1951 = vpop.f32.mrb[0].mxu0
      %v1952 = vadd.f32 0.0, %v1951
      %v1953 = vpop.f32.mrb[0].mxu0
      %1954 = vmatprep.mubr.f32.mxu0 0.0
      %1955 = vmatmul.mubr.f32.gmra.mrb[0].mxu0 %v788
      %v1956 = vpop.f32.mrb[0].mxu0
      %v1957 = vadd.f32 0.0, %v1956
      %v1958 = vpop.f32.mrb[0].mxu0
      %1959 = vmatprep.mubr.f32.mxu0 0.0
      %1960 = vmatmul.mubr.f32.gmra.mrb[0].mxu0 %v790
      %v1961 = vpop.f32.mrb[0].mxu0
      %v1962 = vadd.f32 0.0, %v1961
      %v1963 = vpop.f32.mrb[0].mxu0
      %1964 = vmatprep.mubr.f32.mxu0 0.0
      %1965 = vmatmul.mubr.f32.gmra.mrb[0].mxu0 %v792
      %v1966 = vpop.f32.mrb[0].mxu0
      %v1967 = vadd.f32 0.0, %v1966
      %v1968 = vpop.f32.mrb[0].mxu0
      %1969 = vmatprep.mubr.f32.mxu0 0.0
      %1970 = vmatmul.mubr.f32.gmra.mrb[0].mxu0 %v794
      %v1971 = vpop.f32.mrb[0].mxu0
      %v1972 = vadd.f32 0.0, %v1971
      %v1973 = vpop.f32.mrb[0].mxu0
      %1974 = vmatprep.mubr.f32.mxu0 0.0
      %1975 = vmatmul.mubr.f32.gmra.mrb[0].mxu0 %v796
      %v1976 = vpop.f32.mrb[0].mxu0
      %v1977 = vadd.f32 0.0, %v1976
      %v1978 = vpop.f32.mrb[0].mxu0
      %1979 = vmatprep.mubr.f32.mxu0 0.0
      %1980 = vmatmul.mubr.f32.gmra.mrb[0].mxu0 %v798
      %v1981 = vpop.f32.mrb[0].mxu0
      %v1982 = vadd.f32 0.0, %v1981
      %v1983 = vpop.f32.mrb[0].mxu0
      %1984 = vmatprep.mubr.f32.mxu0 0.0
      %1985 = vmatmul.mubr.f32.gmra.mrb[0].mxu0 %v800
      %v1986 = vpop.f32.mrb[0].mxu0
      %v1987 = vadd.f32 0.0, %v1986
      %v1988 = vpop.f32.mrb[0].mxu0
      %1989 = vmatprep.mubr.f32.mxu0 0.0
      %1990 = vmatmul.mubr.f32.gmra.mrb[0].mxu0 %v802
      %v1991 = vpop.f32.mrb[0].mxu0
      %v1992 = vadd.f32 0.0, %v1991
      %v1993 = vpop.f32.mrb[0].mxu0
      %1994 = vmatprep.mubr.f32.mxu0 0.0
      %1995 = vmatmul.mubr.f32.gmra.mrb[0].mxu0 %v804
      %v1996 = vpop.f32.mrb[0].mxu0
      %v1997 = vadd.f32 0.0, %v1996
      %v1998 = vpop.f32.mrb[0].mxu0
      %1999 = vmatprep.mubr.f32.mxu0 0.0
      %2000 = vmatmul.mubr.f32.gmra.mrb[0].mxu0 %v806
      %v2001 = vpop.f32.mrb[0].mxu0
      %v2002 = vadd.f32 0.0, %v2001
      %v2003 = vpop.f32.mrb[0].mxu0
      %2004 = vmatprep.mubr.f32.mxu0 0.0
      %2005 = vmatmul.mubr.f32.gmra.mrb[0].mxu0 %v1783
      %v2006 = vpop.f32.mrb[0].mxu0
      %v2007 = vadd.f32 0.0, %v2006
      %v2008 = vpop.f32.mrb[0].mxu0
      %2009 = vmatprep.mubr.f32.mxu0 0.0
      %2010 = vmatmul.mubr.f32.gmra.mrb[0].mxu0 %v1785
      %v2011 = vpop.f32.mrb[0].mxu0
      %v2012 = vadd.f32 0.0, %v2011
      %v2013 = vpop.f32.mrb[0].mxu0
      %2014 = vdwg.mxu0
      %v2015 = vadd.f32 %v1711, %v1857
      %v2016 = vadd.f32 %v1712, %v1862
      %v2017 = vadd.f32 %v1713, %v1867
      %v2018 = vadd.f32 %v1714, %v1872
      %v2019 = vadd.f32 %v1715, %v1877
      %v2020 = vadd.f32 %v1716, %v1882
      %v2021 = vadd.f32 %v1717, %v1887
      %v2022 = vadd.f32 %v1718, %v1892
      %v2023 = vadd.f32 %v1719, %v1897
      %v2024 = vadd.f32 %v1720, %v1902
      %v2025 = vadd.f32 %v1721, %v1907
      %v2026 = vadd.f32 %v1722, %v1912
      %v2027 = vadd.f32 %v1723, %v1917
      %v2028 = vadd.f32 %v1724, %v1922
      %v2029 = vadd.f32 %v1725, %v1927
      %v2030 = vadd.f32 %v1726, %v1932
      %v2031 = vadd.f32 %v1727, %v1937
      %v2032 = vadd.f32 %v1728, %v1942
      %v2033 = vadd.f32 %v1729, %v1947
      %v2034 = vadd.f32 %v1730, %v1952
      %v2035 = vadd.f32 %v1731, %v1957
      %v2036 = vadd.f32 %v1732, %v1962
      %v2037 = vadd.f32 %v1733, %v1967
      %v2038 = vadd.f32 %v1734, %v1972
      %v2039 = vadd.f32 %v1735, %v1977
      %v2040 = vadd.f32 %v1736, %v1982
      %v2041 = vadd.f32 %v1737, %v1987
      %v2042 = vadd.f32 %v1738, %v1992
      %v2043 = vadd.f32 %v1739, %v1997
      %v2044 = vadd.f32 %v1740, %v2002
      %v2045 = vadd.f32 %v1741, %v2007
      %v2046 = vadd.f32 %v1742, %v2012
      %v2047 = vrot.slane %v273, 2
      %v2048 = vrot.slane %v274, 2
      %v2049 = vsel %vm1068, %v2047, %v2048
      %v2050 = vrot.slane %v275, 2
      %v2051 = vsel %vm1068, %v2048, %v2050
      %s2052 = scalar_lea.vmem %s1, 20
      %v2053 = vld [vmem:[%s2052] sm:$0xf]
      %v2054 = vsel %vm287, %v2049, 0
      %v2056 = vsel %vm287, %v2051, 0
      %v2059 = vsel %vm384, %v2053, 0
      %2061 = vmatprep.subr.mxu0 0.0
      %2062 = vmatpush1.msra.mxu0 %v2059
      %2063 = vmatprep.subr.mxu0 0.0
      %2064 = vmatpush1.msra.mxu0 0.0
      %2065 = vmatprep.subr.mxu0 0.0
      %2066 = vmatpush1.msra.mxu0 0.0
      %2067 = vmatprep.subr.mxu0 0.0
      %2068 = vmatpush1.msra.mxu0 0.0
      %2069 = vmatprep.subr.mxu0 0.0
      %2070 = vmatpush1.msra.mxu0 0.0
      %2071 = vmatprep.subr.mxu0 0.0
      %2072 = vmatpush1.msra.mxu0 0.0
      %2073 = vmatprep.subr.mxu0 0.0
      %2074 = vmatpush1.msra.mxu0 0.0
      %2075 = vmatprep.subr.mxu0 0.0
      %2076 = vmatpush1.msra.mxu0 0.0
      %2077 = vmatprep.subr.mxu0 0.0
      %2078 = vmatpush1.msra.mxu0 0.0
      %2079 = vmatprep.subr.mxu0 0.0
      %2080 = vmatpush1.msra.mxu0 0.0
      %2081 = vmatprep.subr.mxu0 0.0
      %2082 = vmatpush1.msra.mxu0 0.0
      %2083 = vmatprep.subr.mxu0 0.0
      %2084 = vmatpush1.msra.mxu0 0.0
      %2085 = vmatprep.subr.mxu0 0.0
      %2086 = vmatpush1.msra.mxu0 0.0
      %2087 = vmatprep.subr.mxu0 0.0
      %2088 = vmatpush1.msra.mxu0 0.0
      %2089 = vmatprep.subr.mxu0 0.0
      %2090 = vmatpush1.msra.mxu0 0.0
      %2091 = vmatprep.subr.mxu0 0.0
      %2092 = vmatpush1.msra.mxu0 0.0
      %2093 = vmatprep.subr.mxu0 0.0
      %2094 = vmatpush1.msra.mxu0 0.0
      %2095 = vmatprep.subr.mxu0 0.0
      %2096 = vmatpush1.msra.mxu0 0.0
      %2097 = vmatprep.subr.mxu0 0.0
      %2098 = vmatpush1.msra.mxu0 0.0
      %2099 = vmatprep.subr.mxu0 0.0
      %2100 = vmatpush1.msra.mxu0 0.0
      %2101 = vmatprep.subr.mxu0 0.0
      %2102 = vmatpush1.msra.mxu0 0.0
      %2103 = vmatprep.subr.mxu0 0.0
      %2104 = vmatpush1.msra.mxu0 0.0
      %2105 = vmatprep.subr.mxu0 0.0
      %2106 = vmatpush1.msra.mxu0 0.0
      %2107 = vmatprep.subr.mxu0 0.0
      %2108 = vmatpush1.msra.mxu0 0.0
      %2109 = vmatprep.subr.mxu0 0.0
      %2110 = vmatpush1.msra.mxu0 0.0
      %2111 = vmatprep.subr.mxu0 0.0
      %2112 = vmatpush1.msra.mxu0 0.0
      %2113 = vmatprep.subr.mxu0 0.0
      %2114 = vmatpush1.msra.mxu0 0.0
      %2115 = vmatprep.subr.mxu0 0.0
      %2116 = vmatpush1.msra.mxu0 0.0
      %2117 = vmatprep.subr.mxu0 0.0
      %2118 = vmatpush1.msra.mxu0 0.0
      %2119 = vmatprep.subr.mxu0 0.0
      %2120 = vmatpush1.msra.mxu0 0.0
      %2121 = vmatprep.subr.mxu0 0.0
      %2122 = vmatpush1.msra.mxu0 0.0
      %2123 = vmatprep.subr.mxu0 0.0
      %2124 = vmatpush1.msra.mxu0 0.0
      %2125 = vmatprep.mubr.f32.mxu0 0.0
      %2126 = vmatmul.mubr.f32.gmra.mrb[0].mxu0 %v1155
      %v2127 = vpop.f32.mrb[0].mxu0
      %v2128 = vadd.f32 0.0, %v2127
      %v2129 = vpop.f32.mrb[0].mxu0
      %2130 = vmatprep.mubr.f32.mxu0 0.0
      %2131 = vmatmul.mubr.f32.gmra.mrb[0].mxu0 %v1157
      %v2132 = vpop.f32.mrb[0].mxu0
      %v2133 = vadd.f32 0.0, %v2132
      %v2134 = vpop.f32.mrb[0].mxu0
      %2135 = vmatprep.mubr.f32.mxu0 0.0
      %2136 = vmatmul.mubr.f32.gmra.mrb[0].mxu0 %v1159
      %v2137 = vpop.f32.mrb[0].mxu0
      %v2138 = vadd.f32 0.0, %v2137
      %v2139 = vpop.f32.mrb[0].mxu0
      %2140 = vmatprep.mubr.f32.mxu0 0.0
      %2141 = vmatmul.mubr.f32.gmra.mrb[0].mxu0 %v1161
      %v2142 = vpop.f32.mrb[0].mxu0
      %v2143 = vadd.f32 0.0, %v2142
      %v2144 = vpop.f32.mrb[0].mxu0
      %2145 = vmatprep.mubr.f32.mxu0 0.0
      %2146 = vmatmul.mubr.f32.gmra.mrb[0].mxu0 %v1163
      %v2147 = vpop.f32.mrb[0].mxu0
      %v2148 = vadd.f32 0.0, %v2147
      %v2149 = vpop.f32.mrb[0].mxu0
      %2150 = vmatprep.mubr.f32.mxu0 0.0
      %2151 = vmatmul.mubr.f32.gmra.mrb[0].mxu0 %v1165
      %v2152 = vpop.f32.mrb[0].mxu0
      %v2153 = vadd.f32 0.0, %v2152
      %v2154 = vpop.f32.mrb[0].mxu0
      %2155 = vmatprep.mubr.f32.mxu0 0.0
      %2156 = vmatmul.mubr.f32.gmra.mrb[0].mxu0 %v1167
      %v2157 = vpop.f32.mrb[0].mxu0
      %v2158 = vadd.f32 0.0, %v2157
      %v2159 = vpop.f32.mrb[0].mxu0
      %2160 = vmatprep.mubr.f32.mxu0 0.0
      %2161 = vmatmul.mubr.f32.gmra.mrb[0].mxu0 %v1169
      %v2162 = vpop.f32.mrb[0].mxu0
      %v2163 = vadd.f32 0.0, %v2162
      %v2164 = vpop.f32.mrb[0].mxu0
      %2165 = vmatprep.mubr.f32.mxu0 0.0
      %2166 = vmatmul.mubr.f32.gmra.mrb[0].mxu0 %v1171
      %v2167 = vpop.f32.mrb[0].mxu0
      %v2168 = vadd.f32 0.0, %v2167
      %v2169 = vpop.f32.mrb[0].mxu0
      %2170 = vmatprep.mubr.f32.mxu0 0.0
      %2171 = vmatmul.mubr.f32.gmra.mrb[0].mxu0 %v1173
      %v2172 = vpop.f32.mrb[0].mxu0
      %v2173 = vadd.f32 0.0, %v2172
      %v2174 = vpop.f32.mrb[0].mxu0
      %2175 = vmatprep.mubr.f32.mxu0 0.0
      %2176 = vmatmul.mubr.f32.gmra.mrb[0].mxu0 %v1175
      %v2177 = vpop.f32.mrb[0].mxu0
      %v2178 = vadd.f32 0.0, %v2177
      %v2179 = vpop.f32.mrb[0].mxu0
      %2180 = vmatprep.mubr.f32.mxu0 0.0
      %2181 = vmatmul.mubr.f32.gmra.mrb[0].mxu0 %v1177
      %v2182 = vpop.f32.mrb[0].mxu0
      %v2183 = vadd.f32 0.0, %v2182
      %v2184 = vpop.f32.mrb[0].mxu0
      %2185 = vmatprep.mubr.f32.mxu0 0.0
      %2186 = vmatmul.mubr.f32.gmra.mrb[0].mxu0 %v1179
      %v2187 = vpop.f32.mrb[0].mxu0
      %v2188 = vadd.f32 0.0, %v2187
      %v2189 = vpop.f32.mrb[0].mxu0
      %2190 = vmatprep.mubr.f32.mxu0 0.0
      %2191 = vmatmul.mubr.f32.gmra.mrb[0].mxu0 %v1181
      %v2192 = vpop.f32.mrb[0].mxu0
      %v2193 = vadd.f32 0.0, %v2192
      %v2194 = vpop.f32.mrb[0].mxu0
      %2195 = vmatprep.mubr.f32.mxu0 0.0
      %2196 = vmatmul.mubr.f32.gmra.mrb[0].mxu0 %v1183
      %v2197 = vpop.f32.mrb[0].mxu0
      %v2198 = vadd.f32 0.0, %v2197
      %v2199 = vpop.f32.mrb[0].mxu0
      %2200 = vmatprep.mubr.f32.mxu0 0.0
      %2201 = vmatmul.mubr.f32.gmra.mrb[0].mxu0 %v1185
      %v2202 = vpop.f32.mrb[0].mxu0
      %v2203 = vadd.f32 0.0, %v2202
      %v2204 = vpop.f32.mrb[0].mxu0
      %2205 = vmatprep.mubr.f32.mxu0 0.0
      %2206 = vmatmul.mubr.f32.gmra.mrb[0].mxu0 %v1187
      %v2207 = vpop.f32.mrb[0].mxu0
      %v2208 = vadd.f32 0.0, %v2207
      %v2209 = vpop.f32.mrb[0].mxu0
      %2210 = vmatprep.mubr.f32.mxu0 0.0
      %2211 = vmatmul.mubr.f32.gmra.mrb[0].mxu0 %v1189
      %v2212 = vpop.f32.mrb[0].mxu0
      %v2213 = vadd.f32 0.0, %v2212
      %v2214 = vpop.f32.mrb[0].mxu0
      %2215 = vmatprep.mubr.f32.mxu0 0.0
      %2216 = vmatmul.mubr.f32.gmra.mrb[0].mxu0 %v1191
      %v2217 = vpop.f32.mrb[0].mxu0
      %v2218 = vadd.f32 0.0, %v2217
      %v2219 = vpop.f32.mrb[0].mxu0
      %2220 = vmatprep.mubr.f32.mxu0 0.0
      %2221 = vmatmul.mubr.f32.gmra.mrb[0].mxu0 %v1193
      %v2222 = vpop.f32.mrb[0].mxu0
      %v2223 = vadd.f32 0.0, %v2222
      %v2224 = vpop.f32.mrb[0].mxu0
      %2225 = vmatprep.mubr.f32.mxu0 0.0
      %2226 = vmatmul.mubr.f32.gmra.mrb[0].mxu0 %v1195
      %v2227 = vpop.f32.mrb[0].mxu0
      %v2228 = vadd.f32 0.0, %v2227
      %v2229 = vpop.f32.mrb[0].mxu0
      %2230 = vmatprep.mubr.f32.mxu0 0.0
      %2231 = vmatmul.mubr.f32.gmra.mrb[0].mxu0 %v1197
      %v2232 = vpop.f32.mrb[0].mxu0
      %v2233 = vadd.f32 0.0, %v2232
      %v2234 = vpop.f32.mrb[0].mxu0
      %2235 = vmatprep.mubr.f32.mxu0 0.0
      %2236 = vmatmul.mubr.f32.gmra.mrb[0].mxu0 %v1199
      %v2237 = vpop.f32.mrb[0].mxu0
      %v2238 = vadd.f32 0.0, %v2237
      %v2239 = vpop.f32.mrb[0].mxu0
      %2240 = vmatprep.mubr.f32.mxu0 0.0
      %2241 = vmatmul.mubr.f32.gmra.mrb[0].mxu0 %v1201
      %v2242 = vpop.f32.mrb[0].mxu0
      %v2243 = vadd.f32 0.0, %v2242
      %v2244 = vpop.f32.mrb[0].mxu0
      %2245 = vmatprep.mubr.f32.mxu0 0.0
      %2246 = vmatmul.mubr.f32.gmra.mrb[0].mxu0 %v1203
      %v2247 = vpop.f32.mrb[0].mxu0
      %v2248 = vadd.f32 0.0, %v2247
      %v2249 = vpop.f32.mrb[0].mxu0
      %2250 = vmatprep.mubr.f32.mxu0 0.0
      %2251 = vmatmul.mubr.f32.gmra.mrb[0].mxu0 %v1205
      %v2252 = vpop.f32.mrb[0].mxu0
      %v2253 = vadd.f32 0.0, %v2252
      %v2254 = vpop.f32.mrb[0].mxu0
      %2255 = vmatprep.mubr.f32.mxu0 0.0
      %2256 = vmatmul.mubr.f32.gmra.mrb[0].mxu0 %v1207
      %v2257 = vpop.f32.mrb[0].mxu0
      %v2258 = vadd.f32 0.0, %v2257
      %v2259 = vpop.f32.mrb[0].mxu0
      %2260 = vmatprep.mubr.f32.mxu0 0.0
      %2261 = vmatmul.mubr.f32.gmra.mrb[0].mxu0 %v1209
      %v2262 = vpop.f32.mrb[0].mxu0
      %v2263 = vadd.f32 0.0, %v2262
      %v2264 = vpop.f32.mrb[0].mxu0
      %2265 = vmatprep.mubr.f32.mxu0 0.0
      %2266 = vmatmul.mubr.f32.gmra.mrb[0].mxu0 %v1211
      %v2267 = vpop.f32.mrb[0].mxu0
      %v2268 = vadd.f32 0.0, %v2267
      %v2269 = vpop.f32.mrb[0].mxu0
      %2270 = vmatprep.mubr.f32.mxu0 0.0
      %2271 = vmatmul.mubr.f32.gmra.mrb[0].mxu0 %v1213
      %v2272 = vpop.f32.mrb[0].mxu0
      %v2273 = vadd.f32 0.0, %v2272
      %v2274 = vpop.f32.mrb[0].mxu0
      %2275 = vmatprep.mubr.f32.mxu0 0.0
      %2276 = vmatmul.mubr.f32.gmra.mrb[0].mxu0 %v2054
      %v2277 = vpop.f32.mrb[0].mxu0
      %v2278 = vadd.f32 0.0, %v2277
      %v2279 = vpop.f32.mrb[0].mxu0
      %2280 = vmatprep.mubr.f32.mxu0 0.0
      %2281 = vmatmul.mubr.f32.gmra.mrb[0].mxu0 %v2056
      %v2282 = vpop.f32.mrb[0].mxu0
      %v2283 = vadd.f32 0.0, %v2282
      %v2284 = vpop.f32.mrb[0].mxu0
      %2285 = vdwg.mxu0
      %v2286 = vadd.f32 %v2015, %v2128
      %v2287 = vadd.f32 %v2016, %v2133
      %v2288 = vadd.f32 %v2017, %v2138
      %v2289 = vadd.f32 %v2018, %v2143
      %v2290 = vadd.f32 %v2019, %v2148
      %v2291 = vadd.f32 %v2020, %v2153
      %v2292 = vadd.f32 %v2021, %v2158
      %v2293 = vadd.f32 %v2022, %v2163
      %v2294 = vadd.f32 %v2023, %v2168
      %v2295 = vadd.f32 %v2024, %v2173
      %v2296 = vadd.f32 %v2025, %v2178
      %v2297 = vadd.f32 %v2026, %v2183
      %v2298 = vadd.f32 %v2027, %v2188
      %v2299 = vadd.f32 %v2028, %v2193
      %v2300 = vadd.f32 %v2029, %v2198
      %v2301 = vadd.f32 %v2030, %v2203
      %v2302 = vadd.f32 %v2031, %v2208
      %v2303 = vadd.f32 %v2032, %v2213
      %v2304 = vadd.f32 %v2033, %v2218
      %v2305 = vadd.f32 %v2034, %v2223
      %v2306 = vadd.f32 %v2035, %v2228
      %v2307 = vadd.f32 %v2036, %v2233
      %v2308 = vadd.f32 %v2037, %v2238
      %v2309 = vadd.f32 %v2038, %v2243
      %v2310 = vadd.f32 %v2039, %v2248
      %v2311 = vadd.f32 %v2040, %v2253
      %v2312 = vadd.f32 %v2041, %v2258
      %v2313 = vadd.f32 %v2042, %v2263
      %v2314 = vadd.f32 %v2043, %v2268
      %v2315 = vadd.f32 %v2044, %v2273
      %v2316 = vadd.f32 %v2045, %v2278
      %v2317 = vadd.f32 %v2046, %v2283
      %s2318 = scalar_lea.vmem %s1, 24
      %v2319 = vld [vmem:[%s2318] sm:$0xf]
      %v2321 = vsel %vm287, %v276, 0
      %v2324 = vsel %vm287, %v277, 0
      %v2327 = vsel %vm384, %v2319, 0
      %2329 = vmatprep.subr.mxu0 0.0
      %2330 = vmatpush1.msra.mxu0 %v2327
      %2331 = vmatprep.subr.mxu0 0.0
      %2332 = vmatpush1.msra.mxu0 0.0
      %2333 = vmatprep.subr.mxu0 0.0
      %2334 = vmatpush1.msra.mxu0 0.0
      %2335 = vmatprep.subr.mxu0 0.0
      %2336 = vmatpush1.msra.mxu0 0.0
      %2337 = vmatprep.subr.mxu0 0.0
      %2338 = vmatpush1.msra.mxu0 0.0
      %2339 = vmatprep.subr.mxu0 0.0
      %2340 = vmatpush1.msra.mxu0 0.0
      %2341 = vmatprep.subr.mxu0 0.0
      %2342 = vmatpush1.msra.mxu0 0.0
      %2343 = vmatprep.subr.mxu0 0.0
      %2344 = vmatpush1.msra.mxu0 0.0
      %2345 = vmatprep.subr.mxu0 0.0
      %2346 = vmatpush1.msra.mxu0 0.0
      %2347 = vmatprep.subr.mxu0 0.0
      %2348 = vmatpush1.msra.mxu0 0.0
      %2349 = vmatprep.subr.mxu0 0.0
      %2350 = vmatpush1.msra.mxu0 0.0
      %2351 = vmatprep.subr.mxu0 0.0
      %2352 = vmatpush1.msra.mxu0 0.0
      %2353 = vmatprep.subr.mxu0 0.0
      %2354 = vmatpush1.msra.mxu0 0.0
      %2355 = vmatprep.subr.mxu0 0.0
      %2356 = vmatpush1.msra.mxu0 0.0
      %2357 = vmatprep.subr.mxu0 0.0
      %2358 = vmatpush1.msra.mxu0 0.0
      %2359 = vmatprep.subr.mxu0 0.0
      %2360 = vmatpush1.msra.mxu0 0.0
      %2361 = vmatprep.subr.mxu0 0.0
      %2362 = vmatpush1.msra.mxu0 0.0
      %2363 = vmatprep.subr.mxu0 0.0
      %2364 = vmatpush1.msra.mxu0 0.0
      %2365 = vmatprep.subr.mxu0 0.0
      %2366 = vmatpush1.msra.mxu0 0.0
      %2367 = vmatprep.subr.mxu0 0.0
      %2368 = vmatpush1.msra.mxu0 0.0
      %2369 = vmatprep.subr.mxu0 0.0
      %2370 = vmatpush1.msra.mxu0 0.0
      %2371 = vmatprep.subr.mxu0 0.0
      %2372 = vmatpush1.msra.mxu0 0.0
      %2373 = vmatprep.subr.mxu0 0.0
      %2374 = vmatpush1.msra.mxu0 0.0
      %2375 = vmatprep.subr.mxu0 0.0
      %2376 = vmatpush1.msra.mxu0 0.0
      %2377 = vmatprep.subr.mxu0 0.0
      %2378 = vmatpush1.msra.mxu0 0.0
      %2379 = vmatprep.subr.mxu0 0.0
      %2380 = vmatpush1.msra.mxu0 0.0
      %2381 = vmatprep.subr.mxu0 0.0
      %2382 = vmatpush1.msra.mxu0 0.0
      %2383 = vmatprep.subr.mxu0 0.0
      %2384 = vmatpush1.msra.mxu0 0.0
      %2385 = vmatprep.subr.mxu0 0.0
      %2386 = vmatpush1.msra.mxu0 0.0
      %2387 = vmatprep.subr.mxu0 0.0
      %2388 = vmatpush1.msra.mxu0 0.0
      %2389 = vmatprep.subr.mxu0 0.0
      %2390 = vmatpush1.msra.mxu0 0.0
      %2391 = vmatprep.subr.mxu0 0.0
      %2392 = vmatpush1.msra.mxu0 0.0
      %2393 = vmatprep.mubr.f32.mxu0 0.0
      %2394 = vmatmul.mubr.f32.gmra.mrb[0].mxu0 %v301
      %v2395 = vpop.f32.mrb[0].mxu0
      %v2396 = vadd.f32 0.0, %v2395
      %v2397 = vpop.f32.mrb[0].mxu0
      %2398 = vmatprep.mubr.f32.mxu0 0.0
      %2399 = vmatmul.mubr.f32.gmra.mrb[0].mxu0 %v304
      %v2400 = vpop.f32.mrb[0].mxu0
      %v2401 = vadd.f32 0.0, %v2400
      %v2402 = vpop.f32.mrb[0].mxu0
      %2403 = vmatprep.mubr.f32.mxu0 0.0
      %2404 = vmatmul.mubr.f32.gmra.mrb[0].mxu0 %v307
      %v2405 = vpop.f32.mrb[0].mxu0
      %v2406 = vadd.f32 0.0, %v2405
      %v2407 = vpop.f32.mrb[0].mxu0
      %2408 = vmatprep.mubr.f32.mxu0 0.0
      %2409 = vmatmul.mubr.f32.gmra.mrb[0].mxu0 %v310
      %v2410 = vpop.f32.mrb[0].mxu0
      %v2411 = vadd.f32 0.0, %v2410
      %v2412 = vpop.f32.mrb[0].mxu0
      %2413 = vmatprep.mubr.f32.mxu0 0.0
      %2414 = vmatmul.mubr.f32.gmra.mrb[0].mxu0 %v313
      %v2415 = vpop.f32.mrb[0].mxu0
      %v2416 = vadd.f32 0.0, %v2415
      %v2417 = vpop.f32.mrb[0].mxu0
      %2418 = vmatprep.mubr.f32.mxu0 0.0
      %2419 = vmatmul.mubr.f32.gmra.mrb[0].mxu0 %v316
      %v2420 = vpop.f32.mrb[0].mxu0
      %v2421 = vadd.f32 0.0, %v2420
      %v2422 = vpop.f32.mrb[0].mxu0
      %2423 = vmatprep.mubr.f32.mxu0 0.0
      %2424 = vmatmul.mubr.f32.gmra.mrb[0].mxu0 %v319
      %v2425 = vpop.f32.mrb[0].mxu0
      %v2426 = vadd.f32 0.0, %v2425
      %v2427 = vpop.f32.mrb[0].mxu0
      %2428 = vmatprep.mubr.f32.mxu0 0.0
      %2429 = vmatmul.mubr.f32.gmra.mrb[0].mxu0 %v322
      %v2430 = vpop.f32.mrb[0].mxu0
      %v2431 = vadd.f32 0.0, %v2430
      %v2432 = vpop.f32.mrb[0].mxu0
      %2433 = vmatprep.mubr.f32.mxu0 0.0
      %2434 = vmatmul.mubr.f32.gmra.mrb[0].mxu0 %v325
      %v2435 = vpop.f32.mrb[0].mxu0
      %v2436 = vadd.f32 0.0, %v2435
      %v2437 = vpop.f32.mrb[0].mxu0
      %2438 = vmatprep.mubr.f32.mxu0 0.0
      %2439 = vmatmul.mubr.f32.gmra.mrb[0].mxu0 %v328
      %v2440 = vpop.f32.mrb[0].mxu0
      %v2441 = vadd.f32 0.0, %v2440
      %v2442 = vpop.f32.mrb[0].mxu0
      %2443 = vmatprep.mubr.f32.mxu0 0.0
      %2444 = vmatmul.mubr.f32.gmra.mrb[0].mxu0 %v331
      %v2445 = vpop.f32.mrb[0].mxu0
      %v2446 = vadd.f32 0.0, %v2445
      %v2447 = vpop.f32.mrb[0].mxu0
      %2448 = vmatprep.mubr.f32.mxu0 0.0
      %2449 = vmatmul.mubr.f32.gmra.mrb[0].mxu0 %v334
      %v2450 = vpop.f32.mrb[0].mxu0
      %v2451 = vadd.f32 0.0, %v2450
      %v2452 = vpop.f32.mrb[0].mxu0
      %2453 = vmatprep.mubr.f32.mxu0 0.0
      %2454 = vmatmul.mubr.f32.gmra.mrb[0].mxu0 %v337
      %v2455 = vpop.f32.mrb[0].mxu0
      %v2456 = vadd.f32 0.0, %v2455
      %v2457 = vpop.f32.mrb[0].mxu0
      %2458 = vmatprep.mubr.f32.mxu0 0.0
      %2459 = vmatmul.mubr.f32.gmra.mrb[0].mxu0 %v340
      %v2460 = vpop.f32.mrb[0].mxu0
      %v2461 = vadd.f32 0.0, %v2460
      %v2462 = vpop.f32.mrb[0].mxu0
      %2463 = vmatprep.mubr.f32.mxu0 0.0
      %2464 = vmatmul.mubr.f32.gmra.mrb[0].mxu0 %v343
      %v2465 = vpop.f32.mrb[0].mxu0
      %v2466 = vadd.f32 0.0, %v2465
      %v2467 = vpop.f32.mrb[0].mxu0
      %2468 = vmatprep.mubr.f32.mxu0 0.0
      %2469 = vmatmul.mubr.f32.gmra.mrb[0].mxu0 %v346
      %v2470 = vpop.f32.mrb[0].mxu0
      %v2471 = vadd.f32 0.0, %v2470
      %v2472 = vpop.f32.mrb[0].mxu0
      %2473 = vmatprep.mubr.f32.mxu0 0.0
      %2474 = vmatmul.mubr.f32.gmra.mrb[0].mxu0 %v349
      %v2475 = vpop.f32.mrb[0].mxu0
      %v2476 = vadd.f32 0.0, %v2475
      %v2477 = vpop.f32.mrb[0].mxu0
      %2478 = vmatprep.mubr.f32.mxu0 0.0
      %2479 = vmatmul.mubr.f32.gmra.mrb[0].mxu0 %v352
      %v2480 = vpop.f32.mrb[0].mxu0
      %v2481 = vadd.f32 0.0, %v2480
      %v2482 = vpop.f32.mrb[0].mxu0
      %2483 = vmatprep.mubr.f32.mxu0 0.0
      %2484 = vmatmul.mubr.f32.gmra.mrb[0].mxu0 %v355
      %v2485 = vpop.f32.mrb[0].mxu0
      %v2486 = vadd.f32 0.0, %v2485
      %v2487 = vpop.f32.mrb[0].mxu0
      %2488 = vmatprep.mubr.f32.mxu0 0.0
      %2489 = vmatmul.mubr.f32.gmra.mrb[0].mxu0 %v358
      %v2490 = vpop.f32.mrb[0].mxu0
      %v2491 = vadd.f32 0.0, %v2490
      %v2492 = vpop.f32.mrb[0].mxu0
      %2493 = vmatprep.mubr.f32.mxu0 0.0
      %2494 = vmatmul.mubr.f32.gmra.mrb[0].mxu0 %v361
      %v2495 = vpop.f32.mrb[0].mxu0
      %v2496 = vadd.f32 0.0, %v2495
      %v2497 = vpop.f32.mrb[0].mxu0
      %2498 = vmatprep.mubr.f32.mxu0 0.0
      %2499 = vmatmul.mubr.f32.gmra.mrb[0].mxu0 %v364
      %v2500 = vpop.f32.mrb[0].mxu0
      %v2501 = vadd.f32 0.0, %v2500
      %v2502 = vpop.f32.mrb[0].mxu0
      %2503 = vmatprep.mubr.f32.mxu0 0.0
      %2504 = vmatmul.mubr.f32.gmra.mrb[0].mxu0 %v367
      %v2505 = vpop.f32.mrb[0].mxu0
      %v2506 = vadd.f32 0.0, %v2505
      %v2507 = vpop.f32.mrb[0].mxu0
      %2508 = vmatprep.mubr.f32.mxu0 0.0
      %2509 = vmatmul.mubr.f32.gmra.mrb[0].mxu0 %v370
      %v2510 = vpop.f32.mrb[0].mxu0
      %v2511 = vadd.f32 0.0, %v2510
      %v2512 = vpop.f32.mrb[0].mxu0
      %2513 = vmatprep.mubr.f32.mxu0 0.0
      %2514 = vmatmul.mubr.f32.gmra.mrb[0].mxu0 %v373
      %v2515 = vpop.f32.mrb[0].mxu0
      %v2516 = vadd.f32 0.0, %v2515
      %v2517 = vpop.f32.mrb[0].mxu0
      %2518 = vmatprep.mubr.f32.mxu0 0.0
      %2519 = vmatmul.mubr.f32.gmra.mrb[0].mxu0 %v376
      %v2520 = vpop.f32.mrb[0].mxu0
      %v2521 = vadd.f32 0.0, %v2520
      %v2522 = vpop.f32.mrb[0].mxu0
      %2523 = vmatprep.mubr.f32.mxu0 0.0
      %2524 = vmatmul.mubr.f32.gmra.mrb[0].mxu0 %v379
      %v2525 = vpop.f32.mrb[0].mxu0
      %v2526 = vadd.f32 0.0, %v2525
      %v2527 = vpop.f32.mrb[0].mxu0
      %2528 = vmatprep.mubr.f32.mxu0 0.0
      %2529 = vmatmul.mubr.f32.gmra.mrb[0].mxu0 %v382
      %v2530 = vpop.f32.mrb[0].mxu0
      %v2531 = vadd.f32 0.0, %v2530
      %v2532 = vpop.f32.mrb[0].mxu0
      %2533 = vmatprep.mubr.f32.mxu0 0.0
      %2534 = vmatmul.mubr.f32.gmra.mrb[0].mxu0 %v1478
      %v2535 = vpop.f32.mrb[0].mxu0
      %v2536 = vadd.f32 0.0, %v2535
      %v2537 = vpop.f32.mrb[0].mxu0
      %2538 = vmatprep.mubr.f32.mxu0 0.0
      %2539 = vmatmul.mubr.f32.gmra.mrb[0].mxu0 %v1481
      %v2540 = vpop.f32.mrb[0].mxu0
      %v2541 = vadd.f32 0.0, %v2540
      %v2542 = vpop.f32.mrb[0].mxu0
      %2543 = vmatprep.mubr.f32.mxu0 0.0
      %2544 = vmatmul.mubr.f32.gmra.mrb[0].mxu0 %v2321
      %v2545 = vpop.f32.mrb[0].mxu0
      %v2546 = vadd.f32 0.0, %v2545
      %v2547 = vpop.f32.mrb[0].mxu0
      %2548 = vmatprep.mubr.f32.mxu0 0.0
      %2549 = vmatmul.mubr.f32.gmra.mrb[0].mxu0 %v2324
      %v2550 = vpop.f32.mrb[0].mxu0
      %v2551 = vadd.f32 0.0, %v2550
      %v2552 = vpop.f32.mrb[0].mxu0
      %2553 = vdwg.mxu0
      %v2554 = vadd.f32 %v2286, %v2396
      %v2555 = vadd.f32 %v2287, %v2401
      %v2556 = vadd.f32 %v2288, %v2406
      %v2557 = vadd.f32 %v2289, %v2411
      %v2558 = vadd.f32 %v2290, %v2416
      %v2559 = vadd.f32 %v2291, %v2421
      %v2560 = vadd.f32 %v2292, %v2426
      %v2561 = vadd.f32 %v2293, %v2431
      %v2562 = vadd.f32 %v2294, %v2436
      %v2563 = vadd.f32 %v2295, %v2441
      %v2564 = vadd.f32 %v2296, %v2446
      %v2565 = vadd.f32 %v2297, %v2451
      %v2566 = vadd.f32 %v2298, %v2456
      %v2567 = vadd.f32 %v2299, %v2461
      %v2568 = vadd.f32 %v2300, %v2466
      %v2569 = vadd.f32 %v2301, %v2471
      %v2570 = vadd.f32 %v2302, %v2476
      %v2571 = vadd.f32 %v2303, %v2481
      %v2572 = vadd.f32 %v2304, %v2486
      %v2573 = vadd.f32 %v2305, %v2491
      %v2574 = vadd.f32 %v2306, %v2496
      %v2575 = vadd.f32 %v2307, %v2501
      %v2576 = vadd.f32 %v2308, %v2506
      %v2577 = vadd.f32 %v2309, %v2511
      %v2578 = vadd.f32 %v2310, %v2516
      %v2579 = vadd.f32 %v2311, %v2521
      %v2580 = vadd.f32 %v2312, %v2526
      %v2581 = vadd.f32 %v2313, %v2531
      %v2582 = vadd.f32 %v2314, %v2536
      %v2583 = vadd.f32 %v2315, %v2541
      %v2584 = vadd.f32 %v2316, %v2546
      %v2585 = vadd.f32 %v2317, %v2551
      %v2587 = vrot.slane %v276, 1
      %v2588 = vrot.slane %v277, 1
      %v2589 = vsel %vm661, %v2587, %v2588
      %v2590 = vrot.slane %v278, 1
      %v2591 = vsel %vm661, %v2588, %v2590
      %s2592 = scalar_lea.vmem %s1, 28
      %v2593 = vld [vmem:[%s2592] sm:$0xf]
      %v2594 = vsel %vm287, %v2589, 0
      %v2596 = vsel %vm287, %v2591, 0
      %v2599 = vsel %vm384, %v2593, 0
      %2601 = vmatprep.subr.mxu0 0.0
      %2602 = vmatpush1.msra.mxu0 %v2599
      %2603 = vmatprep.subr.mxu0 0.0
      %2604 = vmatpush1.msra.mxu0 0.0
      %2605 = vmatprep.subr.mxu0 0.0
      %2606 = vmatpush1.msra.mxu0 0.0
      %2607 = vmatprep.subr.mxu0 0.0
      %2608 = vmatpush1.msra.mxu0 0.0
      %2609 = vmatprep.subr.mxu0 0.0
      %2610 = vmatpush1.msra.mxu0 0.0
      %2611 = vmatprep.subr.mxu0 0.0
      %2612 = vmatpush1.msra.mxu0 0.0
      %2613 = vmatprep.subr.mxu0 0.0
      %2614 = vmatpush1.msra.mxu0 0.0
      %2615 = vmatprep.subr.mxu0 0.0
      %2616 = vmatpush1.msra.mxu0 0.0
      %2617 = vmatprep.subr.mxu0 0.0
      %2618 = vmatpush1.msra.mxu0 0.0
      %2619 = vmatprep.subr.mxu0 0.0
      %2620 = vmatpush1.msra.mxu0 0.0
      %2621 = vmatprep.subr.mxu0 0.0
      %2622 = vmatpush1.msra.mxu0 0.0
      %2623 = vmatprep.subr.mxu0 0.0
      %2624 = vmatpush1.msra.mxu0 0.0
      %2625 = vmatprep.subr.mxu0 0.0
      %2626 = vmatpush1.msra.mxu0 0.0
      %2627 = vmatprep.subr.mxu0 0.0
      %2628 = vmatpush1.msra.mxu0 0.0
      %2629 = vmatprep.subr.mxu0 0.0
      %2630 = vmatpush1.msra.mxu0 0.0
      %2631 = vmatprep.subr.mxu0 0.0
      %2632 = vmatpush1.msra.mxu0 0.0
      %2633 = vmatprep.subr.mxu0 0.0
      %2634 = vmatpush1.msra.mxu0 0.0
      %2635 = vmatprep.subr.mxu0 0.0
      %2636 = vmatpush1.msra.mxu0 0.0
      %2637 = vmatprep.subr.mxu0 0.0
      %2638 = vmatpush1.msra.mxu0 0.0
      %2639 = vmatprep.subr.mxu0 0.0
      %2640 = vmatpush1.msra.mxu0 0.0
      %2641 = vmatprep.subr.mxu0 0.0
      %2642 = vmatpush1.msra.mxu0 0.0
      %2643 = vmatprep.subr.mxu0 0.0
      %2644 = vmatpush1.msra.mxu0 0.0
      %2645 = vmatprep.subr.mxu0 0.0
      %2646 = vmatpush1.msra.mxu0 0.0
      %2647 = vmatprep.subr.mxu0 0.0
      %2648 = vmatpush1.msra.mxu0 0.0
      %2649 = vmatprep.subr.mxu0 0.0
      %2650 = vmatpush1.msra.mxu0 0.0
      %2651 = vmatprep.subr.mxu0 0.0
      %2652 = vmatpush1.msra.mxu0 0.0
      %2653 = vmatprep.subr.mxu0 0.0
      %2654 = vmatpush1.msra.mxu0 0.0
      %2655 = vmatprep.subr.mxu0 0.0
      %2656 = vmatpush1.msra.mxu0 0.0
      %2657 = vmatprep.subr.mxu0 0.0
      %2658 = vmatpush1.msra.mxu0 0.0
      %2659 = vmatprep.subr.mxu0 0.0
      %2660 = vmatpush1.msra.mxu0 0.0
      %2661 = vmatprep.subr.mxu0 0.0
      %2662 = vmatpush1.msra.mxu0 0.0
      %2663 = vmatprep.subr.mxu0 0.0
      %2664 = vmatpush1.msra.mxu0 0.0
      %2665 = vmatprep.mubr.f32.mxu0 0.0
      %2666 = vmatmul.mubr.f32.gmra.mrb[0].mxu0 %v752
      %v2667 = vpop.f32.mrb[0].mxu0
      %v2668 = vadd.f32 0.0, %v2667
      %v2669 = vpop.f32.mrb[0].mxu0
      %2670 = vmatprep.mubr.f32.mxu0 0.0
      %2671 = vmatmul.mubr.f32.gmra.mrb[0].mxu0 %v754
      %v2672 = vpop.f32.mrb[0].mxu0
      %v2673 = vadd.f32 0.0, %v2672
      %v2674 = vpop.f32.mrb[0].mxu0
      %2675 = vmatprep.mubr.f32.mxu0 0.0
      %2676 = vmatmul.mubr.f32.gmra.mrb[0].mxu0 %v756
      %v2677 = vpop.f32.mrb[0].mxu0
      %v2678 = vadd.f32 0.0, %v2677
      %v2679 = vpop.f32.mrb[0].mxu0
      %2680 = vmatprep.mubr.f32.mxu0 0.0
      %2681 = vmatmul.mubr.f32.gmra.mrb[0].mxu0 %v758
      %v2682 = vpop.f32.mrb[0].mxu0
      %v2683 = vadd.f32 0.0, %v2682
      %v2684 = vpop.f32.mrb[0].mxu0
      %2685 = vmatprep.mubr.f32.mxu0 0.0
      %2686 = vmatmul.mubr.f32.gmra.mrb[0].mxu0 %v760
      %v2687 = vpop.f32.mrb[0].mxu0
      %v2688 = vadd.f32 0.0, %v2687
      %v2689 = vpop.f32.mrb[0].mxu0
      %2690 = vmatprep.mubr.f32.mxu0 0.0
      %2691 = vmatmul.mubr.f32.gmra.mrb[0].mxu0 %v762
      %v2692 = vpop.f32.mrb[0].mxu0
      %v2693 = vadd.f32 0.0, %v2692
      %v2694 = vpop.f32.mrb[0].mxu0
      %2695 = vmatprep.mubr.f32.mxu0 0.0
      %2696 = vmatmul.mubr.f32.gmra.mrb[0].mxu0 %v764
      %v2697 = vpop.f32.mrb[0].mxu0
      %v2698 = vadd.f32 0.0, %v2697
      %v2699 = vpop.f32.mrb[0].mxu0
      %2700 = vmatprep.mubr.f32.mxu0 0.0
      %2701 = vmatmul.mubr.f32.gmra.mrb[0].mxu0 %v766
      %v2702 = vpop.f32.mrb[0].mxu0
      %v2703 = vadd.f32 0.0, %v2702
      %v2704 = vpop.f32.mrb[0].mxu0
      %2705 = vmatprep.mubr.f32.mxu0 0.0
      %2706 = vmatmul.mubr.f32.gmra.mrb[0].mxu0 %v768
      %v2707 = vpop.f32.mrb[0].mxu0
      %v2708 = vadd.f32 0.0, %v2707
      %v2709 = vpop.f32.mrb[0].mxu0
      %2710 = vmatprep.mubr.f32.mxu0 0.0
      %2711 = vmatmul.mubr.f32.gmra.mrb[0].mxu0 %v770
      %v2712 = vpop.f32.mrb[0].mxu0
      %v2713 = vadd.f32 0.0, %v2712
      %v2714 = vpop.f32.mrb[0].mxu0
      %2715 = vmatprep.mubr.f32.mxu0 0.0
      %2716 = vmatmul.mubr.f32.gmra.mrb[0].mxu0 %v772
      %v2717 = vpop.f32.mrb[0].mxu0
      %v2718 = vadd.f32 0.0, %v2717
      %v2719 = vpop.f32.mrb[0].mxu0
      %2720 = vmatprep.mubr.f32.mxu0 0.0
      %2721 = vmatmul.mubr.f32.gmra.mrb[0].mxu0 %v774
      %v2722 = vpop.f32.mrb[0].mxu0
      %v2723 = vadd.f32 0.0, %v2722
      %v2724 = vpop.f32.mrb[0].mxu0
      %2725 = vmatprep.mubr.f32.mxu0 0.0
      %2726 = vmatmul.mubr.f32.gmra.mrb[0].mxu0 %v776
      %v2727 = vpop.f32.mrb[0].mxu0
      %v2728 = vadd.f32 0.0, %v2727
      %v2729 = vpop.f32.mrb[0].mxu0
      %2730 = vmatprep.mubr.f32.mxu0 0.0
      %2731 = vmatmul.mubr.f32.gmra.mrb[0].mxu0 %v778
      %v2732 = vpop.f32.mrb[0].mxu0
      %v2733 = vadd.f32 0.0, %v2732
      %v2734 = vpop.f32.mrb[0].mxu0
      %2735 = vmatprep.mubr.f32.mxu0 0.0
      %2736 = vmatmul.mubr.f32.gmra.mrb[0].mxu0 %v780
      %v2737 = vpop.f32.mrb[0].mxu0
      %v2738 = vadd.f32 0.0, %v2737
      %v2739 = vpop.f32.mrb[0].mxu0
      %2740 = vmatprep.mubr.f32.mxu0 0.0
      %2741 = vmatmul.mubr.f32.gmra.mrb[0].mxu0 %v782
      %v2742 = vpop.f32.mrb[0].mxu0
      %v2743 = vadd.f32 0.0, %v2742
      %v2744 = vpop.f32.mrb[0].mxu0
      %2745 = vmatprep.mubr.f32.mxu0 0.0
      %2746 = vmatmul.mubr.f32.gmra.mrb[0].mxu0 %v784
      %v2747 = vpop.f32.mrb[0].mxu0
      %v2748 = vadd.f32 0.0, %v2747
      %v2749 = vpop.f32.mrb[0].mxu0
      %2750 = vmatprep.mubr.f32.mxu0 0.0
      %2751 = vmatmul.mubr.f32.gmra.mrb[0].mxu0 %v786
      %v2752 = vpop.f32.mrb[0].mxu0
      %v2753 = vadd.f32 0.0, %v2752
      %v2754 = vpop.f32.mrb[0].mxu0
      %2755 = vmatprep.mubr.f32.mxu0 0.0
      %2756 = vmatmul.mubr.f32.gmra.mrb[0].mxu0 %v788
      %v2757 = vpop.f32.mrb[0].mxu0
      %v2758 = vadd.f32 0.0, %v2757
      %v2759 = vpop.f32.mrb[0].mxu0
      %2760 = vmatprep.mubr.f32.mxu0 0.0
      %2761 = vmatmul.mubr.f32.gmra.mrb[0].mxu0 %v790
      %v2762 = vpop.f32.mrb[0].mxu0
      %v2763 = vadd.f32 0.0, %v2762
      %v2764 = vpop.f32.mrb[0].mxu0
      %2765 = vmatprep.mubr.f32.mxu0 0.0
      %2766 = vmatmul.mubr.f32.gmra.mrb[0].mxu0 %v792
      %v2767 = vpop.f32.mrb[0].mxu0
      %v2768 = vadd.f32 0.0, %v2767
      %v2769 = vpop.f32.mrb[0].mxu0
      %2770 = vmatprep.mubr.f32.mxu0 0.0
      %2771 = vmatmul.mubr.f32.gmra.mrb[0].mxu0 %v794
      %v2772 = vpop.f32.mrb[0].mxu0
      %v2773 = vadd.f32 0.0, %v2772
      %v2774 = vpop.f32.mrb[0].mxu0
      %2775 = vmatprep.mubr.f32.mxu0 0.0
      %2776 = vmatmul.mubr.f32.gmra.mrb[0].mxu0 %v796
      %v2777 = vpop.f32.mrb[0].mxu0
      %v2778 = vadd.f32 0.0, %v2777
      %v2779 = vpop.f32.mrb[0].mxu0
      %2780 = vmatprep.mubr.f32.mxu0 0.0
      %2781 = vmatmul.mubr.f32.gmra.mrb[0].mxu0 %v798
      %v2782 = vpop.f32.mrb[0].mxu0
      %v2783 = vadd.f32 0.0, %v2782
      %v2784 = vpop.f32.mrb[0].mxu0
      %2785 = vmatprep.mubr.f32.mxu0 0.0
      %2786 = vmatmul.mubr.f32.gmra.mrb[0].mxu0 %v800
      %v2787 = vpop.f32.mrb[0].mxu0
      %v2788 = vadd.f32 0.0, %v2787
      %v2789 = vpop.f32.mrb[0].mxu0
      %2790 = vmatprep.mubr.f32.mxu0 0.0
      %2791 = vmatmul.mubr.f32.gmra.mrb[0].mxu0 %v802
      %v2792 = vpop.f32.mrb[0].mxu0
      %v2793 = vadd.f32 0.0, %v2792
      %v2794 = vpop.f32.mrb[0].mxu0
      %2795 = vmatprep.mubr.f32.mxu0 0.0
      %2796 = vmatmul.mubr.f32.gmra.mrb[0].mxu0 %v804
      %v2797 = vpop.f32.mrb[0].mxu0
      %v2798 = vadd.f32 0.0, %v2797
      %v2799 = vpop.f32.mrb[0].mxu0
      %2800 = vmatprep.mubr.f32.mxu0 0.0
      %2801 = vmatmul.mubr.f32.gmra.mrb[0].mxu0 %v806
      %v2802 = vpop.f32.mrb[0].mxu0
      %v2803 = vadd.f32 0.0, %v2802
      %v2804 = vpop.f32.mrb[0].mxu0
      %2805 = vmatprep.mubr.f32.mxu0 0.0
      %2806 = vmatmul.mubr.f32.gmra.mrb[0].mxu0 %v1783
      %v2807 = vpop.f32.mrb[0].mxu0
      %v2808 = vadd.f32 0.0, %v2807
      %v2809 = vpop.f32.mrb[0].mxu0
      %2810 = vmatprep.mubr.f32.mxu0 0.0
      %2811 = vmatmul.mubr.f32.gmra.mrb[0].mxu0 %v1785
      %v2812 = vpop.f32.mrb[0].mxu0
      %v2813 = vadd.f32 0.0, %v2812
      %v2814 = vpop.f32.mrb[0].mxu0
      %2815 = vmatprep.mubr.f32.mxu0 0.0
      %2816 = vmatmul.mubr.f32.gmra.mrb[0].mxu0 %v2594
      %v2817 = vpop.f32.mrb[0].mxu0
      %v2818 = vadd.f32 0.0, %v2817
      %v2819 = vpop.f32.mrb[0].mxu0
      %2820 = vmatprep.mubr.f32.mxu0 0.0
      %2821 = vmatmul.mubr.f32.gmra.mrb[0].mxu0 %v2596
      %v2822 = vpop.f32.mrb[0].mxu0
      %v2823 = vadd.f32 0.0, %v2822
      %v2824 = vpop.f32.mrb[0].mxu0
      %2825 = vdwg.mxu0
      %v2826 = vadd.f32 %v2554, %v2668
      %v2827 = vadd.f32 %v2555, %v2673
      %v2828 = vadd.f32 %v2556, %v2678
      %v2829 = vadd.f32 %v2557, %v2683
      %v2830 = vadd.f32 %v2558, %v2688
      %v2831 = vadd.f32 %v2559, %v2693
      %v2832 = vadd.f32 %v2560, %v2698
      %v2833 = vadd.f32 %v2561, %v2703
      %v2834 = vadd.f32 %v2562, %v2708
      %v2835 = vadd.f32 %v2563, %v2713
      %v2836 = vadd.f32 %v2564, %v2718
      %v2837 = vadd.f32 %v2565, %v2723
      %v2838 = vadd.f32 %v2566, %v2728
      %v2839 = vadd.f32 %v2567, %v2733
      %v2840 = vadd.f32 %v2568, %v2738
      %v2841 = vadd.f32 %v2569, %v2743
      %v2842 = vadd.f32 %v2570, %v2748
      %v2843 = vadd.f32 %v2571, %v2753
      %v2844 = vadd.f32 %v2572, %v2758
      %v2845 = vadd.f32 %v2573, %v2763
      %v2846 = vadd.f32 %v2574, %v2768
      %v2847 = vadd.f32 %v2575, %v2773
      %v2848 = vadd.f32 %v2576, %v2778
      %v2849 = vadd.f32 %v2577, %v2783
      %v2850 = vadd.f32 %v2578, %v2788
      %v2851 = vadd.f32 %v2579, %v2793
      %v2852 = vadd.f32 %v2580, %v2798
      %v2853 = vadd.f32 %v2581, %v2803
      %v2854 = vadd.f32 %v2582, %v2808
      %v2855 = vadd.f32 %v2583, %v2813
      %v2856 = vadd.f32 %v2584, %v2818
      %v2857 = vadd.f32 %v2585, %v2823
      %v2858 = vrot.slane %v276, 2
      %v2859 = vrot.slane %v277, 2
      %v2860 = vsel %vm1068, %v2858, %v2859
      %v2861 = vrot.slane %v278, 2
      %v2862 = vsel %vm1068, %v2859, %v2861
      %s2863 = scalar_lea.vmem %s1, 32
      %v2864 = vld [vmem:[%s2863] sm:$0xf]
      %v2865 = vsel %vm287, %v2860, 0
      %v2867 = vsel %vm287, %v2862, 0
      %v2870 = vsel %vm384, %v2864, 0
      %2872 = vmatprep.subr.mxu0 0.0
      %2873 = vmatpush1.msra.mxu0 %v2870
      %2874 = vmatprep.subr.mxu0 0.0
      %2875 = vmatpush1.msra.mxu0 0.0
      %2876 = vmatprep.subr.mxu0 0.0
      %2877 = vmatpush1.msra.mxu0 0.0
      %2878 = vmatprep.subr.mxu0 0.0
      %2879 = vmatpush1.msra.mxu0 0.0
      %2880 = vmatprep.subr.mxu0 0.0
      %2881 = vmatpush1.msra.mxu0 0.0
      %2882 = vmatprep.subr.mxu0 0.0
      %2883 = vmatpush1.msra.mxu0 0.0
      %2884 = vmatprep.subr.mxu0 0.0
      %2885 = vmatpush1.msra.mxu0 0.0
      %2886 = vmatprep.subr.mxu0 0.0
      %2887 = vmatpush1.msra.mxu0 0.0
      %2888 = vmatprep.subr.mxu0 0.0
      %2889 = vmatpush1.msra.mxu0 0.0
      %2890 = vmatprep.subr.mxu0 0.0
      %2891 = vmatpush1.msra.mxu0 0.0
      %2892 = vmatprep.subr.mxu0 0.0
      %2893 = vmatpush1.msra.mxu0 0.0
      %2894 = vmatprep.subr.mxu0 0.0
      %2895 = vmatpush1.msra.mxu0 0.0
      %2896 = vmatprep.subr.mxu0 0.0
      %2897 = vmatpush1.msra.mxu0 0.0
      %2898 = vmatprep.subr.mxu0 0.0
      %2899 = vmatpush1.msra.mxu0 0.0
      %2900 = vmatprep.subr.mxu0 0.0
      %2901 = vmatpush1.msra.mxu0 0.0
      %2902 = vmatprep.subr.mxu0 0.0
      %2903 = vmatpush1.msra.mxu0 0.0
      %2904 = vmatprep.subr.mxu0 0.0
      %2905 = vmatpush1.msra.mxu0 0.0
      %2906 = vmatprep.subr.mxu0 0.0
      %2907 = vmatpush1.msra.mxu0 0.0
      %2908 = vmatprep.subr.mxu0 0.0
      %2909 = vmatpush1.msra.mxu0 0.0
      %2910 = vmatprep.subr.mxu0 0.0
      %2911 = vmatpush1.msra.mxu0 0.0
      %2912 = vmatprep.subr.mxu0 0.0
      %2913 = vmatpush1.msra.mxu0 0.0
      %2914 = vmatprep.subr.mxu0 0.0
      %2915 = vmatpush1.msra.mxu0 0.0
      %2916 = vmatprep.subr.mxu0 0.0
      %2917 = vmatpush1.msra.mxu0 0.0
      %2918 = vmatprep.subr.mxu0 0.0
      %2919 = vmatpush1.msra.mxu0 0.0
      %2920 = vmatprep.subr.mxu0 0.0
      %2921 = vmatpush1.msra.mxu0 0.0
      %2922 = vmatprep.subr.mxu0 0.0
      %2923 = vmatpush1.msra.mxu0 0.0
      %2924 = vmatprep.subr.mxu0 0.0
      %2925 = vmatpush1.msra.mxu0 0.0
      %2926 = vmatprep.subr.mxu0 0.0
      %2927 = vmatpush1.msra.mxu0 0.0
      %2928 = vmatprep.subr.mxu0 0.0
      %2929 = vmatpush1.msra.mxu0 0.0
      %2930 = vmatprep.subr.mxu0 0.0
      %2931 = vmatpush1.msra.mxu0 0.0
      %2932 = vmatprep.subr.mxu0 0.0
      %2933 = vmatpush1.msra.mxu0 0.0
      %2934 = vmatprep.subr.mxu0 0.0
      %2935 = vmatpush1.msra.mxu0 0.0
      %2936 = vmatprep.mubr.f32.mxu0 0.0
      %2937 = vmatmul.mubr.f32.gmra.mrb[0].mxu0 %v1159
      %v2938 = vpop.f32.mrb[0].mxu0
      %v2939 = vadd.f32 0.0, %v2938
      %v2940 = vpop.f32.mrb[0].mxu0
      %2941 = vmatprep.mubr.f32.mxu0 0.0
      %2942 = vmatmul.mubr.f32.gmra.mrb[0].mxu0 %v1161
      %v2943 = vpop.f32.mrb[0].mxu0
      %v2944 = vadd.f32 0.0, %v2943
      %v2945 = vpop.f32.mrb[0].mxu0
      %2946 = vmatprep.mubr.f32.mxu0 0.0
      %2947 = vmatmul.mubr.f32.gmra.mrb[0].mxu0 %v1163
      %v2948 = vpop.f32.mrb[0].mxu0
      %v2949 = vadd.f32 0.0, %v2948
      %v2950 = vpop.f32.mrb[0].mxu0
      %2951 = vmatprep.mubr.f32.mxu0 0.0
      %2952 = vmatmul.mubr.f32.gmra.mrb[0].mxu0 %v1165
      %v2953 = vpop.f32.mrb[0].mxu0
      %v2954 = vadd.f32 0.0, %v2953
      %v2955 = vpop.f32.mrb[0].mxu0
      %2956 = vmatprep.mubr.f32.mxu0 0.0
      %2957 = vmatmul.mubr.f32.gmra.mrb[0].mxu0 %v1167
      %v2958 = vpop.f32.mrb[0].mxu0
      %v2959 = vadd.f32 0.0, %v2958
      %v2960 = vpop.f32.mrb[0].mxu0
      %2961 = vmatprep.mubr.f32.mxu0 0.0
      %2962 = vmatmul.mubr.f32.gmra.mrb[0].mxu0 %v1169
      %v2963 = vpop.f32.mrb[0].mxu0
      %v2964 = vadd.f32 0.0, %v2963
      %v2965 = vpop.f32.mrb[0].mxu0
      %2966 = vmatprep.mubr.f32.mxu0 0.0
      %2967 = vmatmul.mubr.f32.gmra.mrb[0].mxu0 %v1171
      %v2968 = vpop.f32.mrb[0].mxu0
      %v2969 = vadd.f32 0.0, %v2968
      %v2970 = vpop.f32.mrb[0].mxu0
      %2971 = vmatprep.mubr.f32.mxu0 0.0
      %2972 = vmatmul.mubr.f32.gmra.mrb[0].mxu0 %v1173
      %v2973 = vpop.f32.mrb[0].mxu0
      %v2974 = vadd.f32 0.0, %v2973
      %v2975 = vpop.f32.mrb[0].mxu0
      %2976 = vmatprep.mubr.f32.mxu0 0.0
      %2977 = vmatmul.mubr.f32.gmra.mrb[0].mxu0 %v1175
      %v2978 = vpop.f32.mrb[0].mxu0
      %v2979 = vadd.f32 0.0, %v2978
      %v2980 = vpop.f32.mrb[0].mxu0
      %2981 = vmatprep.mubr.f32.mxu0 0.0
      %2982 = vmatmul.mubr.f32.gmra.mrb[0].mxu0 %v1177
      %v2983 = vpop.f32.mrb[0].mxu0
      %v2984 = vadd.f32 0.0, %v2983
      %v2985 = vpop.f32.mrb[0].mxu0
      %2986 = vmatprep.mubr.f32.mxu0 0.0
      %2987 = vmatmul.mubr.f32.gmra.mrb[0].mxu0 %v1179
      %v2988 = vpop.f32.mrb[0].mxu0
      %v2989 = vadd.f32 0.0, %v2988
      %v2990 = vpop.f32.mrb[0].mxu0
      %2991 = vmatprep.mubr.f32.mxu0 0.0
      %2992 = vmatmul.mubr.f32.gmra.mrb[0].mxu0 %v1181
      %v2993 = vpop.f32.mrb[0].mxu0
      %v2994 = vadd.f32 0.0, %v2993
      %v2995 = vpop.f32.mrb[0].mxu0
      %2996 = vmatprep.mubr.f32.mxu0 0.0
      %2997 = vmatmul.mubr.f32.gmra.mrb[0].mxu0 %v1183
      %v2998 = vpop.f32.mrb[0].mxu0
      %v2999 = vadd.f32 0.0, %v2998
      %v3000 = vpop.f32.mrb[0].mxu0
      %3001 = vmatprep.mubr.f32.mxu0 0.0
      %3002 = vmatmul.mubr.f32.gmra.mrb[0].mxu0 %v1185
      %v3003 = vpop.f32.mrb[0].mxu0
      %v3004 = vadd.f32 0.0, %v3003
      %v3005 = vpop.f32.mrb[0].mxu0
      %3006 = vmatprep.mubr.f32.mxu0 0.0
      %3007 = vmatmul.mubr.f32.gmra.mrb[0].mxu0 %v1187
      %v3008 = vpop.f32.mrb[0].mxu0
      %v3009 = vadd.f32 0.0, %v3008
      %v3010 = vpop.f32.mrb[0].mxu0
      %3011 = vmatprep.mubr.f32.mxu0 0.0
      %3012 = vmatmul.mubr.f32.gmra.mrb[0].mxu0 %v1189
      %v3013 = vpop.f32.mrb[0].mxu0
      %v3014 = vadd.f32 0.0, %v3013
      %v3015 = vpop.f32.mrb[0].mxu0
      %3016 = vmatprep.mubr.f32.mxu0 0.0
      %3017 = vmatmul.mubr.f32.gmra.mrb[0].mxu0 %v1191
      %v3018 = vpop.f32.mrb[0].mxu0
      %v3019 = vadd.f32 0.0, %v3018
      %v3020 = vpop.f32.mrb[0].mxu0
      %3021 = vmatprep.mubr.f32.mxu0 0.0
      %3022 = vmatmul.mubr.f32.gmra.mrb[0].mxu0 %v1193
      %v3023 = vpop.f32.mrb[0].mxu0
      %v3024 = vadd.f32 0.0, %v3023
      %v3025 = vpop.f32.mrb[0].mxu0
      %3026 = vmatprep.mubr.f32.mxu0 0.0
      %3027 = vmatmul.mubr.f32.gmra.mrb[0].mxu0 %v1195
      %v3028 = vpop.f32.mrb[0].mxu0
      %v3029 = vadd.f32 0.0, %v3028
      %v3030 = vpop.f32.mrb[0].mxu0
      %3031 = vmatprep.mubr.f32.mxu0 0.0
      %3032 = vmatmul.mubr.f32.gmra.mrb[0].mxu0 %v1197
      %v3033 = vpop.f32.mrb[0].mxu0
      %v3034 = vadd.f32 0.0, %v3033
      %v3035 = vpop.f32.mrb[0].mxu0
      %3036 = vmatprep.mubr.f32.mxu0 0.0
      %3037 = vmatmul.mubr.f32.gmra.mrb[0].mxu0 %v1199
      %v3038 = vpop.f32.mrb[0].mxu0
      %v3039 = vadd.f32 0.0, %v3038
      %v3040 = vpop.f32.mrb[0].mxu0
      %3041 = vmatprep.mubr.f32.mxu0 0.0
      %3042 = vmatmul.mubr.f32.gmra.mrb[0].mxu0 %v1201
      %v3043 = vpop.f32.mrb[0].mxu0
      %v3044 = vadd.f32 0.0, %v3043
      %v3045 = vpop.f32.mrb[0].mxu0
      %3046 = vmatprep.mubr.f32.mxu0 0.0
      %3047 = vmatmul.mubr.f32.gmra.mrb[0].mxu0 %v1203
      %v3048 = vpop.f32.mrb[0].mxu0
      %v3049 = vadd.f32 0.0, %v3048
      %v3050 = vpop.f32.mrb[0].mxu0
      %3051 = vmatprep.mubr.f32.mxu0 0.0
      %3052 = vmatmul.mubr.f32.gmra.mrb[0].mxu0 %v1205
      %v3053 = vpop.f32.mrb[0].mxu0
      %v3054 = vadd.f32 0.0, %v3053
      %v3055 = vpop.f32.mrb[0].mxu0
      %3056 = vmatprep.mubr.f32.mxu0 0.0
      %3057 = vmatmul.mubr.f32.gmra.mrb[0].mxu0 %v1207
      %v3058 = vpop.f32.mrb[0].mxu0
      %v3059 = vadd.f32 0.0, %v3058
      %v3060 = vpop.f32.mrb[0].mxu0
      %3061 = vmatprep.mubr.f32.mxu0 0.0
      %3062 = vmatmul.mubr.f32.gmra.mrb[0].mxu0 %v1209
      %v3063 = vpop.f32.mrb[0].mxu0
      %v3064 = vadd.f32 0.0, %v3063
      %v3065 = vpop.f32.mrb[0].mxu0
      %3066 = vmatprep.mubr.f32.mxu0 0.0
      %3067 = vmatmul.mubr.f32.gmra.mrb[0].mxu0 %v1211
      %v3068 = vpop.f32.mrb[0].mxu0
      %v3069 = vadd.f32 0.0, %v3068
      %v3070 = vpop.f32.mrb[0].mxu0
      %3071 = vmatprep.mubr.f32.mxu0 0.0
      %3072 = vmatmul.mubr.f32.gmra.mrb[0].mxu0 %v1213
      %v3073 = vpop.f32.mrb[0].mxu0
      %v3074 = vadd.f32 0.0, %v3073
      %v3075 = vpop.f32.mrb[0].mxu0
      %3076 = vmatprep.mubr.f32.mxu0 0.0
      %3077 = vmatmul.mubr.f32.gmra.mrb[0].mxu0 %v2054
      %v3078 = vpop.f32.mrb[0].mxu0
      %v3079 = vadd.f32 0.0, %v3078
      %v3080 = vpop.f32.mrb[0].mxu0
      %3081 = vmatprep.mubr.f32.mxu0 0.0
      %3082 = vmatmul.mubr.f32.gmra.mrb[0].mxu0 %v2056
      %v3083 = vpop.f32.mrb[0].mxu0
      %v3084 = vadd.f32 0.0, %v3083
      %v3085 = vpop.f32.mrb[0].mxu0
      %3086 = vmatprep.mubr.f32.mxu0 0.0
      %3087 = vmatmul.mubr.f32.gmra.mrb[0].mxu0 %v2865
      %v3088 = vpop.f32.mrb[0].mxu0
      %v3089 = vadd.f32 0.0, %v3088
      %v3090 = vpop.f32.mrb[0].mxu0
      %3091 = vmatprep.mubr.f32.mxu0 0.0
      %3092 = vmatmul.mubr.f32.gmra.mrb[0].mxu0 %v2867
      %v3093 = vpop.f32.mrb[0].mxu0
      %v3094 = vadd.f32 0.0, %v3093
      %v3095 = vpop.f32.mrb[0].mxu0
      %3096 = vdwg.mxu0
      %v3097 = vadd.f32 %v2826, %v2939
      %v3098 = vadd.f32 %v2827, %v2944
      %v3099 = vadd.f32 %v2828, %v2949
      %v3100 = vadd.f32 %v2829, %v2954
      %v3101 = vadd.f32 %v2830, %v2959
      %v3102 = vadd.f32 %v2831, %v2964
      %v3103 = vadd.f32 %v2832, %v2969
      %v3104 = vadd.f32 %v2833, %v2974
      %v3105 = vadd.f32 %v2834, %v2979
      %v3106 = vadd.f32 %v2835, %v2984
      %v3107 = vadd.f32 %v2836, %v2989
      %v3108 = vadd.f32 %v2837, %v2994
      %v3109 = vadd.f32 %v2838, %v2999
      %v3110 = vadd.f32 %v2839, %v3004
      %v3111 = vadd.f32 %v2840, %v3009
      %v3112 = vadd.f32 %v2841, %v3014
      %v3113 = vadd.f32 %v2842, %v3019
      %v3114 = vadd.f32 %v2843, %v3024
      %v3115 = vadd.f32 %v2844, %v3029
      %v3116 = vadd.f32 %v2845, %v3034
      %v3117 = vadd.f32 %v2846, %v3039
      %v3118 = vadd.f32 %v2847, %v3044
      %v3119 = vadd.f32 %v2848, %v3049
      %v3120 = vadd.f32 %v2849, %v3054
      %v3121 = vadd.f32 %v2850, %v3059
      %v3122 = vadd.f32 %v2851, %v3064
      %v3123 = vadd.f32 %v2852, %v3069
      %v3124 = vadd.f32 %v2853, %v3074
      %v3125 = vadd.f32 %v2854, %v3079
      %v3126 = vadd.f32 %v2855, %v3084
      %v3127 = vadd.f32 %v2856, %v3089
      %v3128 = vadd.f32 %v2857, %v3094
      %vm3129 = vcmp.ge.f32.partialorder %v3097, 0.0
      %vm3130 = vcmp.ge.f32.partialorder %v3098, 0.0
      %vm3131 = vcmp.ge.f32.partialorder %v3099, 0.0
      %vm3132 = vcmp.ge.f32.partialorder %v3100, 0.0
      %vm3133 = vcmp.ge.f32.partialorder %v3101, 0.0
      %vm3134 = vcmp.ge.f32.partialorder %v3102, 0.0
      %vm3135 = vcmp.ge.f32.partialorder %v3103, 0.0
      %vm3136 = vcmp.ge.f32.partialorder %v3104, 0.0
      %vm3137 = vcmp.ge.f32.partialorder %v3105, 0.0
      %vm3138 = vcmp.ge.f32.partialorder %v3106, 0.0
      %vm3139 = vcmp.ge.f32.partialorder %v3107, 0.0
      %vm3140 = vcmp.ge.f32.partialorder %v3108, 0.0
      %vm3141 = vcmp.ge.f32.partialorder %v3109, 0.0
      %vm3142 = vcmp.ge.f32.partialorder %v3110, 0.0
      %vm3143 = vcmp.ge.f32.partialorder %v3111, 0.0
      %vm3144 = vcmp.ge.f32.partialorder %v3112, 0.0
      %vm3145 = vcmp.ge.f32.partialorder %v3113, 0.0
      %vm3146 = vcmp.ge.f32.partialorder %v3114, 0.0
      %vm3147 = vcmp.ge.f32.partialorder %v3115, 0.0
      %vm3148 = vcmp.ge.f32.partialorder %v3116, 0.0
      %vm3149 = vcmp.ge.f32.partialorder %v3117, 0.0
      %vm3150 = vcmp.ge.f32.partialorder %v3118, 0.0
      %vm3151 = vcmp.ge.f32.partialorder %v3119, 0.0
      %vm3152 = vcmp.ge.f32.partialorder %v3120, 0.0
      %vm3153 = vcmp.ge.f32.partialorder %v3121, 0.0
      %vm3154 = vcmp.ge.f32.partialorder %v3122, 0.0
      %vm3155 = vcmp.ge.f32.partialorder %v3123, 0.0
      %vm3156 = vcmp.ge.f32.partialorder %v3124, 0.0
      %vm3157 = vcmp.ge.f32.partialorder %v3125, 0.0
      %vm3158 = vcmp.ge.f32.partialorder %v3126, 0.0
      %vm3159 = vcmp.ge.f32.partialorder %v3127, 0.0
      %vm3160 = vcmp.ge.f32.partialorder %v3128, 0.0
      %v3161 = vmul.f32 %v3097, 0.2
      %v3162 = vmul.f32 %v3098, 0.2
      %v3163 = vmul.f32 %v3099, 0.2
      %v3164 = vmul.f32 %v3100, 0.2
      %v3165 = vmul.f32 %v3101, 0.2
      %v3166 = vmul.f32 %v3102, 0.2
      %v3167 = vmul.f32 %v3103, 0.2
      %v3168 = vmul.f32 %v3104, 0.2
      %v3169 = vmul.f32 %v3105, 0.2
      %v3170 = vmul.f32 %v3106, 0.2
      %v3171 = vmul.f32 %v3107, 0.2
      %v3172 = vmul.f32 %v3108, 0.2
      %v3173 = vmul.f32 %v3109, 0.2
      %v3174 = vmul.f32 %v3110, 0.2
      %v3175 = vmul.f32 %v3111, 0.2
      %v3176 = vmul.f32 %v3112, 0.2
      %v3177 = vmul.f32 %v3113, 0.2
      %v3178 = vmul.f32 %v3114, 0.2
      %v3179 = vmul.f32 %v3115, 0.2
      %v3180 = vmul.f32 %v3116, 0.2
      %v3181 = vmul.f32 %v3117, 0.2
      %v3182 = vmul.f32 %v3118, 0.2
      %v3183 = vmul.f32 %v3119, 0.2
      %v3184 = vmul.f32 %v3120, 0.2
      %v3185 = vmul.f32 %v3121, 0.2
      %v3186 = vmul.f32 %v3122, 0.2
      %v3187 = vmul.f32 %v3123, 0.2
      %v3188 = vmul.f32 %v3124, 0.2
      %v3189 = vmul.f32 %v3125, 0.2
      %v3190 = vmul.f32 %v3126, 0.2
      %v3191 = vmul.f32 %v3127, 0.2
      %v3192 = vmul.f32 %v3128, 0.2
      %v3193 = vsel %vm3129, %v3097, %v3161
      %v3194 = vsel %vm3130, %v3098, %v3162
      %v3195 = vsel %vm3131, %v3099, %v3163
      %v3196 = vsel %vm3132, %v3100, %v3164
      %v3197 = vsel %vm3133, %v3101, %v3165
      %v3198 = vsel %vm3134, %v3102, %v3166
      %v3199 = vsel %vm3135, %v3103, %v3167
      %v3200 = vsel %vm3136, %v3104, %v3168
      %v3201 = vsel %vm3137, %v3105, %v3169
      %v3202 = vsel %vm3138, %v3106, %v3170
      %v3203 = vsel %vm3139, %v3107, %v3171
      %v3204 = vsel %vm3140, %v3108, %v3172
      %v3205 = vsel %vm3141, %v3109, %v3173
      %v3206 = vsel %vm3142, %v3110, %v3174
      %v3207 = vsel %vm3143, %v3111, %v3175
      %v3208 = vsel %vm3144, %v3112, %v3176
      %v3209 = vsel %vm3145, %v3113, %v3177
      %v3210 = vsel %vm3146, %v3114, %v3178
      %v3211 = vsel %vm3147, %v3115, %v3179
      %v3212 = vsel %vm3148, %v3116, %v3180
      %v3213 = vsel %vm3149, %v3117, %v3181
      %v3214 = vsel %vm3150, %v3118, %v3182
      %v3215 = vsel %vm3151, %v3119, %v3183
      %v3216 = vsel %vm3152, %v3120, %v3184
      %v3217 = vsel %vm3153, %v3121, %v3185
      %v3218 = vsel %vm3154, %v3122, %v3186
      %v3219 = vsel %vm3155, %v3123, %v3187
      %v3220 = vsel %vm3156, %v3124, %v3188
      %v3221 = vsel %vm3157, %v3125, %v3189
      %v3222 = vsel %vm3158, %v3126, %v3190
      %v3223 = vsel %vm3159, %v3127, %v3191
      %v3224 = vsel %vm3160, %v3128, %v3192
      %3225 = vst.msk [vmem:[#allocation2] sm:$0xff] %vm287, 0.0
      %3226 = vst.msk [vmem:[#allocation2 + $0x8] sm:$0xff] %vm287, 0.0
      %vm3227 = vcmask 25600
      %3228 = vst.msk [vmem:[#allocation2 + $0x10] sm:$0x3] %vm3227, 0.0
      %3229 = vst.msk [vmem:[#allocation2 + $0x18] sm:$0xff] %vm287, 0.0
      %3230 = vst.msk [vmem:[#allocation2 + $0x20] sm:$0xff] %vm287, 0.0
      %3231 = vst.msk [vmem:[#allocation2 + $0x28] sm:$0x3] %vm3227, 0.0
      %3232 = vst.msk [vmem:[#allocation2 + $0x30] sm:$0xff] %vm287, 0.0
      %3233 = vst.msk [vmem:[#allocation2 + $0x38] sm:$0xff] %vm287, 0.0
      %3234 = vst.msk [vmem:[#allocation2 + $0x40] sm:$0x3] %vm3227, 0.0
      %3235 = vst.msk [vmem:[#allocation2 + $0x48] sm:$0xff] %vm287, 0.0
      %3236 = vst.msk [vmem:[#allocation2 + $0x50] sm:$0xff] %vm287, 0.0
      %3237 = vst.msk [vmem:[#allocation2 + $0x58] sm:$0x3] %vm3227, 0.0
      %3238 = vst.msk [vmem:[#allocation2 + $0x60] sm:$0xff] %vm287, 0.0
      %3239 = vst.msk [vmem:[#allocation2 + $0x68] sm:$0xff] %vm287, 0.0
      %3240 = vst.msk [vmem:[#allocation2 + $0x70] sm:$0x3] %vm3227, 0.0
      %3241 = vst.msk [vmem:[#allocation2 + $0x78] sm:$0xff] %vm287, 0.0
      %3242 = vst.msk [vmem:[#allocation2 + $0x80] sm:$0xff] %vm287, 0.0
      %3243 = vst.msk [vmem:[#allocation2 + $0x88] sm:$0x3] %vm3227, 0.0
      %3244 = vst.msk [vmem:[#allocation2 + $0x90] sm:$0xff] %vm287, 0.0
      %3245 = vst.msk [vmem:[#allocation2 + $0x98] sm:$0xff] %vm287, 0.0
      %3246 = vst.msk [vmem:[#allocation2 + $0xa0] sm:$0x3] %vm3227, 0.0
      %3247 = vst.msk [vmem:[#allocation2 + $0xa8] sm:$0xff] %vm287, 0.0
      %3248 = vst.msk [vmem:[#allocation2 + $0xb0] sm:$0xff] %vm287, 0.0
      %3249 = vst.msk [vmem:[#allocation2 + $0xb8] sm:$0x3] %vm3227, 0.0
      %3250 = vst.msk [vmem:[#allocation2 + $0xc0] sm:$0xff] %vm287, 0.0
      %3251 = vst.msk [vmem:[#allocation2 + $0xc8] sm:$0xff] %vm287, 0.0
      %3252 = vst.msk [vmem:[#allocation2 + $0xd0] sm:$0x3] %vm3227, 0.0
      %3253 = vst.msk [vmem:[#allocation2 + $0xd8] sm:$0xff] %vm287, 0.0
      %3254 = vst.msk [vmem:[#allocation2 + $0xe0] sm:$0xff] %vm287, 0.0
      %3255 = vst.msk [vmem:[#allocation2 + $0xe8] sm:$0x3] %vm3227, 0.0
      %3256 = vst.msk [vmem:[#allocation2 + $0xf0] sm:$0xff] %vm287, 0.0
      %3257 = vst.msk [vmem:[#allocation2 + $0xf8] sm:$0xff] %vm287, 0.0
      %3258 = vst.msk [vmem:[#allocation2 + $0x100] sm:$0x3] %vm3227, 0.0
      %3259 = vst.msk [vmem:[#allocation2 + $0x108] sm:$0xff] %vm287, 0.0
      %3260 = vst.msk [vmem:[#allocation2 + $0x110] sm:$0xff] %vm287, 0.0
      %3261 = vst.msk [vmem:[#allocation2 + $0x118] sm:$0x3] %vm3227, 0.0
      %3262 = vst.msk [vmem:[#allocation2 + $0x120] sm:$0xff] %vm287, 0.0
      %3263 = vst.msk [vmem:[#allocation2 + $0x128] sm:$0xff] %vm287, 0.0
      %3264 = vst.msk [vmem:[#allocation2 + $0x130] sm:$0x3] %vm3227, 0.0
      %3265 = vst.msk [vmem:[#allocation2 + $0x138] sm:$0xff] %vm287, 0.0
      %3266 = vst.msk [vmem:[#allocation2 + $0x140] sm:$0xff] %vm287, 0.0
      %3267 = vst.msk [vmem:[#allocation2 + $0x148] sm:$0x3] %vm3227, 0.0
      %3268 = vst.msk [vmem:[#allocation2 + $0x150] sm:$0xff] %vm287, 0.0
      %3269 = vst.msk [vmem:[#allocation2 + $0x158] sm:$0xff] %vm287, 0.0
      %3270 = vst.msk [vmem:[#allocation2 + $0x160] sm:$0x3] %vm3227, 0.0
      %3271 = vst.msk [vmem:[#allocation2 + $0x168] sm:$0xff] %vm287, 0.0
      %3272 = vst.msk [vmem:[#allocation2 + $0x170] sm:$0xff] %vm287, 0.0
      %3273 = vst.msk [vmem:[#allocation2 + $0x178] sm:$0x3] %vm3227, 0.0
      %3274 = vst.msk [vmem:[#allocation2 + $0x180] sm:$0xff] %vm287, 0.0
      %3275 = vst.msk [vmem:[#allocation2 + $0x188] sm:$0xff] %vm287, 0.0
      %3276 = vst.msk [vmem:[#allocation2 + $0x190] sm:$0x3] %vm3227, 0.0
      %3277 = vst.msk [vmem:[#allocation2 + $0x198] sm:$0xff] %vm287, 0.0
      %3278 = vst.msk [vmem:[#allocation2 + $0x1a0] sm:$0xff] %vm287, 0.0
      %3279 = vst.msk [vmem:[#allocation2 + $0x1a8] sm:$0x3] %vm3227, 0.0
      %s3280 = scalar_lea.vmem [#allocation2], 24
      %3281 = vst.msk [vmem:[%s3280 + $0x1] sm:$0xff] %vm287, %v3193
      %3282 = vst.msk [vmem:[%s3280 + $0x9] sm:$0xff] %vm287, %v3194
      %3283 = vst.msk [vmem:[%s3280 + $0x19] sm:$0xff] %vm287, %v3195
      %3284 = vst.msk [vmem:[%s3280 + $0x21] sm:$0xff] %vm287, %v3196
      %3285 = vst.msk [vmem:[%s3280 + $0x31] sm:$0xff] %vm287, %v3197
      %3286 = vst.msk [vmem:[%s3280 + $0x39] sm:$0xff] %vm287, %v3198
      %3287 = vst.msk [vmem:[%s3280 + $0x49] sm:$0xff] %vm287, %v3199
      %3288 = vst.msk [vmem:[%s3280 + $0x51] sm:$0xff] %vm287, %v3200
      %3289 = vst.msk [vmem:[%s3280 + $0x61] sm:$0xff] %vm287, %v3201
      %3290 = vst.msk [vmem:[%s3280 + $0x69] sm:$0xff] %vm287, %v3202
      %3291 = vst.msk [vmem:[%s3280 + $0x79] sm:$0xff] %vm287, %v3203
      %3292 = vst.msk [vmem:[%s3280 + $0x81] sm:$0xff] %vm287, %v3204
      %3293 = vst.msk [vmem:[%s3280 + $0x91] sm:$0xff] %vm287, %v3205
      %3294 = vst.msk [vmem:[%s3280 + $0x99] sm:$0xff] %vm287, %v3206
      %3295 = vst.msk [vmem:[%s3280 + $0xa9] sm:$0xff] %vm287, %v3207
      %3296 = vst.msk [vmem:[%s3280 + $0xb1] sm:$0xff] %vm287, %v3208
      %3297 = vst.msk [vmem:[%s3280 + $0xc1] sm:$0xff] %vm287, %v3209
      %3298 = vst.msk [vmem:[%s3280 + $0xc9] sm:$0xff] %vm287, %v3210
      %3299 = vst.msk [vmem:[%s3280 + $0xd9] sm:$0xff] %vm287, %v3211
      %3300 = vst.msk [vmem:[%s3280 + $0xe1] sm:$0xff] %vm287, %v3212
      %3301 = vst.msk [vmem:[%s3280 + $0xf1] sm:$0xff] %vm287, %v3213
      %3302 = vst.msk [vmem:[%s3280 + $0xf9] sm:$0xff] %vm287, %v3214
      %3303 = vst.msk [vmem:[%s3280 + $0x109] sm:$0xff] %vm287, %v3215
      %3304 = vst.msk [vmem:[%s3280 + $0x111] sm:$0xff] %vm287, %v3216
      %3305 = vst.msk [vmem:[%s3280 + $0x121] sm:$0xff] %vm287, %v3217
      %3306 = vst.msk [vmem:[%s3280 + $0x129] sm:$0xff] %vm287, %v3218
      %3307 = vst.msk [vmem:[%s3280 + $0x139] sm:$0xff] %vm287, %v3219
      %3308 = vst.msk [vmem:[%s3280 + $0x141] sm:$0xff] %vm287, %v3220
      %3309 = vst.msk [vmem:[%s3280 + $0x151] sm:$0xff] %vm287, %v3221
      %3310 = vst.msk [vmem:[%s3280 + $0x159] sm:$0xff] %vm287, %v3222
      %3311 = vst.msk [vmem:[%s3280 + $0x169] sm:$0xff] %vm287, %v3223
      %3312 = vst.msk [vmem:[%s3280 + $0x171] sm:$0xff] %vm287, %v3224
      %v3313 = vld [vmem:[#allocation2] sm:$0xff]
      %v3314 = vld [vmem:[#allocation2 + $0x8] sm:$0xff]
      %v3315 = vld [vmem:[#allocation2 + $0x10] sm:$0x3]
      %v3316 = vld [vmem:[#allocation2 + $0x18] sm:$0xff]
      %v3317 = vld [vmem:[#allocation2 + $0x20] sm:$0xff]
      %v3318 = vld [vmem:[#allocation2 + $0x28] sm:$0x3]
      %v3319 = vld [vmem:[#allocation2 + $0x30] sm:$0xff]
      %v3320 = vld [vmem:[#allocation2 + $0x38] sm:$0xff]
      %v3321 = vld [vmem:[#allocation2 + $0x40] sm:$0x3]
      %v3322 = vld [vmem:[#allocation2 + $0x48] sm:$0xff]
      %v3323 = vld [vmem:[#allocation2 + $0x50] sm:$0xff]
      %v3324 = vld [vmem:[#allocation2 + $0x58] sm:$0x3]
      %v3325 = vld [vmem:[#allocation2 + $0x60] sm:$0xff]
      %v3326 = vld [vmem:[#allocation2 + $0x68] sm:$0xff]
      %v3327 = vld [vmem:[#allocation2 + $0x70] sm:$0x3]
      %v3328 = vld [vmem:[#allocation2 + $0x78] sm:$0xff]
      %v3329 = vld [vmem:[#allocation2 + $0x80] sm:$0xff]
      %v3330 = vld [vmem:[#allocation2 + $0x88] sm:$0x3]
      %v3331 = vld [vmem:[#allocation2 + $0x90] sm:$0xff]
      %v3332 = vld [vmem:[#allocation2 + $0x98] sm:$0xff]
      %v3333 = vld [vmem:[#allocation2 + $0xa0] sm:$0x3]
      %v3334 = vld [vmem:[#allocation2 + $0xa8] sm:$0xff]
      %v3335 = vld [vmem:[#allocation2 + $0xb0] sm:$0xff]
      %v3336 = vld [vmem:[#allocation2 + $0xb8] sm:$0x3]
      %v3337 = vld [vmem:[#allocation2 + $0xc0] sm:$0xff]
      %v3338 = vld [vmem:[#allocation2 + $0xc8] sm:$0xff]
      %v3339 = vld [vmem:[#allocation2 + $0xd0] sm:$0x3]
      %v3340 = vld [vmem:[#allocation2 + $0xd8] sm:$0xff]
      %v3341 = vld [vmem:[#allocation2 + $0xe0] sm:$0xff]
      %v3342 = vld [vmem:[#allocation2 + $0xe8] sm:$0x3]
      %v3343 = vld [vmem:[#allocation2 + $0xf0] sm:$0xff]
      %v3344 = vld [vmem:[#allocation2 + $0xf8] sm:$0xff]
      %v3345 = vld [vmem:[#allocation2 + $0x100] sm:$0x3]
      %v3346 = vld [vmem:[#allocation2 + $0x108] sm:$0xff]
      %v3347 = vld [vmem:[#allocation2 + $0x110] sm:$0xff]
      %v3348 = vld [vmem:[#allocation2 + $0x118] sm:$0x3]
      %v3349 = vld [vmem:[#allocation2 + $0x120] sm:$0xff]
      %v3350 = vld [vmem:[#allocation2 + $0x128] sm:$0xff]
      %v3351 = vld [vmem:[#allocation2 + $0x130] sm:$0x3]
      %v3352 = vld [vmem:[#allocation2 + $0x138] sm:$0xff]
      %v3353 = vld [vmem:[#allocation2 + $0x140] sm:$0xff]
      %v3354 = vld [vmem:[#allocation2 + $0x148] sm:$0x3]
      %v3355 = vld [vmem:[#allocation2 + $0x150] sm:$0xff]
      %v3356 = vld [vmem:[#allocation2 + $0x158] sm:$0xff]
      %v3357 = vld [vmem:[#allocation2 + $0x160] sm:$0x3]
      %v3358 = vld [vmem:[#allocation2 + $0x168] sm:$0xff]
      %v3359 = vld [vmem:[#allocation2 + $0x170] sm:$0xff]
      %v3360 = vld [vmem:[#allocation2 + $0x178] sm:$0x3]
      %v3361 = vld [vmem:[#allocation2 + $0x180] sm:$0xff]
      %v3362 = vld [vmem:[#allocation2 + $0x188] sm:$0xff]
      %v3363 = vld [vmem:[#allocation2 + $0x190] sm:$0x3]
      %v3364 = vld [vmem:[#allocation2 + $0x198] sm:$0xff]
      %v3365 = vld [vmem:[#allocation2 + $0x1a0] sm:$0xff]
      %v3366 = vld [vmem:[#allocation2 + $0x1a8] sm:$0x3]
      %v3367 = vld [vmem:[%s4] sm:$0x1]
      %v3369 = vlaneseq
      %v3370 = vshrl.u32 %v3369, 7
      %v3371 = vsub.s32 0, %v3370
      %v3372 = vrot.slane %v3367, %v3371
      %v3374 = vld [vmem:[%s3] sm:$0xf]
      %v3376 = vsel %vm287, %v3313, 0
      %v3379 = vsel %vm287, %v3314, 0
      %v3382 = vsel %vm287, %v3316, 0
      %v3385 = vsel %vm287, %v3317, 0
      %v3388 = vsel %vm287, %v3319, 0
      %v3391 = vsel %vm287, %v3320, 0
      %v3394 = vsel %vm287, %v3322, 0
      %v3397 = vsel %vm287, %v3323, 0
      %v3400 = vsel %vm287, %v3325, 0
      %v3403 = vsel %vm287, %v3326, 0
      %v3406 = vsel %vm287, %v3328, 0
      %v3409 = vsel %vm287, %v3329, 0
      %v3412 = vsel %vm287, %v3331, 0
      %v3415 = vsel %vm287, %v3332, 0
      %v3418 = vsel %vm287, %v3334, 0
      %v3421 = vsel %vm287, %v3335, 0
      %v3424 = vsel %vm287, %v3337, 0
      %v3427 = vsel %vm287, %v3338, 0
      %v3430 = vsel %vm287, %v3340, 0
      %v3433 = vsel %vm287, %v3341, 0
      %v3436 = vsel %vm287, %v3343, 0
      %v3439 = vsel %vm287, %v3344, 0
      %v3442 = vsel %vm287, %v3346, 0
      %v3445 = vsel %vm287, %v3347, 0
      %v3448 = vsel %vm287, %v3349, 0
      %v3451 = vsel %vm287, %v3350, 0
      %v3454 = vsel %vm287, %v3352, 0
      %v3457 = vsel %vm287, %v3353, 0
      %v3460 = vsel %vm287, %v3355, 0
      %v3463 = vsel %vm287, %v3356, 0
      %v3466 = vsel %vm287, %v3358, 0
      %v3469 = vsel %vm287, %v3359, 0
      %v3472 = vsel %vm384, %v3374, 0
      %3474 = vmatprep.subr.mxu0 0.0
      %3475 = vmatpush1.msra.mxu0 %v3472
      %3476 = vmatprep.subr.mxu0 0.0
      %3477 = vmatpush1.msra.mxu0 0.0
      %3478 = vmatprep.subr.mxu0 0.0
      %3479 = vmatpush1.msra.mxu0 0.0
      %3480 = vmatprep.subr.mxu0 0.0
      %3481 = vmatpush1.msra.mxu0 0.0
      %3482 = vmatprep.subr.mxu0 0.0
      %3483 = vmatpush1.msra.mxu0 0.0
      %3484 = vmatprep.subr.mxu0 0.0
      %3485 = vmatpush1.msra.mxu0 0.0
      %3486 = vmatprep.subr.mxu0 0.0
      %3487 = vmatpush1.msra.mxu0 0.0
      %3488 = vmatprep.subr.mxu0 0.0
      %3489 = vmatpush1.msra.mxu0 0.0
      %3490 = vmatprep.subr.mxu0 0.0
      %3491 = vmatpush1.msra.mxu0 0.0
      %3492 = vmatprep.subr.mxu0 0.0
      %3493 = vmatpush1.msra.mxu0 0.0
      %3494 = vmatprep.subr.mxu0 0.0
      %3495 = vmatpush1.msra.mxu0 0.0
      %3496 = vmatprep.subr.mxu0 0.0
      %3497 = vmatpush1.msra.mxu0 0.0
      %3498 = vmatprep.subr.mxu0 0.0
      %3499 = vmatpush1.msra.mxu0 0.0
      %3500 = vmatprep.subr.mxu0 0.0
      %3501 = vmatpush1.msra.mxu0 0.0
      %3502 = vmatprep.subr.mxu0 0.0
      %3503 = vmatpush1.msra.mxu0 0.0
      %3504 = vmatprep.subr.mxu0 0.0
      %3505 = vmatpush1.msra.mxu0 0.0
      %3506 = vmatprep.subr.mxu0 0.0
      %3507 = vmatpush1.msra.mxu0 0.0
      %3508 = vmatprep.subr.mxu0 0.0
      %3509 = vmatpush1.msra.mxu0 0.0
      %3510 = vmatprep.subr.mxu0 0.0
      %3511 = vmatpush1.msra.mxu0 0.0
      %3512 = vmatprep.subr.mxu0 0.0
      %3513 = vmatpush1.msra.mxu0 0.0
      %3514 = vmatprep.subr.mxu0 0.0
      %3515 = vmatpush1.msra.mxu0 0.0
      %3516 = vmatprep.subr.mxu0 0.0
      %3517 = vmatpush1.msra.mxu0 0.0
      %3518 = vmatprep.subr.mxu0 0.0
      %3519 = vmatpush1.msra.mxu0 0.0
      %3520 = vmatprep.subr.mxu0 0.0
      %3521 = vmatpush1.msra.mxu0 0.0
      %3522 = vmatprep.subr.mxu0 0.0
      %3523 = vmatpush1.msra.mxu0 0.0
      %3524 = vmatprep.subr.mxu0 0.0
      %3525 = vmatpush1.msra.mxu0 0.0
      %3526 = vmatprep.subr.mxu0 0.0
      %3527 = vmatpush1.msra.mxu0 0.0
      %3528 = vmatprep.subr.mxu0 0.0
      %3529 = vmatpush1.msra.mxu0 0.0
      %3530 = vmatprep.subr.mxu0 0.0
      %3531 = vmatpush1.msra.mxu0 0.0
      %3532 = vmatprep.subr.mxu0 0.0
      %3533 = vmatpush1.msra.mxu0 0.0
      %3534 = vmatprep.subr.mxu0 0.0
      %3535 = vmatpush1.msra.mxu0 0.0
      %3536 = vmatprep.subr.mxu0 0.0
      %3537 = vmatpush1.msra.mxu0 0.0
      %3538 = vmatprep.mubr.f32.mxu0 0.0
      %3539 = vmatmul.mubr.f32.gmra.mrb[0].mxu0 %v3376
      %v3540 = vpop.f32.mrb[0].mxu0
      %v3541 = vadd.f32 0.0, %v3540
      %v3542 = vpop.f32.mrb[0].mxu0
      %3543 = vmatprep.mubr.f32.mxu0 0.0
      %3544 = vmatmul.mubr.f32.gmra.mrb[0].mxu0 %v3379
      %v3545 = vpop.f32.mrb[0].mxu0
      %v3546 = vadd.f32 0.0, %v3545
      %v3547 = vpop.f32.mrb[0].mxu0
      %3548 = vmatprep.mubr.f32.mxu0 0.0
      %3549 = vmatmul.mubr.f32.gmra.mrb[0].mxu0 %v3382
      %v3550 = vpop.f32.mrb[0].mxu0
      %v3551 = vadd.f32 0.0, %v3550
      %v3552 = vpop.f32.mrb[0].mxu0
      %3553 = vmatprep.mubr.f32.mxu0 0.0
      %3554 = vmatmul.mubr.f32.gmra.mrb[0].mxu0 %v3385
      %v3555 = vpop.f32.mrb[0].mxu0
      %v3556 = vadd.f32 0.0, %v3555
      %v3557 = vpop.f32.mrb[0].mxu0
      %3558 = vmatprep.mubr.f32.mxu0 0.0
      %3559 = vmatmul.mubr.f32.gmra.mrb[0].mxu0 %v3388
      %v3560 = vpop.f32.mrb[0].mxu0
      %v3561 = vadd.f32 0.0, %v3560
      %v3562 = vpop.f32.mrb[0].mxu0
      %3563 = vmatprep.mubr.f32.mxu0 0.0
      %3564 = vmatmul.mubr.f32.gmra.mrb[0].mxu0 %v3391
      %v3565 = vpop.f32.mrb[0].mxu0
      %v3566 = vadd.f32 0.0, %v3565
      %v3567 = vpop.f32.mrb[0].mxu0
      %3568 = vmatprep.mubr.f32.mxu0 0.0
      %3569 = vmatmul.mubr.f32.gmra.mrb[0].mxu0 %v3394
      %v3570 = vpop.f32.mrb[0].mxu0
      %v3571 = vadd.f32 0.0, %v3570
      %v3572 = vpop.f32.mrb[0].mxu0
      %3573 = vmatprep.mubr.f32.mxu0 0.0
      %3574 = vmatmul.mubr.f32.gmra.mrb[0].mxu0 %v3397
      %v3575 = vpop.f32.mrb[0].mxu0
      %v3576 = vadd.f32 0.0, %v3575
      %v3577 = vpop.f32.mrb[0].mxu0
      %3578 = vmatprep.mubr.f32.mxu0 0.0
      %3579 = vmatmul.mubr.f32.gmra.mrb[0].mxu0 %v3400
      %v3580 = vpop.f32.mrb[0].mxu0
      %v3581 = vadd.f32 0.0, %v3580
      %v3582 = vpop.f32.mrb[0].mxu0
      %3583 = vmatprep.mubr.f32.mxu0 0.0
      %3584 = vmatmul.mubr.f32.gmra.mrb[0].mxu0 %v3403
      %v3585 = vpop.f32.mrb[0].mxu0
      %v3586 = vadd.f32 0.0, %v3585
      %v3587 = vpop.f32.mrb[0].mxu0
      %3588 = vmatprep.mubr.f32.mxu0 0.0
      %3589 = vmatmul.mubr.f32.gmra.mrb[0].mxu0 %v3406
      %v3590 = vpop.f32.mrb[0].mxu0
      %v3591 = vadd.f32 0.0, %v3590
      %v3592 = vpop.f32.mrb[0].mxu0
      %3593 = vmatprep.mubr.f32.mxu0 0.0
      %3594 = vmatmul.mubr.f32.gmra.mrb[0].mxu0 %v3409
      %v3595 = vpop.f32.mrb[0].mxu0
      %v3596 = vadd.f32 0.0, %v3595
      %v3597 = vpop.f32.mrb[0].mxu0
      %3598 = vmatprep.mubr.f32.mxu0 0.0
      %3599 = vmatmul.mubr.f32.gmra.mrb[0].mxu0 %v3412
      %v3600 = vpop.f32.mrb[0].mxu0
      %v3601 = vadd.f32 0.0, %v3600
      %v3602 = vpop.f32.mrb[0].mxu0
      %3603 = vmatprep.mubr.f32.mxu0 0.0
      %3604 = vmatmul.mubr.f32.gmra.mrb[0].mxu0 %v3415
      %v3605 = vpop.f32.mrb[0].mxu0
      %v3606 = vadd.f32 0.0, %v3605
      %v3607 = vpop.f32.mrb[0].mxu0
      %3608 = vmatprep.mubr.f32.mxu0 0.0
      %3609 = vmatmul.mubr.f32.gmra.mrb[0].mxu0 %v3418
      %v3610 = vpop.f32.mrb[0].mxu0
      %v3611 = vadd.f32 0.0, %v3610
      %v3612 = vpop.f32.mrb[0].mxu0
      %3613 = vmatprep.mubr.f32.mxu0 0.0
      %3614 = vmatmul.mubr.f32.gmra.mrb[0].mxu0 %v3421
      %v3615 = vpop.f32.mrb[0].mxu0
      %v3616 = vadd.f32 0.0, %v3615
      %v3617 = vpop.f32.mrb[0].mxu0
      %3618 = vmatprep.mubr.f32.mxu0 0.0
      %3619 = vmatmul.mubr.f32.gmra.mrb[0].mxu0 %v3424
      %v3620 = vpop.f32.mrb[0].mxu0
      %v3621 = vadd.f32 0.0, %v3620
      %v3622 = vpop.f32.mrb[0].mxu0
      %3623 = vmatprep.mubr.f32.mxu0 0.0
      %3624 = vmatmul.mubr.f32.gmra.mrb[0].mxu0 %v3427
      %v3625 = vpop.f32.mrb[0].mxu0
      %v3626 = vadd.f32 0.0, %v3625
      %v3627 = vpop.f32.mrb[0].mxu0
      %3628 = vmatprep.mubr.f32.mxu0 0.0
      %3629 = vmatmul.mubr.f32.gmra.mrb[0].mxu0 %v3430
      %v3630 = vpop.f32.mrb[0].mxu0
      %v3631 = vadd.f32 0.0, %v3630
      %v3632 = vpop.f32.mrb[0].mxu0
      %3633 = vmatprep.mubr.f32.mxu0 0.0
      %3634 = vmatmul.mubr.f32.gmra.mrb[0].mxu0 %v3433
      %v3635 = vpop.f32.mrb[0].mxu0
      %v3636 = vadd.f32 0.0, %v3635
      %v3637 = vpop.f32.mrb[0].mxu0
      %3638 = vmatprep.mubr.f32.mxu0 0.0
      %3639 = vmatmul.mubr.f32.gmra.mrb[0].mxu0 %v3436
      %v3640 = vpop.f32.mrb[0].mxu0
      %v3641 = vadd.f32 0.0, %v3640
      %v3642 = vpop.f32.mrb[0].mxu0
      %3643 = vmatprep.mubr.f32.mxu0 0.0
      %3644 = vmatmul.mubr.f32.gmra.mrb[0].mxu0 %v3439
      %v3645 = vpop.f32.mrb[0].mxu0
      %v3646 = vadd.f32 0.0, %v3645
      %v3647 = vpop.f32.mrb[0].mxu0
      %3648 = vmatprep.mubr.f32.mxu0 0.0
      %3649 = vmatmul.mubr.f32.gmra.mrb[0].mxu0 %v3442
      %v3650 = vpop.f32.mrb[0].mxu0
      %v3651 = vadd.f32 0.0, %v3650
      %v3652 = vpop.f32.mrb[0].mxu0
      %3653 = vmatprep.mubr.f32.mxu0 0.0
      %3654 = vmatmul.mubr.f32.gmra.mrb[0].mxu0 %v3445
      %v3655 = vpop.f32.mrb[0].mxu0
      %v3656 = vadd.f32 0.0, %v3655
      %v3657 = vpop.f32.mrb[0].mxu0
      %3658 = vmatprep.mubr.f32.mxu0 0.0
      %3659 = vmatmul.mubr.f32.gmra.mrb[0].mxu0 %v3448
      %v3660 = vpop.f32.mrb[0].mxu0
      %v3661 = vadd.f32 0.0, %v3660
      %v3662 = vpop.f32.mrb[0].mxu0
      %3663 = vmatprep.mubr.f32.mxu0 0.0
      %3664 = vmatmul.mubr.f32.gmra.mrb[0].mxu0 %v3451
      %v3665 = vpop.f32.mrb[0].mxu0
      %v3666 = vadd.f32 0.0, %v3665
      %v3667 = vpop.f32.mrb[0].mxu0
      %3668 = vmatprep.mubr.f32.mxu0 0.0
      %3669 = vmatmul.mubr.f32.gmra.mrb[0].mxu0 %v3454
      %v3670 = vpop.f32.mrb[0].mxu0
      %v3671 = vadd.f32 0.0, %v3670
      %v3672 = vpop.f32.mrb[0].mxu0
      %3673 = vmatprep.mubr.f32.mxu0 0.0
      %3674 = vmatmul.mubr.f32.gmra.mrb[0].mxu0 %v3457
      %v3675 = vpop.f32.mrb[0].mxu0
      %v3676 = vadd.f32 0.0, %v3675
      %v3677 = vpop.f32.mrb[0].mxu0
      %3678 = vmatprep.mubr.f32.mxu0 0.0
      %3679 = vmatmul.mubr.f32.gmra.mrb[0].mxu0 %v3460
      %v3680 = vpop.f32.mrb[0].mxu0
      %v3681 = vadd.f32 0.0, %v3680
      %v3682 = vpop.f32.mrb[0].mxu0
      %3683 = vmatprep.mubr.f32.mxu0 0.0
      %3684 = vmatmul.mubr.f32.gmra.mrb[0].mxu0 %v3463
      %v3685 = vpop.f32.mrb[0].mxu0
      %v3686 = vadd.f32 0.0, %v3685
      %v3687 = vpop.f32.mrb[0].mxu0
      %3688 = vmatprep.mubr.f32.mxu0 0.0
      %3689 = vmatmul.mubr.f32.gmra.mrb[0].mxu0 %v3466
      %v3690 = vpop.f32.mrb[0].mxu0
      %v3691 = vadd.f32 0.0, %v3690
      %v3692 = vpop.f32.mrb[0].mxu0
      %3693 = vmatprep.mubr.f32.mxu0 0.0
      %3694 = vmatmul.mubr.f32.gmra.mrb[0].mxu0 %v3469
      %v3695 = vpop.f32.mrb[0].mxu0
      %v3696 = vadd.f32 0.0, %v3695
      %v3697 = vpop.f32.mrb[0].mxu0
      %3698 = vdwg.mxu0
      %v3699 = vadd.f32 %v3372, %v3541
      %v3700 = vadd.f32 %v3372, %v3546
      %v3701 = vadd.f32 %v3372, %v3551
      %v3702 = vadd.f32 %v3372, %v3556
      %v3703 = vadd.f32 %v3372, %v3561
      %v3704 = vadd.f32 %v3372, %v3566
      %v3705 = vadd.f32 %v3372, %v3571
      %v3706 = vadd.f32 %v3372, %v3576
      %v3707 = vadd.f32 %v3372, %v3581
      %v3708 = vadd.f32 %v3372, %v3586
      %v3709 = vadd.f32 %v3372, %v3591
      %v3710 = vadd.f32 %v3372, %v3596
      %v3711 = vadd.f32 %v3372, %v3601
      %v3712 = vadd.f32 %v3372, %v3606
      %v3713 = vadd.f32 %v3372, %v3611
      %v3714 = vadd.f32 %v3372, %v3616
      %v3715 = vadd.f32 %v3372, %v3621
      %v3716 = vadd.f32 %v3372, %v3626
      %v3717 = vadd.f32 %v3372, %v3631
      %v3718 = vadd.f32 %v3372, %v3636
      %v3719 = vadd.f32 %v3372, %v3641
      %v3720 = vadd.f32 %v3372, %v3646
      %v3721 = vadd.f32 %v3372, %v3651
      %v3722 = vadd.f32 %v3372, %v3656
      %v3723 = vadd.f32 %v3372, %v3661
      %v3724 = vadd.f32 %v3372, %v3666
      %v3725 = vadd.f32 %v3372, %v3671
      %v3726 = vadd.f32 %v3372, %v3676
      %v3727 = vadd.f32 %v3372, %v3681
      %v3728 = vadd.f32 %v3372, %v3686
      %v3729 = vadd.f32 %v3372, %v3691
      %v3730 = vadd.f32 %v3372, %v3696
      %v3747 = vrot.slane %v3313, 1
      %v3748 = vrot.slane %v3314, 1
      %v3749 = vsel %vm661, %v3747, %v3748
      %v3750 = vrot.slane %v3315, 1
      %v3751 = vsel %vm661, %v3748, %v3750
      %v3752 = vrot.slane %v3316, 1
      %v3753 = vrot.slane %v3317, 1
      %v3754 = vsel %vm661, %v3752, %v3753
      %v3755 = vrot.slane %v3318, 1
      %v3756 = vsel %vm661, %v3753, %v3755
      %v3757 = vrot.slane %v3319, 1
      %v3758 = vrot.slane %v3320, 1
      %v3759 = vsel %vm661, %v3757, %v3758
      %v3760 = vrot.slane %v3321, 1
      %v3761 = vsel %vm661, %v3758, %v3760
      %v3762 = vrot.slane %v3322, 1
      %v3763 = vrot.slane %v3323, 1
      %v3764 = vsel %vm661, %v3762, %v3763
      %v3765 = vrot.slane %v3324, 1
      %v3766 = vsel %vm661, %v3763, %v3765
      %v3767 = vrot.slane %v3325, 1
      %v3768 = vrot.slane %v3326, 1
      %v3769 = vsel %vm661, %v3767, %v3768
      %v3770 = vrot.slane %v3327, 1
      %v3771 = vsel %vm661, %v3768, %v3770
      %v3772 = vrot.slane %v3328, 1
      %v3773 = vrot.slane %v3329, 1
      %v3774 = vsel %vm661, %v3772, %v3773
      %v3775 = vrot.slane %v3330, 1
      %v3776 = vsel %vm661, %v3773, %v3775
      %v3777 = vrot.slane %v3331, 1
      %v3778 = vrot.slane %v3332, 1
      %v3779 = vsel %vm661, %v3777, %v3778
      %v3780 = vrot.slane %v3333, 1
      %v3781 = vsel %vm661, %v3778, %v3780
      %v3782 = vrot.slane %v3334, 1
      %v3783 = vrot.slane %v3335, 1
      %v3784 = vsel %vm661, %v3782, %v3783
      %v3785 = vrot.slane %v3336, 1
      %v3786 = vsel %vm661, %v3783, %v3785
      %v3787 = vrot.slane %v3337, 1
      %v3788 = vrot.slane %v3338, 1
      %v3789 = vsel %vm661, %v3787, %v3788
      %v3790 = vrot.slane %v3339, 1
      %v3791 = vsel %vm661, %v3788, %v3790
      %v3792 = vrot.slane %v3340, 1
      %v3793 = vrot.slane %v3341, 1
      %v3794 = vsel %vm661, %v3792, %v3793
      %v3795 = vrot.slane %v3342, 1
      %v3796 = vsel %vm661, %v3793, %v3795
      %v3797 = vrot.slane %v3343, 1
      %v3798 = vrot.slane %v3344, 1
      %v3799 = vsel %vm661, %v3797, %v3798
      %v3800 = vrot.slane %v3345, 1
      %v3801 = vsel %vm661, %v3798, %v3800
      %v3802 = vrot.slane %v3346, 1
      %v3803 = vrot.slane %v3347, 1
      %v3804 = vsel %vm661, %v3802, %v3803
      %v3805 = vrot.slane %v3348, 1
      %v3806 = vsel %vm661, %v3803, %v3805
      %v3807 = vrot.slane %v3349, 1
      %v3808 = vrot.slane %v3350, 1
      %v3809 = vsel %vm661, %v3807, %v3808
      %v3810 = vrot.slane %v3351, 1
      %v3811 = vsel %vm661, %v3808, %v3810
      %v3812 = vrot.slane %v3352, 1
      %v3813 = vrot.slane %v3353, 1
      %v3814 = vsel %vm661, %v3812, %v3813
      %v3815 = vrot.slane %v3354, 1
      %v3816 = vsel %vm661, %v3813, %v3815
      %v3817 = vrot.slane %v3355, 1
      %v3818 = vrot.slane %v3356, 1
      %v3819 = vsel %vm661, %v3817, %v3818
      %v3820 = vrot.slane %v3357, 1
      %v3821 = vsel %vm661, %v3818, %v3820
      %v3822 = vrot.slane %v3358, 1
      %v3823 = vrot.slane %v3359, 1
      %v3824 = vsel %vm661, %v3822, %v3823
      %v3825 = vrot.slane %v3360, 1
      %v3826 = vsel %vm661, %v3823, %v3825
      %s3827 = scalar_lea.vmem %s3, 4
      %v3828 = vld [vmem:[%s3827] sm:$0xf]
      %v3829 = vsel %vm287, %v3749, 0
      %v3831 = vsel %vm287, %v3751, 0
      %v3833 = vsel %vm287, %v3754, 0
      %v3835 = vsel %vm287, %v3756, 0
      %v3837 = vsel %vm287, %v3759, 0
      %v3839 = vsel %vm287, %v3761, 0
      %v3841 = vsel %vm287, %v3764, 0
      %v3843 = vsel %vm287, %v3766, 0
      %v3845 = vsel %vm287, %v3769, 0
      %v3847 = vsel %vm287, %v3771, 0
      %v3849 = vsel %vm287, %v3774, 0
      %v3851 = vsel %vm287, %v3776, 0
      %v3853 = vsel %vm287, %v3779, 0
      %v3855 = vsel %vm287, %v3781, 0
      %v3857 = vsel %vm287, %v3784, 0
      %v3859 = vsel %vm287, %v3786, 0
      %v3861 = vsel %vm287, %v3789, 0
      %v3863 = vsel %vm287, %v3791, 0
      %v3865 = vsel %vm287, %v3794, 0
      %v3867 = vsel %vm287, %v3796, 0
      %v3869 = vsel %vm287, %v3799, 0
      %v3871 = vsel %vm287, %v3801, 0
      %v3873 = vsel %vm287, %v3804, 0
      %v3875 = vsel %vm287, %v3806, 0
      %v3877 = vsel %vm287, %v3809, 0
      %v3879 = vsel %vm287, %v3811, 0
      %v3881 = vsel %vm287, %v3814, 0
      %v3883 = vsel %vm287, %v3816, 0
      %v3885 = vsel %vm287, %v3819, 0
      %v3887 = vsel %vm287, %v3821, 0
      %v3889 = vsel %vm287, %v3824, 0
      %v3891 = vsel %vm287, %v3826, 0
      %v3894 = vsel %vm384, %v3828, 0
      %3896 = vmatprep.subr.mxu0 0.0
      %3897 = vmatpush1.msra.mxu0 %v3894
      %3898 = vmatprep.subr.mxu0 0.0
      %3899 = vmatpush1.msra.mxu0 0.0
      %3900 = vmatprep.subr.mxu0 0.0
      %3901 = vmatpush1.msra.mxu0 0.0
      %3902 = vmatprep.subr.mxu0 0.0
      %3903 = vmatpush1.msra.mxu0 0.0
      %3904 = vmatprep.subr.mxu0 0.0
      %3905 = vmatpush1.msra.mxu0 0.0
      %3906 = vmatprep.subr.mxu0 0.0
      %3907 = vmatpush1.msra.mxu0 0.0
      %3908 = vmatprep.subr.mxu0 0.0
      %3909 = vmatpush1.msra.mxu0 0.0
      %3910 = vmatprep.subr.mxu0 0.0
      %3911 = vmatpush1.msra.mxu0 0.0
      %3912 = vmatprep.subr.mxu0 0.0
      %3913 = vmatpush1.msra.mxu0 0.0
      %3914 = vmatprep.subr.mxu0 0.0
      %3915 = vmatpush1.msra.mxu0 0.0
      %3916 = vmatprep.subr.mxu0 0.0
      %3917 = vmatpush1.msra.mxu0 0.0
      %3918 = vmatprep.subr.mxu0 0.0
      %3919 = vmatpush1.msra.mxu0 0.0
      %3920 = vmatprep.subr.mxu0 0.0
      %3921 = vmatpush1.msra.mxu0 0.0
      %3922 = vmatprep.subr.mxu0 0.0
      %3923 = vmatpush1.msra.mxu0 0.0
      %3924 = vmatprep.subr.mxu0 0.0
      %3925 = vmatpush1.msra.mxu0 0.0
      %3926 = vmatprep.subr.mxu0 0.0
      %3927 = vmatpush1.msra.mxu0 0.0
      %3928 = vmatprep.subr.mxu0 0.0
      %3929 = vmatpush1.msra.mxu0 0.0
      %3930 = vmatprep.subr.mxu0 0.0
      %3931 = vmatpush1.msra.mxu0 0.0
      %3932 = vmatprep.subr.mxu0 0.0
      %3933 = vmatpush1.msra.mxu0 0.0
      %3934 = vmatprep.subr.mxu0 0.0
      %3935 = vmatpush1.msra.mxu0 0.0
      %3936 = vmatprep.subr.mxu0 0.0
      %3937 = vmatpush1.msra.mxu0 0.0
      %3938 = vmatprep.subr.mxu0 0.0
      %3939 = vmatpush1.msra.mxu0 0.0
      %3940 = vmatprep.subr.mxu0 0.0
      %3941 = vmatpush1.msra.mxu0 0.0
      %3942 = vmatprep.subr.mxu0 0.0
      %3943 = vmatpush1.msra.mxu0 0.0
      %3944 = vmatprep.subr.mxu0 0.0
      %3945 = vmatpush1.msra.mxu0 0.0
      %3946 = vmatprep.subr.mxu0 0.0
      %3947 = vmatpush1.msra.mxu0 0.0
      %3948 = vmatprep.subr.mxu0 0.0
      %3949 = vmatpush1.msra.mxu0 0.0
      %3950 = vmatprep.subr.mxu0 0.0
      %3951 = vmatpush1.msra.mxu0 0.0
      %3952 = vmatprep.subr.mxu0 0.0
      %3953 = vmatpush1.msra.mxu0 0.0
      %3954 = vmatprep.subr.mxu0 0.0
      %3955 = vmatpush1.msra.mxu0 0.0
      %3956 = vmatprep.subr.mxu0 0.0
      %3957 = vmatpush1.msra.mxu0 0.0
      %3958 = vmatprep.subr.mxu0 0.0
      %3959 = vmatpush1.msra.mxu0 0.0
      %3960 = vmatprep.mubr.f32.mxu0 0.0
      %3961 = vmatmul.mubr.f32.gmra.mrb[0].mxu0 %v3829
      %v3962 = vpop.f32.mrb[0].mxu0
      %v3963 = vadd.f32 0.0, %v3962
      %v3964 = vpop.f32.mrb[0].mxu0
      %3965 = vmatprep.mubr.f32.mxu0 0.0
      %3966 = vmatmul.mubr.f32.gmra.mrb[0].mxu0 %v3831
      %v3967 = vpop.f32.mrb[0].mxu0
      %v3968 = vadd.f32 0.0, %v3967
      %v3969 = vpop.f32.mrb[0].mxu0
      %3970 = vmatprep.mubr.f32.mxu0 0.0
      %3971 = vmatmul.mubr.f32.gmra.mrb[0].mxu0 %v3833
      %v3972 = vpop.f32.mrb[0].mxu0
      %v3973 = vadd.f32 0.0, %v3972
      %v3974 = vpop.f32.mrb[0].mxu0
      %3975 = vmatprep.mubr.f32.mxu0 0.0
      %3976 = vmatmul.mubr.f32.gmra.mrb[0].mxu0 %v3835
      %v3977 = vpop.f32.mrb[0].mxu0
      %v3978 = vadd.f32 0.0, %v3977
      %v3979 = vpop.f32.mrb[0].mxu0
      %3980 = vmatprep.mubr.f32.mxu0 0.0
      %3981 = vmatmul.mubr.f32.gmra.mrb[0].mxu0 %v3837
      %v3982 = vpop.f32.mrb[0].mxu0
      %v3983 = vadd.f32 0.0, %v3982
      %v3984 = vpop.f32.mrb[0].mxu0
      %3985 = vmatprep.mubr.f32.mxu0 0.0
      %3986 = vmatmul.mubr.f32.gmra.mrb[0].mxu0 %v3839
      %v3987 = vpop.f32.mrb[0].mxu0
      %v3988 = vadd.f32 0.0, %v3987
      %v3989 = vpop.f32.mrb[0].mxu0
      %3990 = vmatprep.mubr.f32.mxu0 0.0
      %3991 = vmatmul.mubr.f32.gmra.mrb[0].mxu0 %v3841
      %v3992 = vpop.f32.mrb[0].mxu0
      %v3993 = vadd.f32 0.0, %v3992
      %v3994 = vpop.f32.mrb[0].mxu0
      %3995 = vmatprep.mubr.f32.mxu0 0.0
      %3996 = vmatmul.mubr.f32.gmra.mrb[0].mxu0 %v3843
      %v3997 = vpop.f32.mrb[0].mxu0
      %v3998 = vadd.f32 0.0, %v3997
      %v3999 = vpop.f32.mrb[0].mxu0
      %4000 = vmatprep.mubr.f32.mxu0 0.0
      %4001 = vmatmul.mubr.f32.gmra.mrb[0].mxu0 %v3845
      %v4002 = vpop.f32.mrb[0].mxu0
      %v4003 = vadd.f32 0.0, %v4002
      %v4004 = vpop.f32.mrb[0].mxu0
      %4005 = vmatprep.mubr.f32.mxu0 0.0
      %4006 = vmatmul.mubr.f32.gmra.mrb[0].mxu0 %v3847
      %v4007 = vpop.f32.mrb[0].mxu0
      %v4008 = vadd.f32 0.0, %v4007
      %v4009 = vpop.f32.mrb[0].mxu0
      %4010 = vmatprep.mubr.f32.mxu0 0.0
      %4011 = vmatmul.mubr.f32.gmra.mrb[0].mxu0 %v3849
      %v4012 = vpop.f32.mrb[0].mxu0
      %v4013 = vadd.f32 0.0, %v4012
      %v4014 = vpop.f32.mrb[0].mxu0
      %4015 = vmatprep.mubr.f32.mxu0 0.0
      %4016 = vmatmul.mubr.f32.gmra.mrb[0].mxu0 %v3851
      %v4017 = vpop.f32.mrb[0].mxu0
      %v4018 = vadd.f32 0.0, %v4017
      %v4019 = vpop.f32.mrb[0].mxu0
      %4020 = vmatprep.mubr.f32.mxu0 0.0
      %4021 = vmatmul.mubr.f32.gmra.mrb[0].mxu0 %v3853
      %v4022 = vpop.f32.mrb[0].mxu0
      %v4023 = vadd.f32 0.0, %v4022
      %v4024 = vpop.f32.mrb[0].mxu0
      %4025 = vmatprep.mubr.f32.mxu0 0.0
      %4026 = vmatmul.mubr.f32.gmra.mrb[0].mxu0 %v3855
      %v4027 = vpop.f32.mrb[0].mxu0
      %v4028 = vadd.f32 0.0, %v4027
      %v4029 = vpop.f32.mrb[0].mxu0
      %4030 = vmatprep.mubr.f32.mxu0 0.0
      %4031 = vmatmul.mubr.f32.gmra.mrb[0].mxu0 %v3857
      %v4032 = vpop.f32.mrb[0].mxu0
      %v4033 = vadd.f32 0.0, %v4032
      %v4034 = vpop.f32.mrb[0].mxu0
      %4035 = vmatprep.mubr.f32.mxu0 0.0
      %4036 = vmatmul.mubr.f32.gmra.mrb[0].mxu0 %v3859
      %v4037 = vpop.f32.mrb[0].mxu0
      %v4038 = vadd.f32 0.0, %v4037
      %v4039 = vpop.f32.mrb[0].mxu0
      %4040 = vmatprep.mubr.f32.mxu0 0.0
      %4041 = vmatmul.mubr.f32.gmra.mrb[0].mxu0 %v3861
      %v4042 = vpop.f32.mrb[0].mxu0
      %v4043 = vadd.f32 0.0, %v4042
      %v4044 = vpop.f32.mrb[0].mxu0
      %4045 = vmatprep.mubr.f32.mxu0 0.0
      %4046 = vmatmul.mubr.f32.gmra.mrb[0].mxu0 %v3863
      %v4047 = vpop.f32.mrb[0].mxu0
      %v4048 = vadd.f32 0.0, %v4047
      %v4049 = vpop.f32.mrb[0].mxu0
      %4050 = vmatprep.mubr.f32.mxu0 0.0
      %4051 = vmatmul.mubr.f32.gmra.mrb[0].mxu0 %v3865
      %v4052 = vpop.f32.mrb[0].mxu0
      %v4053 = vadd.f32 0.0, %v4052
      %v4054 = vpop.f32.mrb[0].mxu0
      %4055 = vmatprep.mubr.f32.mxu0 0.0
      %4056 = vmatmul.mubr.f32.gmra.mrb[0].mxu0 %v3867
      %v4057 = vpop.f32.mrb[0].mxu0
      %v4058 = vadd.f32 0.0, %v4057
      %v4059 = vpop.f32.mrb[0].mxu0
      %4060 = vmatprep.mubr.f32.mxu0 0.0
      %4061 = vmatmul.mubr.f32.gmra.mrb[0].mxu0 %v3869
      %v4062 = vpop.f32.mrb[0].mxu0
      %v4063 = vadd.f32 0.0, %v4062
      %v4064 = vpop.f32.mrb[0].mxu0
      %4065 = vmatprep.mubr.f32.mxu0 0.0
      %4066 = vmatmul.mubr.f32.gmra.mrb[0].mxu0 %v3871
      %v4067 = vpop.f32.mrb[0].mxu0
      %v4068 = vadd.f32 0.0, %v4067
      %v4069 = vpop.f32.mrb[0].mxu0
      %4070 = vmatprep.mubr.f32.mxu0 0.0
      %4071 = vmatmul.mubr.f32.gmra.mrb[0].mxu0 %v3873
      %v4072 = vpop.f32.mrb[0].mxu0
      %v4073 = vadd.f32 0.0, %v4072
      %v4074 = vpop.f32.mrb[0].mxu0
      %4075 = vmatprep.mubr.f32.mxu0 0.0
      %4076 = vmatmul.mubr.f32.gmra.mrb[0].mxu0 %v3875
      %v4077 = vpop.f32.mrb[0].mxu0
      %v4078 = vadd.f32 0.0, %v4077
      %v4079 = vpop.f32.mrb[0].mxu0
      %4080 = vmatprep.mubr.f32.mxu0 0.0
      %4081 = vmatmul.mubr.f32.gmra.mrb[0].mxu0 %v3877
      %v4082 = vpop.f32.mrb[0].mxu0
      %v4083 = vadd.f32 0.0, %v4082
      %v4084 = vpop.f32.mrb[0].mxu0
      %4085 = vmatprep.mubr.f32.mxu0 0.0
      %4086 = vmatmul.mubr.f32.gmra.mrb[0].mxu0 %v3879
      %v4087 = vpop.f32.mrb[0].mxu0
      %v4088 = vadd.f32 0.0, %v4087
      %v4089 = vpop.f32.mrb[0].mxu0
      %4090 = vmatprep.mubr.f32.mxu0 0.0
      %4091 = vmatmul.mubr.f32.gmra.mrb[0].mxu0 %v3881
      %v4092 = vpop.f32.mrb[0].mxu0
      %v4093 = vadd.f32 0.0, %v4092
      %v4094 = vpop.f32.mrb[0].mxu0
      %4095 = vmatprep.mubr.f32.mxu0 0.0
      %4096 = vmatmul.mubr.f32.gmra.mrb[0].mxu0 %v3883
      %v4097 = vpop.f32.mrb[0].mxu0
      %v4098 = vadd.f32 0.0, %v4097
      %v4099 = vpop.f32.mrb[0].mxu0
      %4100 = vmatprep.mubr.f32.mxu0 0.0
      %4101 = vmatmul.mubr.f32.gmra.mrb[0].mxu0 %v3885
      %v4102 = vpop.f32.mrb[0].mxu0
      %v4103 = vadd.f32 0.0, %v4102
      %v4104 = vpop.f32.mrb[0].mxu0
      %4105 = vmatprep.mubr.f32.mxu0 0.0
      %4106 = vmatmul.mubr.f32.gmra.mrb[0].mxu0 %v3887
      %v4107 = vpop.f32.mrb[0].mxu0
      %v4108 = vadd.f32 0.0, %v4107
      %v4109 = vpop.f32.mrb[0].mxu0
      %4110 = vmatprep.mubr.f32.mxu0 0.0
      %4111 = vmatmul.mubr.f32.gmra.mrb[0].mxu0 %v3889
      %v4112 = vpop.f32.mrb[0].mxu0
      %v4113 = vadd.f32 0.0, %v4112
      %v4114 = vpop.f32.mrb[0].mxu0
      %4115 = vmatprep.mubr.f32.mxu0 0.0
      %4116 = vmatmul.mubr.f32.gmra.mrb[0].mxu0 %v3891
      %v4117 = vpop.f32.mrb[0].mxu0
      %v4118 = vadd.f32 0.0, %v4117
      %v4119 = vpop.f32.mrb[0].mxu0
      %4120 = vdwg.mxu0
      %v4121 = vadd.f32 %v3699, %v3963
      %v4122 = vadd.f32 %v3700, %v3968
      %v4123 = vadd.f32 %v3701, %v3973
      %v4124 = vadd.f32 %v3702, %v3978
      %v4125 = vadd.f32 %v3703, %v3983
      %v4126 = vadd.f32 %v3704, %v3988
      %v4127 = vadd.f32 %v3705, %v3993
      %v4128 = vadd.f32 %v3706, %v3998
      %v4129 = vadd.f32 %v3707, %v4003
      %v4130 = vadd.f32 %v3708, %v4008
      %v4131 = vadd.f32 %v3709, %v4013
      %v4132 = vadd.f32 %v3710, %v4018
      %v4133 = vadd.f32 %v3711, %v4023
      %v4134 = vadd.f32 %v3712, %v4028
      %v4135 = vadd.f32 %v3713, %v4033
      %v4136 = vadd.f32 %v3714, %v4038
      %v4137 = vadd.f32 %v3715, %v4043
      %v4138 = vadd.f32 %v3716, %v4048
      %v4139 = vadd.f32 %v3717, %v4053
      %v4140 = vadd.f32 %v3718, %v4058
      %v4141 = vadd.f32 %v3719, %v4063
      %v4142 = vadd.f32 %v3720, %v4068
      %v4143 = vadd.f32 %v3721, %v4073
      %v4144 = vadd.f32 %v3722, %v4078
      %v4145 = vadd.f32 %v3723, %v4083
      %v4146 = vadd.f32 %v3724, %v4088
      %v4147 = vadd.f32 %v3725, %v4093
      %v4148 = vadd.f32 %v3726, %v4098
      %v4149 = vadd.f32 %v3727, %v4103
      %v4150 = vadd.f32 %v3728, %v4108
      %v4151 = vadd.f32 %v3729, %v4113
      %v4152 = vadd.f32 %v3730, %v4118
      %v4153 = vrot.slane %v3313, 2
      %v4154 = vrot.slane %v3314, 2
      %v4155 = vsel %vm1068, %v4153, %v4154
      %v4156 = vrot.slane %v3315, 2
      %v4157 = vsel %vm1068, %v4154, %v4156
      %v4158 = vrot.slane %v3316, 2
      %v4159 = vrot.slane %v3317, 2
      %v4160 = vsel %vm1068, %v4158, %v4159
      %v4161 = vrot.slane %v3318, 2
      %v4162 = vsel %vm1068, %v4159, %v4161
      %v4163 = vrot.slane %v3319, 2
      %v4164 = vrot.slane %v3320, 2
      %v4165 = vsel %vm1068, %v4163, %v4164
      %v4166 = vrot.slane %v3321, 2
      %v4167 = vsel %vm1068, %v4164, %v4166
      %v4168 = vrot.slane %v3322, 2
      %v4169 = vrot.slane %v3323, 2
      %v4170 = vsel %vm1068, %v4168, %v4169
      %v4171 = vrot.slane %v3324, 2
      %v4172 = vsel %vm1068, %v4169, %v4171
      %v4173 = vrot.slane %v3325, 2
      %v4174 = vrot.slane %v3326, 2
      %v4175 = vsel %vm1068, %v4173, %v4174
      %v4176 = vrot.slane %v3327, 2
      %v4177 = vsel %vm1068, %v4174, %v4176
      %v4178 = vrot.slane %v3328, 2
      %v4179 = vrot.slane %v3329, 2
      %v4180 = vsel %vm1068, %v4178, %v4179
      %v4181 = vrot.slane %v3330, 2
      %v4182 = vsel %vm1068, %v4179, %v4181
      %v4183 = vrot.slane %v3331, 2
      %v4184 = vrot.slane %v3332, 2
      %v4185 = vsel %vm1068, %v4183, %v4184
      %v4186 = vrot.slane %v3333, 2
      %v4187 = vsel %vm1068, %v4184, %v4186
      %v4188 = vrot.slane %v3334, 2
      %v4189 = vrot.slane %v3335, 2
      %v4190 = vsel %vm1068, %v4188, %v4189
      %v4191 = vrot.slane %v3336, 2
      %v4192 = vsel %vm1068, %v4189, %v4191
      %v4193 = vrot.slane %v3337, 2
      %v4194 = vrot.slane %v3338, 2
      %v4195 = vsel %vm1068, %v4193, %v4194
      %v4196 = vrot.slane %v3339, 2
      %v4197 = vsel %vm1068, %v4194, %v4196
      %v4198 = vrot.slane %v3340, 2
      %v4199 = vrot.slane %v3341, 2
      %v4200 = vsel %vm1068, %v4198, %v4199
      %v4201 = vrot.slane %v3342, 2
      %v4202 = vsel %vm1068, %v4199, %v4201
      %v4203 = vrot.slane %v3343, 2
      %v4204 = vrot.slane %v3344, 2
      %v4205 = vsel %vm1068, %v4203, %v4204
      %v4206 = vrot.slane %v3345, 2
      %v4207 = vsel %vm1068, %v4204, %v4206
      %v4208 = vrot.slane %v3346, 2
      %v4209 = vrot.slane %v3347, 2
      %v4210 = vsel %vm1068, %v4208, %v4209
      %v4211 = vrot.slane %v3348, 2
      %v4212 = vsel %vm1068, %v4209, %v4211
      %v4213 = vrot.slane %v3349, 2
      %v4214 = vrot.slane %v3350, 2
      %v4215 = vsel %vm1068, %v4213, %v4214
      %v4216 = vrot.slane %v3351, 2
      %v4217 = vsel %vm1068, %v4214, %v4216
      %v4218 = vrot.slane %v3352, 2
      %v4219 = vrot.slane %v3353, 2
      %v4220 = vsel %vm1068, %v4218, %v4219
      %v4221 = vrot.slane %v3354, 2
      %v4222 = vsel %vm1068, %v4219, %v4221
      %v4223 = vrot.slane %v3355, 2
      %v4224 = vrot.slane %v3356, 2
      %v4225 = vsel %vm1068, %v4223, %v4224
      %v4226 = vrot.slane %v3357, 2
      %v4227 = vsel %vm1068, %v4224, %v4226
      %v4228 = vrot.slane %v3358, 2
      %v4229 = vrot.slane %v3359, 2
      %v4230 = vsel %vm1068, %v4228, %v4229
      %v4231 = vrot.slane %v3360, 2
      %v4232 = vsel %vm1068, %v4229, %v4231
      %s4233 = scalar_lea.vmem %s3, 8
      %v4234 = vld [vmem:[%s4233] sm:$0xf]
      %v4235 = vsel %vm287, %v4155, 0
      %v4237 = vsel %vm287, %v4157, 0
      %v4239 = vsel %vm287, %v4160, 0
      %v4241 = vsel %vm287, %v4162, 0
      %v4243 = vsel %vm287, %v4165, 0
      %v4245 = vsel %vm287, %v4167, 0
      %v4247 = vsel %vm287, %v4170, 0
      %v4249 = vsel %vm287, %v4172, 0
      %v4251 = vsel %vm287, %v4175, 0
      %v4253 = vsel %vm287, %v4177, 0
      %v4255 = vsel %vm287, %v4180, 0
      %v4257 = vsel %vm287, %v4182, 0
      %v4259 = vsel %vm287, %v4185, 0
      %v4261 = vsel %vm287, %v4187, 0
      %v4263 = vsel %vm287, %v4190, 0
      %v4265 = vsel %vm287, %v4192, 0
      %v4267 = vsel %vm287, %v4195, 0
      %v4269 = vsel %vm287, %v4197, 0
      %v4271 = vsel %vm287, %v4200, 0
      %v4273 = vsel %vm287, %v4202, 0
      %v4275 = vsel %vm287, %v4205, 0
      %v4277 = vsel %vm287, %v4207, 0
      %v4279 = vsel %vm287, %v4210, 0
      %v4281 = vsel %vm287, %v4212, 0
      %v4283 = vsel %vm287, %v4215, 0
      %v4285 = vsel %vm287, %v4217, 0
      %v4287 = vsel %vm287, %v4220, 0
      %v4289 = vsel %vm287, %v4222, 0
      %v4291 = vsel %vm287, %v4225, 0
      %v4293 = vsel %vm287, %v4227, 0
      %v4295 = vsel %vm287, %v4230, 0
      %v4297 = vsel %vm287, %v4232, 0
      %v4300 = vsel %vm384, %v4234, 0
      %4302 = vmatprep.subr.mxu0 0.0
      %4303 = vmatpush1.msra.mxu0 %v4300
      %4304 = vmatprep.subr.mxu0 0.0
      %4305 = vmatpush1.msra.mxu0 0.0
      %4306 = vmatprep.subr.mxu0 0.0
      %4307 = vmatpush1.msra.mxu0 0.0
      %4308 = vmatprep.subr.mxu0 0.0
      %4309 = vmatpush1.msra.mxu0 0.0
      %4310 = vmatprep.subr.mxu0 0.0
      %4311 = vmatpush1.msra.mxu0 0.0
      %4312 = vmatprep.subr.mxu0 0.0
      %4313 = vmatpush1.msra.mxu0 0.0
      %4314 = vmatprep.subr.mxu0 0.0
      %4315 = vmatpush1.msra.mxu0 0.0
      %4316 = vmatprep.subr.mxu0 0.0
      %4317 = vmatpush1.msra.mxu0 0.0
      %4318 = vmatprep.subr.mxu0 0.0
      %4319 = vmatpush1.msra.mxu0 0.0
      %4320 = vmatprep.subr.mxu0 0.0
      %4321 = vmatpush1.msra.mxu0 0.0
      %4322 = vmatprep.subr.mxu0 0.0
      %4323 = vmatpush1.msra.mxu0 0.0
      %4324 = vmatprep.subr.mxu0 0.0
      %4325 = vmatpush1.msra.mxu0 0.0
      %4326 = vmatprep.subr.mxu0 0.0
      %4327 = vmatpush1.msra.mxu0 0.0
      %4328 = vmatprep.subr.mxu0 0.0
      %4329 = vmatpush1.msra.mxu0 0.0
      %4330 = vmatprep.subr.mxu0 0.0
      %4331 = vmatpush1.msra.mxu0 0.0
      %4332 = vmatprep.subr.mxu0 0.0
      %4333 = vmatpush1.msra.mxu0 0.0
      %4334 = vmatprep.subr.mxu0 0.0
      %4335 = vmatpush1.msra.mxu0 0.0
      %4336 = vmatprep.subr.mxu0 0.0
      %4337 = vmatpush1.msra.mxu0 0.0
      %4338 = vmatprep.subr.mxu0 0.0
      %4339 = vmatpush1.msra.mxu0 0.0
      %4340 = vmatprep.subr.mxu0 0.0
      %4341 = vmatpush1.msra.mxu0 0.0
      %4342 = vmatprep.subr.mxu0 0.0
      %4343 = vmatpush1.msra.mxu0 0.0
      %4344 = vmatprep.subr.mxu0 0.0
      %4345 = vmatpush1.msra.mxu0 0.0
      %4346 = vmatprep.subr.mxu0 0.0
      %4347 = vmatpush1.msra.mxu0 0.0
      %4348 = vmatprep.subr.mxu0 0.0
      %4349 = vmatpush1.msra.mxu0 0.0
      %4350 = vmatprep.subr.mxu0 0.0
      %4351 = vmatpush1.msra.mxu0 0.0
      %4352 = vmatprep.subr.mxu0 0.0
      %4353 = vmatpush1.msra.mxu0 0.0
      %4354 = vmatprep.subr.mxu0 0.0
      %4355 = vmatpush1.msra.mxu0 0.0
      %4356 = vmatprep.subr.mxu0 0.0
      %4357 = vmatpush1.msra.mxu0 0.0
      %4358 = vmatprep.subr.mxu0 0.0
      %4359 = vmatpush1.msra.mxu0 0.0
      %4360 = vmatprep.subr.mxu0 0.0
      %4361 = vmatpush1.msra.mxu0 0.0
      %4362 = vmatprep.subr.mxu0 0.0
      %4363 = vmatpush1.msra.mxu0 0.0
      %4364 = vmatprep.subr.mxu0 0.0
      %4365 = vmatpush1.msra.mxu0 0.0
      %4366 = vmatprep.mubr.f32.mxu0 0.0
      %4367 = vmatmul.mubr.f32.gmra.mrb[0].mxu0 %v4235
      %v4368 = vpop.f32.mrb[0].mxu0
      %v4369 = vadd.f32 0.0, %v4368
      %v4370 = vpop.f32.mrb[0].mxu0
      %4371 = vmatprep.mubr.f32.mxu0 0.0
      %4372 = vmatmul.mubr.f32.gmra.mrb[0].mxu0 %v4237
      %v4373 = vpop.f32.mrb[0].mxu0
      %v4374 = vadd.f32 0.0, %v4373
      %v4375 = vpop.f32.mrb[0].mxu0
      %4376 = vmatprep.mubr.f32.mxu0 0.0
      %4377 = vmatmul.mubr.f32.gmra.mrb[0].mxu0 %v4239
      %v4378 = vpop.f32.mrb[0].mxu0
      %v4379 = vadd.f32 0.0, %v4378
      %v4380 = vpop.f32.mrb[0].mxu0
      %4381 = vmatprep.mubr.f32.mxu0 0.0
      %4382 = vmatmul.mubr.f32.gmra.mrb[0].mxu0 %v4241
      %v4383 = vpop.f32.mrb[0].mxu0
      %v4384 = vadd.f32 0.0, %v4383
      %v4385 = vpop.f32.mrb[0].mxu0
      %4386 = vmatprep.mubr.f32.mxu0 0.0
      %4387 = vmatmul.mubr.f32.gmra.mrb[0].mxu0 %v4243
      %v4388 = vpop.f32.mrb[0].mxu0
      %v4389 = vadd.f32 0.0, %v4388
      %v4390 = vpop.f32.mrb[0].mxu0
      %4391 = vmatprep.mubr.f32.mxu0 0.0
      %4392 = vmatmul.mubr.f32.gmra.mrb[0].mxu0 %v4245
      %v4393 = vpop.f32.mrb[0].mxu0
      %v4394 = vadd.f32 0.0, %v4393
      %v4395 = vpop.f32.mrb[0].mxu0
      %4396 = vmatprep.mubr.f32.mxu0 0.0
      %4397 = vmatmul.mubr.f32.gmra.mrb[0].mxu0 %v4247
      %v4398 = vpop.f32.mrb[0].mxu0
      %v4399 = vadd.f32 0.0, %v4398
      %v4400 = vpop.f32.mrb[0].mxu0
      %4401 = vmatprep.mubr.f32.mxu0 0.0
      %4402 = vmatmul.mubr.f32.gmra.mrb[0].mxu0 %v4249
      %v4403 = vpop.f32.mrb[0].mxu0
      %v4404 = vadd.f32 0.0, %v4403
      %v4405 = vpop.f32.mrb[0].mxu0
      %4406 = vmatprep.mubr.f32.mxu0 0.0
      %4407 = vmatmul.mubr.f32.gmra.mrb[0].mxu0 %v4251
      %v4408 = vpop.f32.mrb[0].mxu0
      %v4409 = vadd.f32 0.0, %v4408
      %v4410 = vpop.f32.mrb[0].mxu0
      %4411 = vmatprep.mubr.f32.mxu0 0.0
      %4412 = vmatmul.mubr.f32.gmra.mrb[0].mxu0 %v4253
      %v4413 = vpop.f32.mrb[0].mxu0
      %v4414 = vadd.f32 0.0, %v4413
      %v4415 = vpop.f32.mrb[0].mxu0
      %4416 = vmatprep.mubr.f32.mxu0 0.0
      %4417 = vmatmul.mubr.f32.gmra.mrb[0].mxu0 %v4255
      %v4418 = vpop.f32.mrb[0].mxu0
      %v4419 = vadd.f32 0.0, %v4418
      %v4420 = vpop.f32.mrb[0].mxu0
      %4421 = vmatprep.mubr.f32.mxu0 0.0
      %4422 = vmatmul.mubr.f32.gmra.mrb[0].mxu0 %v4257
      %v4423 = vpop.f32.mrb[0].mxu0
      %v4424 = vadd.f32 0.0, %v4423
      %v4425 = vpop.f32.mrb[0].mxu0
      %4426 = vmatprep.mubr.f32.mxu0 0.0
      %4427 = vmatmul.mubr.f32.gmra.mrb[0].mxu0 %v4259
      %v4428 = vpop.f32.mrb[0].mxu0
      %v4429 = vadd.f32 0.0, %v4428
      %v4430 = vpop.f32.mrb[0].mxu0
      %4431 = vmatprep.mubr.f32.mxu0 0.0
      %4432 = vmatmul.mubr.f32.gmra.mrb[0].mxu0 %v4261
      %v4433 = vpop.f32.mrb[0].mxu0
      %v4434 = vadd.f32 0.0, %v4433
      %v4435 = vpop.f32.mrb[0].mxu0
      %4436 = vmatprep.mubr.f32.mxu0 0.0
      %4437 = vmatmul.mubr.f32.gmra.mrb[0].mxu0 %v4263
      %v4438 = vpop.f32.mrb[0].mxu0
      %v4439 = vadd.f32 0.0, %v4438
      %v4440 = vpop.f32.mrb[0].mxu0
      %4441 = vmatprep.mubr.f32.mxu0 0.0
      %4442 = vmatmul.mubr.f32.gmra.mrb[0].mxu0 %v4265
      %v4443 = vpop.f32.mrb[0].mxu0
      %v4444 = vadd.f32 0.0, %v4443
      %v4445 = vpop.f32.mrb[0].mxu0
      %4446 = vmatprep.mubr.f32.mxu0 0.0
      %4447 = vmatmul.mubr.f32.gmra.mrb[0].mxu0 %v4267
      %v4448 = vpop.f32.mrb[0].mxu0
      %v4449 = vadd.f32 0.0, %v4448
      %v4450 = vpop.f32.mrb[0].mxu0
      %4451 = vmatprep.mubr.f32.mxu0 0.0
      %4452 = vmatmul.mubr.f32.gmra.mrb[0].mxu0 %v4269
      %v4453 = vpop.f32.mrb[0].mxu0
      %v4454 = vadd.f32 0.0, %v4453
      %v4455 = vpop.f32.mrb[0].mxu0
      %4456 = vmatprep.mubr.f32.mxu0 0.0
      %4457 = vmatmul.mubr.f32.gmra.mrb[0].mxu0 %v4271
      %v4458 = vpop.f32.mrb[0].mxu0
      %v4459 = vadd.f32 0.0, %v4458
      %v4460 = vpop.f32.mrb[0].mxu0
      %4461 = vmatprep.mubr.f32.mxu0 0.0
      %4462 = vmatmul.mubr.f32.gmra.mrb[0].mxu0 %v4273
      %v4463 = vpop.f32.mrb[0].mxu0
      %v4464 = vadd.f32 0.0, %v4463
      %v4465 = vpop.f32.mrb[0].mxu0
      %4466 = vmatprep.mubr.f32.mxu0 0.0
      %4467 = vmatmul.mubr.f32.gmra.mrb[0].mxu0 %v4275
      %v4468 = vpop.f32.mrb[0].mxu0
      %v4469 = vadd.f32 0.0, %v4468
      %v4470 = vpop.f32.mrb[0].mxu0
      %4471 = vmatprep.mubr.f32.mxu0 0.0
      %4472 = vmatmul.mubr.f32.gmra.mrb[0].mxu0 %v4277
      %v4473 = vpop.f32.mrb[0].mxu0
      %v4474 = vadd.f32 0.0, %v4473
      %v4475 = vpop.f32.mrb[0].mxu0
      %4476 = vmatprep.mubr.f32.mxu0 0.0
      %4477 = vmatmul.mubr.f32.gmra.mrb[0].mxu0 %v4279
      %v4478 = vpop.f32.mrb[0].mxu0
      %v4479 = vadd.f32 0.0, %v4478
      %v4480 = vpop.f32.mrb[0].mxu0
      %4481 = vmatprep.mubr.f32.mxu0 0.0
      %4482 = vmatmul.mubr.f32.gmra.mrb[0].mxu0 %v4281
      %v4483 = vpop.f32.mrb[0].mxu0
      %v4484 = vadd.f32 0.0, %v4483
      %v4485 = vpop.f32.mrb[0].mxu0
      %4486 = vmatprep.mubr.f32.mxu0 0.0
      %4487 = vmatmul.mubr.f32.gmra.mrb[0].mxu0 %v4283
      %v4488 = vpop.f32.mrb[0].mxu0
      %v4489 = vadd.f32 0.0, %v4488
      %v4490 = vpop.f32.mrb[0].mxu0
      %4491 = vmatprep.mubr.f32.mxu0 0.0
      %4492 = vmatmul.mubr.f32.gmra.mrb[0].mxu0 %v4285
      %v4493 = vpop.f32.mrb[0].mxu0
      %v4494 = vadd.f32 0.0, %v4493
      %v4495 = vpop.f32.mrb[0].mxu0
      %4496 = vmatprep.mubr.f32.mxu0 0.0
      %4497 = vmatmul.mubr.f32.gmra.mrb[0].mxu0 %v4287
      %v4498 = vpop.f32.mrb[0].mxu0
      %v4499 = vadd.f32 0.0, %v4498
      %v4500 = vpop.f32.mrb[0].mxu0
      %4501 = vmatprep.mubr.f32.mxu0 0.0
      %4502 = vmatmul.mubr.f32.gmra.mrb[0].mxu0 %v4289
      %v4503 = vpop.f32.mrb[0].mxu0
      %v4504 = vadd.f32 0.0, %v4503
      %v4505 = vpop.f32.mrb[0].mxu0
      %4506 = vmatprep.mubr.f32.mxu0 0.0
      %4507 = vmatmul.mubr.f32.gmra.mrb[0].mxu0 %v4291
      %v4508 = vpop.f32.mrb[0].mxu0
      %v4509 = vadd.f32 0.0, %v4508
      %v4510 = vpop.f32.mrb[0].mxu0
      %4511 = vmatprep.mubr.f32.mxu0 0.0
      %4512 = vmatmul.mubr.f32.gmra.mrb[0].mxu0 %v4293
      %v4513 = vpop.f32.mrb[0].mxu0
      %v4514 = vadd.f32 0.0, %v4513
      %v4515 = vpop.f32.mrb[0].mxu0
      %4516 = vmatprep.mubr.f32.mxu0 0.0
      %4517 = vmatmul.mubr.f32.gmra.mrb[0].mxu0 %v4295
      %v4518 = vpop.f32.mrb[0].mxu0
      %v4519 = vadd.f32 0.0, %v4518
      %v4520 = vpop.f32.mrb[0].mxu0
      %4521 = vmatprep.mubr.f32.mxu0 0.0
      %4522 = vmatmul.mubr.f32.gmra.mrb[0].mxu0 %v4297
      %v4523 = vpop.f32.mrb[0].mxu0
      %v4524 = vadd.f32 0.0, %v4523
      %v4525 = vpop.f32.mrb[0].mxu0
      %4526 = vdwg.mxu0
      %v4527 = vadd.f32 %v4121, %v4369
      %v4528 = vadd.f32 %v4122, %v4374
      %v4529 = vadd.f32 %v4123, %v4379
      %v4530 = vadd.f32 %v4124, %v4384
      %v4531 = vadd.f32 %v4125, %v4389
      %v4532 = vadd.f32 %v4126, %v4394
      %v4533 = vadd.f32 %v4127, %v4399
      %v4534 = vadd.f32 %v4128, %v4404
      %v4535 = vadd.f32 %v4129, %v4409
      %v4536 = vadd.f32 %v4130, %v4414
      %v4537 = vadd.f32 %v4131, %v4419
      %v4538 = vadd.f32 %v4132, %v4424
      %v4539 = vadd.f32 %v4133, %v4429
      %v4540 = vadd.f32 %v4134, %v4434
      %v4541 = vadd.f32 %v4135, %v4439
      %v4542 = vadd.f32 %v4136, %v4444
      %v4543 = vadd.f32 %v4137, %v4449
      %v4544 = vadd.f32 %v4138, %v4454
      %v4545 = vadd.f32 %v4139, %v4459
      %v4546 = vadd.f32 %v4140, %v4464
      %v4547 = vadd.f32 %v4141, %v4469
      %v4548 = vadd.f32 %v4142, %v4474
      %v4549 = vadd.f32 %v4143, %v4479
      %v4550 = vadd.f32 %v4144, %v4484
      %v4551 = vadd.f32 %v4145, %v4489
      %v4552 = vadd.f32 %v4146, %v4494
      %v4553 = vadd.f32 %v4147, %v4499
      %v4554 = vadd.f32 %v4148, %v4504
      %v4555 = vadd.f32 %v4149, %v4509
      %v4556 = vadd.f32 %v4150, %v4514
      %v4557 = vadd.f32 %v4151, %v4519
      %v4558 = vadd.f32 %v4152, %v4524
      %s4559 = scalar_lea.vmem %s3, 12
      %v4560 = vld [vmem:[%s4559] sm:$0xf]
      %v4562 = vsel %vm287, %v3361, 0
      %v4565 = vsel %vm287, %v3362, 0
      %v4568 = vsel %vm384, %v4560, 0
      %4570 = vmatprep.subr.mxu0 0.0
      %4571 = vmatpush1.msra.mxu0 %v4568
      %4572 = vmatprep.subr.mxu0 0.0
      %4573 = vmatpush1.msra.mxu0 0.0
      %4574 = vmatprep.subr.mxu0 0.0
      %4575 = vmatpush1.msra.mxu0 0.0
      %4576 = vmatprep.subr.mxu0 0.0
      %4577 = vmatpush1.msra.mxu0 0.0
      %4578 = vmatprep.subr.mxu0 0.0
      %4579 = vmatpush1.msra.mxu0 0.0
      %4580 = vmatprep.subr.mxu0 0.0
      %4581 = vmatpush1.msra.mxu0 0.0
      %4582 = vmatprep.subr.mxu0 0.0
      %4583 = vmatpush1.msra.mxu0 0.0
      %4584 = vmatprep.subr.mxu0 0.0
      %4585 = vmatpush1.msra.mxu0 0.0
      %4586 = vmatprep.subr.mxu0 0.0
      %4587 = vmatpush1.msra.mxu0 0.0
      %4588 = vmatprep.subr.mxu0 0.0
      %4589 = vmatpush1.msra.mxu0 0.0
      %4590 = vmatprep.subr.mxu0 0.0
      %4591 = vmatpush1.msra.mxu0 0.0
      %4592 = vmatprep.subr.mxu0 0.0
      %4593 = vmatpush1.msra.mxu0 0.0
      %4594 = vmatprep.subr.mxu0 0.0
      %4595 = vmatpush1.msra.mxu0 0.0
      %4596 = vmatprep.subr.mxu0 0.0
      %4597 = vmatpush1.msra.mxu0 0.0
      %4598 = vmatprep.subr.mxu0 0.0
      %4599 = vmatpush1.msra.mxu0 0.0
      %4600 = vmatprep.subr.mxu0 0.0
      %4601 = vmatpush1.msra.mxu0 0.0
      %4602 = vmatprep.subr.mxu0 0.0
      %4603 = vmatpush1.msra.mxu0 0.0
      %4604 = vmatprep.subr.mxu0 0.0
      %4605 = vmatpush1.msra.mxu0 0.0
      %4606 = vmatprep.subr.mxu0 0.0
      %4607 = vmatpush1.msra.mxu0 0.0
      %4608 = vmatprep.subr.mxu0 0.0
      %4609 = vmatpush1.msra.mxu0 0.0
      %4610 = vmatprep.subr.mxu0 0.0
      %4611 = vmatpush1.msra.mxu0 0.0
      %4612 = vmatprep.subr.mxu0 0.0
      %4613 = vmatpush1.msra.mxu0 0.0
      %4614 = vmatprep.subr.mxu0 0.0
      %4615 = vmatpush1.msra.mxu0 0.0
      %4616 = vmatprep.subr.mxu0 0.0
      %4617 = vmatpush1.msra.mxu0 0.0
      %4618 = vmatprep.subr.mxu0 0.0
      %4619 = vmatpush1.msra.mxu0 0.0
      %4620 = vmatprep.subr.mxu0 0.0
      %4621 = vmatpush1.msra.mxu0 0.0
      %4622 = vmatprep.subr.mxu0 0.0
      %4623 = vmatpush1.msra.mxu0 0.0
      %4624 = vmatprep.subr.mxu0 0.0
      %4625 = vmatpush1.msra.mxu0 0.0
      %4626 = vmatprep.subr.mxu0 0.0
      %4627 = vmatpush1.msra.mxu0 0.0
      %4628 = vmatprep.subr.mxu0 0.0
      %4629 = vmatpush1.msra.mxu0 0.0
      %4630 = vmatprep.subr.mxu0 0.0
      %4631 = vmatpush1.msra.mxu0 0.0
      %4632 = vmatprep.subr.mxu0 0.0
      %4633 = vmatpush1.msra.mxu0 0.0
      %4634 = vmatprep.mubr.f32.mxu0 0.0
      %4635 = vmatmul.mubr.f32.gmra.mrb[0].mxu0 %v3382
      %v4636 = vpop.f32.mrb[0].mxu0
      %v4637 = vadd.f32 0.0, %v4636
      %v4638 = vpop.f32.mrb[0].mxu0
      %4639 = vmatprep.mubr.f32.mxu0 0.0
      %4640 = vmatmul.mubr.f32.gmra.mrb[0].mxu0 %v3385
      %v4641 = vpop.f32.mrb[0].mxu0
      %v4642 = vadd.f32 0.0, %v4641
      %v4643 = vpop.f32.mrb[0].mxu0
      %4644 = vmatprep.mubr.f32.mxu0 0.0
      %4645 = vmatmul.mubr.f32.gmra.mrb[0].mxu0 %v3388
      %v4646 = vpop.f32.mrb[0].mxu0
      %v4647 = vadd.f32 0.0, %v4646
      %v4648 = vpop.f32.mrb[0].mxu0
      %4649 = vmatprep.mubr.f32.mxu0 0.0
      %4650 = vmatmul.mubr.f32.gmra.mrb[0].mxu0 %v3391
      %v4651 = vpop.f32.mrb[0].mxu0
      %v4652 = vadd.f32 0.0, %v4651
      %v4653 = vpop.f32.mrb[0].mxu0
      %4654 = vmatprep.mubr.f32.mxu0 0.0
      %4655 = vmatmul.mubr.f32.gmra.mrb[0].mxu0 %v3394
      %v4656 = vpop.f32.mrb[0].mxu0
      %v4657 = vadd.f32 0.0, %v4656
      %v4658 = vpop.f32.mrb[0].mxu0
      %4659 = vmatprep.mubr.f32.mxu0 0.0
      %4660 = vmatmul.mubr.f32.gmra.mrb[0].mxu0 %v3397
      %v4661 = vpop.f32.mrb[0].mxu0
      %v4662 = vadd.f32 0.0, %v4661
      %v4663 = vpop.f32.mrb[0].mxu0
      %4664 = vmatprep.mubr.f32.mxu0 0.0
      %4665 = vmatmul.mubr.f32.gmra.mrb[0].mxu0 %v3400
      %v4666 = vpop.f32.mrb[0].mxu0
      %v4667 = vadd.f32 0.0, %v4666
      %v4668 = vpop.f32.mrb[0].mxu0
      %4669 = vmatprep.mubr.f32.mxu0 0.0
      %4670 = vmatmul.mubr.f32.gmra.mrb[0].mxu0 %v3403
      %v4671 = vpop.f32.mrb[0].mxu0
      %v4672 = vadd.f32 0.0, %v4671
      %v4673 = vpop.f32.mrb[0].mxu0
      %4674 = vmatprep.mubr.f32.mxu0 0.0
      %4675 = vmatmul.mubr.f32.gmra.mrb[0].mxu0 %v3406
      %v4676 = vpop.f32.mrb[0].mxu0
      %v4677 = vadd.f32 0.0, %v4676
      %v4678 = vpop.f32.mrb[0].mxu0
      %4679 = vmatprep.mubr.f32.mxu0 0.0
      %4680 = vmatmul.mubr.f32.gmra.mrb[0].mxu0 %v3409
      %v4681 = vpop.f32.mrb[0].mxu0
      %v4682 = vadd.f32 0.0, %v4681
      %v4683 = vpop.f32.mrb[0].mxu0
      %4684 = vmatprep.mubr.f32.mxu0 0.0
      %4685 = vmatmul.mubr.f32.gmra.mrb[0].mxu0 %v3412
      %v4686 = vpop.f32.mrb[0].mxu0
      %v4687 = vadd.f32 0.0, %v4686
      %v4688 = vpop.f32.mrb[0].mxu0
      %4689 = vmatprep.mubr.f32.mxu0 0.0
      %4690 = vmatmul.mubr.f32.gmra.mrb[0].mxu0 %v3415
      %v4691 = vpop.f32.mrb[0].mxu0
      %v4692 = vadd.f32 0.0, %v4691
      %v4693 = vpop.f32.mrb[0].mxu0
      %4694 = vmatprep.mubr.f32.mxu0 0.0
      %4695 = vmatmul.mubr.f32.gmra.mrb[0].mxu0 %v3418
      %v4696 = vpop.f32.mrb[0].mxu0
      %v4697 = vadd.f32 0.0, %v4696
      %v4698 = vpop.f32.mrb[0].mxu0
      %4699 = vmatprep.mubr.f32.mxu0 0.0
      %4700 = vmatmul.mubr.f32.gmra.mrb[0].mxu0 %v3421
      %v4701 = vpop.f32.mrb[0].mxu0
      %v4702 = vadd.f32 0.0, %v4701
      %v4703 = vpop.f32.mrb[0].mxu0
      %4704 = vmatprep.mubr.f32.mxu0 0.0
      %4705 = vmatmul.mubr.f32.gmra.mrb[0].mxu0 %v3424
      %v4706 = vpop.f32.mrb[0].mxu0
      %v4707 = vadd.f32 0.0, %v4706
      %v4708 = vpop.f32.mrb[0].mxu0
      %4709 = vmatprep.mubr.f32.mxu0 0.0
      %4710 = vmatmul.mubr.f32.gmra.mrb[0].mxu0 %v3427
      %v4711 = vpop.f32.mrb[0].mxu0
      %v4712 = vadd.f32 0.0, %v4711
      %v4713 = vpop.f32.mrb[0].mxu0
      %4714 = vmatprep.mubr.f32.mxu0 0.0
      %4715 = vmatmul.mubr.f32.gmra.mrb[0].mxu0 %v3430
      %v4716 = vpop.f32.mrb[0].mxu0
      %v4717 = vadd.f32 0.0, %v4716
      %v4718 = vpop.f32.mrb[0].mxu0
      %4719 = vmatprep.mubr.f32.mxu0 0.0
      %4720 = vmatmul.mubr.f32.gmra.mrb[0].mxu0 %v3433
      %v4721 = vpop.f32.mrb[0].mxu0
      %v4722 = vadd.f32 0.0, %v4721
      %v4723 = vpop.f32.mrb[0].mxu0
      %4724 = vmatprep.mubr.f32.mxu0 0.0
      %4725 = vmatmul.mubr.f32.gmra.mrb[0].mxu0 %v3436
      %v4726 = vpop.f32.mrb[0].mxu0
      %v4727 = vadd.f32 0.0, %v4726
      %v4728 = vpop.f32.mrb[0].mxu0
      %4729 = vmatprep.mubr.f32.mxu0 0.0
      %4730 = vmatmul.mubr.f32.gmra.mrb[0].mxu0 %v3439
      %v4731 = vpop.f32.mrb[0].mxu0
      %v4732 = vadd.f32 0.0, %v4731
      %v4733 = vpop.f32.mrb[0].mxu0
      %4734 = vmatprep.mubr.f32.mxu0 0.0
      %4735 = vmatmul.mubr.f32.gmra.mrb[0].mxu0 %v3442
      %v4736 = vpop.f32.mrb[0].mxu0
      %v4737 = vadd.f32 0.0, %v4736
      %v4738 = vpop.f32.mrb[0].mxu0
      %4739 = vmatprep.mubr.f32.mxu0 0.0
      %4740 = vmatmul.mubr.f32.gmra.mrb[0].mxu0 %v3445
      %v4741 = vpop.f32.mrb[0].mxu0
      %v4742 = vadd.f32 0.0, %v4741
      %v4743 = vpop.f32.mrb[0].mxu0
      %4744 = vmatprep.mubr.f32.mxu0 0.0
      %4745 = vmatmul.mubr.f32.gmra.mrb[0].mxu0 %v3448
      %v4746 = vpop.f32.mrb[0].mxu0
      %v4747 = vadd.f32 0.0, %v4746
      %v4748 = vpop.f32.mrb[0].mxu0
      %4749 = vmatprep.mubr.f32.mxu0 0.0
      %4750 = vmatmul.mubr.f32.gmra.mrb[0].mxu0 %v3451
      %v4751 = vpop.f32.mrb[0].mxu0
      %v4752 = vadd.f32 0.0, %v4751
      %v4753 = vpop.f32.mrb[0].mxu0
      %4754 = vmatprep.mubr.f32.mxu0 0.0
      %4755 = vmatmul.mubr.f32.gmra.mrb[0].mxu0 %v3454
      %v4756 = vpop.f32.mrb[0].mxu0
      %v4757 = vadd.f32 0.0, %v4756
      %v4758 = vpop.f32.mrb[0].mxu0
      %4759 = vmatprep.mubr.f32.mxu0 0.0
      %4760 = vmatmul.mubr.f32.gmra.mrb[0].mxu0 %v3457
      %v4761 = vpop.f32.mrb[0].mxu0
      %v4762 = vadd.f32 0.0, %v4761
      %v4763 = vpop.f32.mrb[0].mxu0
      %4764 = vmatprep.mubr.f32.mxu0 0.0
      %4765 = vmatmul.mubr.f32.gmra.mrb[0].mxu0 %v3460
      %v4766 = vpop.f32.mrb[0].mxu0
      %v4767 = vadd.f32 0.0, %v4766
      %v4768 = vpop.f32.mrb[0].mxu0
      %4769 = vmatprep.mubr.f32.mxu0 0.0
      %4770 = vmatmul.mubr.f32.gmra.mrb[0].mxu0 %v3463
      %v4771 = vpop.f32.mrb[0].mxu0
      %v4772 = vadd.f32 0.0, %v4771
      %v4773 = vpop.f32.mrb[0].mxu0
      %4774 = vmatprep.mubr.f32.mxu0 0.0
      %4775 = vmatmul.mubr.f32.gmra.mrb[0].mxu0 %v3466
      %v4776 = vpop.f32.mrb[0].mxu0
      %v4777 = vadd.f32 0.0, %v4776
      %v4778 = vpop.f32.mrb[0].mxu0
      %4779 = vmatprep.mubr.f32.mxu0 0.0
      %4780 = vmatmul.mubr.f32.gmra.mrb[0].mxu0 %v3469
      %v4781 = vpop.f32.mrb[0].mxu0
      %v4782 = vadd.f32 0.0, %v4781
      %v4783 = vpop.f32.mrb[0].mxu0
      %4784 = vmatprep.mubr.f32.mxu0 0.0
      %4785 = vmatmul.mubr.f32.gmra.mrb[0].mxu0 %v4562
      %v4786 = vpop.f32.mrb[0].mxu0
      %v4787 = vadd.f32 0.0, %v4786
      %v4788 = vpop.f32.mrb[0].mxu0
      %4789 = vmatprep.mubr.f32.mxu0 0.0
      %4790 = vmatmul.mubr.f32.gmra.mrb[0].mxu0 %v4565
      %v4791 = vpop.f32.mrb[0].mxu0
      %v4792 = vadd.f32 0.0, %v4791
      %v4793 = vpop.f32.mrb[0].mxu0
      %4794 = vdwg.mxu0
      %v4795 = vadd.f32 %v4527, %v4637
      %v4796 = vadd.f32 %v4528, %v4642
      %v4797 = vadd.f32 %v4529, %v4647
      %v4798 = vadd.f32 %v4530, %v4652
      %v4799 = vadd.f32 %v4531, %v4657
      %v4800 = vadd.f32 %v4532, %v4662
      %v4801 = vadd.f32 %v4533, %v4667
      %v4802 = vadd.f32 %v4534, %v4672
      %v4803 = vadd.f32 %v4535, %v4677
      %v4804 = vadd.f32 %v4536, %v4682
      %v4805 = vadd.f32 %v4537, %v4687
      %v4806 = vadd.f32 %v4538, %v4692
      %v4807 = vadd.f32 %v4539, %v4697
      %v4808 = vadd.f32 %v4540, %v4702
      %v4809 = vadd.f32 %v4541, %v4707
      %v4810 = vadd.f32 %v4542, %v4712
      %v4811 = vadd.f32 %v4543, %v4717
      %v4812 = vadd.f32 %v4544, %v4722
      %v4813 = vadd.f32 %v4545, %v4727
      %v4814 = vadd.f32 %v4546, %v4732
      %v4815 = vadd.f32 %v4547, %v4737
      %v4816 = vadd.f32 %v4548, %v4742
      %v4817 = vadd.f32 %v4549, %v4747
      %v4818 = vadd.f32 %v4550, %v4752
      %v4819 = vadd.f32 %v4551, %v4757
      %v4820 = vadd.f32 %v4552, %v4762
      %v4821 = vadd.f32 %v4553, %v4767
      %v4822 = vadd.f32 %v4554, %v4772
      %v4823 = vadd.f32 %v4555, %v4777
      %v4824 = vadd.f32 %v4556, %v4782
      %v4825 = vadd.f32 %v4557, %v4787
      %v4826 = vadd.f32 %v4558, %v4792
      %v4828 = vrot.slane %v3361, 1
      %v4829 = vrot.slane %v3362, 1
      %v4830 = vsel %vm661, %v4828, %v4829
      %v4831 = vrot.slane %v3363, 1
      %v4832 = vsel %vm661, %v4829, %v4831
      %s4833 = scalar_lea.vmem %s3, 16
      %v4834 = vld [vmem:[%s4833] sm:$0xf]
      %v4835 = vsel %vm287, %v4830, 0
      %v4837 = vsel %vm287, %v4832, 0
      %v4840 = vsel %vm384, %v4834, 0
      %4842 = vmatprep.subr.mxu0 0.0
      %4843 = vmatpush1.msra.mxu0 %v4840
      %4844 = vmatprep.subr.mxu0 0.0
      %4845 = vmatpush1.msra.mxu0 0.0
      %4846 = vmatprep.subr.mxu0 0.0
      %4847 = vmatpush1.msra.mxu0 0.0
      %4848 = vmatprep.subr.mxu0 0.0
      %4849 = vmatpush1.msra.mxu0 0.0
      %4850 = vmatprep.subr.mxu0 0.0
      %4851 = vmatpush1.msra.mxu0 0.0
      %4852 = vmatprep.subr.mxu0 0.0
      %4853 = vmatpush1.msra.mxu0 0.0
      %4854 = vmatprep.subr.mxu0 0.0
      %4855 = vmatpush1.msra.mxu0 0.0
      %4856 = vmatprep.subr.mxu0 0.0
      %4857 = vmatpush1.msra.mxu0 0.0
      %4858 = vmatprep.subr.mxu0 0.0
      %4859 = vmatpush1.msra.mxu0 0.0
      %4860 = vmatprep.subr.mxu0 0.0
      %4861 = vmatpush1.msra.mxu0 0.0
      %4862 = vmatprep.subr.mxu0 0.0
      %4863 = vmatpush1.msra.mxu0 0.0
      %4864 = vmatprep.subr.mxu0 0.0
      %4865 = vmatpush1.msra.mxu0 0.0
      %4866 = vmatprep.subr.mxu0 0.0
      %4867 = vmatpush1.msra.mxu0 0.0
      %4868 = vmatprep.subr.mxu0 0.0
      %4869 = vmatpush1.msra.mxu0 0.0
      %4870 = vmatprep.subr.mxu0 0.0
      %4871 = vmatpush1.msra.mxu0 0.0
      %4872 = vmatprep.subr.mxu0 0.0
      %4873 = vmatpush1.msra.mxu0 0.0
      %4874 = vmatprep.subr.mxu0 0.0
      %4875 = vmatpush1.msra.mxu0 0.0
      %4876 = vmatprep.subr.mxu0 0.0
      %4877 = vmatpush1.msra.mxu0 0.0
      %4878 = vmatprep.subr.mxu0 0.0
      %4879 = vmatpush1.msra.mxu0 0.0
      %4880 = vmatprep.subr.mxu0 0.0
      %4881 = vmatpush1.msra.mxu0 0.0
      %4882 = vmatprep.subr.mxu0 0.0
      %4883 = vmatpush1.msra.mxu0 0.0
      %4884 = vmatprep.subr.mxu0 0.0
      %4885 = vmatpush1.msra.mxu0 0.0
      %4886 = vmatprep.subr.mxu0 0.0
      %4887 = vmatpush1.msra.mxu0 0.0
      %4888 = vmatprep.subr.mxu0 0.0
      %4889 = vmatpush1.msra.mxu0 0.0
      %4890 = vmatprep.subr.mxu0 0.0
      %4891 = vmatpush1.msra.mxu0 0.0
      %4892 = vmatprep.subr.mxu0 0.0
      %4893 = vmatpush1.msra.mxu0 0.0
      %4894 = vmatprep.subr.mxu0 0.0
      %4895 = vmatpush1.msra.mxu0 0.0
      %4896 = vmatprep.subr.mxu0 0.0
      %4897 = vmatpush1.msra.mxu0 0.0
      %4898 = vmatprep.subr.mxu0 0.0
      %4899 = vmatpush1.msra.mxu0 0.0
      %4900 = vmatprep.subr.mxu0 0.0
      %4901 = vmatpush1.msra.mxu0 0.0
      %4902 = vmatprep.subr.mxu0 0.0
      %4903 = vmatpush1.msra.mxu0 0.0
      %4904 = vmatprep.subr.mxu0 0.0
      %4905 = vmatpush1.msra.mxu0 0.0
      %4906 = vmatprep.mubr.f32.mxu0 0.0
      %4907 = vmatmul.mubr.f32.gmra.mrb[0].mxu0 %v3833
      %v4908 = vpop.f32.mrb[0].mxu0
      %v4909 = vadd.f32 0.0, %v4908
      %v4910 = vpop.f32.mrb[0].mxu0
      %4911 = vmatprep.mubr.f32.mxu0 0.0
      %4912 = vmatmul.mubr.f32.gmra.mrb[0].mxu0 %v3835
      %v4913 = vpop.f32.mrb[0].mxu0
      %v4914 = vadd.f32 0.0, %v4913
      %v4915 = vpop.f32.mrb[0].mxu0
      %4916 = vmatprep.mubr.f32.mxu0 0.0
      %4917 = vmatmul.mubr.f32.gmra.mrb[0].mxu0 %v3837
      %v4918 = vpop.f32.mrb[0].mxu0
      %v4919 = vadd.f32 0.0, %v4918
      %v4920 = vpop.f32.mrb[0].mxu0
      %4921 = vmatprep.mubr.f32.mxu0 0.0
      %4922 = vmatmul.mubr.f32.gmra.mrb[0].mxu0 %v3839
      %v4923 = vpop.f32.mrb[0].mxu0
      %v4924 = vadd.f32 0.0, %v4923
      %v4925 = vpop.f32.mrb[0].mxu0
      %4926 = vmatprep.mubr.f32.mxu0 0.0
      %4927 = vmatmul.mubr.f32.gmra.mrb[0].mxu0 %v3841
      %v4928 = vpop.f32.mrb[0].mxu0
      %v4929 = vadd.f32 0.0, %v4928
      %v4930 = vpop.f32.mrb[0].mxu0
      %4931 = vmatprep.mubr.f32.mxu0 0.0
      %4932 = vmatmul.mubr.f32.gmra.mrb[0].mxu0 %v3843
      %v4933 = vpop.f32.mrb[0].mxu0
      %v4934 = vadd.f32 0.0, %v4933
      %v4935 = vpop.f32.mrb[0].mxu0
      %4936 = vmatprep.mubr.f32.mxu0 0.0
      %4937 = vmatmul.mubr.f32.gmra.mrb[0].mxu0 %v3845
      %v4938 = vpop.f32.mrb[0].mxu0
      %v4939 = vadd.f32 0.0, %v4938
      %v4940 = vpop.f32.mrb[0].mxu0
      %4941 = vmatprep.mubr.f32.mxu0 0.0
      %4942 = vmatmul.mubr.f32.gmra.mrb[0].mxu0 %v3847
      %v4943 = vpop.f32.mrb[0].mxu0
      %v4944 = vadd.f32 0.0, %v4943
      %v4945 = vpop.f32.mrb[0].mxu0
      %4946 = vmatprep.mubr.f32.mxu0 0.0
      %4947 = vmatmul.mubr.f32.gmra.mrb[0].mxu0 %v3849
      %v4948 = vpop.f32.mrb[0].mxu0
      %v4949 = vadd.f32 0.0, %v4948
      %v4950 = vpop.f32.mrb[0].mxu0
      %4951 = vmatprep.mubr.f32.mxu0 0.0
      %4952 = vmatmul.mubr.f32.gmra.mrb[0].mxu0 %v3851
      %v4953 = vpop.f32.mrb[0].mxu0
      %v4954 = vadd.f32 0.0, %v4953
      %v4955 = vpop.f32.mrb[0].mxu0
      %4956 = vmatprep.mubr.f32.mxu0 0.0
      %4957 = vmatmul.mubr.f32.gmra.mrb[0].mxu0 %v3853
      %v4958 = vpop.f32.mrb[0].mxu0
      %v4959 = vadd.f32 0.0, %v4958
      %v4960 = vpop.f32.mrb[0].mxu0
      %4961 = vmatprep.mubr.f32.mxu0 0.0
      %4962 = vmatmul.mubr.f32.gmra.mrb[0].mxu0 %v3855
      %v4963 = vpop.f32.mrb[0].mxu0
      %v4964 = vadd.f32 0.0, %v4963
      %v4965 = vpop.f32.mrb[0].mxu0
      %4966 = vmatprep.mubr.f32.mxu0 0.0
      %4967 = vmatmul.mubr.f32.gmra.mrb[0].mxu0 %v3857
      %v4968 = vpop.f32.mrb[0].mxu0
      %v4969 = vadd.f32 0.0, %v4968
      %v4970 = vpop.f32.mrb[0].mxu0
      %4971 = vmatprep.mubr.f32.mxu0 0.0
      %4972 = vmatmul.mubr.f32.gmra.mrb[0].mxu0 %v3859
      %v4973 = vpop.f32.mrb[0].mxu0
      %v4974 = vadd.f32 0.0, %v4973
      %v4975 = vpop.f32.mrb[0].mxu0
      %4976 = vmatprep.mubr.f32.mxu0 0.0
      %4977 = vmatmul.mubr.f32.gmra.mrb[0].mxu0 %v3861
      %v4978 = vpop.f32.mrb[0].mxu0
      %v4979 = vadd.f32 0.0, %v4978
      %v4980 = vpop.f32.mrb[0].mxu0
      %4981 = vmatprep.mubr.f32.mxu0 0.0
      %4982 = vmatmul.mubr.f32.gmra.mrb[0].mxu0 %v3863
      %v4983 = vpop.f32.mrb[0].mxu0
      %v4984 = vadd.f32 0.0, %v4983
      %v4985 = vpop.f32.mrb[0].mxu0
      %4986 = vmatprep.mubr.f32.mxu0 0.0
      %4987 = vmatmul.mubr.f32.gmra.mrb[0].mxu0 %v3865
      %v4988 = vpop.f32.mrb[0].mxu0
      %v4989 = vadd.f32 0.0, %v4988
      %v4990 = vpop.f32.mrb[0].mxu0
      %4991 = vmatprep.mubr.f32.mxu0 0.0
      %4992 = vmatmul.mubr.f32.gmra.mrb[0].mxu0 %v3867
      %v4993 = vpop.f32.mrb[0].mxu0
      %v4994 = vadd.f32 0.0, %v4993
      %v4995 = vpop.f32.mrb[0].mxu0
      %4996 = vmatprep.mubr.f32.mxu0 0.0
      %4997 = vmatmul.mubr.f32.gmra.mrb[0].mxu0 %v3869
      %v4998 = vpop.f32.mrb[0].mxu0
      %v4999 = vadd.f32 0.0, %v4998
      %v5000 = vpop.f32.mrb[0].mxu0
      %5001 = vmatprep.mubr.f32.mxu0 0.0
      %5002 = vmatmul.mubr.f32.gmra.mrb[0].mxu0 %v3871
      %v5003 = vpop.f32.mrb[0].mxu0
      %v5004 = vadd.f32 0.0, %v5003
      %v5005 = vpop.f32.mrb[0].mxu0
      %5006 = vmatprep.mubr.f32.mxu0 0.0
      %5007 = vmatmul.mubr.f32.gmra.mrb[0].mxu0 %v3873
      %v5008 = vpop.f32.mrb[0].mxu0
      %v5009 = vadd.f32 0.0, %v5008
      %v5010 = vpop.f32.mrb[0].mxu0
      %5011 = vmatprep.mubr.f32.mxu0 0.0
      %5012 = vmatmul.mubr.f32.gmra.mrb[0].mxu0 %v3875
      %v5013 = vpop.f32.mrb[0].mxu0
      %v5014 = vadd.f32 0.0, %v5013
      %v5015 = vpop.f32.mrb[0].mxu0
      %5016 = vmatprep.mubr.f32.mxu0 0.0
      %5017 = vmatmul.mubr.f32.gmra.mrb[0].mxu0 %v3877
      %v5018 = vpop.f32.mrb[0].mxu0
      %v5019 = vadd.f32 0.0, %v5018
      %v5020 = vpop.f32.mrb[0].mxu0
      %5021 = vmatprep.mubr.f32.mxu0 0.0
      %5022 = vmatmul.mubr.f32.gmra.mrb[0].mxu0 %v3879
      %v5023 = vpop.f32.mrb[0].mxu0
      %v5024 = vadd.f32 0.0, %v5023
      %v5025 = vpop.f32.mrb[0].mxu0
      %5026 = vmatprep.mubr.f32.mxu0 0.0
      %5027 = vmatmul.mubr.f32.gmra.mrb[0].mxu0 %v3881
      %v5028 = vpop.f32.mrb[0].mxu0
      %v5029 = vadd.f32 0.0, %v5028
      %v5030 = vpop.f32.mrb[0].mxu0
      %5031 = vmatprep.mubr.f32.mxu0 0.0
      %5032 = vmatmul.mubr.f32.gmra.mrb[0].mxu0 %v3883
      %v5033 = vpop.f32.mrb[0].mxu0
      %v5034 = vadd.f32 0.0, %v5033
      %v5035 = vpop.f32.mrb[0].mxu0
      %5036 = vmatprep.mubr.f32.mxu0 0.0
      %5037 = vmatmul.mubr.f32.gmra.mrb[0].mxu0 %v3885
      %v5038 = vpop.f32.mrb[0].mxu0
      %v5039 = vadd.f32 0.0, %v5038
      %v5040 = vpop.f32.mrb[0].mxu0
      %5041 = vmatprep.mubr.f32.mxu0 0.0
      %5042 = vmatmul.mubr.f32.gmra.mrb[0].mxu0 %v3887
      %v5043 = vpop.f32.mrb[0].mxu0
      %v5044 = vadd.f32 0.0, %v5043
      %v5045 = vpop.f32.mrb[0].mxu0
      %5046 = vmatprep.mubr.f32.mxu0 0.0
      %5047 = vmatmul.mubr.f32.gmra.mrb[0].mxu0 %v3889
      %v5048 = vpop.f32.mrb[0].mxu0
      %v5049 = vadd.f32 0.0, %v5048
      %v5050 = vpop.f32.mrb[0].mxu0
      %5051 = vmatprep.mubr.f32.mxu0 0.0
      %5052 = vmatmul.mubr.f32.gmra.mrb[0].mxu0 %v3891
      %v5053 = vpop.f32.mrb[0].mxu0
      %v5054 = vadd.f32 0.0, %v5053
      %v5055 = vpop.f32.mrb[0].mxu0
      %5056 = vmatprep.mubr.f32.mxu0 0.0
      %5057 = vmatmul.mubr.f32.gmra.mrb[0].mxu0 %v4835
      %v5058 = vpop.f32.mrb[0].mxu0
      %v5059 = vadd.f32 0.0, %v5058
      %v5060 = vpop.f32.mrb[0].mxu0
      %5061 = vmatprep.mubr.f32.mxu0 0.0
      %5062 = vmatmul.mubr.f32.gmra.mrb[0].mxu0 %v4837
      %v5063 = vpop.f32.mrb[0].mxu0
      %v5064 = vadd.f32 0.0, %v5063
      %v5065 = vpop.f32.mrb[0].mxu0
      %5066 = vdwg.mxu0
      %v5067 = vadd.f32 %v4795, %v4909
      %v5068 = vadd.f32 %v4796, %v4914
      %v5069 = vadd.f32 %v4797, %v4919
      %v5070 = vadd.f32 %v4798, %v4924
      %v5071 = vadd.f32 %v4799, %v4929
      %v5072 = vadd.f32 %v4800, %v4934
      %v5073 = vadd.f32 %v4801, %v4939
      %v5074 = vadd.f32 %v4802, %v4944
      %v5075 = vadd.f32 %v4803, %v4949
      %v5076 = vadd.f32 %v4804, %v4954
      %v5077 = vadd.f32 %v4805, %v4959
      %v5078 = vadd.f32 %v4806, %v4964
      %v5079 = vadd.f32 %v4807, %v4969
      %v5080 = vadd.f32 %v4808, %v4974
      %v5081 = vadd.f32 %v4809, %v4979
      %v5082 = vadd.f32 %v4810, %v4984
      %v5083 = vadd.f32 %v4811, %v4989
      %v5084 = vadd.f32 %v4812, %v4994
      %v5085 = vadd.f32 %v4813, %v4999
      %v5086 = vadd.f32 %v4814, %v5004
      %v5087 = vadd.f32 %v4815, %v5009
      %v5088 = vadd.f32 %v4816, %v5014
      %v5089 = vadd.f32 %v4817, %v5019
      %v5090 = vadd.f32 %v4818, %v5024
      %v5091 = vadd.f32 %v4819, %v5029
      %v5092 = vadd.f32 %v4820, %v5034
      %v5093 = vadd.f32 %v4821, %v5039
      %v5094 = vadd.f32 %v4822, %v5044
      %v5095 = vadd.f32 %v4823, %v5049
      %v5096 = vadd.f32 %v4824, %v5054
      %v5097 = vadd.f32 %v4825, %v5059
      %v5098 = vadd.f32 %v4826, %v5064
      %v5099 = vrot.slane %v3361, 2
      %v5100 = vrot.slane %v3362, 2
      %v5101 = vsel %vm1068, %v5099, %v5100
      %v5102 = vrot.slane %v3363, 2
      %v5103 = vsel %vm1068, %v5100, %v5102
      %s5104 = scalar_lea.vmem %s3, 20
      %v5105 = vld [vmem:[%s5104] sm:$0xf]
      %v5106 = vsel %vm287, %v5101, 0
      %v5108 = vsel %vm287, %v5103, 0
      %v5111 = vsel %vm384, %v5105, 0
      %5113 = vmatprep.subr.mxu0 0.0
      %5114 = vmatpush1.msra.mxu0 %v5111
      %5115 = vmatprep.subr.mxu0 0.0
      %5116 = vmatpush1.msra.mxu0 0.0
      %5117 = vmatprep.subr.mxu0 0.0
      %5118 = vmatpush1.msra.mxu0 0.0
      %5119 = vmatprep.subr.mxu0 0.0
      %5120 = vmatpush1.msra.mxu0 0.0
      %5121 = vmatprep.subr.mxu0 0.0
      %5122 = vmatpush1.msra.mxu0 0.0
      %5123 = vmatprep.subr.mxu0 0.0
      %5124 = vmatpush1.msra.mxu0 0.0
      %5125 = vmatprep.subr.mxu0 0.0
      %5126 = vmatpush1.msra.mxu0 0.0
      %5127 = vmatprep.subr.mxu0 0.0
      %5128 = vmatpush1.msra.mxu0 0.0
      %5129 = vmatprep.subr.mxu0 0.0
      %5130 = vmatpush1.msra.mxu0 0.0
      %5131 = vmatprep.subr.mxu0 0.0
      %5132 = vmatpush1.msra.mxu0 0.0
      %5133 = vmatprep.subr.mxu0 0.0
      %5134 = vmatpush1.msra.mxu0 0.0
      %5135 = vmatprep.subr.mxu0 0.0
      %5136 = vmatpush1.msra.mxu0 0.0
      %5137 = vmatprep.subr.mxu0 0.0
      %5138 = vmatpush1.msra.mxu0 0.0
      %5139 = vmatprep.subr.mxu0 0.0
      %5140 = vmatpush1.msra.mxu0 0.0
      %5141 = vmatprep.subr.mxu0 0.0
      %5142 = vmatpush1.msra.mxu0 0.0
      %5143 = vmatprep.subr.mxu0 0.0
      %5144 = vmatpush1.msra.mxu0 0.0
      %5145 = vmatprep.subr.mxu0 0.0
      %5146 = vmatpush1.msra.mxu0 0.0
      %5147 = vmatprep.subr.mxu0 0.0
      %5148 = vmatpush1.msra.mxu0 0.0
      %5149 = vmatprep.subr.mxu0 0.0
      %5150 = vmatpush1.msra.mxu0 0.0
      %5151 = vmatprep.subr.mxu0 0.0
      %5152 = vmatpush1.msra.mxu0 0.0
      %5153 = vmatprep.subr.mxu0 0.0
      %5154 = vmatpush1.msra.mxu0 0.0
      %5155 = vmatprep.subr.mxu0 0.0
      %5156 = vmatpush1.msra.mxu0 0.0
      %5157 = vmatprep.subr.mxu0 0.0
      %5158 = vmatpush1.msra.mxu0 0.0
      %5159 = vmatprep.subr.mxu0 0.0
      %5160 = vmatpush1.msra.mxu0 0.0
      %5161 = vmatprep.subr.mxu0 0.0
      %5162 = vmatpush1.msra.mxu0 0.0
      %5163 = vmatprep.subr.mxu0 0.0
      %5164 = vmatpush1.msra.mxu0 0.0
      %5165 = vmatprep.subr.mxu0 0.0
      %5166 = vmatpush1.msra.mxu0 0.0
      %5167 = vmatprep.subr.mxu0 0.0
      %5168 = vmatpush1.msra.mxu0 0.0
      %5169 = vmatprep.subr.mxu0 0.0
      %5170 = vmatpush1.msra.mxu0 0.0
      %5171 = vmatprep.subr.mxu0 0.0
      %5172 = vmatpush1.msra.mxu0 0.0
      %5173 = vmatprep.subr.mxu0 0.0
      %5174 = vmatpush1.msra.mxu0 0.0
      %5175 = vmatprep.subr.mxu0 0.0
      %5176 = vmatpush1.msra.mxu0 0.0
      %5177 = vmatprep.mubr.f32.mxu0 0.0
      %5178 = vmatmul.mubr.f32.gmra.mrb[0].mxu0 %v4239
      %v5179 = vpop.f32.mrb[0].mxu0
      %v5180 = vadd.f32 0.0, %v5179
      %v5181 = vpop.f32.mrb[0].mxu0
      %5182 = vmatprep.mubr.f32.mxu0 0.0
      %5183 = vmatmul.mubr.f32.gmra.mrb[0].mxu0 %v4241
      %v5184 = vpop.f32.mrb[0].mxu0
      %v5185 = vadd.f32 0.0, %v5184
      %v5186 = vpop.f32.mrb[0].mxu0
      %5187 = vmatprep.mubr.f32.mxu0 0.0
      %5188 = vmatmul.mubr.f32.gmra.mrb[0].mxu0 %v4243
      %v5189 = vpop.f32.mrb[0].mxu0
      %v5190 = vadd.f32 0.0, %v5189
      %v5191 = vpop.f32.mrb[0].mxu0
      %5192 = vmatprep.mubr.f32.mxu0 0.0
      %5193 = vmatmul.mubr.f32.gmra.mrb[0].mxu0 %v4245
      %v5194 = vpop.f32.mrb[0].mxu0
      %v5195 = vadd.f32 0.0, %v5194
      %v5196 = vpop.f32.mrb[0].mxu0
      %5197 = vmatprep.mubr.f32.mxu0 0.0
      %5198 = vmatmul.mubr.f32.gmra.mrb[0].mxu0 %v4247
      %v5199 = vpop.f32.mrb[0].mxu0
      %v5200 = vadd.f32 0.0, %v5199
      %v5201 = vpop.f32.mrb[0].mxu0
      %5202 = vmatprep.mubr.f32.mxu0 0.0
      %5203 = vmatmul.mubr.f32.gmra.mrb[0].mxu0 %v4249
      %v5204 = vpop.f32.mrb[0].mxu0
      %v5205 = vadd.f32 0.0, %v5204
      %v5206 = vpop.f32.mrb[0].mxu0
      %5207 = vmatprep.mubr.f32.mxu0 0.0
      %5208 = vmatmul.mubr.f32.gmra.mrb[0].mxu0 %v4251
      %v5209 = vpop.f32.mrb[0].mxu0
      %v5210 = vadd.f32 0.0, %v5209
      %v5211 = vpop.f32.mrb[0].mxu0
      %5212 = vmatprep.mubr.f32.mxu0 0.0
      %5213 = vmatmul.mubr.f32.gmra.mrb[0].mxu0 %v4253
      %v5214 = vpop.f32.mrb[0].mxu0
      %v5215 = vadd.f32 0.0, %v5214
      %v5216 = vpop.f32.mrb[0].mxu0
      %5217 = vmatprep.mubr.f32.mxu0 0.0
      %5218 = vmatmul.mubr.f32.gmra.mrb[0].mxu0 %v4255
      %v5219 = vpop.f32.mrb[0].mxu0
      %v5220 = vadd.f32 0.0, %v5219
      %v5221 = vpop.f32.mrb[0].mxu0
      %5222 = vmatprep.mubr.f32.mxu0 0.0
      %5223 = vmatmul.mubr.f32.gmra.mrb[0].mxu0 %v4257
      %v5224 = vpop.f32.mrb[0].mxu0
      %v5225 = vadd.f32 0.0, %v5224
      %v5226 = vpop.f32.mrb[0].mxu0
      %5227 = vmatprep.mubr.f32.mxu0 0.0
      %5228 = vmatmul.mubr.f32.gmra.mrb[0].mxu0 %v4259
      %v5229 = vpop.f32.mrb[0].mxu0
      %v5230 = vadd.f32 0.0, %v5229
      %v5231 = vpop.f32.mrb[0].mxu0
      %5232 = vmatprep.mubr.f32.mxu0 0.0
      %5233 = vmatmul.mubr.f32.gmra.mrb[0].mxu0 %v4261
      %v5234 = vpop.f32.mrb[0].mxu0
      %v5235 = vadd.f32 0.0, %v5234
      %v5236 = vpop.f32.mrb[0].mxu0
      %5237 = vmatprep.mubr.f32.mxu0 0.0
      %5238 = vmatmul.mubr.f32.gmra.mrb[0].mxu0 %v4263
      %v5239 = vpop.f32.mrb[0].mxu0
      %v5240 = vadd.f32 0.0, %v5239
      %v5241 = vpop.f32.mrb[0].mxu0
      %5242 = vmatprep.mubr.f32.mxu0 0.0
      %5243 = vmatmul.mubr.f32.gmra.mrb[0].mxu0 %v4265
      %v5244 = vpop.f32.mrb[0].mxu0
      %v5245 = vadd.f32 0.0, %v5244
      %v5246 = vpop.f32.mrb[0].mxu0
      %5247 = vmatprep.mubr.f32.mxu0 0.0
      %5248 = vmatmul.mubr.f32.gmra.mrb[0].mxu0 %v4267
      %v5249 = vpop.f32.mrb[0].mxu0
      %v5250 = vadd.f32 0.0, %v5249
      %v5251 = vpop.f32.mrb[0].mxu0
      %5252 = vmatprep.mubr.f32.mxu0 0.0
      %5253 = vmatmul.mubr.f32.gmra.mrb[0].mxu0 %v4269
      %v5254 = vpop.f32.mrb[0].mxu0
      %v5255 = vadd.f32 0.0, %v5254
      %v5256 = vpop.f32.mrb[0].mxu0
      %5257 = vmatprep.mubr.f32.mxu0 0.0
      %5258 = vmatmul.mubr.f32.gmra.mrb[0].mxu0 %v4271
      %v5259 = vpop.f32.mrb[0].mxu0
      %v5260 = vadd.f32 0.0, %v5259
      %v5261 = vpop.f32.mrb[0].mxu0
      %5262 = vmatprep.mubr.f32.mxu0 0.0
      %5263 = vmatmul.mubr.f32.gmra.mrb[0].mxu0 %v4273
      %v5264 = vpop.f32.mrb[0].mxu0
      %v5265 = vadd.f32 0.0, %v5264
      %v5266 = vpop.f32.mrb[0].mxu0
      %5267 = vmatprep.mubr.f32.mxu0 0.0
      %5268 = vmatmul.mubr.f32.gmra.mrb[0].mxu0 %v4275
      %v5269 = vpop.f32.mrb[0].mxu0
      %v5270 = vadd.f32 0.0, %v5269
      %v5271 = vpop.f32.mrb[0].mxu0
      %5272 = vmatprep.mubr.f32.mxu0 0.0
      %5273 = vmatmul.mubr.f32.gmra.mrb[0].mxu0 %v4277
      %v5274 = vpop.f32.mrb[0].mxu0
      %v5275 = vadd.f32 0.0, %v5274
      %v5276 = vpop.f32.mrb[0].mxu0
      %5277 = vmatprep.mubr.f32.mxu0 0.0
      %5278 = vmatmul.mubr.f32.gmra.mrb[0].mxu0 %v4279
      %v5279 = vpop.f32.mrb[0].mxu0
      %v5280 = vadd.f32 0.0, %v5279
      %v5281 = vpop.f32.mrb[0].mxu0
      %5282 = vmatprep.mubr.f32.mxu0 0.0
      %5283 = vmatmul.mubr.f32.gmra.mrb[0].mxu0 %v4281
      %v5284 = vpop.f32.mrb[0].mxu0
      %v5285 = vadd.f32 0.0, %v5284
      %v5286 = vpop.f32.mrb[0].mxu0
      %5287 = vmatprep.mubr.f32.mxu0 0.0
      %5288 = vmatmul.mubr.f32.gmra.mrb[0].mxu0 %v4283
      %v5289 = vpop.f32.mrb[0].mxu0
      %v5290 = vadd.f32 0.0, %v5289
      %v5291 = vpop.f32.mrb[0].mxu0
      %5292 = vmatprep.mubr.f32.mxu0 0.0
      %5293 = vmatmul.mubr.f32.gmra.mrb[0].mxu0 %v4285
      %v5294 = vpop.f32.mrb[0].mxu0
      %v5295 = vadd.f32 0.0, %v5294
      %v5296 = vpop.f32.mrb[0].mxu0
      %5297 = vmatprep.mubr.f32.mxu0 0.0
      %5298 = vmatmul.mubr.f32.gmra.mrb[0].mxu0 %v4287
      %v5299 = vpop.f32.mrb[0].mxu0
      %v5300 = vadd.f32 0.0, %v5299
      %v5301 = vpop.f32.mrb[0].mxu0
      %5302 = vmatprep.mubr.f32.mxu0 0.0
      %5303 = vmatmul.mubr.f32.gmra.mrb[0].mxu0 %v4289
      %v5304 = vpop.f32.mrb[0].mxu0
      %v5305 = vadd.f32 0.0, %v5304
      %v5306 = vpop.f32.mrb[0].mxu0
      %5307 = vmatprep.mubr.f32.mxu0 0.0
      %5308 = vmatmul.mubr.f32.gmra.mrb[0].mxu0 %v4291
      %v5309 = vpop.f32.mrb[0].mxu0
      %v5310 = vadd.f32 0.0, %v5309
      %v5311 = vpop.f32.mrb[0].mxu0
      %5312 = vmatprep.mubr.f32.mxu0 0.0
      %5313 = vmatmul.mubr.f32.gmra.mrb[0].mxu0 %v4293
      %v5314 = vpop.f32.mrb[0].mxu0
      %v5315 = vadd.f32 0.0, %v5314
      %v5316 = vpop.f32.mrb[0].mxu0
      %5317 = vmatprep.mubr.f32.mxu0 0.0
      %5318 = vmatmul.mubr.f32.gmra.mrb[0].mxu0 %v4295
      %v5319 = vpop.f32.mrb[0].mxu0
      %v5320 = vadd.f32 0.0, %v5319
      %v5321 = vpop.f32.mrb[0].mxu0
      %5322 = vmatprep.mubr.f32.mxu0 0.0
      %5323 = vmatmul.mubr.f32.gmra.mrb[0].mxu0 %v4297
      %v5324 = vpop.f32.mrb[0].mxu0
      %v5325 = vadd.f32 0.0, %v5324
      %v5326 = vpop.f32.mrb[0].mxu0
      %5327 = vmatprep.mubr.f32.mxu0 0.0
      %5328 = vmatmul.mubr.f32.gmra.mrb[0].mxu0 %v5106
      %v5329 = vpop.f32.mrb[0].mxu0
      %v5330 = vadd.f32 0.0, %v5329
      %v5331 = vpop.f32.mrb[0].mxu0
      %5332 = vmatprep.mubr.f32.mxu0 0.0
      %5333 = vmatmul.mubr.f32.gmra.mrb[0].mxu0 %v5108
      %v5334 = vpop.f32.mrb[0].mxu0
      %v5335 = vadd.f32 0.0, %v5334
      %v5336 = vpop.f32.mrb[0].mxu0
      %5337 = vdwg.mxu0
      %v5338 = vadd.f32 %v5067, %v5180
      %v5339 = vadd.f32 %v5068, %v5185
      %v5340 = vadd.f32 %v5069, %v5190
      %v5341 = vadd.f32 %v5070, %v5195
      %v5342 = vadd.f32 %v5071, %v5200
      %v5343 = vadd.f32 %v5072, %v5205
      %v5344 = vadd.f32 %v5073, %v5210
      %v5345 = vadd.f32 %v5074, %v5215
      %v5346 = vadd.f32 %v5075, %v5220
      %v5347 = vadd.f32 %v5076, %v5225
      %v5348 = vadd.f32 %v5077, %v5230
      %v5349 = vadd.f32 %v5078, %v5235
      %v5350 = vadd.f32 %v5079, %v5240
      %v5351 = vadd.f32 %v5080, %v5245
      %v5352 = vadd.f32 %v5081, %v5250
      %v5353 = vadd.f32 %v5082, %v5255
      %v5354 = vadd.f32 %v5083, %v5260
      %v5355 = vadd.f32 %v5084, %v5265
      %v5356 = vadd.f32 %v5085, %v5270
      %v5357 = vadd.f32 %v5086, %v5275
      %v5358 = vadd.f32 %v5087, %v5280
      %v5359 = vadd.f32 %v5088, %v5285
      %v5360 = vadd.f32 %v5089, %v5290
      %v5361 = vadd.f32 %v5090, %v5295
      %v5362 = vadd.f32 %v5091, %v5300
      %v5363 = vadd.f32 %v5092, %v5305
      %v5364 = vadd.f32 %v5093, %v5310
      %v5365 = vadd.f32 %v5094, %v5315
      %v5366 = vadd.f32 %v5095, %v5320
      %v5367 = vadd.f32 %v5096, %v5325
      %v5368 = vadd.f32 %v5097, %v5330
      %v5369 = vadd.f32 %v5098, %v5335
      %s5370 = scalar_lea.vmem %s3, 24
      %v5371 = vld [vmem:[%s5370] sm:$0xf]
      %v5373 = vsel %vm287, %v3364, 0
      %v5376 = vsel %vm287, %v3365, 0
      %v5379 = vsel %vm384, %v5371, 0
      %5381 = vmatprep.subr.mxu0 0.0
      %5382 = vmatpush1.msra.mxu0 %v5379
      %5383 = vmatprep.subr.mxu0 0.0
      %5384 = vmatpush1.msra.mxu0 0.0
      %5385 = vmatprep.subr.mxu0 0.0
      %5386 = vmatpush1.msra.mxu0 0.0
      %5387 = vmatprep.subr.mxu0 0.0
      %5388 = vmatpush1.msra.mxu0 0.0
      %5389 = vmatprep.subr.mxu0 0.0
      %5390 = vmatpush1.msra.mxu0 0.0
      %5391 = vmatprep.subr.mxu0 0.0
      %5392 = vmatpush1.msra.mxu0 0.0
      %5393 = vmatprep.subr.mxu0 0.0
      %5394 = vmatpush1.msra.mxu0 0.0
      %5395 = vmatprep.subr.mxu0 0.0
      %5396 = vmatpush1.msra.mxu0 0.0
      %5397 = vmatprep.subr.mxu0 0.0
      %5398 = vmatpush1.msra.mxu0 0.0
      %5399 = vmatprep.subr.mxu0 0.0
      %5400 = vmatpush1.msra.mxu0 0.0
      %5401 = vmatprep.subr.mxu0 0.0
      %5402 = vmatpush1.msra.mxu0 0.0
      %5403 = vmatprep.subr.mxu0 0.0
      %5404 = vmatpush1.msra.mxu0 0.0
      %5405 = vmatprep.subr.mxu0 0.0
      %5406 = vmatpush1.msra.mxu0 0.0
      %5407 = vmatprep.subr.mxu0 0.0
      %5408 = vmatpush1.msra.mxu0 0.0
      %5409 = vmatprep.subr.mxu0 0.0
      %5410 = vmatpush1.msra.mxu0 0.0
      %5411 = vmatprep.subr.mxu0 0.0
      %5412 = vmatpush1.msra.mxu0 0.0
      %5413 = vmatprep.subr.mxu0 0.0
      %5414 = vmatpush1.msra.mxu0 0.0
      %5415 = vmatprep.subr.mxu0 0.0
      %5416 = vmatpush1.msra.mxu0 0.0
      %5417 = vmatprep.subr.mxu0 0.0
      %5418 = vmatpush1.msra.mxu0 0.0
      %5419 = vmatprep.subr.mxu0 0.0
      %5420 = vmatpush1.msra.mxu0 0.0
      %5421 = vmatprep.subr.mxu0 0.0
      %5422 = vmatpush1.msra.mxu0 0.0
      %5423 = vmatprep.subr.mxu0 0.0
      %5424 = vmatpush1.msra.mxu0 0.0
      %5425 = vmatprep.subr.mxu0 0.0
      %5426 = vmatpush1.msra.mxu0 0.0
      %5427 = vmatprep.subr.mxu0 0.0
      %5428 = vmatpush1.msra.mxu0 0.0
      %5429 = vmatprep.subr.mxu0 0.0
      %5430 = vmatpush1.msra.mxu0 0.0
      %5431 = vmatprep.subr.mxu0 0.0
      %5432 = vmatpush1.msra.mxu0 0.0
      %5433 = vmatprep.subr.mxu0 0.0
      %5434 = vmatpush1.msra.mxu0 0.0
      %5435 = vmatprep.subr.mxu0 0.0
      %5436 = vmatpush1.msra.mxu0 0.0
      %5437 = vmatprep.subr.mxu0 0.0
      %5438 = vmatpush1.msra.mxu0 0.0
      %5439 = vmatprep.subr.mxu0 0.0
      %5440 = vmatpush1.msra.mxu0 0.0
      %5441 = vmatprep.subr.mxu0 0.0
      %5442 = vmatpush1.msra.mxu0 0.0
      %5443 = vmatprep.subr.mxu0 0.0
      %5444 = vmatpush1.msra.mxu0 0.0
      %5445 = vmatprep.mubr.f32.mxu0 0.0
      %5446 = vmatmul.mubr.f32.gmra.mrb[0].mxu0 %v3388
      %v5447 = vpop.f32.mrb[0].mxu0
      %v5448 = vadd.f32 0.0, %v5447
      %v5449 = vpop.f32.mrb[0].mxu0
      %5450 = vmatprep.mubr.f32.mxu0 0.0
      %5451 = vmatmul.mubr.f32.gmra.mrb[0].mxu0 %v3391
      %v5452 = vpop.f32.mrb[0].mxu0
      %v5453 = vadd.f32 0.0, %v5452
      %v5454 = vpop.f32.mrb[0].mxu0
      %5455 = vmatprep.mubr.f32.mxu0 0.0
      %5456 = vmatmul.mubr.f32.gmra.mrb[0].mxu0 %v3394
      %v5457 = vpop.f32.mrb[0].mxu0
      %v5458 = vadd.f32 0.0, %v5457
      %v5459 = vpop.f32.mrb[0].mxu0
      %5460 = vmatprep.mubr.f32.mxu0 0.0
      %5461 = vmatmul.mubr.f32.gmra.mrb[0].mxu0 %v3397
      %v5462 = vpop.f32.mrb[0].mxu0
      %v5463 = vadd.f32 0.0, %v5462
      %v5464 = vpop.f32.mrb[0].mxu0
      %5465 = vmatprep.mubr.f32.mxu0 0.0
      %5466 = vmatmul.mubr.f32.gmra.mrb[0].mxu0 %v3400
      %v5467 = vpop.f32.mrb[0].mxu0
      %v5468 = vadd.f32 0.0, %v5467
      %v5469 = vpop.f32.mrb[0].mxu0
      %5470 = vmatprep.mubr.f32.mxu0 0.0
      %5471 = vmatmul.mubr.f32.gmra.mrb[0].mxu0 %v3403
      %v5472 = vpop.f32.mrb[0].mxu0
      %v5473 = vadd.f32 0.0, %v5472
      %v5474 = vpop.f32.mrb[0].mxu0
      %5475 = vmatprep.mubr.f32.mxu0 0.0
      %5476 = vmatmul.mubr.f32.gmra.mrb[0].mxu0 %v3406
      %v5477 = vpop.f32.mrb[0].mxu0
      %v5478 = vadd.f32 0.0, %v5477
      %v5479 = vpop.f32.mrb[0].mxu0
      %5480 = vmatprep.mubr.f32.mxu0 0.0
      %5481 = vmatmul.mubr.f32.gmra.mrb[0].mxu0 %v3409
      %v5482 = vpop.f32.mrb[0].mxu0
      %v5483 = vadd.f32 0.0, %v5482
      %v5484 = vpop.f32.mrb[0].mxu0
      %5485 = vmatprep.mubr.f32.mxu0 0.0
      %5486 = vmatmul.mubr.f32.gmra.mrb[0].mxu0 %v3412
      %v5487 = vpop.f32.mrb[0].mxu0
      %v5488 = vadd.f32 0.0, %v5487
      %v5489 = vpop.f32.mrb[0].mxu0
      %5490 = vmatprep.mubr.f32.mxu0 0.0
      %5491 = vmatmul.mubr.f32.gmra.mrb[0].mxu0 %v3415
      %v5492 = vpop.f32.mrb[0].mxu0
      %v5493 = vadd.f32 0.0, %v5492
      %v5494 = vpop.f32.mrb[0].mxu0
      %5495 = vmatprep.mubr.f32.mxu0 0.0
      %5496 = vmatmul.mubr.f32.gmra.mrb[0].mxu0 %v3418
      %v5497 = vpop.f32.mrb[0].mxu0
      %v5498 = vadd.f32 0.0, %v5497
      %v5499 = vpop.f32.mrb[0].mxu0
      %5500 = vmatprep.mubr.f32.mxu0 0.0
      %5501 = vmatmul.mubr.f32.gmra.mrb[0].mxu0 %v3421
      %v5502 = vpop.f32.mrb[0].mxu0
      %v5503 = vadd.f32 0.0, %v5502
      %v5504 = vpop.f32.mrb[0].mxu0
      %5505 = vmatprep.mubr.f32.mxu0 0.0
      %5506 = vmatmul.mubr.f32.gmra.mrb[0].mxu0 %v3424
      %v5507 = vpop.f32.mrb[0].mxu0
      %v5508 = vadd.f32 0.0, %v5507
      %v5509 = vpop.f32.mrb[0].mxu0
      %5510 = vmatprep.mubr.f32.mxu0 0.0
      %5511 = vmatmul.mubr.f32.gmra.mrb[0].mxu0 %v3427
      %v5512 = vpop.f32.mrb[0].mxu0
      %v5513 = vadd.f32 0.0, %v5512
      %v5514 = vpop.f32.mrb[0].mxu0
      %5515 = vmatprep.mubr.f32.mxu0 0.0
      %5516 = vmatmul.mubr.f32.gmra.mrb[0].mxu0 %v3430
      %v5517 = vpop.f32.mrb[0].mxu0
      %v5518 = vadd.f32 0.0, %v5517
      %v5519 = vpop.f32.mrb[0].mxu0
      %5520 = vmatprep.mubr.f32.mxu0 0.0
      %5521 = vmatmul.mubr.f32.gmra.mrb[0].mxu0 %v3433
      %v5522 = vpop.f32.mrb[0].mxu0
      %v5523 = vadd.f32 0.0, %v5522
      %v5524 = vpop.f32.mrb[0].mxu0
      %5525 = vmatprep.mubr.f32.mxu0 0.0
      %5526 = vmatmul.mubr.f32.gmra.mrb[0].mxu0 %v3436
      %v5527 = vpop.f32.mrb[0].mxu0
      %v5528 = vadd.f32 0.0, %v5527
      %v5529 = vpop.f32.mrb[0].mxu0
      %5530 = vmatprep.mubr.f32.mxu0 0.0
      %5531 = vmatmul.mubr.f32.gmra.mrb[0].mxu0 %v3439
      %v5532 = vpop.f32.mrb[0].mxu0
      %v5533 = vadd.f32 0.0, %v5532
      %v5534 = vpop.f32.mrb[0].mxu0
      %5535 = vmatprep.mubr.f32.mxu0 0.0
      %5536 = vmatmul.mubr.f32.gmra.mrb[0].mxu0 %v3442
      %v5537 = vpop.f32.mrb[0].mxu0
      %v5538 = vadd.f32 0.0, %v5537
      %v5539 = vpop.f32.mrb[0].mxu0
      %5540 = vmatprep.mubr.f32.mxu0 0.0
      %5541 = vmatmul.mubr.f32.gmra.mrb[0].mxu0 %v3445
      %v5542 = vpop.f32.mrb[0].mxu0
      %v5543 = vadd.f32 0.0, %v5542
      %v5544 = vpop.f32.mrb[0].mxu0
      %5545 = vmatprep.mubr.f32.mxu0 0.0
      %5546 = vmatmul.mubr.f32.gmra.mrb[0].mxu0 %v3448
      %v5547 = vpop.f32.mrb[0].mxu0
      %v5548 = vadd.f32 0.0, %v5547
      %v5549 = vpop.f32.mrb[0].mxu0
      %5550 = vmatprep.mubr.f32.mxu0 0.0
      %5551 = vmatmul.mubr.f32.gmra.mrb[0].mxu0 %v3451
      %v5552 = vpop.f32.mrb[0].mxu0
      %v5553 = vadd.f32 0.0, %v5552
      %v5554 = vpop.f32.mrb[0].mxu0
      %5555 = vmatprep.mubr.f32.mxu0 0.0
      %5556 = vmatmul.mubr.f32.gmra.mrb[0].mxu0 %v3454
      %v5557 = vpop.f32.mrb[0].mxu0
      %v5558 = vadd.f32 0.0, %v5557
      %v5559 = vpop.f32.mrb[0].mxu0
      %5560 = vmatprep.mubr.f32.mxu0 0.0
      %5561 = vmatmul.mubr.f32.gmra.mrb[0].mxu0 %v3457
      %v5562 = vpop.f32.mrb[0].mxu0
      %v5563 = vadd.f32 0.0, %v5562
      %v5564 = vpop.f32.mrb[0].mxu0
      %5565 = vmatprep.mubr.f32.mxu0 0.0
      %5566 = vmatmul.mubr.f32.gmra.mrb[0].mxu0 %v3460
      %v5567 = vpop.f32.mrb[0].mxu0
      %v5568 = vadd.f32 0.0, %v5567
      %v5569 = vpop.f32.mrb[0].mxu0
      %5570 = vmatprep.mubr.f32.mxu0 0.0
      %5571 = vmatmul.mubr.f32.gmra.mrb[0].mxu0 %v3463
      %v5572 = vpop.f32.mrb[0].mxu0
      %v5573 = vadd.f32 0.0, %v5572
      %v5574 = vpop.f32.mrb[0].mxu0
      %5575 = vmatprep.mubr.f32.mxu0 0.0
      %5576 = vmatmul.mubr.f32.gmra.mrb[0].mxu0 %v3466
      %v5577 = vpop.f32.mrb[0].mxu0
      %v5578 = vadd.f32 0.0, %v5577
      %v5579 = vpop.f32.mrb[0].mxu0
      %5580 = vmatprep.mubr.f32.mxu0 0.0
      %5581 = vmatmul.mubr.f32.gmra.mrb[0].mxu0 %v3469
      %v5582 = vpop.f32.mrb[0].mxu0
      %v5583 = vadd.f32 0.0, %v5582
      %v5584 = vpop.f32.mrb[0].mxu0
      %5585 = vmatprep.mubr.f32.mxu0 0.0
      %5586 = vmatmul.mubr.f32.gmra.mrb[0].mxu0 %v4562
      %v5587 = vpop.f32.mrb[0].mxu0
      %v5588 = vadd.f32 0.0, %v5587
      %v5589 = vpop.f32.mrb[0].mxu0
      %5590 = vmatprep.mubr.f32.mxu0 0.0
      %5591 = vmatmul.mubr.f32.gmra.mrb[0].mxu0 %v4565
      %v5592 = vpop.f32.mrb[0].mxu0
      %v5593 = vadd.f32 0.0, %v5592
      %v5594 = vpop.f32.mrb[0].mxu0
      %5595 = vmatprep.mubr.f32.mxu0 0.0
      %5596 = vmatmul.mubr.f32.gmra.mrb[0].mxu0 %v5373
      %v5597 = vpop.f32.mrb[0].mxu0
      %v5598 = vadd.f32 0.0, %v5597
      %v5599 = vpop.f32.mrb[0].mxu0
      %5600 = vmatprep.mubr.f32.mxu0 0.0
      %5601 = vmatmul.mubr.f32.gmra.mrb[0].mxu0 %v5376
      %v5602 = vpop.f32.mrb[0].mxu0
      %v5603 = vadd.f32 0.0, %v5602
      %v5604 = vpop.f32.mrb[0].mxu0
      %5605 = vdwg.mxu0
      %v5606 = vadd.f32 %v5338, %v5448
      %v5607 = vadd.f32 %v5339, %v5453
      %v5608 = vadd.f32 %v5340, %v5458
      %v5609 = vadd.f32 %v5341, %v5463
      %v5610 = vadd.f32 %v5342, %v5468
      %v5611 = vadd.f32 %v5343, %v5473
      %v5612 = vadd.f32 %v5344, %v5478
      %v5613 = vadd.f32 %v5345, %v5483
      %v5614 = vadd.f32 %v5346, %v5488
      %v5615 = vadd.f32 %v5347, %v5493
      %v5616 = vadd.f32 %v5348, %v5498
      %v5617 = vadd.f32 %v5349, %v5503
      %v5618 = vadd.f32 %v5350, %v5508
      %v5619 = vadd.f32 %v5351, %v5513
      %v5620 = vadd.f32 %v5352, %v5518
      %v5621 = vadd.f32 %v5353, %v5523
      %v5622 = vadd.f32 %v5354, %v5528
      %v5623 = vadd.f32 %v5355, %v5533
      %v5624 = vadd.f32 %v5356, %v5538
      %v5625 = vadd.f32 %v5357, %v5543
      %v5626 = vadd.f32 %v5358, %v5548
      %v5627 = vadd.f32 %v5359, %v5553
      %v5628 = vadd.f32 %v5360, %v5558
      %v5629 = vadd.f32 %v5361, %v5563
      %v5630 = vadd.f32 %v5362, %v5568
      %v5631 = vadd.f32 %v5363, %v5573
      %v5632 = vadd.f32 %v5364, %v5578
      %v5633 = vadd.f32 %v5365, %v5583
      %v5634 = vadd.f32 %v5366, %v5588
      %v5635 = vadd.f32 %v5367, %v5593
      %v5636 = vadd.f32 %v5368, %v5598
      %v5637 = vadd.f32 %v5369, %v5603
      %v5639 = vrot.slane %v3364, 1
      %v5640 = vrot.slane %v3365, 1
      %v5641 = vsel %vm661, %v5639, %v5640
      %v5642 = vrot.slane %v3366, 1
      %v5643 = vsel %vm661, %v5640, %v5642
      %s5644 = scalar_lea.vmem %s3, 28
      %v5645 = vld [vmem:[%s5644] sm:$0xf]
      %v5646 = vsel %vm287, %v5641, 0
      %v5648 = vsel %vm287, %v5643, 0
      %v5651 = vsel %vm384, %v5645, 0
      %5653 = vmatprep.subr.mxu0 0.0
      %5654 = vmatpush1.msra.mxu0 %v5651
      %5655 = vmatprep.subr.mxu0 0.0
      %5656 = vmatpush1.msra.mxu0 0.0
      %5657 = vmatprep.subr.mxu0 0.0
      %5658 = vmatpush1.msra.mxu0 0.0
      %5659 = vmatprep.subr.mxu0 0.0
      %5660 = vmatpush1.msra.mxu0 0.0
      %5661 = vmatprep.subr.mxu0 0.0
      %5662 = vmatpush1.msra.mxu0 0.0
      %5663 = vmatprep.subr.mxu0 0.0
      %5664 = vmatpush1.msra.mxu0 0.0
      %5665 = vmatprep.subr.mxu0 0.0
      %5666 = vmatpush1.msra.mxu0 0.0
      %5667 = vmatprep.subr.mxu0 0.0
      %5668 = vmatpush1.msra.mxu0 0.0
      %5669 = vmatprep.subr.mxu0 0.0
      %5670 = vmatpush1.msra.mxu0 0.0
      %5671 = vmatprep.subr.mxu0 0.0
      %5672 = vmatpush1.msra.mxu0 0.0
      %5673 = vmatprep.subr.mxu0 0.0
      %5674 = vmatpush1.msra.mxu0 0.0
      %5675 = vmatprep.subr.mxu0 0.0
      %5676 = vmatpush1.msra.mxu0 0.0
      %5677 = vmatprep.subr.mxu0 0.0
      %5678 = vmatpush1.msra.mxu0 0.0
      %5679 = vmatprep.subr.mxu0 0.0
      %5680 = vmatpush1.msra.mxu0 0.0
      %5681 = vmatprep.subr.mxu0 0.0
      %5682 = vmatpush1.msra.mxu0 0.0
      %5683 = vmatprep.subr.mxu0 0.0
      %5684 = vmatpush1.msra.mxu0 0.0
      %5685 = vmatprep.subr.mxu0 0.0
      %5686 = vmatpush1.msra.mxu0 0.0
      %5687 = vmatprep.subr.mxu0 0.0
      %5688 = vmatpush1.msra.mxu0 0.0
      %5689 = vmatprep.subr.mxu0 0.0
      %5690 = vmatpush1.msra.mxu0 0.0
      %5691 = vmatprep.subr.mxu0 0.0
      %5692 = vmatpush1.msra.mxu0 0.0
      %5693 = vmatprep.subr.mxu0 0.0
      %5694 = vmatpush1.msra.mxu0 0.0
      %5695 = vmatprep.subr.mxu0 0.0
      %5696 = vmatpush1.msra.mxu0 0.0
      %5697 = vmatprep.subr.mxu0 0.0
      %5698 = vmatpush1.msra.mxu0 0.0
      %5699 = vmatprep.subr.mxu0 0.0
      %5700 = vmatpush1.msra.mxu0 0.0
      %5701 = vmatprep.subr.mxu0 0.0
      %5702 = vmatpush1.msra.mxu0 0.0
      %5703 = vmatprep.subr.mxu0 0.0
      %5704 = vmatpush1.msra.mxu0 0.0
      %5705 = vmatprep.subr.mxu0 0.0
      %5706 = vmatpush1.msra.mxu0 0.0
      %5707 = vmatprep.subr.mxu0 0.0
      %5708 = vmatpush1.msra.mxu0 0.0
      %5709 = vmatprep.subr.mxu0 0.0
      %5710 = vmatpush1.msra.mxu0 0.0
      %5711 = vmatprep.subr.mxu0 0.0
      %5712 = vmatpush1.msra.mxu0 0.0
      %5713 = vmatprep.subr.mxu0 0.0
      %5714 = vmatpush1.msra.mxu0 0.0
      %5715 = vmatprep.subr.mxu0 0.0
      %5716 = vmatpush1.msra.mxu0 0.0
      %5717 = vmatprep.mubr.f32.mxu0 0.0
      %5718 = vmatmul.mubr.f32.gmra.mrb[0].mxu0 %v3837
      %v5719 = vpop.f32.mrb[0].mxu0
      %v5720 = vadd.f32 0.0, %v5719
      %v5721 = vpop.f32.mrb[0].mxu0
      %5722 = vmatprep.mubr.f32.mxu0 0.0
      %5723 = vmatmul.mubr.f32.gmra.mrb[0].mxu0 %v3839
      %v5724 = vpop.f32.mrb[0].mxu0
      %v5725 = vadd.f32 0.0, %v5724
      %v5726 = vpop.f32.mrb[0].mxu0
      %5727 = vmatprep.mubr.f32.mxu0 0.0
      %5728 = vmatmul.mubr.f32.gmra.mrb[0].mxu0 %v3841
      %v5729 = vpop.f32.mrb[0].mxu0
      %v5730 = vadd.f32 0.0, %v5729
      %v5731 = vpop.f32.mrb[0].mxu0
      %5732 = vmatprep.mubr.f32.mxu0 0.0
      %5733 = vmatmul.mubr.f32.gmra.mrb[0].mxu0 %v3843
      %v5734 = vpop.f32.mrb[0].mxu0
      %v5735 = vadd.f32 0.0, %v5734
      %v5736 = vpop.f32.mrb[0].mxu0
      %5737 = vmatprep.mubr.f32.mxu0 0.0
      %5738 = vmatmul.mubr.f32.gmra.mrb[0].mxu0 %v3845
      %v5739 = vpop.f32.mrb[0].mxu0
      %v5740 = vadd.f32 0.0, %v5739
      %v5741 = vpop.f32.mrb[0].mxu0
      %5742 = vmatprep.mubr.f32.mxu0 0.0
      %5743 = vmatmul.mubr.f32.gmra.mrb[0].mxu0 %v3847
      %v5744 = vpop.f32.mrb[0].mxu0
      %v5745 = vadd.f32 0.0, %v5744
      %v5746 = vpop.f32.mrb[0].mxu0
      %5747 = vmatprep.mubr.f32.mxu0 0.0
      %5748 = vmatmul.mubr.f32.gmra.mrb[0].mxu0 %v3849
      %v5749 = vpop.f32.mrb[0].mxu0
      %v5750 = vadd.f32 0.0, %v5749
      %v5751 = vpop.f32.mrb[0].mxu0
      %5752 = vmatprep.mubr.f32.mxu0 0.0
      %5753 = vmatmul.mubr.f32.gmra.mrb[0].mxu0 %v3851
      %v5754 = vpop.f32.mrb[0].mxu0
      %v5755 = vadd.f32 0.0, %v5754
      %v5756 = vpop.f32.mrb[0].mxu0
      %5757 = vmatprep.mubr.f32.mxu0 0.0
      %5758 = vmatmul.mubr.f32.gmra.mrb[0].mxu0 %v3853
      %v5759 = vpop.f32.mrb[0].mxu0
      %v5760 = vadd.f32 0.0, %v5759
      %v5761 = vpop.f32.mrb[0].mxu0
      %5762 = vmatprep.mubr.f32.mxu0 0.0
      %5763 = vmatmul.mubr.f32.gmra.mrb[0].mxu0 %v3855
      %v5764 = vpop.f32.mrb[0].mxu0
      %v5765 = vadd.f32 0.0, %v5764
      %v5766 = vpop.f32.mrb[0].mxu0
      %5767 = vmatprep.mubr.f32.mxu0 0.0
      %5768 = vmatmul.mubr.f32.gmra.mrb[0].mxu0 %v3857
      %v5769 = vpop.f32.mrb[0].mxu0
      %v5770 = vadd.f32 0.0, %v5769
      %v5771 = vpop.f32.mrb[0].mxu0
      %5772 = vmatprep.mubr.f32.mxu0 0.0
      %5773 = vmatmul.mubr.f32.gmra.mrb[0].mxu0 %v3859
      %v5774 = vpop.f32.mrb[0].mxu0
      %v5775 = vadd.f32 0.0, %v5774
      %v5776 = vpop.f32.mrb[0].mxu0
      %5777 = vmatprep.mubr.f32.mxu0 0.0
      %5778 = vmatmul.mubr.f32.gmra.mrb[0].mxu0 %v3861
      %v5779 = vpop.f32.mrb[0].mxu0
      %v5780 = vadd.f32 0.0, %v5779
      %v5781 = vpop.f32.mrb[0].mxu0
      %5782 = vmatprep.mubr.f32.mxu0 0.0
      %5783 = vmatmul.mubr.f32.gmra.mrb[0].mxu0 %v3863
      %v5784 = vpop.f32.mrb[0].mxu0
      %v5785 = vadd.f32 0.0, %v5784
      %v5786 = vpop.f32.mrb[0].mxu0
      %5787 = vmatprep.mubr.f32.mxu0 0.0
      %5788 = vmatmul.mubr.f32.gmra.mrb[0].mxu0 %v3865
      %v5789 = vpop.f32.mrb[0].mxu0
      %v5790 = vadd.f32 0.0, %v5789
      %v5791 = vpop.f32.mrb[0].mxu0
      %5792 = vmatprep.mubr.f32.mxu0 0.0
      %5793 = vmatmul.mubr.f32.gmra.mrb[0].mxu0 %v3867
      %v5794 = vpop.f32.mrb[0].mxu0
      %v5795 = vadd.f32 0.0, %v5794
      %v5796 = vpop.f32.mrb[0].mxu0
      %5797 = vmatprep.mubr.f32.mxu0 0.0
      %5798 = vmatmul.mubr.f32.gmra.mrb[0].mxu0 %v3869
      %v5799 = vpop.f32.mrb[0].mxu0
      %v5800 = vadd.f32 0.0, %v5799
      %v5801 = vpop.f32.mrb[0].mxu0
      %5802 = vmatprep.mubr.f32.mxu0 0.0
      %5803 = vmatmul.mubr.f32.gmra.mrb[0].mxu0 %v3871
      %v5804 = vpop.f32.mrb[0].mxu0
      %v5805 = vadd.f32 0.0, %v5804
      %v5806 = vpop.f32.mrb[0].mxu0
      %5807 = vmatprep.mubr.f32.mxu0 0.0
      %5808 = vmatmul.mubr.f32.gmra.mrb[0].mxu0 %v3873
      %v5809 = vpop.f32.mrb[0].mxu0
      %v5810 = vadd.f32 0.0, %v5809
      %v5811 = vpop.f32.mrb[0].mxu0
      %5812 = vmatprep.mubr.f32.mxu0 0.0
      %5813 = vmatmul.mubr.f32.gmra.mrb[0].mxu0 %v3875
      %v5814 = vpop.f32.mrb[0].mxu0
      %v5815 = vadd.f32 0.0, %v5814
      %v5816 = vpop.f32.mrb[0].mxu0
      %5817 = vmatprep.mubr.f32.mxu0 0.0
      %5818 = vmatmul.mubr.f32.gmra.mrb[0].mxu0 %v3877
      %v5819 = vpop.f32.mrb[0].mxu0
      %v5820 = vadd.f32 0.0, %v5819
      %v5821 = vpop.f32.mrb[0].mxu0
      %5822 = vmatprep.mubr.f32.mxu0 0.0
      %5823 = vmatmul.mubr.f32.gmra.mrb[0].mxu0 %v3879
      %v5824 = vpop.f32.mrb[0].mxu0
      %v5825 = vadd.f32 0.0, %v5824
      %v5826 = vpop.f32.mrb[0].mxu0
      %5827 = vmatprep.mubr.f32.mxu0 0.0
      %5828 = vmatmul.mubr.f32.gmra.mrb[0].mxu0 %v3881
      %v5829 = vpop.f32.mrb[0].mxu0
      %v5830 = vadd.f32 0.0, %v5829
      %v5831 = vpop.f32.mrb[0].mxu0
      %5832 = vmatprep.mubr.f32.mxu0 0.0
      %5833 = vmatmul.mubr.f32.gmra.mrb[0].mxu0 %v3883
      %v5834 = vpop.f32.mrb[0].mxu0
      %v5835 = vadd.f32 0.0, %v5834
      %v5836 = vpop.f32.mrb[0].mxu0
      %5837 = vmatprep.mubr.f32.mxu0 0.0
      %5838 = vmatmul.mubr.f32.gmra.mrb[0].mxu0 %v3885
      %v5839 = vpop.f32.mrb[0].mxu0
      %v5840 = vadd.f32 0.0, %v5839
      %v5841 = vpop.f32.mrb[0].mxu0
      %5842 = vmatprep.mubr.f32.mxu0 0.0
      %5843 = vmatmul.mubr.f32.gmra.mrb[0].mxu0 %v3887
      %v5844 = vpop.f32.mrb[0].mxu0
      %v5845 = vadd.f32 0.0, %v5844
      %v5846 = vpop.f32.mrb[0].mxu0
      %5847 = vmatprep.mubr.f32.mxu0 0.0
      %5848 = vmatmul.mubr.f32.gmra.mrb[0].mxu0 %v3889
      %v5849 = vpop.f32.mrb[0].mxu0
      %v5850 = vadd.f32 0.0, %v5849
      %v5851 = vpop.f32.mrb[0].mxu0
      %5852 = vmatprep.mubr.f32.mxu0 0.0
      %5853 = vmatmul.mubr.f32.gmra.mrb[0].mxu0 %v3891
      %v5854 = vpop.f32.mrb[0].mxu0
      %v5855 = vadd.f32 0.0, %v5854
      %v5856 = vpop.f32.mrb[0].mxu0
      %5857 = vmatprep.mubr.f32.mxu0 0.0
      %5858 = vmatmul.mubr.f32.gmra.mrb[0].mxu0 %v4835
      %v5859 = vpop.f32.mrb[0].mxu0
      %v5860 = vadd.f32 0.0, %v5859
      %v5861 = vpop.f32.mrb[0].mxu0
      %5862 = vmatprep.mubr.f32.mxu0 0.0
      %5863 = vmatmul.mubr.f32.gmra.mrb[0].mxu0 %v4837
      %v5864 = vpop.f32.mrb[0].mxu0
      %v5865 = vadd.f32 0.0, %v5864
      %v5866 = vpop.f32.mrb[0].mxu0
      %5867 = vmatprep.mubr.f32.mxu0 0.0
      %5868 = vmatmul.mubr.f32.gmra.mrb[0].mxu0 %v5646
      %v5869 = vpop.f32.mrb[0].mxu0
      %v5870 = vadd.f32 0.0, %v5869
      %v5871 = vpop.f32.mrb[0].mxu0
      %5872 = vmatprep.mubr.f32.mxu0 0.0
      %5873 = vmatmul.mubr.f32.gmra.mrb[0].mxu0 %v5648
      %v5874 = vpop.f32.mrb[0].mxu0
      %v5875 = vadd.f32 0.0, %v5874
      %v5876 = vpop.f32.mrb[0].mxu0
      %5877 = vdwg.mxu0
      %v5878 = vadd.f32 %v5606, %v5720
      %v5879 = vadd.f32 %v5607, %v5725
      %v5880 = vadd.f32 %v5608, %v5730
      %v5881 = vadd.f32 %v5609, %v5735
      %v5882 = vadd.f32 %v5610, %v5740
      %v5883 = vadd.f32 %v5611, %v5745
      %v5884 = vadd.f32 %v5612, %v5750
      %v5885 = vadd.f32 %v5613, %v5755
      %v5886 = vadd.f32 %v5614, %v5760
      %v5887 = vadd.f32 %v5615, %v5765
      %v5888 = vadd.f32 %v5616, %v5770
      %v5889 = vadd.f32 %v5617, %v5775
      %v5890 = vadd.f32 %v5618, %v5780
      %v5891 = vadd.f32 %v5619, %v5785
      %v5892 = vadd.f32 %v5620, %v5790
      %v5893 = vadd.f32 %v5621, %v5795
      %v5894 = vadd.f32 %v5622, %v5800
      %v5895 = vadd.f32 %v5623, %v5805
      %v5896 = vadd.f32 %v5624, %v5810
      %v5897 = vadd.f32 %v5625, %v5815
      %v5898 = vadd.f32 %v5626, %v5820
      %v5899 = vadd.f32 %v5627, %v5825
      %v5900 = vadd.f32 %v5628, %v5830
      %v5901 = vadd.f32 %v5629, %v5835
      %v5902 = vadd.f32 %v5630, %v5840
      %v5903 = vadd.f32 %v5631, %v5845
      %v5904 = vadd.f32 %v5632, %v5850
      %v5905 = vadd.f32 %v5633, %v5855
      %v5906 = vadd.f32 %v5634, %v5860
      %v5907 = vadd.f32 %v5635, %v5865
      %v5908 = vadd.f32 %v5636, %v5870
      %v5909 = vadd.f32 %v5637, %v5875
      %v5910 = vrot.slane %v3364, 2
      %v5911 = vrot.slane %v3365, 2
      %v5912 = vsel %vm1068, %v5910, %v5911
      %v5913 = vrot.slane %v3366, 2
      %v5914 = vsel %vm1068, %v5911, %v5913
      %s5915 = scalar_lea.vmem %s3, 32
      %v5916 = vld [vmem:[%s5915] sm:$0xf]
      %v5917 = vsel %vm287, %v5912, 0
      %v5919 = vsel %vm287, %v5914, 0
      %v5922 = vsel %vm384, %v5916, 0
      %5924 = vmatprep.subr.mxu0 0.0
      %5925 = vmatpush1.msra.mxu0 %v5922
      %5926 = vmatprep.subr.mxu0 0.0
      %5927 = vmatpush1.msra.mxu0 0.0
      %5928 = vmatprep.subr.mxu0 0.0
      %5929 = vmatpush1.msra.mxu0 0.0
      %5930 = vmatprep.subr.mxu0 0.0
      %5931 = vmatpush1.msra.mxu0 0.0
      %5932 = vmatprep.subr.mxu0 0.0
      %5933 = vmatpush1.msra.mxu0 0.0
      %5934 = vmatprep.subr.mxu0 0.0
      %5935 = vmatpush1.msra.mxu0 0.0
      %5936 = vmatprep.subr.mxu0 0.0
      %5937 = vmatpush1.msra.mxu0 0.0
      %5938 = vmatprep.subr.mxu0 0.0
      %5939 = vmatpush1.msra.mxu0 0.0
      %5940 = vmatprep.subr.mxu0 0.0
      %5941 = vmatpush1.msra.mxu0 0.0
      %5942 = vmatprep.subr.mxu0 0.0
      %5943 = vmatpush1.msra.mxu0 0.0
      %5944 = vmatprep.subr.mxu0 0.0
      %5945 = vmatpush1.msra.mxu0 0.0
      %5946 = vmatprep.subr.mxu0 0.0
      %5947 = vmatpush1.msra.mxu0 0.0
      %5948 = vmatprep.subr.mxu0 0.0
      %5949 = vmatpush1.msra.mxu0 0.0
      %5950 = vmatprep.subr.mxu0 0.0
      %5951 = vmatpush1.msra.mxu0 0.0
      %5952 = vmatprep.subr.mxu0 0.0
      %5953 = vmatpush1.msra.mxu0 0.0
      %5954 = vmatprep.subr.mxu0 0.0
      %5955 = vmatpush1.msra.mxu0 0.0
      %5956 = vmatprep.subr.mxu0 0.0
      %5957 = vmatpush1.msra.mxu0 0.0
      %5958 = vmatprep.subr.mxu0 0.0
      %5959 = vmatpush1.msra.mxu0 0.0
      %5960 = vmatprep.subr.mxu0 0.0
      %5961 = vmatpush1.msra.mxu0 0.0
      %5962 = vmatprep.subr.mxu0 0.0
      %5963 = vmatpush1.msra.mxu0 0.0
      %5964 = vmatprep.subr.mxu0 0.0
      %5965 = vmatpush1.msra.mxu0 0.0
      %5966 = vmatprep.subr.mxu0 0.0
      %5967 = vmatpush1.msra.mxu0 0.0
      %5968 = vmatprep.subr.mxu0 0.0
      %5969 = vmatpush1.msra.mxu0 0.0
      %5970 = vmatprep.subr.mxu0 0.0
      %5971 = vmatpush1.msra.mxu0 0.0
      %5972 = vmatprep.subr.mxu0 0.0
      %5973 = vmatpush1.msra.mxu0 0.0
      %5974 = vmatprep.subr.mxu0 0.0
      %5975 = vmatpush1.msra.mxu0 0.0
      %5976 = vmatprep.subr.mxu0 0.0
      %5977 = vmatpush1.msra.mxu0 0.0
      %5978 = vmatprep.subr.mxu0 0.0
      %5979 = vmatpush1.msra.mxu0 0.0
      %5980 = vmatprep.subr.mxu0 0.0
      %5981 = vmatpush1.msra.mxu0 0.0
      %5982 = vmatprep.subr.mxu0 0.0
      %5983 = vmatpush1.msra.mxu0 0.0
      %5984 = vmatprep.subr.mxu0 0.0
      %5985 = vmatpush1.msra.mxu0 0.0
      %5986 = vmatprep.subr.mxu0 0.0
      %5987 = vmatpush1.msra.mxu0 0.0
      %5988 = vmatprep.mubr.f32.mxu0 0.0
      %5989 = vmatmul.mubr.f32.gmra.mrb[0].mxu0 %v4243
      %v5990 = vpop.f32.mrb[0].mxu0
      %v5991 = vadd.f32 0.0, %v5990
      %v5992 = vpop.f32.mrb[0].mxu0
      %5993 = vmatprep.mubr.f32.mxu0 0.0
      %5994 = vmatmul.mubr.f32.gmra.mrb[0].mxu0 %v4245
      %v5995 = vpop.f32.mrb[0].mxu0
      %v5996 = vadd.f32 0.0, %v5995
      %v5997 = vpop.f32.mrb[0].mxu0
      %5998 = vmatprep.mubr.f32.mxu0 0.0
      %5999 = vmatmul.mubr.f32.gmra.mrb[0].mxu0 %v4247
      %v6000 = vpop.f32.mrb[0].mxu0
      %v6001 = vadd.f32 0.0, %v6000
      %v6002 = vpop.f32.mrb[0].mxu0
      %6003 = vmatprep.mubr.f32.mxu0 0.0
      %6004 = vmatmul.mubr.f32.gmra.mrb[0].mxu0 %v4249
      %v6005 = vpop.f32.mrb[0].mxu0
      %v6006 = vadd.f32 0.0, %v6005
      %v6007 = vpop.f32.mrb[0].mxu0
      %6008 = vmatprep.mubr.f32.mxu0 0.0
      %6009 = vmatmul.mubr.f32.gmra.mrb[0].mxu0 %v4251
      %v6010 = vpop.f32.mrb[0].mxu0
      %v6011 = vadd.f32 0.0, %v6010
      %v6012 = vpop.f32.mrb[0].mxu0
      %6013 = vmatprep.mubr.f32.mxu0 0.0
      %6014 = vmatmul.mubr.f32.gmra.mrb[0].mxu0 %v4253
      %v6015 = vpop.f32.mrb[0].mxu0
      %v6016 = vadd.f32 0.0, %v6015
      %v6017 = vpop.f32.mrb[0].mxu0
      %6018 = vmatprep.mubr.f32.mxu0 0.0
      %6019 = vmatmul.mubr.f32.gmra.mrb[0].mxu0 %v4255
      %v6020 = vpop.f32.mrb[0].mxu0
      %v6021 = vadd.f32 0.0, %v6020
      %v6022 = vpop.f32.mrb[0].mxu0
      %6023 = vmatprep.mubr.f32.mxu0 0.0
      %6024 = vmatmul.mubr.f32.gmra.mrb[0].mxu0 %v4257
      %v6025 = vpop.f32.mrb[0].mxu0
      %v6026 = vadd.f32 0.0, %v6025
      %v6027 = vpop.f32.mrb[0].mxu0
      %6028 = vmatprep.mubr.f32.mxu0 0.0
      %6029 = vmatmul.mubr.f32.gmra.mrb[0].mxu0 %v4259
      %v6030 = vpop.f32.mrb[0].mxu0
      %v6031 = vadd.f32 0.0, %v6030
      %v6032 = vpop.f32.mrb[0].mxu0
      %6033 = vmatprep.mubr.f32.mxu0 0.0
      %6034 = vmatmul.mubr.f32.gmra.mrb[0].mxu0 %v4261
      %v6035 = vpop.f32.mrb[0].mxu0
      %v6036 = vadd.f32 0.0, %v6035
      %v6037 = vpop.f32.mrb[0].mxu0
      %6038 = vmatprep.mubr.f32.mxu0 0.0
      %6039 = vmatmul.mubr.f32.gmra.mrb[0].mxu0 %v4263
      %v6040 = vpop.f32.mrb[0].mxu0
      %v6041 = vadd.f32 0.0, %v6040
      %v6042 = vpop.f32.mrb[0].mxu0
      %6043 = vmatprep.mubr.f32.mxu0 0.0
      %6044 = vmatmul.mubr.f32.gmra.mrb[0].mxu0 %v4265
      %v6045 = vpop.f32.mrb[0].mxu0
      %v6046 = vadd.f32 0.0, %v6045
      %v6047 = vpop.f32.mrb[0].mxu0
      %6048 = vmatprep.mubr.f32.mxu0 0.0
      %6049 = vmatmul.mubr.f32.gmra.mrb[0].mxu0 %v4267
      %v6050 = vpop.f32.mrb[0].mxu0
      %v6051 = vadd.f32 0.0, %v6050
      %v6052 = vpop.f32.mrb[0].mxu0
      %6053 = vmatprep.mubr.f32.mxu0 0.0
      %6054 = vmatmul.mubr.f32.gmra.mrb[0].mxu0 %v4269
      %v6055 = vpop.f32.mrb[0].mxu0
      %v6056 = vadd.f32 0.0, %v6055
      %v6057 = vpop.f32.mrb[0].mxu0
      %6058 = vmatprep.mubr.f32.mxu0 0.0
      %6059 = vmatmul.mubr.f32.gmra.mrb[0].mxu0 %v4271
      %v6060 = vpop.f32.mrb[0].mxu0
      %v6061 = vadd.f32 0.0, %v6060
      %v6062 = vpop.f32.mrb[0].mxu0
      %6063 = vmatprep.mubr.f32.mxu0 0.0
      %6064 = vmatmul.mubr.f32.gmra.mrb[0].mxu0 %v4273
      %v6065 = vpop.f32.mrb[0].mxu0
      %v6066 = vadd.f32 0.0, %v6065
      %v6067 = vpop.f32.mrb[0].mxu0
      %6068 = vmatprep.mubr.f32.mxu0 0.0
      %6069 = vmatmul.mubr.f32.gmra.mrb[0].mxu0 %v4275
      %v6070 = vpop.f32.mrb[0].mxu0
      %v6071 = vadd.f32 0.0, %v6070
      %v6072 = vpop.f32.mrb[0].mxu0
      %6073 = vmatprep.mubr.f32.mxu0 0.0
      %6074 = vmatmul.mubr.f32.gmra.mrb[0].mxu0 %v4277
      %v6075 = vpop.f32.mrb[0].mxu0
      %v6076 = vadd.f32 0.0, %v6075
      %v6077 = vpop.f32.mrb[0].mxu0
      %6078 = vmatprep.mubr.f32.mxu0 0.0
      %6079 = vmatmul.mubr.f32.gmra.mrb[0].mxu0 %v4279
      %v6080 = vpop.f32.mrb[0].mxu0
      %v6081 = vadd.f32 0.0, %v6080
      %v6082 = vpop.f32.mrb[0].mxu0
      %6083 = vmatprep.mubr.f32.mxu0 0.0
      %6084 = vmatmul.mubr.f32.gmra.mrb[0].mxu0 %v4281
      %v6085 = vpop.f32.mrb[0].mxu0
      %v6086 = vadd.f32 0.0, %v6085
      %v6087 = vpop.f32.mrb[0].mxu0
      %6088 = vmatprep.mubr.f32.mxu0 0.0
      %6089 = vmatmul.mubr.f32.gmra.mrb[0].mxu0 %v4283
      %v6090 = vpop.f32.mrb[0].mxu0
      %v6091 = vadd.f32 0.0, %v6090
      %v6092 = vpop.f32.mrb[0].mxu0
      %6093 = vmatprep.mubr.f32.mxu0 0.0
      %6094 = vmatmul.mubr.f32.gmra.mrb[0].mxu0 %v4285
      %v6095 = vpop.f32.mrb[0].mxu0
      %v6096 = vadd.f32 0.0, %v6095
      %v6097 = vpop.f32.mrb[0].mxu0
      %6098 = vmatprep.mubr.f32.mxu0 0.0
      %6099 = vmatmul.mubr.f32.gmra.mrb[0].mxu0 %v4287
      %v6100 = vpop.f32.mrb[0].mxu0
      %v6101 = vadd.f32 0.0, %v6100
      %v6102 = vpop.f32.mrb[0].mxu0
      %6103 = vmatprep.mubr.f32.mxu0 0.0
      %6104 = vmatmul.mubr.f32.gmra.mrb[0].mxu0 %v4289
      %v6105 = vpop.f32.mrb[0].mxu0
      %v6106 = vadd.f32 0.0, %v6105
      %v6107 = vpop.f32.mrb[0].mxu0
      %6108 = vmatprep.mubr.f32.mxu0 0.0
      %6109 = vmatmul.mubr.f32.gmra.mrb[0].mxu0 %v4291
      %v6110 = vpop.f32.mrb[0].mxu0
      %v6111 = vadd.f32 0.0, %v6110
      %v6112 = vpop.f32.mrb[0].mxu0
      %6113 = vmatprep.mubr.f32.mxu0 0.0
      %6114 = vmatmul.mubr.f32.gmra.mrb[0].mxu0 %v4293
      %v6115 = vpop.f32.mrb[0].mxu0
      %v6116 = vadd.f32 0.0, %v6115
      %v6117 = vpop.f32.mrb[0].mxu0
      %6118 = vmatprep.mubr.f32.mxu0 0.0
      %6119 = vmatmul.mubr.f32.gmra.mrb[0].mxu0 %v4295
      %v6120 = vpop.f32.mrb[0].mxu0
      %v6121 = vadd.f32 0.0, %v6120
      %v6122 = vpop.f32.mrb[0].mxu0
      %6123 = vmatprep.mubr.f32.mxu0 0.0
      %6124 = vmatmul.mubr.f32.gmra.mrb[0].mxu0 %v4297
      %v6125 = vpop.f32.mrb[0].mxu0
      %v6126 = vadd.f32 0.0, %v6125
      %v6127 = vpop.f32.mrb[0].mxu0
      %6128 = vmatprep.mubr.f32.mxu0 0.0
      %6129 = vmatmul.mubr.f32.gmra.mrb[0].mxu0 %v5106
      %v6130 = vpop.f32.mrb[0].mxu0
      %v6131 = vadd.f32 0.0, %v6130
      %v6132 = vpop.f32.mrb[0].mxu0
      %6133 = vmatprep.mubr.f32.mxu0 0.0
      %6134 = vmatmul.mubr.f32.gmra.mrb[0].mxu0 %v5108
      %v6135 = vpop.f32.mrb[0].mxu0
      %v6136 = vadd.f32 0.0, %v6135
      %v6137 = vpop.f32.mrb[0].mxu0
      %6138 = vmatprep.mubr.f32.mxu0 0.0
      %6139 = vmatmul.mubr.f32.gmra.mrb[0].mxu0 %v5917
      %v6140 = vpop.f32.mrb[0].mxu0
      %v6141 = vadd.f32 0.0, %v6140
      %v6142 = vpop.f32.mrb[0].mxu0
      %6143 = vmatprep.mubr.f32.mxu0 0.0
      %6144 = vmatmul.mubr.f32.gmra.mrb[0].mxu0 %v5919
      %v6145 = vpop.f32.mrb[0].mxu0
      %v6146 = vadd.f32 0.0, %v6145
      %v6147 = vpop.f32.mrb[0].mxu0
      %6148 = vdwg.mxu0
      %v6149 = vadd.f32 %v5878, %v5991
      %v6150 = vadd.f32 %v5879, %v5996
      %v6151 = vadd.f32 %v5880, %v6001
      %v6152 = vadd.f32 %v5881, %v6006
      %v6153 = vadd.f32 %v5882, %v6011
      %v6154 = vadd.f32 %v5883, %v6016
      %v6155 = vadd.f32 %v5884, %v6021
      %v6156 = vadd.f32 %v5885, %v6026
      %v6157 = vadd.f32 %v5886, %v6031
      %v6158 = vadd.f32 %v5887, %v6036
      %v6159 = vadd.f32 %v5888, %v6041
      %v6160 = vadd.f32 %v5889, %v6046
      %v6161 = vadd.f32 %v5890, %v6051
      %v6162 = vadd.f32 %v5891, %v6056
      %v6163 = vadd.f32 %v5892, %v6061
      %v6164 = vadd.f32 %v5893, %v6066
      %v6165 = vadd.f32 %v5894, %v6071
      %v6166 = vadd.f32 %v5895, %v6076
      %v6167 = vadd.f32 %v5896, %v6081
      %v6168 = vadd.f32 %v5897, %v6086
      %v6169 = vadd.f32 %v5898, %v6091
      %v6170 = vadd.f32 %v5899, %v6096
      %v6171 = vadd.f32 %v5900, %v6101
      %v6172 = vadd.f32 %v5901, %v6106
      %v6173 = vadd.f32 %v5902, %v6111
      %v6174 = vadd.f32 %v5903, %v6116
      %v6175 = vadd.f32 %v5904, %v6121
      %v6176 = vadd.f32 %v5905, %v6126
      %v6177 = vadd.f32 %v5906, %v6131
      %v6178 = vadd.f32 %v5907, %v6136
      %v6179 = vadd.f32 %v5908, %v6141
      %v6180 = vadd.f32 %v5909, %v6146
      %vm6181 = vcmp.ge.f32.partialorder %v6149, 0.0
      %vm6182 = vcmp.ge.f32.partialorder %v6150, 0.0
      %vm6183 = vcmp.ge.f32.partialorder %v6151, 0.0
      %vm6184 = vcmp.ge.f32.partialorder %v6152, 0.0
      %vm6185 = vcmp.ge.f32.partialorder %v6153, 0.0
      %vm6186 = vcmp.ge.f32.partialorder %v6154, 0.0
      %vm6187 = vcmp.ge.f32.partialorder %v6155, 0.0
      %vm6188 = vcmp.ge.f32.partialorder %v6156, 0.0
      %vm6189 = vcmp.ge.f32.partialorder %v6157, 0.0
      %vm6190 = vcmp.ge.f32.partialorder %v6158, 0.0
      %vm6191 = vcmp.ge.f32.partialorder %v6159, 0.0
      %vm6192 = vcmp.ge.f32.partialorder %v6160, 0.0
      %vm6193 = vcmp.ge.f32.partialorder %v6161, 0.0
      %vm6194 = vcmp.ge.f32.partialorder %v6162, 0.0
      %vm6195 = vcmp.ge.f32.partialorder %v6163, 0.0
      %vm6196 = vcmp.ge.f32.partialorder %v6164, 0.0
      %vm6197 = vcmp.ge.f32.partialorder %v6165, 0.0
      %vm6198 = vcmp.ge.f32.partialorder %v6166, 0.0
      %vm6199 = vcmp.ge.f32.partialorder %v6167, 0.0
      %vm6200 = vcmp.ge.f32.partialorder %v6168, 0.0
      %vm6201 = vcmp.ge.f32.partialorder %v6169, 0.0
      %vm6202 = vcmp.ge.f32.partialorder %v6170, 0.0
      %vm6203 = vcmp.ge.f32.partialorder %v6171, 0.0
      %vm6204 = vcmp.ge.f32.partialorder %v6172, 0.0
      %vm6205 = vcmp.ge.f32.partialorder %v6173, 0.0
      %vm6206 = vcmp.ge.f32.partialorder %v6174, 0.0
      %vm6207 = vcmp.ge.f32.partialorder %v6175, 0.0
      %vm6208 = vcmp.ge.f32.partialorder %v6176, 0.0
      %vm6209 = vcmp.ge.f32.partialorder %v6177, 0.0
      %vm6210 = vcmp.ge.f32.partialorder %v6178, 0.0
      %vm6211 = vcmp.ge.f32.partialorder %v6179, 0.0
      %vm6212 = vcmp.ge.f32.partialorder %v6180, 0.0
      %v6213 = vmul.f32 %v6149, 0.2
      %v6214 = vmul.f32 %v6150, 0.2
      %v6215 = vmul.f32 %v6151, 0.2
      %v6216 = vmul.f32 %v6152, 0.2
      %v6217 = vmul.f32 %v6153, 0.2
      %v6218 = vmul.f32 %v6154, 0.2
      %v6219 = vmul.f32 %v6155, 0.2
      %v6220 = vmul.f32 %v6156, 0.2
      %v6221 = vmul.f32 %v6157, 0.2
      %v6222 = vmul.f32 %v6158, 0.2
      %v6223 = vmul.f32 %v6159, 0.2
      %v6224 = vmul.f32 %v6160, 0.2
      %v6225 = vmul.f32 %v6161, 0.2
      %v6226 = vmul.f32 %v6162, 0.2
      %v6227 = vmul.f32 %v6163, 0.2
      %v6228 = vmul.f32 %v6164, 0.2
      %v6229 = vmul.f32 %v6165, 0.2
      %v6230 = vmul.f32 %v6166, 0.2
      %v6231 = vmul.f32 %v6167, 0.2
      %v6232 = vmul.f32 %v6168, 0.2
      %v6233 = vmul.f32 %v6169, 0.2
      %v6234 = vmul.f32 %v6170, 0.2
      %v6235 = vmul.f32 %v6171, 0.2
      %v6236 = vmul.f32 %v6172, 0.2
      %v6237 = vmul.f32 %v6173, 0.2
      %v6238 = vmul.f32 %v6174, 0.2
      %v6239 = vmul.f32 %v6175, 0.2
      %v6240 = vmul.f32 %v6176, 0.2
      %v6241 = vmul.f32 %v6177, 0.2
      %v6242 = vmul.f32 %v6178, 0.2
      %v6243 = vmul.f32 %v6179, 0.2
      %v6244 = vmul.f32 %v6180, 0.2
      %v6245 = vsel %vm6181, %v6149, %v6213
      %v6246 = vsel %vm6182, %v6150, %v6214
      %v6247 = vsel %vm6183, %v6151, %v6215
      %v6248 = vsel %vm6184, %v6152, %v6216
      %v6249 = vsel %vm6185, %v6153, %v6217
      %v6250 = vsel %vm6186, %v6154, %v6218
      %v6251 = vsel %vm6187, %v6155, %v6219
      %v6252 = vsel %vm6188, %v6156, %v6220
      %v6253 = vsel %vm6189, %v6157, %v6221
      %v6254 = vsel %vm6190, %v6158, %v6222
      %v6255 = vsel %vm6191, %v6159, %v6223
      %v6256 = vsel %vm6192, %v6160, %v6224
      %v6257 = vsel %vm6193, %v6161, %v6225
      %v6258 = vsel %vm6194, %v6162, %v6226
      %v6259 = vsel %vm6195, %v6163, %v6227
      %v6260 = vsel %vm6196, %v6164, %v6228
      %v6261 = vsel %vm6197, %v6165, %v6229
      %v6262 = vsel %vm6198, %v6166, %v6230
      %v6263 = vsel %vm6199, %v6167, %v6231
      %v6264 = vsel %vm6200, %v6168, %v6232
      %v6265 = vsel %vm6201, %v6169, %v6233
      %v6266 = vsel %vm6202, %v6170, %v6234
      %v6267 = vsel %vm6203, %v6171, %v6235
      %v6268 = vsel %vm6204, %v6172, %v6236
      %v6269 = vsel %vm6205, %v6173, %v6237
      %v6270 = vsel %vm6206, %v6174, %v6238
      %v6271 = vsel %vm6207, %v6175, %v6239
      %v6272 = vsel %vm6208, %v6176, %v6240
      %v6273 = vsel %vm6209, %v6177, %v6241
      %v6274 = vsel %vm6210, %v6178, %v6242
      %v6275 = vsel %vm6211, %v6179, %v6243
      %v6276 = vsel %vm6212, %v6180, %v6244
      %v6277 = vadd.f32 %v669, %v6245
      %v6278 = vadd.f32 %v671, %v6246
      %v6279 = vadd.f32 %v674, %v6247
      %v6280 = vadd.f32 %v676, %v6248
      %v6281 = vadd.f32 %v679, %v6249
      %v6282 = vadd.f32 %v681, %v6250
      %v6283 = vadd.f32 %v684, %v6251
      %v6284 = vadd.f32 %v686, %v6252
      %v6285 = vadd.f32 %v689, %v6253
      %v6286 = vadd.f32 %v691, %v6254
      %v6287 = vadd.f32 %v694, %v6255
      %v6288 = vadd.f32 %v696, %v6256
      %v6289 = vadd.f32 %v699, %v6257
      %v6290 = vadd.f32 %v701, %v6258
      %v6291 = vadd.f32 %v704, %v6259
      %v6292 = vadd.f32 %v706, %v6260
      %v6293 = vadd.f32 %v709, %v6261
      %v6294 = vadd.f32 %v711, %v6262
      %v6295 = vadd.f32 %v714, %v6263
      %v6296 = vadd.f32 %v716, %v6264
      %v6297 = vadd.f32 %v719, %v6265
      %v6298 = vadd.f32 %v721, %v6266
      %v6299 = vadd.f32 %v724, %v6267
      %v6300 = vadd.f32 %v726, %v6268
      %v6301 = vadd.f32 %v729, %v6269
      %v6302 = vadd.f32 %v731, %v6270
      %v6303 = vadd.f32 %v734, %v6271
      %v6304 = vadd.f32 %v736, %v6272
      %v6305 = vadd.f32 %v739, %v6273
      %v6306 = vadd.f32 %v741, %v6274
      %v6307 = vadd.f32 %v1746, %v6275
      %v6308 = vadd.f32 %v1748, %v6276
      %6309 = vst.msk [vmem:[%s224] sm:$0xff] %vm287, %v6277
      %6310 = vst.msk [vmem:[%s224 + $0x8] sm:$0xff] %vm287, %v6278
      %6311 = vst.msk [vmem:[%s224 + $0x10] sm:$0xff] %vm287, %v6279
      %6312 = vst.msk [vmem:[%s224 + $0x18] sm:$0xff] %vm287, %v6280
      %6313 = vst.msk [vmem:[%s224 + $0x20] sm:$0xff] %vm287, %v6281
      %6314 = vst.msk [vmem:[%s224 + $0x28] sm:$0xff] %vm287, %v6282
      %6315 = vst.msk [vmem:[%s224 + $0x30] sm:$0xff] %vm287, %v6283
      %6316 = vst.msk [vmem:[%s224 + $0x38] sm:$0xff] %vm287, %v6284
      %6317 = vst.msk [vmem:[%s224 + $0x40] sm:$0xff] %vm287, %v6285
      %6318 = vst.msk [vmem:[%s224 + $0x48] sm:$0xff] %vm287, %v6286
      %6319 = vst.msk [vmem:[%s224 + $0x50] sm:$0xff] %vm287, %v6287
      %6320 = vst.msk [vmem:[%s224 + $0x58] sm:$0xff] %vm287, %v6288
      %6321 = vst.msk [vmem:[%s224 + $0x60] sm:$0xff] %vm287, %v6289
      %6322 = vst.msk [vmem:[%s224 + $0x68] sm:$0xff] %vm287, %v6290
      %6323 = vst.msk [vmem:[%s224 + $0x70] sm:$0xff] %vm287, %v6291
      %6324 = vst.msk [vmem:[%s224 + $0x78] sm:$0xff] %vm287, %v6292
      %6325 = vst.msk [vmem:[%s224 + $0x80] sm:$0xff] %vm287, %v6293
      %6326 = vst.msk [vmem:[%s224 + $0x88] sm:$0xff] %vm287, %v6294
      %6327 = vst.msk [vmem:[%s224 + $0x90] sm:$0xff] %vm287, %v6295
      %6328 = vst.msk [vmem:[%s224 + $0x98] sm:$0xff] %vm287, %v6296
      %6329 = vst.msk [vmem:[%s224 + $0xa0] sm:$0xff] %vm287, %v6297
      %6330 = vst.msk [vmem:[%s224 + $0xa8] sm:$0xff] %vm287, %v6298
      %6331 = vst.msk [vmem:[%s224 + $0xb0] sm:$0xff] %vm287, %v6299
      %6332 = vst.msk [vmem:[%s224 + $0xb8] sm:$0xff] %vm287, %v6300
      %6333 = vst.msk [vmem:[%s224 + $0xc0] sm:$0xff] %vm287, %v6301
      %6334 = vst.msk [vmem:[%s224 + $0xc8] sm:$0xff] %vm287, %v6302
      %6335 = vst.msk [vmem:[%s224 + $0xd0] sm:$0xff] %vm287, %v6303
      %6336 = vst.msk [vmem:[%s224 + $0xd8] sm:$0xff] %vm287, %v6304
      %6337 = vst.msk [vmem:[%s224 + $0xe0] sm:$0xff] %vm287, %v6305
      %6338 = vst.msk [vmem:[%s224 + $0xe8] sm:$0xff] %vm287, %v6306
      %6339 = vst.msk [vmem:[%s224 + $0xf0] sm:$0xff] %vm287, %v6307
      %6340 = vst.msk [vmem:[%s224 + $0xf8] sm:$0xff] %vm287, %v6308
      %p6341 = scmp.lt.s32.totalorder %s16, 1
      %s6342 = scalar_select %p6341, %s16, 1
      %s6343 = smul.addr %s6342, 32
      %s6344 = smul.addr %s6343, 8
      %s6345 = scalar_lea.vmem %s5, %s6344
      // Predicated region
      $region41: #{tpu_custom_call.1} parent=39 // pred_check
        %p6346 = pneg %p144
      $region42: #{tpu_custom_call.1} parent=39 // pred_check_branch
        %6348 = sbr.rel (%p6346) target = $region44
      $region43: #{tpu_custom_call.1} parent=39 // pred_region
        _
      $region44: #{tpu_custom_call.1} parent=39 // pred_fallthru
        _
    $region40: #{tpu_custom_call.1} parent=5 // pred_fallthru
      _
    %p6349 = scmp.le.s32.totalorder 2, %s11
    // Predicated region
    $region45: #{tpu_custom_call.1} parent=5 // pred_check
      %p6350 = pneg %p6349
    $region46: #{tpu_custom_call.1} parent=5 // pred_check_branch
      %6352 = sbr.rel (%p6350) target = $region48
    $region47: #{tpu_custom_call.1} parent=5 // pred_region
      %s6353 = ssub.s32 %s11, 2
      // Predicated region
      $region49: #{tpu_custom_call.1} parent=47 // pred_check
        %p6354 = pneg %p150
      $region50: #{tpu_custom_call.1} parent=47 // pred_check_branch
        %6356 = sbr.rel (%p6354) target = $region52
      $region51: #{tpu_custom_call.1} parent=47 // pred_region
        %p6357 = scmp.lt.s32.totalorder %s17, 1
        %s6358 = scalar_select %p6357, %s17, 1
        %s6359 = smul.addr %s6358, 32
        %s6360 = smul.addr %s6359, 8
        %s6361 = scalar_lea.vmem %s5, %s6360
      $region52: #{tpu_custom_call.1} parent=47 // pred_fallthru
        _
    $region48: #{tpu_custom_call.1} parent=5 // pred_fallthru
      _
  $region6: #{tpu_custom_call.1} parent=0 // loop_footer
    %s15 = sadd.s32 1, %s11
  $region7: #{tpu_custom_call.1} parent=0 // loop_footer_branch
    %10 = sbr.rel target = $region3
  $region8: #{tpu_custom_call.1} parent=0 // loop_exit
    _

</llo_original>
